<compile_context>
chip_gen: v7x
topology: tpu7x:2x2x1
jax: 0.10.0
libtpu: 0.0.40
codegen_flags: <defaults>
</compile_context>

<pallas_src>
import functools

import jax
import jax.numpy as jnp
import numpy as np
from jax.experimental import pallas as pl
from jax.experimental.pallas import tpu as pltpu

# Model dims (from the PyTorch module).
L = 5            # LSTM layers
H = 20           # hidden size == input feature size
D_IN = 20
F1, F2, F3 = 32, 32, 5

# Kernel layout constants.
HP = 32          # gate stripe width: H=20 padded to 32 lanes
GH = 4 * HP      # 128 fused gate lanes == one full vreg width
DP = HP          # padded input-feature width (D_IN == H)
BP = 8           # batch padded to one sublane tile.  For throughput, grow BP
                 # in multiples of 8 (NOT a grid): per-step latency is ~flat
                 # until the LHS fills the MXU height (~128/256 rows).
OUT_LANES = 128  # output padded to a full lane tile -> unmasked final store


def _rnn_kernel(x_ref,            # (T*BP, DP)  time-major, zero-padded input, f32
                wih_ref,          # (L, DP, GH) fused+padded input->gate weights, bf16
                whh_ref,          # (L, HP, GH) fused+padded hidden->gate weights, bf16
                b_ref,            # (L, 1, GH)  fused bias (b_ih + b_hh), f32
                fc1w_ref, fc1b_ref,
                fc2w_ref, fc2b_ref,
                fc3w_ref, fc3b_ref,
                out_ref,          # (BP, OUT_LANES)
                *, T):

    def cell(l, x_in, h_prev, c_prev):
        """One LSTM cell of layer l.  x_in/h_prev: (BP, HP) bf16; c_prev f32."""
        # Weights are indexed from VMEM at point of use — holding all L layers'
        # fused weights in vregs would spill (review opt 1 caveat).
        # bf16 operands + f32 accumulation: single-pass MXU matmuls.
        # The reviewed (BP,2HP)@(2HP,GH) fusion needs a lane-concat of h into
        # lanes HP..2HP-1 *on the dependent chain*; two independent dots issue
        # back-to-back with no cross-lane op, so they are kept separate and the
        # x-side result simply absorbs the bias add.
        gx = jnp.dot(x_in, wih_ref[l], preferred_element_type=jnp.float32)
        gh = jnp.dot(h_prev, whh_ref[l], preferred_element_type=jnp.float32)
        g = gx + gh + b_ref[l]                              # (BP, GH) f32
        # One-EUP sigmoid over the contiguous i|f|o stripes:
        #   sigmoid(x) == 0.5 * tanh(0.5 * x) + 0.5
        sig = 0.5 * jnp.tanh(0.5 * g[:, :3 * HP]) + 0.5
        i_g = sig[:, 0 * HP:1 * HP]      # lanes 0..HP-1: no lane shift needed
        f_g = sig[:, 1 * HP:2 * HP]      # remaining stripe extractions are XLU
        o_g = sig[:, 2 * HP:3 * HP]      # rotates; they overlap with other
        g_g = jnp.tanh(g[:, 3 * HP:])    # cells of the same wavefront diagonal.
        c_new = f_g * c_prev + i_g * g_g
        h_new = (o_g * jnp.tanh(c_new)).astype(jnp.bfloat16)
        return h_new, c_new

    h = [jnp.zeros((BP, HP), jnp.bfloat16)] * L   # h0 = 0 (carried in vregs)
    c = [jnp.zeros((BP, HP), jnp.float32)] * L    # c0 = 0 (kept f32)

    # Diagonal wavefront over the (layer, time) cell grid.  Cell (l, t) needs
    # h^{l-1}_t (produced on diagonal d-1) and h^{l}_{t-1} (diagonal d-1), so
    # every cell on diagonal d = l + t is independent of the others: the
    # dependent chain is L + T - 1 = 12 diagonals instead of L*T = 40 cells,
    # and up to min(L, T) = 5 cells per diagonal are in flight together.
    for d in range(L + T - 1):
        l_lo = max(0, d - T + 1)
        l_hi = min(L - 1, d)
        # Decreasing l: cell (l, t) reads h[l-1] == h^{l-1}_t *before* layer
        # l-1's cell of this diagonal overwrites it, and h[l] still holds
        # h^{l}_{t-1}; the cells stay mutually independent (pure SSA values).
        for l in range(l_hi, l_lo - 1, -1):
            t = d - l
            if l == 0:
                x_in = x_ref[pl.ds(t * BP, BP), :].astype(jnp.bfloat16)
            else:
                x_in = h[l - 1]
            h[l], c[l] = cell(l, x_in, h[l], c[l])

    # MLP head on the last timestep: relu(fc1(h_last + x_last)) -> relu(fc2)
    # -> fc3.  Head stays f32 (off the chain, tiny, better accuracy).  Padded
    # lanes of h and x are exactly zero; padded batch rows are sliced away by
    # the wrapper; fc3 weight/bias are padded to 128 output lanes so the final
    # store is a full unmasked (8,128) vst.
    last_x = x_ref[pl.ds((T - 1) * BP, BP), :]              # (BP, HP) f32
    z = h[L - 1].astype(jnp.float32) + last_x
    z = jnp.maximum(
        jnp.dot(z, fc1w_ref[...], preferred_element_type=jnp.float32)
        + fc1b_ref[...], 0.0)
    z = jnp.maximum(
        jnp.dot(z, fc2w_ref[...], preferred_element_type=jnp.float32)
        + fc2b_ref[...], 0.0)
    out_ref[...] = (
        jnp.dot(z, fc3w_ref[...], preferred_element_type=jnp.float32)
        + fc3b_ref[...]).astype(out_ref.dtype)


def _pack_gates(w):
    # (L, 4, R, H) -> (L, DP, GH); gate g occupies lanes [g*HP, g*HP + H).
    # NOTE: a real torch.nn.LSTM state_dict import must first permute from
    # PyTorch's stacked (i, f, g, o) weights of shape (4H, R) into this
    # gate-split, pre-transposed (4, R, H) layout with gate order (i, f, o, g).
    l, g, r, h = w.shape
    w = jnp.pad(w, ((0, 0), (0, 0), (0, DP - r), (0, HP - h)))
    return jnp.transpose(w, (0, 2, 1, 3)).reshape(l, DP, g * HP)


def _pack_bias(b):
    # (L, 4, 1, H) -> (L, 1, GH).  For a torch import, b = b_ih + b_hh.
    l = b.shape[0]
    b = jnp.pad(b, ((0, 0), (0, 0), (0, 0), (0, HP - b.shape[-1])))
    return jnp.transpose(b, (0, 2, 1, 3)).reshape(l, 1, GH)


@jax.jit
def rnn_forward(x, params):
    """x: (B, T, D_IN) float32 -> (B, F3) float32."""
    B, T, D = x.shape
    # Time-major, batch padded to BP sublanes, features padded to DP lanes.
    x_tm = jnp.transpose(x, (1, 0, 2))
    x_tm = jnp.pad(x_tm, ((0, 0), (0, BP - B), (0, DP - D)))
    x2d = x_tm.reshape(T * BP, DP)

    # Recurrence matmul operands in bf16 (padding stays exactly zero in bf16,
    # so the padded-lane invariant is preserved); bias / head stay f32.
    wih = _pack_gates(params["w_ih"]).astype(jnp.bfloat16)   # (L, DP, GH)
    whh = _pack_gates(params["w_hh"]).astype(jnp.bfloat16)   # (L, HP, GH)
    b = _pack_bias(params["b"])                              # (L, 1, GH)
    fc1w = jnp.pad(params["fc1_w"], ((0, HP - H), (0, 0)))   # (HP, F1)
    fc3w = jnp.pad(params["fc3_w"], ((0, 0), (0, OUT_LANES - F3)))  # (F2, 128)
    fc3b = jnp.pad(params["fc3_b"], ((0, 0), (0, OUT_LANES - F3)))  # (1, 128)

    vmem = pl.BlockSpec(memory_space=pltpu.MemorySpace.VMEM)
    inputs = (x2d, wih, whh, b,
              fc1w, params["fc1_b"],
              params["fc2_w"], params["fc2_b"],
              fc3w, fc3b)

    # No grid, no tiling, no vmem_limit: total resident footprint is ~0.1 MiB,
    # the whole problem lives in VMEM on one TensorCore.  On v7x, a cross-TC
    # batch split (leading grid axis, dimension_semantics=("parallel",)) only
    # pays once each core has many sublanes of independent batch.
    out = pl.pallas_call(
        functools.partial(_rnn_kernel, T=T),
        out_shape=jax.ShapeDtypeStruct((BP, OUT_LANES), jnp.float32),
        in_specs=[vmem] * len(inputs),
        out_specs=vmem,
    )(*inputs)
    return out[:B, :F3]


def init_params(key):
    """Deterministic synthetic parameters matching the nn.Module shapes.

    LSTM weights are stored gate-split and pre-transposed, gate order
    (i, f, o, g) (a real PyTorch import would permute from torch's i,f,g,o
    stacked (4H, D) layout and sum b_ih + b_hh).
    """
    ks = jax.random.split(key, 8)
    s_lstm = 1.0 / np.sqrt(H)
    return {
        "w_ih": jax.random.uniform(ks[0], (L, 4, D_IN, H), jnp.float32,
                                   -s_lstm, s_lstm),
        "w_hh": jax.random.uniform(ks[1], (L, 4, H, H), jnp.float32,
                                   -s_lstm, s_lstm),
        "b": jax.random.uniform(ks[2], (L, 4, 1, H), jnp.float32,
                                -2 * s_lstm, 2 * s_lstm),
        "fc1_w": jax.random.uniform(ks[3], (H, F1), jnp.float32,
                                    -1 / np.sqrt(H), 1 / np.sqrt(H)),
        "fc1_b": jax.random.uniform(ks[4], (1, F1), jnp.float32,
                                    -1 / np.sqrt(H), 1 / np.sqrt(H)),
        "fc2_w": jax.random.uniform(ks[5], (F1, F2), jnp.float32,
                                    -1 / np.sqrt(F1), 1 / np.sqrt(F1)),
        "fc2_b": jax.random.uniform(ks[6], (1, F2), jnp.float32,
                                    -1 / np.sqrt(F1), 1 / np.sqrt(F1)),
        "fc3_w": jax.random.uniform(ks[7], (F2, F3), jnp.float32,
                                    -1 / np.sqrt(F2), 1 / np.sqrt(F2)),
        "fc3_b": jnp.zeros((1, F3), jnp.float32),
    }


def ref_forward(x, p):
    """Pure-JAX f32 reference matching torch.nn.LSTM(batch_first) + MLP head."""
    B, T, _ = x.shape
    h = [jnp.zeros((B, H), jnp.float32) for _ in range(L)]
    c = [jnp.zeros((B, H), jnp.float32) for _ in range(L)]
    for t in range(T):
        inp = x[:, t, :]
        for l in range(L):
            # Stored gate order: 0=i, 1=f, 2=o, 3=g.
            gi = inp @ p["w_ih"][l, 0] + h[l] @ p["w_hh"][l, 0] + p["b"][l, 0]
            gf = inp @ p["w_ih"][l, 1] + h[l] @ p["w_hh"][l, 1] + p["b"][l, 1]
            go = inp @ p["w_ih"][l, 2] + h[l] @ p["w_hh"][l, 2] + p["b"][l, 2]
            gg = inp @ p["w_ih"][l, 3] + h[l] @ p["w_hh"][l, 3] + p["b"][l, 3]
            i_g = jax.nn.sigmoid(gi)
            f_g = jax.nn.sigmoid(gf)
            o_g = jax.nn.sigmoid(go)
            g_g = jnp.tanh(gg)
            c[l] = f_g * c[l] + i_g * g_g
            h[l] = o_g * jnp.tanh(c[l])
            inp = h[l]
    z = h[L - 1] + x[:, -1, :]
    z = jnp.maximum(z @ p["fc1_w"] + p["fc1_b"], 0.0)
    z = jnp.maximum(z @ p["fc2_w"] + p["fc2_b"], 0.0)
    return z @ p["fc3_w"] + p["fc3_b"]


if __name__ == "__main__":
    key = jax.random.PRNGKey(0)
    k_x, k_p = jax.random.split(key)

    B, T = 2, 8
    x = jax.random.normal(k_x, (B, T, D_IN), jnp.float32)
    params = init_params(k_p)

    out = jax.block_until_ready(rnn_forward(x, params))
    ref = jax.block_until_ready(ref_forward(x, params))

    assert out.shape == (B, F3), out.shape
    # Tolerance loosened from 1e-4: recurrence matmul operands are bf16 with
    # f32 accumulation (review opt 2); H=20 dot products keep the drift small.
    np.testing.assert_allclose(np.asarray(out), np.asarray(ref),
                               rtol=2e-2, atol=2e-2)
    print("KERNEL_OK")
</pallas_src>

<mosaic_0001>
module attributes {stable_mosaic.version = 11 : i64} {
  func.func @_rnn_kernel(%arg0: memref<64x32xf32, #tpu.memory_space<vmem>>, %arg1: memref<5x32x128xbf16, #tpu.memory_space<vmem>>, %arg2: memref<5x32x128xbf16, #tpu.memory_space<vmem>>, %arg3: memref<5x1x128xf32, #tpu.memory_space<vmem>>, %arg4: memref<32x32xf32, #tpu.memory_space<vmem>>, %arg5: memref<1x32xf32, #tpu.memory_space<vmem>>, %arg6: memref<32x32xf32, #tpu.memory_space<vmem>>, %arg7: memref<1x32xf32, #tpu.memory_space<vmem>>, %arg8: memref<32x128xf32, #tpu.memory_space<vmem>>, %arg9: memref<1x128xf32, #tpu.memory_space<vmem>>, %arg10: memref<8x128xf32, #tpu.memory_space<vmem>>) attributes {dimension_semantics = [], scalar_prefetch = 0 : i64, scratch_operands = 0 : i64, tpu.core_type = #tpu.core_type<tc>} {
    %cst = arith.constant 0.000000e+00 : bf16
    %0 = vector.broadcast %cst : bf16 to vector<8x32xbf16>
    %cst_0 = arith.constant 0.000000e+00 : f32
    %1 = vector.broadcast %cst_0 : f32 to vector<8x32xf32>
    %c0 = arith.constant 0 : index
    %c0_1 = arith.constant 0 : index
    %2 = vector.load %arg0[%c0, %c0_1] : memref<64x32xf32, #tpu.memory_space<vmem>>, vector<8x32xf32>
    %3 = arith.truncf %2 : vector<8x32xf32> to vector<8x32xbf16>
    %c0_2 = arith.constant 0 : index
    %c0_3 = arith.constant 0 : index
    %c0_4 = arith.constant 0 : index
    %4 = vector.load %arg1[%c0_2, %c0_3, %c0_4] : memref<5x32x128xbf16, #tpu.memory_space<vmem>>, vector<1x32x128xbf16>
    %5 = vector.shape_cast %4 : vector<1x32x128xbf16> to vector<32x128xbf16>
    %cst_5 = arith.constant dense<0.000000e+00> : vector<8x128xf32>
    %6 = tpu.matmul %3, %5, %cst_5 {dimension_numbers = #tpu.dot_dimension_numbers<[1], [0], [0], [1], [0, 0, 1, 1], [], []>} : vector<8x32xbf16>, vector<32x128xbf16>, vector<8x128xf32> -> vector<8x128xf32>
    %c0_6 = arith.constant 0 : index
    %c0_7 = arith.constant 0 : index
    %c0_8 = arith.constant 0 : index
    %7 = vector.load %arg2[%c0_6, %c0_7, %c0_8] : memref<5x32x128xbf16, #tpu.memory_space<vmem>>, vector<1x32x128xbf16>
    %8 = vector.shape_cast %7 : vector<1x32x128xbf16> to vector<32x128xbf16>
    %cst_9 = arith.constant dense<0.000000e+00> : vector<8x128xf32>
    %9 = tpu.matmul %0, %8, %cst_9 {dimension_numbers = #tpu.dot_dimension_numbers<[1], [0], [0], [1], [0, 0, 1, 1], [], []>} : vector<8x32xbf16>, vector<32x128xbf16>, vector<8x128xf32> -> vector<8x128xf32>
    %10 = arith.addf %6, %9 : vector<8x128xf32>
    %c0_10 = arith.constant 0 : index
    %c0_11 = arith.constant 0 : index
    %c0_12 = arith.constant 0 : index
    %11 = vector.load %arg3[%c0_10, %c0_11, %c0_12] : memref<5x1x128xf32, #tpu.memory_space<vmem>>, vector<1x1x128xf32>
    %12 = vector.shape_cast %11 : vector<1x1x128xf32> to vector<1x128xf32>
    %13 = vector.broadcast %12 : vector<1x128xf32> to vector<8x128xf32>
    %14 = arith.addf %10, %13 : vector<8x128xf32>
    %15 = vector.extract_strided_slice %14 {offsets = [0, 0], sizes = [8, 96], strides = [1, 1]} : vector<8x128xf32> to vector<8x96xf32>
    %cst_13 = arith.constant 5.000000e-01 : f32
    %16 = vector.broadcast %cst_13 : f32 to vector<8x96xf32>
    %17 = arith.mulf %16, %15 : vector<8x96xf32>
    %18 = math.tanh %17 : vector<8x96xf32>
    %cst_14 = arith.constant 5.000000e-01 : f32
    %19 = vector.broadcast %cst_14 : f32 to vector<8x96xf32>
    %20 = arith.mulf %19, %18 : vector<8x96xf32>
    %cst_15 = arith.constant 5.000000e-01 : f32
    %21 = vector.broadcast %cst_15 : f32 to vector<8x96xf32>
    %22 = arith.addf %20, %21 : vector<8x96xf32>
    %23 = vector.extract_strided_slice %22 {offsets = [0, 0], sizes = [8, 32], strides = [1, 1]} : vector<8x96xf32> to vector<8x32xf32>
    %24 = vector.extract_strided_slice %22 {offsets = [0, 32], sizes = [8, 32], strides = [1, 1]} : vector<8x96xf32> to vector<8x32xf32>
    %25 = vector.extract_strided_slice %22 {offsets = [0, 64], sizes = [8, 32], strides = [1, 1]} : vector<8x96xf32> to vector<8x32xf32>
    %26 = vector.extract_strided_slice %14 {offsets = [0, 96], sizes = [8, 32], strides = [1, 1]} : vector<8x128xf32> to vector<8x32xf32>
    %27 = math.tanh %26 : vector<8x32xf32>
    %28 = arith.mulf %24, %1 : vector<8x32xf32>
    %29 = arith.mulf %23, %27 : vector<8x32xf32>
    %30 = arith.addf %28, %29 : vector<8x32xf32>
    %31 = math.tanh %30 : vector<8x32xf32>
    %32 = arith.mulf %25, %31 : vector<8x32xf32>
    %33 = arith.truncf %32 : vector<8x32xf32> to vector<8x32xbf16>
    %c1 = arith.constant 1 : index
    %c0_16 = arith.constant 0 : index
    %c0_17 = arith.constant 0 : index
    %34 = vector.load %arg1[%c1, %c0_16, %c0_17] : memref<5x32x128xbf16, #tpu.memory_space<vmem>>, vector<1x32x128xbf16>
    %35 = vector.shape_cast %34 : vector<1x32x128xbf16> to vector<32x128xbf16>
    %cst_18 = arith.constant dense<0.000000e+00> : vector<8x128xf32>
    %36 = tpu.matmul %33, %35, %cst_18 {dimension_numbers = #tpu.dot_dimension_numbers<[1], [0], [0], [1], [0, 0, 1, 1], [], []>} : vector<8x32xbf16>, vector<32x128xbf16>, vector<8x128xf32> -> vector<8x128xf32>
    %c1_19 = arith.constant 1 : index
    %c0_20 = arith.constant 0 : index
    %c0_21 = arith.constant 0 : index
    %37 = vector.load %arg2[%c1_19, %c0_20, %c0_21] : memref<5x32x128xbf16, #tpu.memory_space<vmem>>, vector<1x32x128xbf16>
    %38 = vector.shape_cast %37 : vector<1x32x128xbf16> to vector<32x128xbf16>
    %cst_22 = arith.constant dense<0.000000e+00> : vector<8x128xf32>
    %39 = tpu.matmul %0, %38, %cst_22 {dimension_numbers = #tpu.dot_dimension_numbers<[1], [0], [0], [1], [0, 0, 1, 1], [], []>} : vector<8x32xbf16>, vector<32x128xbf16>, vector<8x128xf32> -> vector<8x128xf32>
    %40 = arith.addf %36, %39 : vector<8x128xf32>
    %c1_23 = arith.constant 1 : index
    %c0_24 = arith.constant 0 : index
    %c0_25 = arith.constant 0 : index
    %41 = vector.load %arg3[%c1_23, %c0_24, %c0_25] : memref<5x1x128xf32, #tpu.memory_space<vmem>>, vector<1x1x128xf32>
    %42 = vector.shape_cast %41 : vector<1x1x128xf32> to vector<1x128xf32>
    %43 = vector.broadcast %42 : vector<1x128xf32> to vector<8x128xf32>
    %44 = arith.addf %40, %43 : vector<8x128xf32>
    %45 = vector.extract_strided_slice %44 {offsets = [0, 0], sizes = [8, 96], strides = [1, 1]} : vector<8x128xf32> to vector<8x96xf32>
    %cst_26 = arith.constant 5.000000e-01 : f32
    %46 = vector.broadcast %cst_26 : f32 to vector<8x96xf32>
    %47 = arith.mulf %46, %45 : vector<8x96xf32>
    %48 = math.tanh %47 : vector<8x96xf32>
    %cst_27 = arith.constant 5.000000e-01 : f32
    %49 = vector.broadcast %cst_27 : f32 to vector<8x96xf32>
    %50 = arith.mulf %49, %48 : vector<8x96xf32>
    %cst_28 = arith.constant 5.000000e-01 : f32
    %51 = vector.broadcast %cst_28 : f32 to vector<8x96xf32>
    %52 = arith.addf %50, %51 : vector<8x96xf32>
    %53 = vector.extract_strided_slice %52 {offsets = [0, 0], sizes = [8, 32], strides = [1, 1]} : vector<8x96xf32> to vector<8x32xf32>
    %54 = vector.extract_strided_slice %52 {offsets = [0, 32], sizes = [8, 32], strides = [1, 1]} : vector<8x96xf32> to vector<8x32xf32>
    %55 = vector.extract_strided_slice %52 {offsets = [0, 64], sizes = [8, 32], strides = [1, 1]} : vector<8x96xf32> to vector<8x32xf32>
    %56 = vector.extract_strided_slice %44 {offsets = [0, 96], sizes = [8, 32], strides = [1, 1]} : vector<8x128xf32> to vector<8x32xf32>
    %57 = math.tanh %56 : vector<8x32xf32>
    %58 = arith.mulf %54, %1 : vector<8x32xf32>
    %59 = arith.mulf %53, %57 : vector<8x32xf32>
    %60 = arith.addf %58, %59 : vector<8x32xf32>
    %61 = math.tanh %60 : vector<8x32xf32>
    %62 = arith.mulf %55, %61 : vector<8x32xf32>
    %63 = arith.truncf %62 : vector<8x32xf32> to vector<8x32xbf16>
    %c8 = arith.constant 8 : index
    %c0_29 = arith.constant 0 : index
    %64 = vector.load %arg0[%c8, %c0_29] : memref<64x32xf32, #tpu.memory_space<vmem>>, vector<8x32xf32>
    %65 = arith.truncf %64 : vector<8x32xf32> to vector<8x32xbf16>
    %c0_30 = arith.constant 0 : index
    %c0_31 = arith.constant 0 : index
    %c0_32 = arith.constant 0 : index
    %66 = vector.load %arg1[%c0_30, %c0_31, %c0_32] : memref<5x32x128xbf16, #tpu.memory_space<vmem>>, vector<1x32x128xbf16>
    %67 = vector.shape_cast %66 : vector<1x32x128xbf16> to vector<32x128xbf16>
    %cst_33 = arith.constant dense<0.000000e+00> : vector<8x128xf32>
    %68 = tpu.matmul %65, %67, %cst_33 {dimension_numbers = #tpu.dot_dimension_numbers<[1], [0], [0], [1], [0, 0, 1, 1], [], []>} : vector<8x32xbf16>, vector<32x128xbf16>, vector<8x128xf32> -> vector<8x128xf32>
    %c0_34 = arith.constant 0 : index
    %c0_35 = arith.constant 0 : index
    %c0_36 = arith.constant 0 : index
    %69 = vector.load %arg2[%c0_34, %c0_35, %c0_36] : memref<5x32x128xbf16, #tpu.memory_space<vmem>>, vector<1x32x128xbf16>
    %70 = vector.shape_cast %69 : vector<1x32x128xbf16> to vector<32x128xbf16>
    %cst_37 = arith.constant dense<0.000000e+00> : vector<8x128xf32>
    %71 = tpu.matmul %33, %70, %cst_37 {dimension_numbers = #tpu.dot_dimension_numbers<[1], [0], [0], [1], [0, 0, 1, 1], [], []>} : vector<8x32xbf16>, vector<32x128xbf16>, vector<8x128xf32> -> vector<8x128xf32>
    %72 = arith.addf %68, %71 : vector<8x128xf32>
    %c0_38 = arith.constant 0 : index
    %c0_39 = arith.constant 0 : index
    %c0_40 = arith.constant 0 : index
    %73 = vector.load %arg3[%c0_38, %c0_39, %c0_40] : memref<5x1x128xf32, #tpu.memory_space<vmem>>, vector<1x1x128xf32>
    %74 = vector.shape_cast %73 : vector<1x1x128xf32> to vector<1x128xf32>
    %75 = vector.broadcast %74 : vector<1x128xf32> to vector<8x128xf32>
    %76 = arith.addf %72, %75 : vector<8x128xf32>
    %77 = vector.extract_strided_slice %76 {offsets = [0, 0], sizes = [8, 96], strides = [1, 1]} : vector<8x128xf32> to vector<8x96xf32>
    %cst_41 = arith.constant 5.000000e-01 : f32
    %78 = vector.broadcast %cst_41 : f32 to vector<8x96xf32>
    %79 = arith.mulf %78, %77 : vector<8x96xf32>
    %80 = math.tanh %79 : vector<8x96xf32>
    %cst_42 = arith.constant 5.000000e-01 : f32
    %81 = vector.broadcast %cst_42 : f32 to vector<8x96xf32>
    %82 = arith.mulf %81, %80 : vector<8x96xf32>
    %cst_43 = arith.constant 5.000000e-01 : f32
    %83 = vector.broadcast %cst_43 : f32 to vector<8x96xf32>
    %84 = arith.addf %82, %83 : vector<8x96xf32>
    %85 = vector.extract_strided_slice %84 {offsets = [0, 0], sizes = [8, 32], strides = [1, 1]} : vector<8x96xf32> to vector<8x32xf32>
    %86 = vector.extract_strided_slice %84 {offsets = [0, 32], sizes = [8, 32], strides = [1, 1]} : vector<8x96xf32> to vector<8x32xf32>
    %87 = vector.extract_strided_slice %84 {offsets = [0, 64], sizes = [8, 32], strides = [1, 1]} : vector<8x96xf32> to vector<8x32xf32>
    %88 = vector.extract_strided_slice %76 {offsets = [0, 96], sizes = [8, 32], strides = [1, 1]} : vector<8x128xf32> to vector<8x32xf32>
    %89 = math.tanh %88 : vector<8x32xf32>
    %90 = arith.mulf %86, %30 : vector<8x32xf32>
    %91 = arith.mulf %85, %89 : vector<8x32xf32>
    %92 = arith.addf %90, %91 : vector<8x32xf32>
    %93 = math.tanh %92 : vector<8x32xf32>
    %94 = arith.mulf %87, %93 : vector<8x32xf32>
    %95 = arith.truncf %94 : vector<8x32xf32> to vector<8x32xbf16>
    %c2 = arith.constant 2 : index
    %c0_44 = arith.constant 0 : index
    %c0_45 = arith.constant 0 : index
    %96 = vector.load %arg1[%c2, %c0_44, %c0_45] : memref<5x32x128xbf16, #tpu.memory_space<vmem>>, vector<1x32x128xbf16>
    %97 = vector.shape_cast %96 : vector<1x32x128xbf16> to vector<32x128xbf16>
    %cst_46 = arith.constant dense<0.000000e+00> : vector<8x128xf32>
    %98 = tpu.matmul %63, %97, %cst_46 {dimension_numbers = #tpu.dot_dimension_numbers<[1], [0], [0], [1], [0, 0, 1, 1], [], []>} : vector<8x32xbf16>, vector<32x128xbf16>, vector<8x128xf32> -> vector<8x128xf32>
    %c2_47 = arith.constant 2 : index
    %c0_48 = arith.constant 0 : index
    %c0_49 = arith.constant 0 : index
    %99 = vector.load %arg2[%c2_47, %c0_48, %c0_49] : memref<5x32x128xbf16, #tpu.memory_space<vmem>>, vector<1x32x128xbf16>
    %100 = vector.shape_cast %99 : vector<1x32x128xbf16> to vector<32x128xbf16>
    %cst_50 = arith.constant dense<0.000000e+00> : vector<8x128xf32>
    %101 = tpu.matmul %0, %100, %cst_50 {dimension_numbers = #tpu.dot_dimension_numbers<[1], [0], [0], [1], [0, 0, 1, 1], [], []>} : vector<8x32xbf16>, vector<32x128xbf16>, vector<8x128xf32> -> vector<8x128xf32>
    %102 = arith.addf %98, %101 : vector<8x128xf32>
    %c2_51 = arith.constant 2 : index
    %c0_52 = arith.constant 0 : index
    %c0_53 = arith.constant 0 : index
    %103 = vector.load %arg3[%c2_51, %c0_52, %c0_53] : memref<5x1x128xf32, #tpu.memory_space<vmem>>, vector<1x1x128xf32>
    %104 = vector.shape_cast %103 : vector<1x1x128xf32> to vector<1x128xf32>
    %105 = vector.broadcast %104 : vector<1x128xf32> to vector<8x128xf32>
    %106 = arith.addf %102, %105 : vector<8x128xf32>
    %107 = vector.extract_strided_slice %106 {offsets = [0, 0], sizes = [8, 96], strides = [1, 1]} : vector<8x128xf32> to vector<8x96xf32>
    %cst_54 = arith.constant 5.000000e-01 : f32
    %108 = vector.broadcast %cst_54 : f32 to vector<8x96xf32>
    %109 = arith.mulf %108, %107 : vector<8x96xf32>
    %110 = math.tanh %109 : vector<8x96xf32>
    %cst_55 = arith.constant 5.000000e-01 : f32
    %111 = vector.broadcast %cst_55 : f32 to vector<8x96xf32>
    %112 = arith.mulf %111, %110 : vector<8x96xf32>
    %cst_56 = arith.constant 5.000000e-01 : f32
    %113 = vector.broadcast %cst_56 : f32 to vector<8x96xf32>
    %114 = arith.addf %112, %113 : vector<8x96xf32>
    %115 = vector.extract_strided_slice %114 {offsets = [0, 0], sizes = [8, 32], strides = [1, 1]} : vector<8x96xf32> to vector<8x32xf32>
    %116 = vector.extract_strided_slice %114 {offsets = [0, 32], sizes = [8, 32], strides = [1, 1]} : vector<8x96xf32> to vector<8x32xf32>
    %117 = vector.extract_strided_slice %114 {offsets = [0, 64], sizes = [8, 32], strides = [1, 1]} : vector<8x96xf32> to vector<8x32xf32>
    %118 = vector.extract_strided_slice %106 {offsets = [0, 96], sizes = [8, 32], strides = [1, 1]} : vector<8x128xf32> to vector<8x32xf32>
    %119 = math.tanh %118 : vector<8x32xf32>
    %120 = arith.mulf %116, %1 : vector<8x32xf32>
    %121 = arith.mulf %115, %119 : vector<8x32xf32>
    %122 = arith.addf %120, %121 : vector<8x32xf32>
    %123 = math.tanh %122 : vector<8x32xf32>
    %124 = arith.mulf %117, %123 : vector<8x32xf32>
    %125 = arith.truncf %124 : vector<8x32xf32> to vector<8x32xbf16>
    %c1_57 = arith.constant 1 : index
    %c0_58 = arith.constant 0 : index
    %c0_59 = arith.constant 0 : index
    %126 = vector.load %arg1[%c1_57, %c0_58, %c0_59] : memref<5x32x128xbf16, #tpu.memory_space<vmem>>, vector<1x32x128xbf16>
    %127 = vector.shape_cast %126 : vector<1x32x128xbf16> to vector<32x128xbf16>
    %cst_60 = arith.constant dense<0.000000e+00> : vector<8x128xf32>
    %128 = tpu.matmul %95, %127, %cst_60 {dimension_numbers = #tpu.dot_dimension_numbers<[1], [0], [0], [1], [0, 0, 1, 1], [], []>} : vector<8x32xbf16>, vector<32x128xbf16>, vector<8x128xf32> -> vector<8x128xf32>
    %c1_61 = arith.constant 1 : index
    %c0_62 = arith.constant 0 : index
    %c0_63 = arith.constant 0 : index
    %129 = vector.load %arg2[%c1_61, %c0_62, %c0_63] : memref<5x32x128xbf16, #tpu.memory_space<vmem>>, vector<1x32x128xbf16>
    %130 = vector.shape_cast %129 : vector<1x32x128xbf16> to vector<32x128xbf16>
    %cst_64 = arith.constant dense<0.000000e+00> : vector<8x128xf32>
    %131 = tpu.matmul %63, %130, %cst_64 {dimension_numbers = #tpu.dot_dimension_numbers<[1], [0], [0], [1], [0, 0, 1, 1], [], []>} : vector<8x32xbf16>, vector<32x128xbf16>, vector<8x128xf32> -> vector<8x128xf32>
    %132 = arith.addf %128, %131 : vector<8x128xf32>
    %c1_65 = arith.constant 1 : index
    %c0_66 = arith.constant 0 : index
    %c0_67 = arith.constant 0 : index
    %133 = vector.load %arg3[%c1_65, %c0_66, %c0_67] : memref<5x1x128xf32, #tpu.memory_space<vmem>>, vector<1x1x128xf32>
    %134 = vector.shape_cast %133 : vector<1x1x128xf32> to vector<1x128xf32>
    %135 = vector.broadcast %134 : vector<1x128xf32> to vector<8x128xf32>
    %136 = arith.addf %132, %135 : vector<8x128xf32>
    %137 = vector.extract_strided_slice %136 {offsets = [0, 0], sizes = [8, 96], strides = [1, 1]} : vector<8x128xf32> to vector<8x96xf32>
    %cst_68 = arith.constant 5.000000e-01 : f32
    %138 = vector.broadcast %cst_68 : f32 to vector<8x96xf32>
    %139 = arith.mulf %138, %137 : vector<8x96xf32>
    %140 = math.tanh %139 : vector<8x96xf32>
    %cst_69 = arith.constant 5.000000e-01 : f32
    %141 = vector.broadcast %cst_69 : f32 to vector<8x96xf32>
    %142 = arith.mulf %141, %140 : vector<8x96xf32>
    %cst_70 = arith.constant 5.000000e-01 : f32
    %143 = vector.broadcast %cst_70 : f32 to vector<8x96xf32>
    %144 = arith.addf %142, %143 : vector<8x96xf32>
    %145 = vector.extract_strided_slice %144 {offsets = [0, 0], sizes = [8, 32], strides = [1, 1]} : vector<8x96xf32> to vector<8x32xf32>
    %146 = vector.extract_strided_slice %144 {offsets = [0, 32], sizes = [8, 32], strides = [1, 1]} : vector<8x96xf32> to vector<8x32xf32>
    %147 = vector.extract_strided_slice %144 {offsets = [0, 64], sizes = [8, 32], strides = [1, 1]} : vector<8x96xf32> to vector<8x32xf32>
    %148 = vector.extract_strided_slice %136 {offsets = [0, 96], sizes = [8, 32], strides = [1, 1]} : vector<8x128xf32> to vector<8x32xf32>
    %149 = math.tanh %148 : vector<8x32xf32>
    %150 = arith.mulf %146, %60 : vector<8x32xf32>
    %151 = arith.mulf %145, %149 : vector<8x32xf32>
    %152 = arith.addf %150, %151 : vector<8x32xf32>
    %153 = math.tanh %152 : vector<8x32xf32>
    %154 = arith.mulf %147, %153 : vector<8x32xf32>
    %155 = arith.truncf %154 : vector<8x32xf32> to vector<8x32xbf16>
    %c16 = arith.constant 16 : index
    %c0_71 = arith.constant 0 : index
    %156 = vector.load %arg0[%c16, %c0_71] : memref<64x32xf32, #tpu.memory_space<vmem>>, vector<8x32xf32>
    %157 = arith.truncf %156 : vector<8x32xf32> to vector<8x32xbf16>
    %c0_72 = arith.constant 0 : index
    %c0_73 = arith.constant 0 : index
    %c0_74 = arith.constant 0 : index
    %158 = vector.load %arg1[%c0_72, %c0_73, %c0_74] : memref<5x32x128xbf16, #tpu.memory_space<vmem>>, vector<1x32x128xbf16>
    %159 = vector.shape_cast %158 : vector<1x32x128xbf16> to vector<32x128xbf16>
    %cst_75 = arith.constant dense<0.000000e+00> : vector<8x128xf32>
    %160 = tpu.matmul %157, %159, %cst_75 {dimension_numbers = #tpu.dot_dimension_numbers<[1], [0], [0], [1], [0, 0, 1, 1], [], []>} : vector<8x32xbf16>, vector<32x128xbf16>, vector<8x128xf32> -> vector<8x128xf32>
    %c0_76 = arith.constant 0 : index
    %c0_77 = arith.constant 0 : index
    %c0_78 = arith.constant 0 : index
    %161 = vector.load %arg2[%c0_76, %c0_77, %c0_78] : memref<5x32x128xbf16, #tpu.memory_space<vmem>>, vector<1x32x128xbf16>
    %162 = vector.shape_cast %161 : vector<1x32x128xbf16> to vector<32x128xbf16>
    %cst_79 = arith.constant dense<0.000000e+00> : vector<8x128xf32>
    %163 = tpu.matmul %95, %162, %cst_79 {dimension_numbers = #tpu.dot_dimension_numbers<[1], [0], [0], [1], [0, 0, 1, 1], [], []>} : vector<8x32xbf16>, vector<32x128xbf16>, vector<8x128xf32> -> vector<8x128xf32>
    %164 = arith.addf %160, %163 : vector<8x128xf32>
    %c0_80 = arith.constant 0 : index
    %c0_81 = arith.constant 0 : index
    %c0_82 = arith.constant 0 : index
    %165 = vector.load %arg3[%c0_80, %c0_81, %c0_82] : memref<5x1x128xf32, #tpu.memory_space<vmem>>, vector<1x1x128xf32>
    %166 = vector.shape_cast %165 : vector<1x1x128xf32> to vector<1x128xf32>
    %167 = vector.broadcast %166 : vector<1x128xf32> to vector<8x128xf32>
    %168 = arith.addf %164, %167 : vector<8x128xf32>
    %169 = vector.extract_strided_slice %168 {offsets = [0, 0], sizes = [8, 96], strides = [1, 1]} : vector<8x128xf32> to vector<8x96xf32>
    %cst_83 = arith.constant 5.000000e-01 : f32
    %170 = vector.broadcast %cst_83 : f32 to vector<8x96xf32>
    %171 = arith.mulf %170, %169 : vector<8x96xf32>
    %172 = math.tanh %171 : vector<8x96xf32>
    %cst_84 = arith.constant 5.000000e-01 : f32
    %173 = vector.broadcast %cst_84 : f32 to vector<8x96xf32>
    %174 = arith.mulf %173, %172 : vector<8x96xf32>
    %cst_85 = arith.constant 5.000000e-01 : f32
    %175 = vector.broadcast %cst_85 : f32 to vector<8x96xf32>
    %176 = arith.addf %174, %175 : vector<8x96xf32>
    %177 = vector.extract_strided_slice %176 {offsets = [0, 0], sizes = [8, 32], strides = [1, 1]} : vector<8x96xf32> to vector<8x32xf32>
    %178 = vector.extract_strided_slice %176 {offsets = [0, 32], sizes = [8, 32], strides = [1, 1]} : vector<8x96xf32> to vector<8x32xf32>
    %179 = vector.extract_strided_slice %176 {offsets = [0, 64], sizes = [8, 32], strides = [1, 1]} : vector<8x96xf32> to vector<8x32xf32>
    %180 = vector.extract_strided_slice %168 {offsets = [0, 96], sizes = [8, 32], strides = [1, 1]} : vector<8x128xf32> to vector<8x32xf32>
    %181 = math.tanh %180 : vector<8x32xf32>
    %182 = arith.mulf %178, %92 : vector<8x32xf32>
    %183 = arith.mulf %177, %181 : vector<8x32xf32>
    %184 = arith.addf %182, %183 : vector<8x32xf32>
    %185 = math.tanh %184 : vector<8x32xf32>
    %186 = arith.mulf %179, %185 : vector<8x32xf32>
    %187 = arith.truncf %186 : vector<8x32xf32> to vector<8x32xbf16>
    %c3 = arith.constant 3 : index
    %c0_86 = arith.constant 0 : index
    %c0_87 = arith.constant 0 : index
    %188 = vector.load %arg1[%c3, %c0_86, %c0_87] : memref<5x32x128xbf16, #tpu.memory_space<vmem>>, vector<1x32x128xbf16>
    %189 = vector.shape_cast %188 : vector<1x32x128xbf16> to vector<32x128xbf16>
    %cst_88 = arith.constant dense<0.000000e+00> : vector<8x128xf32>
    %190 = tpu.matmul %125, %189, %cst_88 {dimension_numbers = #tpu.dot_dimension_numbers<[1], [0], [0], [1], [0, 0, 1, 1], [], []>} : vector<8x32xbf16>, vector<32x128xbf16>, vector<8x128xf32> -> vector<8x128xf32>
    %c3_89 = arith.constant 3 : index
    %c0_90 = arith.constant 0 : index
    %c0_91 = arith.constant 0 : index
    %191 = vector.load %arg2[%c3_89, %c0_90, %c0_91] : memref<5x32x128xbf16, #tpu.memory_space<vmem>>, vector<1x32x128xbf16>
    %192 = vector.shape_cast %191 : vector<1x32x128xbf16> to vector<32x128xbf16>
    %cst_92 = arith.constant dense<0.000000e+00> : vector<8x128xf32>
    %193 = tpu.matmul %0, %192, %cst_92 {dimension_numbers = #tpu.dot_dimension_numbers<[1], [0], [0], [1], [0, 0, 1, 1], [], []>} : vector<8x32xbf16>, vector<32x128xbf16>, vector<8x128xf32> -> vector<8x128xf32>
    %194 = arith.addf %190, %193 : vector<8x128xf32>
    %c3_93 = arith.constant 3 : index
    %c0_94 = arith.constant 0 : index
    %c0_95 = arith.constant 0 : index
    %195 = vector.load %arg3[%c3_93, %c0_94, %c0_95] : memref<5x1x128xf32, #tpu.memory_space<vmem>>, vector<1x1x128xf32>
    %196 = vector.shape_cast %195 : vector<1x1x128xf32> to vector<1x128xf32>
    %197 = vector.broadcast %196 : vector<1x128xf32> to vector<8x128xf32>
    %198 = arith.addf %194, %197 : vector<8x128xf32>
    %199 = vector.extract_strided_slice %198 {offsets = [0, 0], sizes = [8, 96], strides = [1, 1]} : vector<8x128xf32> to vector<8x96xf32>
    %cst_96 = arith.constant 5.000000e-01 : f32
    %200 = vector.broadcast %cst_96 : f32 to vector<8x96xf32>
    %201 = arith.mulf %200, %199 : vector<8x96xf32>
    %202 = math.tanh %201 : vector<8x96xf32>
    %cst_97 = arith.constant 5.000000e-01 : f32
    %203 = vector.broadcast %cst_97 : f32 to vector<8x96xf32>
    %204 = arith.mulf %203, %202 : vector<8x96xf32>
    %cst_98 = arith.constant 5.000000e-01 : f32
    %205 = vector.broadcast %cst_98 : f32 to vector<8x96xf32>
    %206 = arith.addf %204, %205 : vector<8x96xf32>
    %207 = vector.extract_strided_slice %206 {offsets = [0, 0], sizes = [8, 32], strides = [1, 1]} : vector<8x96xf32> to vector<8x32xf32>
    %208 = vector.extract_strided_slice %206 {offsets = [0, 32], sizes = [8, 32], strides = [1, 1]} : vector<8x96xf32> to vector<8x32xf32>
    %209 = vector.extract_strided_slice %206 {offsets = [0, 64], sizes = [8, 32], strides = [1, 1]} : vector<8x96xf32> to vector<8x32xf32>
    %210 = vector.extract_strided_slice %198 {offsets = [0, 96], sizes = [8, 32], strides = [1, 1]} : vector<8x128xf32> to vector<8x32xf32>
    %211 = math.tanh %210 : vector<8x32xf32>
    %212 = arith.mulf %208, %1 : vector<8x32xf32>
    %213 = arith.mulf %207, %211 : vector<8x32xf32>
    %214 = arith.addf %212, %213 : vector<8x32xf32>
    %215 = math.tanh %214 : vector<8x32xf32>
    %216 = arith.mulf %209, %215 : vector<8x32xf32>
    %217 = arith.truncf %216 : vector<8x32xf32> to vector<8x32xbf16>
    %c2_99 = arith.constant 2 : index
    %c0_100 = arith.constant 0 : index
    %c0_101 = arith.constant 0 : index
    %218 = vector.load %arg1[%c2_99, %c0_100, %c0_101] : memref<5x32x128xbf16, #tpu.memory_space<vmem>>, vector<1x32x128xbf16>
    %219 = vector.shape_cast %218 : vector<1x32x128xbf16> to vector<32x128xbf16>
    %cst_102 = arith.constant dense<0.000000e+00> : vector<8x128xf32>
    %220 = tpu.matmul %155, %219, %cst_102 {dimension_numbers = #tpu.dot_dimension_numbers<[1], [0], [0], [1], [0, 0, 1, 1], [], []>} : vector<8x32xbf16>, vector<32x128xbf16>, vector<8x128xf32> -> vector<8x128xf32>
    %c2_103 = arith.constant 2 : index
    %c0_104 = arith.constant 0 : index
    %c0_105 = arith.constant 0 : index
    %221 = vector.load %arg2[%c2_103, %c0_104, %c0_105] : memref<5x32x128xbf16, #tpu.memory_space<vmem>>, vector<1x32x128xbf16>
    %222 = vector.shape_cast %221 : vector<1x32x128xbf16> to vector<32x128xbf16>
    %cst_106 = arith.constant dense<0.000000e+00> : vector<8x128xf32>
    %223 = tpu.matmul %125, %222, %cst_106 {dimension_numbers = #tpu.dot_dimension_numbers<[1], [0], [0], [1], [0, 0, 1, 1], [], []>} : vector<8x32xbf16>, vector<32x128xbf16>, vector<8x128xf32> -> vector<8x128xf32>
    %224 = arith.addf %220, %223 : vector<8x128xf32>
    %c2_107 = arith.constant 2 : index
    %c0_108 = arith.constant 0 : index
    %c0_109 = arith.constant 0 : index
    %225 = vector.load %arg3[%c2_107, %c0_108, %c0_109] : memref<5x1x128xf32, #tpu.memory_space<vmem>>, vector<1x1x128xf32>
    %226 = vector.shape_cast %225 : vector<1x1x128xf32> to vector<1x128xf32>
    %227 = vector.broadcast %226 : vector<1x128xf32> to vector<8x128xf32>
    %228 = arith.addf %224, %227 : vector<8x128xf32>
    %229 = vector.extract_strided_slice %228 {offsets = [0, 0], sizes = [8, 96], strides = [1, 1]} : vector<8x128xf32> to vector<8x96xf32>
    %cst_110 = arith.constant 5.000000e-01 : f32
    %230 = vector.broadcast %cst_110 : f32 to vector<8x96xf32>
    %231 = arith.mulf %230, %229 : vector<8x96xf32>
    %232 = math.tanh %231 : vector<8x96xf32>
    %cst_111 = arith.constant 5.000000e-01 : f32
    %233 = vector.broadcast %cst_111 : f32 to vector<8x96xf32>
    %234 = arith.mulf %233, %232 : vector<8x96xf32>
    %cst_112 = arith.constant 5.000000e-01 : f32
    %235 = vector.broadcast %cst_112 : f32 to vector<8x96xf32>
    %236 = arith.addf %234, %235 : vector<8x96xf32>
    %237 = vector.extract_strided_slice %236 {offsets = [0, 0], sizes = [8, 32], strides = [1, 1]} : vector<8x96xf32> to vector<8x32xf32>
    %238 = vector.extract_strided_slice %236 {offsets = [0, 32], sizes = [8, 32], strides = [1, 1]} : vector<8x96xf32> to vector<8x32xf32>
    %239 = vector.extract_strided_slice %236 {offsets = [0, 64], sizes = [8, 32], strides = [1, 1]} : vector<8x96xf32> to vector<8x32xf32>
    %240 = vector.extract_strided_slice %228 {offsets = [0, 96], sizes = [8, 32], strides = [1, 1]} : vector<8x128xf32> to vector<8x32xf32>
    %241 = math.tanh %240 : vector<8x32xf32>
    %242 = arith.mulf %238, %122 : vector<8x32xf32>
    %243 = arith.mulf %237, %241 : vector<8x32xf32>
    %244 = arith.addf %242, %243 : vector<8x32xf32>
    %245 = math.tanh %244 : vector<8x32xf32>
    %246 = arith.mulf %239, %245 : vector<8x32xf32>
    %247 = arith.truncf %246 : vector<8x32xf32> to vector<8x32xbf16>
    %c1_113 = arith.constant 1 : index
    %c0_114 = arith.constant 0 : index
    %c0_115 = arith.constant 0 : index
    %248 = vector.load %arg1[%c1_113, %c0_114, %c0_115] : memref<5x32x128xbf16, #tpu.memory_space<vmem>>, vector<1x32x128xbf16>
    %249 = vector.shape_cast %248 : vector<1x32x128xbf16> to vector<32x128xbf16>
    %cst_116 = arith.constant dense<0.000000e+00> : vector<8x128xf32>
    %250 = tpu.matmul %187, %249, %cst_116 {dimension_numbers = #tpu.dot_dimension_numbers<[1], [0], [0], [1], [0, 0, 1, 1], [], []>} : vector<8x32xbf16>, vector<32x128xbf16>, vector<8x128xf32> -> vector<8x128xf32>
    %c1_117 = arith.constant 1 : index
    %c0_118 = arith.constant 0 : index
    %c0_119 = arith.constant 0 : index
    %251 = vector.load %arg2[%c1_117, %c0_118, %c0_119] : memref<5x32x128xbf16, #tpu.memory_space<vmem>>, vector<1x32x128xbf16>
    %252 = vector.shape_cast %251 : vector<1x32x128xbf16> to vector<32x128xbf16>
    %cst_120 = arith.constant dense<0.000000e+00> : vector<8x128xf32>
    %253 = tpu.matmul %155, %252, %cst_120 {dimension_numbers = #tpu.dot_dimension_numbers<[1], [0], [0], [1], [0, 0, 1, 1], [], []>} : vector<8x32xbf16>, vector<32x128xbf16>, vector<8x128xf32> -> vector<8x128xf32>
    %254 = arith.addf %250, %253 : vector<8x128xf32>
    %c1_121 = arith.constant 1 : index
    %c0_122 = arith.constant 0 : index
    %c0_123 = arith.constant 0 : index
    %255 = vector.load %arg3[%c1_121, %c0_122, %c0_123] : memref<5x1x128xf32, #tpu.memory_space<vmem>>, vector<1x1x128xf32>
    %256 = vector.shape_cast %255 : vector<1x1x128xf32> to vector<1x128xf32>
    %257 = vector.broadcast %256 : vector<1x128xf32> to vector<8x128xf32>
    %258 = arith.addf %254, %257 : vector<8x128xf32>
    %259 = vector.extract_strided_slice %258 {offsets = [0, 0], sizes = [8, 96], strides = [1, 1]} : vector<8x128xf32> to vector<8x96xf32>
    %cst_124 = arith.constant 5.000000e-01 : f32
    %260 = vector.broadcast %cst_124 : f32 to vector<8x96xf32>
    %261 = arith.mulf %260, %259 : vector<8x96xf32>
    %262 = math.tanh %261 : vector<8x96xf32>
    %cst_125 = arith.constant 5.000000e-01 : f32
    %263 = vector.broadcast %cst_125 : f32 to vector<8x96xf32>
    %264 = arith.mulf %263, %262 : vector<8x96xf32>
    %cst_126 = arith.constant 5.000000e-01 : f32
    %265 = vector.broadcast %cst_126 : f32 to vector<8x96xf32>
    %266 = arith.addf %264, %265 : vector<8x96xf32>
    %267 = vector.extract_strided_slice %266 {offsets = [0, 0], sizes = [8, 32], strides = [1, 1]} : vector<8x96xf32> to vector<8x32xf32>
    %268 = vector.extract_strided_slice %266 {offsets = [0, 32], sizes = [8, 32], strides = [1, 1]} : vector<8x96xf32> to vector<8x32xf32>
    %269 = vector.extract_strided_slice %266 {offsets = [0, 64], sizes = [8, 32], strides = [1, 1]} : vector<8x96xf32> to vector<8x32xf32>
    %270 = vector.extract_strided_slice %258 {offsets = [0, 96], sizes = [8, 32], strides = [1, 1]} : vector<8x128xf32> to vector<8x32xf32>
    %271 = math.tanh %270 : vector<8x32xf32>
    %272 = arith.mulf %268, %152 : vector<8x32xf32>
    %273 = arith.mulf %267, %271 : vector<8x32xf32>
    %274 = arith.addf %272, %273 : vector<8x32xf32>
    %275 = math.tanh %274 : vector<8x32xf32>
    %276 = arith.mulf %269, %275 : vector<8x32xf32>
    %277 = arith.truncf %276 : vector<8x32xf32> to vector<8x32xbf16>
    %c24 = arith.constant 24 : index
    %c0_127 = arith.constant 0 : index
    %278 = vector.load %arg0[%c24, %c0_127] : memref<64x32xf32, #tpu.memory_space<vmem>>, vector<8x32xf32>
    %279 = arith.truncf %278 : vector<8x32xf32> to vector<8x32xbf16>
    %c0_128 = arith.constant 0 : index
    %c0_129 = arith.constant 0 : index
    %c0_130 = arith.constant 0 : index
    %280 = vector.load %arg1[%c0_128, %c0_129, %c0_130] : memref<5x32x128xbf16, #tpu.memory_space<vmem>>, vector<1x32x128xbf16>
    %281 = vector.shape_cast %280 : vector<1x32x128xbf16> to vector<32x128xbf16>
    %cst_131 = arith.constant dense<0.000000e+00> : vector<8x128xf32>
    %282 = tpu.matmul %279, %281, %cst_131 {dimension_numbers = #tpu.dot_dimension_numbers<[1], [0], [0], [1], [0, 0, 1, 1], [], []>} : vector<8x32xbf16>, vector<32x128xbf16>, vector<8x128xf32> -> vector<8x128xf32>
    %c0_132 = arith.constant 0 : index
    %c0_133 = arith.constant 0 : index
    %c0_134 = arith.constant 0 : index
    %283 = vector.load %arg2[%c0_132, %c0_133, %c0_134] : memref<5x32x128xbf16, #tpu.memory_space<vmem>>, vector<1x32x128xbf16>
    %284 = vector.shape_cast %283 : vector<1x32x128xbf16> to vector<32x128xbf16>
    %cst_135 = arith.constant dense<0.000000e+00> : vector<8x128xf32>
    %285 = tpu.matmul %187, %284, %cst_135 {dimension_numbers = #tpu.dot_dimension_numbers<[1], [0], [0], [1], [0, 0, 1, 1], [], []>} : vector<8x32xbf16>, vector<32x128xbf16>, vector<8x128xf32> -> vector<8x128xf32>
    %286 = arith.addf %282, %285 : vector<8x128xf32>
    %c0_136 = arith.constant 0 : index
    %c0_137 = arith.constant 0 : index
    %c0_138 = arith.constant 0 : index
    %287 = vector.load %arg3[%c0_136, %c0_137, %c0_138] : memref<5x1x128xf32, #tpu.memory_space<vmem>>, vector<1x1x128xf32>
    %288 = vector.shape_cast %287 : vector<1x1x128xf32> to vector<1x128xf32>
    %289 = vector.broadcast %288 : vector<1x128xf32> to vector<8x128xf32>
    %290 = arith.addf %286, %289 : vector<8x128xf32>
    %291 = vector.extract_strided_slice %290 {offsets = [0, 0], sizes = [8, 96], strides = [1, 1]} : vector<8x128xf32> to vector<8x96xf32>
    %cst_139 = arith.constant 5.000000e-01 : f32
    %292 = vector.broadcast %cst_139 : f32 to vector<8x96xf32>
    %293 = arith.mulf %292, %291 : vector<8x96xf32>
    %294 = math.tanh %293 : vector<8x96xf32>
    %cst_140 = arith.constant 5.000000e-01 : f32
    %295 = vector.broadcast %cst_140 : f32 to vector<8x96xf32>
    %296 = arith.mulf %295, %294 : vector<8x96xf32>
    %cst_141 = arith.constant 5.000000e-01 : f32
    %297 = vector.broadcast %cst_141 : f32 to vector<8x96xf32>
    %298 = arith.addf %296, %297 : vector<8x96xf32>
    %299 = vector.extract_strided_slice %298 {offsets = [0, 0], sizes = [8, 32], strides = [1, 1]} : vector<8x96xf32> to vector<8x32xf32>
    %300 = vector.extract_strided_slice %298 {offsets = [0, 32], sizes = [8, 32], strides = [1, 1]} : vector<8x96xf32> to vector<8x32xf32>
    %301 = vector.extract_strided_slice %298 {offsets = [0, 64], sizes = [8, 32], strides = [1, 1]} : vector<8x96xf32> to vector<8x32xf32>
    %302 = vector.extract_strided_slice %290 {offsets = [0, 96], sizes = [8, 32], strides = [1, 1]} : vector<8x128xf32> to vector<8x32xf32>
    %303 = math.tanh %302 : vector<8x32xf32>
    %304 = arith.mulf %300, %184 : vector<8x32xf32>
    %305 = arith.mulf %299, %303 : vector<8x32xf32>
    %306 = arith.addf %304, %305 : vector<8x32xf32>
    %307 = math.tanh %306 : vector<8x32xf32>
    %308 = arith.mulf %301, %307 : vector<8x32xf32>
    %309 = arith.truncf %308 : vector<8x32xf32> to vector<8x32xbf16>
    %c4 = arith.constant 4 : index
    %c0_142 = arith.constant 0 : index
    %c0_143 = arith.constant 0 : index
    %310 = vector.load %arg1[%c4, %c0_142, %c0_143] : memref<5x32x128xbf16, #tpu.memory_space<vmem>>, vector<1x32x128xbf16>
    %311 = vector.shape_cast %310 : vector<1x32x128xbf16> to vector<32x128xbf16>
    %cst_144 = arith.constant dense<0.000000e+00> : vector<8x128xf32>
    %312 = tpu.matmul %217, %311, %cst_144 {dimension_numbers = #tpu.dot_dimension_numbers<[1], [0], [0], [1], [0, 0, 1, 1], [], []>} : vector<8x32xbf16>, vector<32x128xbf16>, vector<8x128xf32> -> vector<8x128xf32>
    %c4_145 = arith.constant 4 : index
    %c0_146 = arith.constant 0 : index
    %c0_147 = arith.constant 0 : index
    %313 = vector.load %arg2[%c4_145, %c0_146, %c0_147] : memref<5x32x128xbf16, #tpu.memory_space<vmem>>, vector<1x32x128xbf16>
    %314 = vector.shape_cast %313 : vector<1x32x128xbf16> to vector<32x128xbf16>
    %cst_148 = arith.constant dense<0.000000e+00> : vector<8x128xf32>
    %315 = tpu.matmul %0, %314, %cst_148 {dimension_numbers = #tpu.dot_dimension_numbers<[1], [0], [0], [1], [0, 0, 1, 1], [], []>} : vector<8x32xbf16>, vector<32x128xbf16>, vector<8x128xf32> -> vector<8x128xf32>
    %316 = arith.addf %312, %315 : vector<8x128xf32>
    %c4_149 = arith.constant 4 : index
    %c0_150 = arith.constant 0 : index
    %c0_151 = arith.constant 0 : index
    %317 = vector.load %arg3[%c4_149, %c0_150, %c0_151] : memref<5x1x128xf32, #tpu.memory_space<vmem>>, vector<1x1x128xf32>
    %318 = vector.shape_cast %317 : vector<1x1x128xf32> to vector<1x128xf32>
    %319 = vector.broadcast %318 : vector<1x128xf32> to vector<8x128xf32>
    %320 = arith.addf %316, %319 : vector<8x128xf32>
    %321 = vector.extract_strided_slice %320 {offsets = [0, 0], sizes = [8, 96], strides = [1, 1]} : vector<8x128xf32> to vector<8x96xf32>
    %cst_152 = arith.constant 5.000000e-01 : f32
    %322 = vector.broadcast %cst_152 : f32 to vector<8x96xf32>
    %323 = arith.mulf %322, %321 : vector<8x96xf32>
    %324 = math.tanh %323 : vector<8x96xf32>
    %cst_153 = arith.constant 5.000000e-01 : f32
    %325 = vector.broadcast %cst_153 : f32 to vector<8x96xf32>
    %326 = arith.mulf %325, %324 : vector<8x96xf32>
    %cst_154 = arith.constant 5.000000e-01 : f32
    %327 = vector.broadcast %cst_154 : f32 to vector<8x96xf32>
    %328 = arith.addf %326, %327 : vector<8x96xf32>
    %329 = vector.extract_strided_slice %328 {offsets = [0, 0], sizes = [8, 32], strides = [1, 1]} : vector<8x96xf32> to vector<8x32xf32>
    %330 = vector.extract_strided_slice %328 {offsets = [0, 32], sizes = [8, 32], strides = [1, 1]} : vector<8x96xf32> to vector<8x32xf32>
    %331 = vector.extract_strided_slice %328 {offsets = [0, 64], sizes = [8, 32], strides = [1, 1]} : vector<8x96xf32> to vector<8x32xf32>
    %332 = vector.extract_strided_slice %320 {offsets = [0, 96], sizes = [8, 32], strides = [1, 1]} : vector<8x128xf32> to vector<8x32xf32>
    %333 = math.tanh %332 : vector<8x32xf32>
    %334 = arith.mulf %330, %1 : vector<8x32xf32>
    %335 = arith.mulf %329, %333 : vector<8x32xf32>
    %336 = arith.addf %334, %335 : vector<8x32xf32>
    %337 = math.tanh %336 : vector<8x32xf32>
    %338 = arith.mulf %331, %337 : vector<8x32xf32>
    %339 = arith.truncf %338 : vector<8x32xf32> to vector<8x32xbf16>
    %c3_155 = arith.constant 3 : index
    %c0_156 = arith.constant 0 : index
    %c0_157 = arith.constant 0 : index
    %340 = vector.load %arg1[%c3_155, %c0_156, %c0_157] : memref<5x32x128xbf16, #tpu.memory_space<vmem>>, vector<1x32x128xbf16>
    %341 = vector.shape_cast %340 : vector<1x32x128xbf16> to vector<32x128xbf16>
    %cst_158 = arith.constant dense<0.000000e+00> : vector<8x128xf32>
    %342 = tpu.matmul %247, %341, %cst_158 {dimension_numbers = #tpu.dot_dimension_numbers<[1], [0], [0], [1], [0, 0, 1, 1], [], []>} : vector<8x32xbf16>, vector<32x128xbf16>, vector<8x128xf32> -> vector<8x128xf32>
    %c3_159 = arith.constant 3 : index
    %c0_160 = arith.constant 0 : index
    %c0_161 = arith.constant 0 : index
    %343 = vector.load %arg2[%c3_159, %c0_160, %c0_161] : memref<5x32x128xbf16, #tpu.memory_space<vmem>>, vector<1x32x128xbf16>
    %344 = vector.shape_cast %343 : vector<1x32x128xbf16> to vector<32x128xbf16>
    %cst_162 = arith.constant dense<0.000000e+00> : vector<8x128xf32>
    %345 = tpu.matmul %217, %344, %cst_162 {dimension_numbers = #tpu.dot_dimension_numbers<[1], [0], [0], [1], [0, 0, 1, 1], [], []>} : vector<8x32xbf16>, vector<32x128xbf16>, vector<8x128xf32> -> vector<8x128xf32>
    %346 = arith.addf %342, %345 : vector<8x128xf32>
    %c3_163 = arith.constant 3 : index
    %c0_164 = arith.constant 0 : index
    %c0_165 = arith.constant 0 : index
    %347 = vector.load %arg3[%c3_163, %c0_164, %c0_165] : memref<5x1x128xf32, #tpu.memory_space<vmem>>, vector<1x1x128xf32>
    %348 = vector.shape_cast %347 : vector<1x1x128xf32> to vector<1x128xf32>
    %349 = vector.broadcast %348 : vector<1x128xf32> to vector<8x128xf32>
    %350 = arith.addf %346, %349 : vector<8x128xf32>
    %351 = vector.extract_strided_slice %350 {offsets = [0, 0], sizes = [8, 96], strides = [1, 1]} : vector<8x128xf32> to vector<8x96xf32>
    %cst_166 = arith.constant 5.000000e-01 : f32
    %352 = vector.broadcast %cst_166 : f32 to vector<8x96xf32>
    %353 = arith.mulf %352, %351 : vector<8x96xf32>
    %354 = math.tanh %353 : vector<8x96xf32>
    %cst_167 = arith.constant 5.000000e-01 : f32
    %355 = vector.broadcast %cst_167 : f32 to vector<8x96xf32>
    %356 = arith.mulf %355, %354 : vector<8x96xf32>
    %cst_168 = arith.constant 5.000000e-01 : f32
    %357 = vector.broadcast %cst_168 : f32 to vector<8x96xf32>
    %358 = arith.addf %356, %357 : vector<8x96xf32>
    %359 = vector.extract_strided_slice %358 {offsets = [0, 0], sizes = [8, 32], strides = [1, 1]} : vector<8x96xf32> to vector<8x32xf32>
    %360 = vector.extract_strided_slice %358 {offsets = [0, 32], sizes = [8, 32], strides = [1, 1]} : vector<8x96xf32> to vector<8x32xf32>
    %361 = vector.extract_strided_slice %358 {offsets = [0, 64], sizes = [8, 32], strides = [1, 1]} : vector<8x96xf32> to vector<8x32xf32>
    %362 = vector.extract_strided_slice %350 {offsets = [0, 96], sizes = [8, 32], strides = [1, 1]} : vector<8x128xf32> to vector<8x32xf32>
    %363 = math.tanh %362 : vector<8x32xf32>
    %364 = arith.mulf %360, %214 : vector<8x32xf32>
    %365 = arith.mulf %359, %363 : vector<8x32xf32>
    %366 = arith.addf %364, %365 : vector<8x32xf32>
    %367 = math.tanh %366 : vector<8x32xf32>
    %368 = arith.mulf %361, %367 : vector<8x32xf32>
    %369 = arith.truncf %368 : vector<8x32xf32> to vector<8x32xbf16>
    %c2_169 = arith.constant 2 : index
    %c0_170 = arith.constant 0 : index
    %c0_171 = arith.constant 0 : index
    %370 = vector.load %arg1[%c2_169, %c0_170, %c0_171] : memref<5x32x128xbf16, #tpu.memory_space<vmem>>, vector<1x32x128xbf16>
    %371 = vector.shape_cast %370 : vector<1x32x128xbf16> to vector<32x128xbf16>
    %cst_172 = arith.constant dense<0.000000e+00> : vector<8x128xf32>
    %372 = tpu.matmul %277, %371, %cst_172 {dimension_numbers = #tpu.dot_dimension_numbers<[1], [0], [0], [1], [0, 0, 1, 1], [], []>} : vector<8x32xbf16>, vector<32x128xbf16>, vector<8x128xf32> -> vector<8x128xf32>
    %c2_173 = arith.constant 2 : index
    %c0_174 = arith.constant 0 : index
    %c0_175 = arith.constant 0 : index
    %373 = vector.load %arg2[%c2_173, %c0_174, %c0_175] : memref<5x32x128xbf16, #tpu.memory_space<vmem>>, vector<1x32x128xbf16>
    %374 = vector.shape_cast %373 : vector<1x32x128xbf16> to vector<32x128xbf16>
    %cst_176 = arith.constant dense<0.000000e+00> : vector<8x128xf32>
    %375 = tpu.matmul %247, %374, %cst_176 {dimension_numbers = #tpu.dot_dimension_numbers<[1], [0], [0], [1], [0, 0, 1, 1], [], []>} : vector<8x32xbf16>, vector<32x128xbf16>, vector<8x128xf32> -> vector<8x128xf32>
    %376 = arith.addf %372, %375 : vector<8x128xf32>
    %c2_177 = arith.constant 2 : index
    %c0_178 = arith.constant 0 : index
    %c0_179 = arith.constant 0 : index
    %377 = vector.load %arg3[%c2_177, %c0_178, %c0_179] : memref<5x1x128xf32, #tpu.memory_space<vmem>>, vector<1x1x128xf32>
    %378 = vector.shape_cast %377 : vector<1x1x128xf32> to vector<1x128xf32>
    %379 = vector.broadcast %378 : vector<1x128xf32> to vector<8x128xf32>
    %380 = arith.addf %376, %379 : vector<8x128xf32>
    %381 = vector.extract_strided_slice %380 {offsets = [0, 0], sizes = [8, 96], strides = [1, 1]} : vector<8x128xf32> to vector<8x96xf32>
    %cst_180 = arith.constant 5.000000e-01 : f32
    %382 = vector.broadcast %cst_180 : f32 to vector<8x96xf32>
    %383 = arith.mulf %382, %381 : vector<8x96xf32>
    %384 = math.tanh %383 : vector<8x96xf32>
    %cst_181 = arith.constant 5.000000e-01 : f32
    %385 = vector.broadcast %cst_181 : f32 to vector<8x96xf32>
    %386 = arith.mulf %385, %384 : vector<8x96xf32>
    %cst_182 = arith.constant 5.000000e-01 : f32
    %387 = vector.broadcast %cst_182 : f32 to vector<8x96xf32>
    %388 = arith.addf %386, %387 : vector<8x96xf32>
    %389 = vector.extract_strided_slice %388 {offsets = [0, 0], sizes = [8, 32], strides = [1, 1]} : vector<8x96xf32> to vector<8x32xf32>
    %390 = vector.extract_strided_slice %388 {offsets = [0, 32], sizes = [8, 32], strides = [1, 1]} : vector<8x96xf32> to vector<8x32xf32>
    %391 = vector.extract_strided_slice %388 {offsets = [0, 64], sizes = [8, 32], strides = [1, 1]} : vector<8x96xf32> to vector<8x32xf32>
    %392 = vector.extract_strided_slice %380 {offsets = [0, 96], sizes = [8, 32], strides = [1, 1]} : vector<8x128xf32> to vector<8x32xf32>
    %393 = math.tanh %392 : vector<8x32xf32>
    %394 = arith.mulf %390, %244 : vector<8x32xf32>
    %395 = arith.mulf %389, %393 : vector<8x32xf32>
    %396 = arith.addf %394, %395 : vector<8x32xf32>
    %397 = math.tanh %396 : vector<8x32xf32>
    %398 = arith.mulf %391, %397 : vector<8x32xf32>
    %399 = arith.truncf %398 : vector<8x32xf32> to vector<8x32xbf16>
    %c1_183 = arith.constant 1 : index
    %c0_184 = arith.constant 0 : index
    %c0_185 = arith.constant 0 : index
    %400 = vector.load %arg1[%c1_183, %c0_184, %c0_185] : memref<5x32x128xbf16, #tpu.memory_space<vmem>>, vector<1x32x128xbf16>
    %401 = vector.shape_cast %400 : vector<1x32x128xbf16> to vector<32x128xbf16>
    %cst_186 = arith.constant dense<0.000000e+00> : vector<8x128xf32>
    %402 = tpu.matmul %309, %401, %cst_186 {dimension_numbers = #tpu.dot_dimension_numbers<[1], [0], [0], [1], [0, 0, 1, 1], [], []>} : vector<8x32xbf16>, vector<32x128xbf16>, vector<8x128xf32> -> vector<8x128xf32>
    %c1_187 = arith.constant 1 : index
    %c0_188 = arith.constant 0 : index
    %c0_189 = arith.constant 0 : index
    %403 = vector.load %arg2[%c1_187, %c0_188, %c0_189] : memref<5x32x128xbf16, #tpu.memory_space<vmem>>, vector<1x32x128xbf16>
    %404 = vector.shape_cast %403 : vector<1x32x128xbf16> to vector<32x128xbf16>
    %cst_190 = arith.constant dense<0.000000e+00> : vector<8x128xf32>
    %405 = tpu.matmul %277, %404, %cst_190 {dimension_numbers = #tpu.dot_dimension_numbers<[1], [0], [0], [1], [0, 0, 1, 1], [], []>} : vector<8x32xbf16>, vector<32x128xbf16>, vector<8x128xf32> -> vector<8x128xf32>
    %406 = arith.addf %402, %405 : vector<8x128xf32>
    %c1_191 = arith.constant 1 : index
    %c0_192 = arith.constant 0 : index
    %c0_193 = arith.constant 0 : index
    %407 = vector.load %arg3[%c1_191, %c0_192, %c0_193] : memref<5x1x128xf32, #tpu.memory_space<vmem>>, vector<1x1x128xf32>
    %408 = vector.shape_cast %407 : vector<1x1x128xf32> to vector<1x128xf32>
    %409 = vector.broadcast %408 : vector<1x128xf32> to vector<8x128xf32>
    %410 = arith.addf %406, %409 : vector<8x128xf32>
    %411 = vector.extract_strided_slice %410 {offsets = [0, 0], sizes = [8, 96], strides = [1, 1]} : vector<8x128xf32> to vector<8x96xf32>
    %cst_194 = arith.constant 5.000000e-01 : f32
    %412 = vector.broadcast %cst_194 : f32 to vector<8x96xf32>
    %413 = arith.mulf %412, %411 : vector<8x96xf32>
    %414 = math.tanh %413 : vector<8x96xf32>
    %cst_195 = arith.constant 5.000000e-01 : f32
    %415 = vector.broadcast %cst_195 : f32 to vector<8x96xf32>
    %416 = arith.mulf %415, %414 : vector<8x96xf32>
    %cst_196 = arith.constant 5.000000e-01 : f32
    %417 = vector.broadcast %cst_196 : f32 to vector<8x96xf32>
    %418 = arith.addf %416, %417 : vector<8x96xf32>
    %419 = vector.extract_strided_slice %418 {offsets = [0, 0], sizes = [8, 32], strides = [1, 1]} : vector<8x96xf32> to vector<8x32xf32>
    %420 = vector.extract_strided_slice %418 {offsets = [0, 32], sizes = [8, 32], strides = [1, 1]} : vector<8x96xf32> to vector<8x32xf32>
    %421 = vector.extract_strided_slice %418 {offsets = [0, 64], sizes = [8, 32], strides = [1, 1]} : vector<8x96xf32> to vector<8x32xf32>
    %422 = vector.extract_strided_slice %410 {offsets = [0, 96], sizes = [8, 32], strides = [1, 1]} : vector<8x128xf32> to vector<8x32xf32>
    %423 = math.tanh %422 : vector<8x32xf32>
    %424 = arith.mulf %420, %274 : vector<8x32xf32>
    %425 = arith.mulf %419, %423 : vector<8x32xf32>
    %426 = arith.addf %424, %425 : vector<8x32xf32>
    %427 = math.tanh %426 : vector<8x32xf32>
    %428 = arith.mulf %421, %427 : vector<8x32xf32>
    %429 = arith.truncf %428 : vector<8x32xf32> to vector<8x32xbf16>
    %c32 = arith.constant 32 : index
    %c0_197 = arith.constant 0 : index
    %430 = vector.load %arg0[%c32, %c0_197] : memref<64x32xf32, #tpu.memory_space<vmem>>, vector<8x32xf32>
    %431 = arith.truncf %430 : vector<8x32xf32> to vector<8x32xbf16>
    %c0_198 = arith.constant 0 : index
    %c0_199 = arith.constant 0 : index
    %c0_200 = arith.constant 0 : index
    %432 = vector.load %arg1[%c0_198, %c0_199, %c0_200] : memref<5x32x128xbf16, #tpu.memory_space<vmem>>, vector<1x32x128xbf16>
    %433 = vector.shape_cast %432 : vector<1x32x128xbf16> to vector<32x128xbf16>
    %cst_201 = arith.constant dense<0.000000e+00> : vector<8x128xf32>
    %434 = tpu.matmul %431, %433, %cst_201 {dimension_numbers = #tpu.dot_dimension_numbers<[1], [0], [0], [1], [0, 0, 1, 1], [], []>} : vector<8x32xbf16>, vector<32x128xbf16>, vector<8x128xf32> -> vector<8x128xf32>
    %c0_202 = arith.constant 0 : index
    %c0_203 = arith.constant 0 : index
    %c0_204 = arith.constant 0 : index
    %435 = vector.load %arg2[%c0_202, %c0_203, %c0_204] : memref<5x32x128xbf16, #tpu.memory_space<vmem>>, vector<1x32x128xbf16>
    %436 = vector.shape_cast %435 : vector<1x32x128xbf16> to vector<32x128xbf16>
    %cst_205 = arith.constant dense<0.000000e+00> : vector<8x128xf32>
    %437 = tpu.matmul %309, %436, %cst_205 {dimension_numbers = #tpu.dot_dimension_numbers<[1], [0], [0], [1], [0, 0, 1, 1], [], []>} : vector<8x32xbf16>, vector<32x128xbf16>, vector<8x128xf32> -> vector<8x128xf32>
    %438 = arith.addf %434, %437 : vector<8x128xf32>
    %c0_206 = arith.constant 0 : index
    %c0_207 = arith.constant 0 : index
    %c0_208 = arith.constant 0 : index
    %439 = vector.load %arg3[%c0_206, %c0_207, %c0_208] : memref<5x1x128xf32, #tpu.memory_space<vmem>>, vector<1x1x128xf32>
    %440 = vector.shape_cast %439 : vector<1x1x128xf32> to vector<1x128xf32>
    %441 = vector.broadcast %440 : vector<1x128xf32> to vector<8x128xf32>
    %442 = arith.addf %438, %441 : vector<8x128xf32>
    %443 = vector.extract_strided_slice %442 {offsets = [0, 0], sizes = [8, 96], strides = [1, 1]} : vector<8x128xf32> to vector<8x96xf32>
    %cst_209 = arith.constant 5.000000e-01 : f32
    %444 = vector.broadcast %cst_209 : f32 to vector<8x96xf32>
    %445 = arith.mulf %444, %443 : vector<8x96xf32>
    %446 = math.tanh %445 : vector<8x96xf32>
    %cst_210 = arith.constant 5.000000e-01 : f32
    %447 = vector.broadcast %cst_210 : f32 to vector<8x96xf32>
    %448 = arith.mulf %447, %446 : vector<8x96xf32>
    %cst_211 = arith.constant 5.000000e-01 : f32
    %449 = vector.broadcast %cst_211 : f32 to vector<8x96xf32>
    %450 = arith.addf %448, %449 : vector<8x96xf32>
    %451 = vector.extract_strided_slice %450 {offsets = [0, 0], sizes = [8, 32], strides = [1, 1]} : vector<8x96xf32> to vector<8x32xf32>
    %452 = vector.extract_strided_slice %450 {offsets = [0, 32], sizes = [8, 32], strides = [1, 1]} : vector<8x96xf32> to vector<8x32xf32>
    %453 = vector.extract_strided_slice %450 {offsets = [0, 64], sizes = [8, 32], strides = [1, 1]} : vector<8x96xf32> to vector<8x32xf32>
    %454 = vector.extract_strided_slice %442 {offsets = [0, 96], sizes = [8, 32], strides = [1, 1]} : vector<8x128xf32> to vector<8x32xf32>
    %455 = math.tanh %454 : vector<8x32xf32>
    %456 = arith.mulf %452, %306 : vector<8x32xf32>
    %457 = arith.mulf %451, %455 : vector<8x32xf32>
    %458 = arith.addf %456, %457 : vector<8x32xf32>
    %459 = math.tanh %458 : vector<8x32xf32>
    %460 = arith.mulf %453, %459 : vector<8x32xf32>
    %461 = arith.truncf %460 : vector<8x32xf32> to vector<8x32xbf16>
    %c4_212 = arith.constant 4 : index
    %c0_213 = arith.constant 0 : index
    %c0_214 = arith.constant 0 : index
    %462 = vector.load %arg1[%c4_212, %c0_213, %c0_214] : memref<5x32x128xbf16, #tpu.memory_space<vmem>>, vector<1x32x128xbf16>
    %463 = vector.shape_cast %462 : vector<1x32x128xbf16> to vector<32x128xbf16>
    %cst_215 = arith.constant dense<0.000000e+00> : vector<8x128xf32>
    %464 = tpu.matmul %369, %463, %cst_215 {dimension_numbers = #tpu.dot_dimension_numbers<[1], [0], [0], [1], [0, 0, 1, 1], [], []>} : vector<8x32xbf16>, vector<32x128xbf16>, vector<8x128xf32> -> vector<8x128xf32>
    %c4_216 = arith.constant 4 : index
    %c0_217 = arith.constant 0 : index
    %c0_218 = arith.constant 0 : index
    %465 = vector.load %arg2[%c4_216, %c0_217, %c0_218] : memref<5x32x128xbf16, #tpu.memory_space<vmem>>, vector<1x32x128xbf16>
    %466 = vector.shape_cast %465 : vector<1x32x128xbf16> to vector<32x128xbf16>
    %cst_219 = arith.constant dense<0.000000e+00> : vector<8x128xf32>
    %467 = tpu.matmul %339, %466, %cst_219 {dimension_numbers = #tpu.dot_dimension_numbers<[1], [0], [0], [1], [0, 0, 1, 1], [], []>} : vector<8x32xbf16>, vector<32x128xbf16>, vector<8x128xf32> -> vector<8x128xf32>
    %468 = arith.addf %464, %467 : vector<8x128xf32>
    %c4_220 = arith.constant 4 : index
    %c0_221 = arith.constant 0 : index
    %c0_222 = arith.constant 0 : index
    %469 = vector.load %arg3[%c4_220, %c0_221, %c0_222] : memref<5x1x128xf32, #tpu.memory_space<vmem>>, vector<1x1x128xf32>
    %470 = vector.shape_cast %469 : vector<1x1x128xf32> to vector<1x128xf32>
    %471 = vector.broadcast %470 : vector<1x128xf32> to vector<8x128xf32>
    %472 = arith.addf %468, %471 : vector<8x128xf32>
    %473 = vector.extract_strided_slice %472 {offsets = [0, 0], sizes = [8, 96], strides = [1, 1]} : vector<8x128xf32> to vector<8x96xf32>
    %cst_223 = arith.constant 5.000000e-01 : f32
    %474 = vector.broadcast %cst_223 : f32 to vector<8x96xf32>
    %475 = arith.mulf %474, %473 : vector<8x96xf32>
    %476 = math.tanh %475 : vector<8x96xf32>
    %cst_224 = arith.constant 5.000000e-01 : f32
    %477 = vector.broadcast %cst_224 : f32 to vector<8x96xf32>
    %478 = arith.mulf %477, %476 : vector<8x96xf32>
    %cst_225 = arith.constant 5.000000e-01 : f32
    %479 = vector.broadcast %cst_225 : f32 to vector<8x96xf32>
    %480 = arith.addf %478, %479 : vector<8x96xf32>
    %481 = vector.extract_strided_slice %480 {offsets = [0, 0], sizes = [8, 32], strides = [1, 1]} : vector<8x96xf32> to vector<8x32xf32>
    %482 = vector.extract_strided_slice %480 {offsets = [0, 32], sizes = [8, 32], strides = [1, 1]} : vector<8x96xf32> to vector<8x32xf32>
    %483 = vector.extract_strided_slice %480 {offsets = [0, 64], sizes = [8, 32], strides = [1, 1]} : vector<8x96xf32> to vector<8x32xf32>
    %484 = vector.extract_strided_slice %472 {offsets = [0, 96], sizes = [8, 32], strides = [1, 1]} : vector<8x128xf32> to vector<8x32xf32>
    %485 = math.tanh %484 : vector<8x32xf32>
    %486 = arith.mulf %482, %336 : vector<8x32xf32>
    %487 = arith.mulf %481, %485 : vector<8x32xf32>
    %488 = arith.addf %486, %487 : vector<8x32xf32>
    %489 = math.tanh %488 : vector<8x32xf32>
    %490 = arith.mulf %483, %489 : vector<8x32xf32>
    %491 = arith.truncf %490 : vector<8x32xf32> to vector<8x32xbf16>
    %c3_226 = arith.constant 3 : index
    %c0_227 = arith.constant 0 : index
    %c0_228 = arith.constant 0 : index
    %492 = vector.load %arg1[%c3_226, %c0_227, %c0_228] : memref<5x32x128xbf16, #tpu.memory_space<vmem>>, vector<1x32x128xbf16>
    %493 = vector.shape_cast %492 : vector<1x32x128xbf16> to vector<32x128xbf16>
    %cst_229 = arith.constant dense<0.000000e+00> : vector<8x128xf32>
    %494 = tpu.matmul %399, %493, %cst_229 {dimension_numbers = #tpu.dot_dimension_numbers<[1], [0], [0], [1], [0, 0, 1, 1], [], []>} : vector<8x32xbf16>, vector<32x128xbf16>, vector<8x128xf32> -> vector<8x128xf32>
    %c3_230 = arith.constant 3 : index
    %c0_231 = arith.constant 0 : index
    %c0_232 = arith.constant 0 : index
    %495 = vector.load %arg2[%c3_230, %c0_231, %c0_232] : memref<5x32x128xbf16, #tpu.memory_space<vmem>>, vector<1x32x128xbf16>
    %496 = vector.shape_cast %495 : vector<1x32x128xbf16> to vector<32x128xbf16>
    %cst_233 = arith.constant dense<0.000000e+00> : vector<8x128xf32>
    %497 = tpu.matmul %369, %496, %cst_233 {dimension_numbers = #tpu.dot_dimension_numbers<[1], [0], [0], [1], [0, 0, 1, 1], [], []>} : vector<8x32xbf16>, vector<32x128xbf16>, vector<8x128xf32> -> vector<8x128xf32>
    %498 = arith.addf %494, %497 : vector<8x128xf32>
    %c3_234 = arith.constant 3 : index
    %c0_235 = arith.constant 0 : index
    %c0_236 = arith.constant 0 : index
    %499 = vector.load %arg3[%c3_234, %c0_235, %c0_236] : memref<5x1x128xf32, #tpu.memory_space<vmem>>, vector<1x1x128xf32>
    %500 = vector.shape_cast %499 : vector<1x1x128xf32> to vector<1x128xf32>
    %501 = vector.broadcast %500 : vector<1x128xf32> to vector<8x128xf32>
    %502 = arith.addf %498, %501 : vector<8x128xf32>
    %503 = vector.extract_strided_slice %502 {offsets = [0, 0], sizes = [8, 96], strides = [1, 1]} : vector<8x128xf32> to vector<8x96xf32>
    %cst_237 = arith.constant 5.000000e-01 : f32
    %504 = vector.broadcast %cst_237 : f32 to vector<8x96xf32>
    %505 = arith.mulf %504, %503 : vector<8x96xf32>
    %506 = math.tanh %505 : vector<8x96xf32>
    %cst_238 = arith.constant 5.000000e-01 : f32
    %507 = vector.broadcast %cst_238 : f32 to vector<8x96xf32>
    %508 = arith.mulf %507, %506 : vector<8x96xf32>
    %cst_239 = arith.constant 5.000000e-01 : f32
    %509 = vector.broadcast %cst_239 : f32 to vector<8x96xf32>
    %510 = arith.addf %508, %509 : vector<8x96xf32>
    %511 = vector.extract_strided_slice %510 {offsets = [0, 0], sizes = [8, 32], strides = [1, 1]} : vector<8x96xf32> to vector<8x32xf32>
    %512 = vector.extract_strided_slice %510 {offsets = [0, 32], sizes = [8, 32], strides = [1, 1]} : vector<8x96xf32> to vector<8x32xf32>
    %513 = vector.extract_strided_slice %510 {offsets = [0, 64], sizes = [8, 32], strides = [1, 1]} : vector<8x96xf32> to vector<8x32xf32>
    %514 = vector.extract_strided_slice %502 {offsets = [0, 96], sizes = [8, 32], strides = [1, 1]} : vector<8x128xf32> to vector<8x32xf32>
    %515 = math.tanh %514 : vector<8x32xf32>
    %516 = arith.mulf %512, %366 : vector<8x32xf32>
    %517 = arith.mulf %511, %515 : vector<8x32xf32>
    %518 = arith.addf %516, %517 : vector<8x32xf32>
    %519 = math.tanh %518 : vector<8x32xf32>
    %520 = arith.mulf %513, %519 : vector<8x32xf32>
    %521 = arith.truncf %520 : vector<8x32xf32> to vector<8x32xbf16>
    %c2_240 = arith.constant 2 : index
    %c0_241 = arith.constant 0 : index
    %c0_242 = arith.constant 0 : index
    %522 = vector.load %arg1[%c2_240, %c0_241, %c0_242] : memref<5x32x128xbf16, #tpu.memory_space<vmem>>, vector<1x32x128xbf16>
    %523 = vector.shape_cast %522 : vector<1x32x128xbf16> to vector<32x128xbf16>
    %cst_243 = arith.constant dense<0.000000e+00> : vector<8x128xf32>
    %524 = tpu.matmul %429, %523, %cst_243 {dimension_numbers = #tpu.dot_dimension_numbers<[1], [0], [0], [1], [0, 0, 1, 1], [], []>} : vector<8x32xbf16>, vector<32x128xbf16>, vector<8x128xf32> -> vector<8x128xf32>
    %c2_244 = arith.constant 2 : index
    %c0_245 = arith.constant 0 : index
    %c0_246 = arith.constant 0 : index
    %525 = vector.load %arg2[%c2_244, %c0_245, %c0_246] : memref<5x32x128xbf16, #tpu.memory_space<vmem>>, vector<1x32x128xbf16>
    %526 = vector.shape_cast %525 : vector<1x32x128xbf16> to vector<32x128xbf16>
    %cst_247 = arith.constant dense<0.000000e+00> : vector<8x128xf32>
    %527 = tpu.matmul %399, %526, %cst_247 {dimension_numbers = #tpu.dot_dimension_numbers<[1], [0], [0], [1], [0, 0, 1, 1], [], []>} : vector<8x32xbf16>, vector<32x128xbf16>, vector<8x128xf32> -> vector<8x128xf32>
    %528 = arith.addf %524, %527 : vector<8x128xf32>
    %c2_248 = arith.constant 2 : index
    %c0_249 = arith.constant 0 : index
    %c0_250 = arith.constant 0 : index
    %529 = vector.load %arg3[%c2_248, %c0_249, %c0_250] : memref<5x1x128xf32, #tpu.memory_space<vmem>>, vector<1x1x128xf32>
    %530 = vector.shape_cast %529 : vector<1x1x128xf32> to vector<1x128xf32>
    %531 = vector.broadcast %530 : vector<1x128xf32> to vector<8x128xf32>
    %532 = arith.addf %528, %531 : vector<8x128xf32>
    %533 = vector.extract_strided_slice %532 {offsets = [0, 0], sizes = [8, 96], strides = [1, 1]} : vector<8x128xf32> to vector<8x96xf32>
    %cst_251 = arith.constant 5.000000e-01 : f32
    %534 = vector.broadcast %cst_251 : f32 to vector<8x96xf32>
    %535 = arith.mulf %534, %533 : vector<8x96xf32>
    %536 = math.tanh %535 : vector<8x96xf32>
    %cst_252 = arith.constant 5.000000e-01 : f32
    %537 = vector.broadcast %cst_252 : f32 to vector<8x96xf32>
    %538 = arith.mulf %537, %536 : vector<8x96xf32>
    %cst_253 = arith.constant 5.000000e-01 : f32
    %539 = vector.broadcast %cst_253 : f32 to vector<8x96xf32>
    %540 = arith.addf %538, %539 : vector<8x96xf32>
    %541 = vector.extract_strided_slice %540 {offsets = [0, 0], sizes = [8, 32], strides = [1, 1]} : vector<8x96xf32> to vector<8x32xf32>
    %542 = vector.extract_strided_slice %540 {offsets = [0, 32], sizes = [8, 32], strides = [1, 1]} : vector<8x96xf32> to vector<8x32xf32>
    %543 = vector.extract_strided_slice %540 {offsets = [0, 64], sizes = [8, 32], strides = [1, 1]} : vector<8x96xf32> to vector<8x32xf32>
    %544 = vector.extract_strided_slice %532 {offsets = [0, 96], sizes = [8, 32], strides = [1, 1]} : vector<8x128xf32> to vector<8x32xf32>
    %545 = math.tanh %544 : vector<8x32xf32>
    %546 = arith.mulf %542, %396 : vector<8x32xf32>
    %547 = arith.mulf %541, %545 : vector<8x32xf32>
    %548 = arith.addf %546, %547 : vector<8x32xf32>
    %549 = math.tanh %548 : vector<8x32xf32>
    %550 = arith.mulf %543, %549 : vector<8x32xf32>
    %551 = arith.truncf %550 : vector<8x32xf32> to vector<8x32xbf16>
    %c1_254 = arith.constant 1 : index
    %c0_255 = arith.constant 0 : index
    %c0_256 = arith.constant 0 : index
    %552 = vector.load %arg1[%c1_254, %c0_255, %c0_256] : memref<5x32x128xbf16, #tpu.memory_space<vmem>>, vector<1x32x128xbf16>
    %553 = vector.shape_cast %552 : vector<1x32x128xbf16> to vector<32x128xbf16>
    %cst_257 = arith.constant dense<0.000000e+00> : vector<8x128xf32>
    %554 = tpu.matmul %461, %553, %cst_257 {dimension_numbers = #tpu.dot_dimension_numbers<[1], [0], [0], [1], [0, 0, 1, 1], [], []>} : vector<8x32xbf16>, vector<32x128xbf16>, vector<8x128xf32> -> vector<8x128xf32>
    %c1_258 = arith.constant 1 : index
    %c0_259 = arith.constant 0 : index
    %c0_260 = arith.constant 0 : index
    %555 = vector.load %arg2[%c1_258, %c0_259, %c0_260] : memref<5x32x128xbf16, #tpu.memory_space<vmem>>, vector<1x32x128xbf16>
    %556 = vector.shape_cast %555 : vector<1x32x128xbf16> to vector<32x128xbf16>
    %cst_261 = arith.constant dense<0.000000e+00> : vector<8x128xf32>
    %557 = tpu.matmul %429, %556, %cst_261 {dimension_numbers = #tpu.dot_dimension_numbers<[1], [0], [0], [1], [0, 0, 1, 1], [], []>} : vector<8x32xbf16>, vector<32x128xbf16>, vector<8x128xf32> -> vector<8x128xf32>
    %558 = arith.addf %554, %557 : vector<8x128xf32>
    %c1_262 = arith.constant 1 : index
    %c0_263 = arith.constant 0 : index
    %c0_264 = arith.constant 0 : index
    %559 = vector.load %arg3[%c1_262, %c0_263, %c0_264] : memref<5x1x128xf32, #tpu.memory_space<vmem>>, vector<1x1x128xf32>
    %560 = vector.shape_cast %559 : vector<1x1x128xf32> to vector<1x128xf32>
    %561 = vector.broadcast %560 : vector<1x128xf32> to vector<8x128xf32>
    %562 = arith.addf %558, %561 : vector<8x128xf32>
    %563 = vector.extract_strided_slice %562 {offsets = [0, 0], sizes = [8, 96], strides = [1, 1]} : vector<8x128xf32> to vector<8x96xf32>
    %cst_265 = arith.constant 5.000000e-01 : f32
    %564 = vector.broadcast %cst_265 : f32 to vector<8x96xf32>
    %565 = arith.mulf %564, %563 : vector<8x96xf32>
    %566 = math.tanh %565 : vector<8x96xf32>
    %cst_266 = arith.constant 5.000000e-01 : f32
    %567 = vector.broadcast %cst_266 : f32 to vector<8x96xf32>
    %568 = arith.mulf %567, %566 : vector<8x96xf32>
    %cst_267 = arith.constant 5.000000e-01 : f32
    %569 = vector.broadcast %cst_267 : f32 to vector<8x96xf32>
    %570 = arith.addf %568, %569 : vector<8x96xf32>
    %571 = vector.extract_strided_slice %570 {offsets = [0, 0], sizes = [8, 32], strides = [1, 1]} : vector<8x96xf32> to vector<8x32xf32>
    %572 = vector.extract_strided_slice %570 {offsets = [0, 32], sizes = [8, 32], strides = [1, 1]} : vector<8x96xf32> to vector<8x32xf32>
    %573 = vector.extract_strided_slice %570 {offsets = [0, 64], sizes = [8, 32], strides = [1, 1]} : vector<8x96xf32> to vector<8x32xf32>
    %574 = vector.extract_strided_slice %562 {offsets = [0, 96], sizes = [8, 32], strides = [1, 1]} : vector<8x128xf32> to vector<8x32xf32>
    %575 = math.tanh %574 : vector<8x32xf32>
    %576 = arith.mulf %572, %426 : vector<8x32xf32>
    %577 = arith.mulf %571, %575 : vector<8x32xf32>
    %578 = arith.addf %576, %577 : vector<8x32xf32>
    %579 = math.tanh %578 : vector<8x32xf32>
    %580 = arith.mulf %573, %579 : vector<8x32xf32>
    %581 = arith.truncf %580 : vector<8x32xf32> to vector<8x32xbf16>
    %c40 = arith.constant 40 : index
    %c0_268 = arith.constant 0 : index
    %582 = vector.load %arg0[%c40, %c0_268] : memref<64x32xf32, #tpu.memory_space<vmem>>, vector<8x32xf32>
    %583 = arith.truncf %582 : vector<8x32xf32> to vector<8x32xbf16>
    %c0_269 = arith.constant 0 : index
    %c0_270 = arith.constant 0 : index
    %c0_271 = arith.constant 0 : index
    %584 = vector.load %arg1[%c0_269, %c0_270, %c0_271] : memref<5x32x128xbf16, #tpu.memory_space<vmem>>, vector<1x32x128xbf16>
    %585 = vector.shape_cast %584 : vector<1x32x128xbf16> to vector<32x128xbf16>
    %cst_272 = arith.constant dense<0.000000e+00> : vector<8x128xf32>
    %586 = tpu.matmul %583, %585, %cst_272 {dimension_numbers = #tpu.dot_dimension_numbers<[1], [0], [0], [1], [0, 0, 1, 1], [], []>} : vector<8x32xbf16>, vector<32x128xbf16>, vector<8x128xf32> -> vector<8x128xf32>
    %c0_273 = arith.constant 0 : index
    %c0_274 = arith.constant 0 : index
    %c0_275 = arith.constant 0 : index
    %587 = vector.load %arg2[%c0_273, %c0_274, %c0_275] : memref<5x32x128xbf16, #tpu.memory_space<vmem>>, vector<1x32x128xbf16>
    %588 = vector.shape_cast %587 : vector<1x32x128xbf16> to vector<32x128xbf16>
    %cst_276 = arith.constant dense<0.000000e+00> : vector<8x128xf32>
    %589 = tpu.matmul %461, %588, %cst_276 {dimension_numbers = #tpu.dot_dimension_numbers<[1], [0], [0], [1], [0, 0, 1, 1], [], []>} : vector<8x32xbf16>, vector<32x128xbf16>, vector<8x128xf32> -> vector<8x128xf32>
    %590 = arith.addf %586, %589 : vector<8x128xf32>
    %c0_277 = arith.constant 0 : index
    %c0_278 = arith.constant 0 : index
    %c0_279 = arith.constant 0 : index
    %591 = vector.load %arg3[%c0_277, %c0_278, %c0_279] : memref<5x1x128xf32, #tpu.memory_space<vmem>>, vector<1x1x128xf32>
    %592 = vector.shape_cast %591 : vector<1x1x128xf32> to vector<1x128xf32>
    %593 = vector.broadcast %592 : vector<1x128xf32> to vector<8x128xf32>
    %594 = arith.addf %590, %593 : vector<8x128xf32>
    %595 = vector.extract_strided_slice %594 {offsets = [0, 0], sizes = [8, 96], strides = [1, 1]} : vector<8x128xf32> to vector<8x96xf32>
    %cst_280 = arith.constant 5.000000e-01 : f32
    %596 = vector.broadcast %cst_280 : f32 to vector<8x96xf32>
    %597 = arith.mulf %596, %595 : vector<8x96xf32>
    %598 = math.tanh %597 : vector<8x96xf32>
    %cst_281 = arith.constant 5.000000e-01 : f32
    %599 = vector.broadcast %cst_281 : f32 to vector<8x96xf32>
    %600 = arith.mulf %599, %598 : vector<8x96xf32>
    %cst_282 = arith.constant 5.000000e-01 : f32
    %601 = vector.broadcast %cst_282 : f32 to vector<8x96xf32>
    %602 = arith.addf %600, %601 : vector<8x96xf32>
    %603 = vector.extract_strided_slice %602 {offsets = [0, 0], sizes = [8, 32], strides = [1, 1]} : vector<8x96xf32> to vector<8x32xf32>
    %604 = vector.extract_strided_slice %602 {offsets = [0, 32], sizes = [8, 32], strides = [1, 1]} : vector<8x96xf32> to vector<8x32xf32>
    %605 = vector.extract_strided_slice %602 {offsets = [0, 64], sizes = [8, 32], strides = [1, 1]} : vector<8x96xf32> to vector<8x32xf32>
    %606 = vector.extract_strided_slice %594 {offsets = [0, 96], sizes = [8, 32], strides = [1, 1]} : vector<8x128xf32> to vector<8x32xf32>
    %607 = math.tanh %606 : vector<8x32xf32>
    %608 = arith.mulf %604, %458 : vector<8x32xf32>
    %609 = arith.mulf %603, %607 : vector<8x32xf32>
    %610 = arith.addf %608, %609 : vector<8x32xf32>
    %611 = math.tanh %610 : vector<8x32xf32>
    %612 = arith.mulf %605, %611 : vector<8x32xf32>
    %613 = arith.truncf %612 : vector<8x32xf32> to vector<8x32xbf16>
    %c4_283 = arith.constant 4 : index
    %c0_284 = arith.constant 0 : index
    %c0_285 = arith.constant 0 : index
    %614 = vector.load %arg1[%c4_283, %c0_284, %c0_285] : memref<5x32x128xbf16, #tpu.memory_space<vmem>>, vector<1x32x128xbf16>
    %615 = vector.shape_cast %614 : vector<1x32x128xbf16> to vector<32x128xbf16>
    %cst_286 = arith.constant dense<0.000000e+00> : vector<8x128xf32>
    %616 = tpu.matmul %521, %615, %cst_286 {dimension_numbers = #tpu.dot_dimension_numbers<[1], [0], [0], [1], [0, 0, 1, 1], [], []>} : vector<8x32xbf16>, vector<32x128xbf16>, vector<8x128xf32> -> vector<8x128xf32>
    %c4_287 = arith.constant 4 : index
    %c0_288 = arith.constant 0 : index
    %c0_289 = arith.constant 0 : index
    %617 = vector.load %arg2[%c4_287, %c0_288, %c0_289] : memref<5x32x128xbf16, #tpu.memory_space<vmem>>, vector<1x32x128xbf16>
    %618 = vector.shape_cast %617 : vector<1x32x128xbf16> to vector<32x128xbf16>
    %cst_290 = arith.constant dense<0.000000e+00> : vector<8x128xf32>
    %619 = tpu.matmul %491, %618, %cst_290 {dimension_numbers = #tpu.dot_dimension_numbers<[1], [0], [0], [1], [0, 0, 1, 1], [], []>} : vector<8x32xbf16>, vector<32x128xbf16>, vector<8x128xf32> -> vector<8x128xf32>
    %620 = arith.addf %616, %619 : vector<8x128xf32>
    %c4_291 = arith.constant 4 : index
    %c0_292 = arith.constant 0 : index
    %c0_293 = arith.constant 0 : index
    %621 = vector.load %arg3[%c4_291, %c0_292, %c0_293] : memref<5x1x128xf32, #tpu.memory_space<vmem>>, vector<1x1x128xf32>
    %622 = vector.shape_cast %621 : vector<1x1x128xf32> to vector<1x128xf32>
    %623 = vector.broadcast %622 : vector<1x128xf32> to vector<8x128xf32>
    %624 = arith.addf %620, %623 : vector<8x128xf32>
    %625 = vector.extract_strided_slice %624 {offsets = [0, 0], sizes = [8, 96], strides = [1, 1]} : vector<8x128xf32> to vector<8x96xf32>
    %cst_294 = arith.constant 5.000000e-01 : f32
    %626 = vector.broadcast %cst_294 : f32 to vector<8x96xf32>
    %627 = arith.mulf %626, %625 : vector<8x96xf32>
    %628 = math.tanh %627 : vector<8x96xf32>
    %cst_295 = arith.constant 5.000000e-01 : f32
    %629 = vector.broadcast %cst_295 : f32 to vector<8x96xf32>
    %630 = arith.mulf %629, %628 : vector<8x96xf32>
    %cst_296 = arith.constant 5.000000e-01 : f32
    %631 = vector.broadcast %cst_296 : f32 to vector<8x96xf32>
    %632 = arith.addf %630, %631 : vector<8x96xf32>
    %633 = vector.extract_strided_slice %632 {offsets = [0, 0], sizes = [8, 32], strides = [1, 1]} : vector<8x96xf32> to vector<8x32xf32>
    %634 = vector.extract_strided_slice %632 {offsets = [0, 32], sizes = [8, 32], strides = [1, 1]} : vector<8x96xf32> to vector<8x32xf32>
    %635 = vector.extract_strided_slice %632 {offsets = [0, 64], sizes = [8, 32], strides = [1, 1]} : vector<8x96xf32> to vector<8x32xf32>
    %636 = vector.extract_strided_slice %624 {offsets = [0, 96], sizes = [8, 32], strides = [1, 1]} : vector<8x128xf32> to vector<8x32xf32>
    %637 = math.tanh %636 : vector<8x32xf32>
    %638 = arith.mulf %634, %488 : vector<8x32xf32>
    %639 = arith.mulf %633, %637 : vector<8x32xf32>
    %640 = arith.addf %638, %639 : vector<8x32xf32>
    %641 = math.tanh %640 : vector<8x32xf32>
    %642 = arith.mulf %635, %641 : vector<8x32xf32>
    %643 = arith.truncf %642 : vector<8x32xf32> to vector<8x32xbf16>
    %c3_297 = arith.constant 3 : index
    %c0_298 = arith.constant 0 : index
    %c0_299 = arith.constant 0 : index
    %644 = vector.load %arg1[%c3_297, %c0_298, %c0_299] : memref<5x32x128xbf16, #tpu.memory_space<vmem>>, vector<1x32x128xbf16>
    %645 = vector.shape_cast %644 : vector<1x32x128xbf16> to vector<32x128xbf16>
    %cst_300 = arith.constant dense<0.000000e+00> : vector<8x128xf32>
    %646 = tpu.matmul %551, %645, %cst_300 {dimension_numbers = #tpu.dot_dimension_numbers<[1], [0], [0], [1], [0, 0, 1, 1], [], []>} : vector<8x32xbf16>, vector<32x128xbf16>, vector<8x128xf32> -> vector<8x128xf32>
    %c3_301 = arith.constant 3 : index
    %c0_302 = arith.constant 0 : index
    %c0_303 = arith.constant 0 : index
    %647 = vector.load %arg2[%c3_301, %c0_302, %c0_303] : memref<5x32x128xbf16, #tpu.memory_space<vmem>>, vector<1x32x128xbf16>
    %648 = vector.shape_cast %647 : vector<1x32x128xbf16> to vector<32x128xbf16>
    %cst_304 = arith.constant dense<0.000000e+00> : vector<8x128xf32>
    %649 = tpu.matmul %521, %648, %cst_304 {dimension_numbers = #tpu.dot_dimension_numbers<[1], [0], [0], [1], [0, 0, 1, 1], [], []>} : vector<8x32xbf16>, vector<32x128xbf16>, vector<8x128xf32> -> vector<8x128xf32>
    %650 = arith.addf %646, %649 : vector<8x128xf32>
    %c3_305 = arith.constant 3 : index
    %c0_306 = arith.constant 0 : index
    %c0_307 = arith.constant 0 : index
    %651 = vector.load %arg3[%c3_305, %c0_306, %c0_307] : memref<5x1x128xf32, #tpu.memory_space<vmem>>, vector<1x1x128xf32>
    %652 = vector.shape_cast %651 : vector<1x1x128xf32> to vector<1x128xf32>
    %653 = vector.broadcast %652 : vector<1x128xf32> to vector<8x128xf32>
    %654 = arith.addf %650, %653 : vector<8x128xf32>
    %655 = vector.extract_strided_slice %654 {offsets = [0, 0], sizes = [8, 96], strides = [1, 1]} : vector<8x128xf32> to vector<8x96xf32>
    %cst_308 = arith.constant 5.000000e-01 : f32
    %656 = vector.broadcast %cst_308 : f32 to vector<8x96xf32>
    %657 = arith.mulf %656, %655 : vector<8x96xf32>
    %658 = math.tanh %657 : vector<8x96xf32>
    %cst_309 = arith.constant 5.000000e-01 : f32
    %659 = vector.broadcast %cst_309 : f32 to vector<8x96xf32>
    %660 = arith.mulf %659, %658 : vector<8x96xf32>
    %cst_310 = arith.constant 5.000000e-01 : f32
    %661 = vector.broadcast %cst_310 : f32 to vector<8x96xf32>
    %662 = arith.addf %660, %661 : vector<8x96xf32>
    %663 = vector.extract_strided_slice %662 {offsets = [0, 0], sizes = [8, 32], strides = [1, 1]} : vector<8x96xf32> to vector<8x32xf32>
    %664 = vector.extract_strided_slice %662 {offsets = [0, 32], sizes = [8, 32], strides = [1, 1]} : vector<8x96xf32> to vector<8x32xf32>
    %665 = vector.extract_strided_slice %662 {offsets = [0, 64], sizes = [8, 32], strides = [1, 1]} : vector<8x96xf32> to vector<8x32xf32>
    %666 = vector.extract_strided_slice %654 {offsets = [0, 96], sizes = [8, 32], strides = [1, 1]} : vector<8x128xf32> to vector<8x32xf32>
    %667 = math.tanh %666 : vector<8x32xf32>
    %668 = arith.mulf %664, %518 : vector<8x32xf32>
    %669 = arith.mulf %663, %667 : vector<8x32xf32>
    %670 = arith.addf %668, %669 : vector<8x32xf32>
    %671 = math.tanh %670 : vector<8x32xf32>
    %672 = arith.mulf %665, %671 : vector<8x32xf32>
    %673 = arith.truncf %672 : vector<8x32xf32> to vector<8x32xbf16>
    %c2_311 = arith.constant 2 : index
    %c0_312 = arith.constant 0 : index
    %c0_313 = arith.constant 0 : index
    %674 = vector.load %arg1[%c2_311, %c0_312, %c0_313] : memref<5x32x128xbf16, #tpu.memory_space<vmem>>, vector<1x32x128xbf16>
    %675 = vector.shape_cast %674 : vector<1x32x128xbf16> to vector<32x128xbf16>
    %cst_314 = arith.constant dense<0.000000e+00> : vector<8x128xf32>
    %676 = tpu.matmul %581, %675, %cst_314 {dimension_numbers = #tpu.dot_dimension_numbers<[1], [0], [0], [1], [0, 0, 1, 1], [], []>} : vector<8x32xbf16>, vector<32x128xbf16>, vector<8x128xf32> -> vector<8x128xf32>
    %c2_315 = arith.constant 2 : index
    %c0_316 = arith.constant 0 : index
    %c0_317 = arith.constant 0 : index
    %677 = vector.load %arg2[%c2_315, %c0_316, %c0_317] : memref<5x32x128xbf16, #tpu.memory_space<vmem>>, vector<1x32x128xbf16>
    %678 = vector.shape_cast %677 : vector<1x32x128xbf16> to vector<32x128xbf16>
    %cst_318 = arith.constant dense<0.000000e+00> : vector<8x128xf32>
    %679 = tpu.matmul %551, %678, %cst_318 {dimension_numbers = #tpu.dot_dimension_numbers<[1], [0], [0], [1], [0, 0, 1, 1], [], []>} : vector<8x32xbf16>, vector<32x128xbf16>, vector<8x128xf32> -> vector<8x128xf32>
    %680 = arith.addf %676, %679 : vector<8x128xf32>
    %c2_319 = arith.constant 2 : index
    %c0_320 = arith.constant 0 : index
    %c0_321 = arith.constant 0 : index
    %681 = vector.load %arg3[%c2_319, %c0_320, %c0_321] : memref<5x1x128xf32, #tpu.memory_space<vmem>>, vector<1x1x128xf32>
    %682 = vector.shape_cast %681 : vector<1x1x128xf32> to vector<1x128xf32>
    %683 = vector.broadcast %682 : vector<1x128xf32> to vector<8x128xf32>
    %684 = arith.addf %680, %683 : vector<8x128xf32>
    %685 = vector.extract_strided_slice %684 {offsets = [0, 0], sizes = [8, 96], strides = [1, 1]} : vector<8x128xf32> to vector<8x96xf32>
    %cst_322 = arith.constant 5.000000e-01 : f32
    %686 = vector.broadcast %cst_322 : f32 to vector<8x96xf32>
    %687 = arith.mulf %686, %685 : vector<8x96xf32>
    %688 = math.tanh %687 : vector<8x96xf32>
    %cst_323 = arith.constant 5.000000e-01 : f32
    %689 = vector.broadcast %cst_323 : f32 to vector<8x96xf32>
    %690 = arith.mulf %689, %688 : vector<8x96xf32>
    %cst_324 = arith.constant 5.000000e-01 : f32
    %691 = vector.broadcast %cst_324 : f32 to vector<8x96xf32>
    %692 = arith.addf %690, %691 : vector<8x96xf32>
    %693 = vector.extract_strided_slice %692 {offsets = [0, 0], sizes = [8, 32], strides = [1, 1]} : vector<8x96xf32> to vector<8x32xf32>
    %694 = vector.extract_strided_slice %692 {offsets = [0, 32], sizes = [8, 32], strides = [1, 1]} : vector<8x96xf32> to vector<8x32xf32>
    %695 = vector.extract_strided_slice %692 {offsets = [0, 64], sizes = [8, 32], strides = [1, 1]} : vector<8x96xf32> to vector<8x32xf32>
    %696 = vector.extract_strided_slice %684 {offsets = [0, 96], sizes = [8, 32], strides = [1, 1]} : vector<8x128xf32> to vector<8x32xf32>
    %697 = math.tanh %696 : vector<8x32xf32>
    %698 = arith.mulf %694, %548 : vector<8x32xf32>
    %699 = arith.mulf %693, %697 : vector<8x32xf32>
    %700 = arith.addf %698, %699 : vector<8x32xf32>
    %701 = math.tanh %700 : vector<8x32xf32>
    %702 = arith.mulf %695, %701 : vector<8x32xf32>
    %703 = arith.truncf %702 : vector<8x32xf32> to vector<8x32xbf16>
    %c1_325 = arith.constant 1 : index
    %c0_326 = arith.constant 0 : index
    %c0_327 = arith.constant 0 : index
    %704 = vector.load %arg1[%c1_325, %c0_326, %c0_327] : memref<5x32x128xbf16, #tpu.memory_space<vmem>>, vector<1x32x128xbf16>
    %705 = vector.shape_cast %704 : vector<1x32x128xbf16> to vector<32x128xbf16>
    %cst_328 = arith.constant dense<0.000000e+00> : vector<8x128xf32>
    %706 = tpu.matmul %613, %705, %cst_328 {dimension_numbers = #tpu.dot_dimension_numbers<[1], [0], [0], [1], [0, 0, 1, 1], [], []>} : vector<8x32xbf16>, vector<32x128xbf16>, vector<8x128xf32> -> vector<8x128xf32>
    %c1_329 = arith.constant 1 : index
    %c0_330 = arith.constant 0 : index
    %c0_331 = arith.constant 0 : index
    %707 = vector.load %arg2[%c1_329, %c0_330, %c0_331] : memref<5x32x128xbf16, #tpu.memory_space<vmem>>, vector<1x32x128xbf16>
    %708 = vector.shape_cast %707 : vector<1x32x128xbf16> to vector<32x128xbf16>
    %cst_332 = arith.constant dense<0.000000e+00> : vector<8x128xf32>
    %709 = tpu.matmul %581, %708, %cst_332 {dimension_numbers = #tpu.dot_dimension_numbers<[1], [0], [0], [1], [0, 0, 1, 1], [], []>} : vector<8x32xbf16>, vector<32x128xbf16>, vector<8x128xf32> -> vector<8x128xf32>
    %710 = arith.addf %706, %709 : vector<8x128xf32>
    %c1_333 = arith.constant 1 : index
    %c0_334 = arith.constant 0 : index
    %c0_335 = arith.constant 0 : index
    %711 = vector.load %arg3[%c1_333, %c0_334, %c0_335] : memref<5x1x128xf32, #tpu.memory_space<vmem>>, vector<1x1x128xf32>
    %712 = vector.shape_cast %711 : vector<1x1x128xf32> to vector<1x128xf32>
    %713 = vector.broadcast %712 : vector<1x128xf32> to vector<8x128xf32>
    %714 = arith.addf %710, %713 : vector<8x128xf32>
    %715 = vector.extract_strided_slice %714 {offsets = [0, 0], sizes = [8, 96], strides = [1, 1]} : vector<8x128xf32> to vector<8x96xf32>
    %cst_336 = arith.constant 5.000000e-01 : f32
    %716 = vector.broadcast %cst_336 : f32 to vector<8x96xf32>
    %717 = arith.mulf %716, %715 : vector<8x96xf32>
    %718 = math.tanh %717 : vector<8x96xf32>
    %cst_337 = arith.constant 5.000000e-01 : f32
    %719 = vector.broadcast %cst_337 : f32 to vector<8x96xf32>
    %720 = arith.mulf %719, %718 : vector<8x96xf32>
    %cst_338 = arith.constant 5.000000e-01 : f32
    %721 = vector.broadcast %cst_338 : f32 to vector<8x96xf32>
    %722 = arith.addf %720, %721 : vector<8x96xf32>
    %723 = vector.extract_strided_slice %722 {offsets = [0, 0], sizes = [8, 32], strides = [1, 1]} : vector<8x96xf32> to vector<8x32xf32>
    %724 = vector.extract_strided_slice %722 {offsets = [0, 32], sizes = [8, 32], strides = [1, 1]} : vector<8x96xf32> to vector<8x32xf32>
    %725 = vector.extract_strided_slice %722 {offsets = [0, 64], sizes = [8, 32], strides = [1, 1]} : vector<8x96xf32> to vector<8x32xf32>
    %726 = vector.extract_strided_slice %714 {offsets = [0, 96], sizes = [8, 32], strides = [1, 1]} : vector<8x128xf32> to vector<8x32xf32>
    %727 = math.tanh %726 : vector<8x32xf32>
    %728 = arith.mulf %724, %578 : vector<8x32xf32>
    %729 = arith.mulf %723, %727 : vector<8x32xf32>
    %730 = arith.addf %728, %729 : vector<8x32xf32>
    %731 = math.tanh %730 : vector<8x32xf32>
    %732 = arith.mulf %725, %731 : vector<8x32xf32>
    %733 = arith.truncf %732 : vector<8x32xf32> to vector<8x32xbf16>
    %c48 = arith.constant 48 : index
    %c0_339 = arith.constant 0 : index
    %734 = vector.load %arg0[%c48, %c0_339] : memref<64x32xf32, #tpu.memory_space<vmem>>, vector<8x32xf32>
    %735 = arith.truncf %734 : vector<8x32xf32> to vector<8x32xbf16>
    %c0_340 = arith.constant 0 : index
    %c0_341 = arith.constant 0 : index
    %c0_342 = arith.constant 0 : index
    %736 = vector.load %arg1[%c0_340, %c0_341, %c0_342] : memref<5x32x128xbf16, #tpu.memory_space<vmem>>, vector<1x32x128xbf16>
    %737 = vector.shape_cast %736 : vector<1x32x128xbf16> to vector<32x128xbf16>
    %cst_343 = arith.constant dense<0.000000e+00> : vector<8x128xf32>
    %738 = tpu.matmul %735, %737, %cst_343 {dimension_numbers = #tpu.dot_dimension_numbers<[1], [0], [0], [1], [0, 0, 1, 1], [], []>} : vector<8x32xbf16>, vector<32x128xbf16>, vector<8x128xf32> -> vector<8x128xf32>
    %c0_344 = arith.constant 0 : index
    %c0_345 = arith.constant 0 : index
    %c0_346 = arith.constant 0 : index
    %739 = vector.load %arg2[%c0_344, %c0_345, %c0_346] : memref<5x32x128xbf16, #tpu.memory_space<vmem>>, vector<1x32x128xbf16>
    %740 = vector.shape_cast %739 : vector<1x32x128xbf16> to vector<32x128xbf16>
    %cst_347 = arith.constant dense<0.000000e+00> : vector<8x128xf32>
    %741 = tpu.matmul %613, %740, %cst_347 {dimension_numbers = #tpu.dot_dimension_numbers<[1], [0], [0], [1], [0, 0, 1, 1], [], []>} : vector<8x32xbf16>, vector<32x128xbf16>, vector<8x128xf32> -> vector<8x128xf32>
    %742 = arith.addf %738, %741 : vector<8x128xf32>
    %c0_348 = arith.constant 0 : index
    %c0_349 = arith.constant 0 : index
    %c0_350 = arith.constant 0 : index
    %743 = vector.load %arg3[%c0_348, %c0_349, %c0_350] : memref<5x1x128xf32, #tpu.memory_space<vmem>>, vector<1x1x128xf32>
    %744 = vector.shape_cast %743 : vector<1x1x128xf32> to vector<1x128xf32>
    %745 = vector.broadcast %744 : vector<1x128xf32> to vector<8x128xf32>
    %746 = arith.addf %742, %745 : vector<8x128xf32>
    %747 = vector.extract_strided_slice %746 {offsets = [0, 0], sizes = [8, 96], strides = [1, 1]} : vector<8x128xf32> to vector<8x96xf32>
    %cst_351 = arith.constant 5.000000e-01 : f32
    %748 = vector.broadcast %cst_351 : f32 to vector<8x96xf32>
    %749 = arith.mulf %748, %747 : vector<8x96xf32>
    %750 = math.tanh %749 : vector<8x96xf32>
    %cst_352 = arith.constant 5.000000e-01 : f32
    %751 = vector.broadcast %cst_352 : f32 to vector<8x96xf32>
    %752 = arith.mulf %751, %750 : vector<8x96xf32>
    %cst_353 = arith.constant 5.000000e-01 : f32
    %753 = vector.broadcast %cst_353 : f32 to vector<8x96xf32>
    %754 = arith.addf %752, %753 : vector<8x96xf32>
    %755 = vector.extract_strided_slice %754 {offsets = [0, 0], sizes = [8, 32], strides = [1, 1]} : vector<8x96xf32> to vector<8x32xf32>
    %756 = vector.extract_strided_slice %754 {offsets = [0, 32], sizes = [8, 32], strides = [1, 1]} : vector<8x96xf32> to vector<8x32xf32>
    %757 = vector.extract_strided_slice %754 {offsets = [0, 64], sizes = [8, 32], strides = [1, 1]} : vector<8x96xf32> to vector<8x32xf32>
    %758 = vector.extract_strided_slice %746 {offsets = [0, 96], sizes = [8, 32], strides = [1, 1]} : vector<8x128xf32> to vector<8x32xf32>
    %759 = math.tanh %758 : vector<8x32xf32>
    %760 = arith.mulf %756, %610 : vector<8x32xf32>
    %761 = arith.mulf %755, %759 : vector<8x32xf32>
    %762 = arith.addf %760, %761 : vector<8x32xf32>
    %763 = math.tanh %762 : vector<8x32xf32>
    %764 = arith.mulf %757, %763 : vector<8x32xf32>
    %765 = arith.truncf %764 : vector<8x32xf32> to vector<8x32xbf16>
    %c4_354 = arith.constant 4 : index
    %c0_355 = arith.constant 0 : index
    %c0_356 = arith.constant 0 : index
    %766 = vector.load %arg1[%c4_354, %c0_355, %c0_356] : memref<5x32x128xbf16, #tpu.memory_space<vmem>>, vector<1x32x128xbf16>
    %767 = vector.shape_cast %766 : vector<1x32x128xbf16> to vector<32x128xbf16>
    %cst_357 = arith.constant dense<0.000000e+00> : vector<8x128xf32>
    %768 = tpu.matmul %673, %767, %cst_357 {dimension_numbers = #tpu.dot_dimension_numbers<[1], [0], [0], [1], [0, 0, 1, 1], [], []>} : vector<8x32xbf16>, vector<32x128xbf16>, vector<8x128xf32> -> vector<8x128xf32>
    %c4_358 = arith.constant 4 : index
    %c0_359 = arith.constant 0 : index
    %c0_360 = arith.constant 0 : index
    %769 = vector.load %arg2[%c4_358, %c0_359, %c0_360] : memref<5x32x128xbf16, #tpu.memory_space<vmem>>, vector<1x32x128xbf16>
    %770 = vector.shape_cast %769 : vector<1x32x128xbf16> to vector<32x128xbf16>
    %cst_361 = arith.constant dense<0.000000e+00> : vector<8x128xf32>
    %771 = tpu.matmul %643, %770, %cst_361 {dimension_numbers = #tpu.dot_dimension_numbers<[1], [0], [0], [1], [0, 0, 1, 1], [], []>} : vector<8x32xbf16>, vector<32x128xbf16>, vector<8x128xf32> -> vector<8x128xf32>
    %772 = arith.addf %768, %771 : vector<8x128xf32>
    %c4_362 = arith.constant 4 : index
    %c0_363 = arith.constant 0 : index
    %c0_364 = arith.constant 0 : index
    %773 = vector.load %arg3[%c4_362, %c0_363, %c0_364] : memref<5x1x128xf32, #tpu.memory_space<vmem>>, vector<1x1x128xf32>
    %774 = vector.shape_cast %773 : vector<1x1x128xf32> to vector<1x128xf32>
    %775 = vector.broadcast %774 : vector<1x128xf32> to vector<8x128xf32>
    %776 = arith.addf %772, %775 : vector<8x128xf32>
    %777 = vector.extract_strided_slice %776 {offsets = [0, 0], sizes = [8, 96], strides = [1, 1]} : vector<8x128xf32> to vector<8x96xf32>
    %cst_365 = arith.constant 5.000000e-01 : f32
    %778 = vector.broadcast %cst_365 : f32 to vector<8x96xf32>
    %779 = arith.mulf %778, %777 : vector<8x96xf32>
    %780 = math.tanh %779 : vector<8x96xf32>
    %cst_366 = arith.constant 5.000000e-01 : f32
    %781 = vector.broadcast %cst_366 : f32 to vector<8x96xf32>
    %782 = arith.mulf %781, %780 : vector<8x96xf32>
    %cst_367 = arith.constant 5.000000e-01 : f32
    %783 = vector.broadcast %cst_367 : f32 to vector<8x96xf32>
    %784 = arith.addf %782, %783 : vector<8x96xf32>
    %785 = vector.extract_strided_slice %784 {offsets = [0, 0], sizes = [8, 32], strides = [1, 1]} : vector<8x96xf32> to vector<8x32xf32>
    %786 = vector.extract_strided_slice %784 {offsets = [0, 32], sizes = [8, 32], strides = [1, 1]} : vector<8x96xf32> to vector<8x32xf32>
    %787 = vector.extract_strided_slice %784 {offsets = [0, 64], sizes = [8, 32], strides = [1, 1]} : vector<8x96xf32> to vector<8x32xf32>
    %788 = vector.extract_strided_slice %776 {offsets = [0, 96], sizes = [8, 32], strides = [1, 1]} : vector<8x128xf32> to vector<8x32xf32>
    %789 = math.tanh %788 : vector<8x32xf32>
    %790 = arith.mulf %786, %640 : vector<8x32xf32>
    %791 = arith.mulf %785, %789 : vector<8x32xf32>
    %792 = arith.addf %790, %791 : vector<8x32xf32>
    %793 = math.tanh %792 : vector<8x32xf32>
    %794 = arith.mulf %787, %793 : vector<8x32xf32>
    %795 = arith.truncf %794 : vector<8x32xf32> to vector<8x32xbf16>
    %c3_368 = arith.constant 3 : index
    %c0_369 = arith.constant 0 : index
    %c0_370 = arith.constant 0 : index
    %796 = vector.load %arg1[%c3_368, %c0_369, %c0_370] : memref<5x32x128xbf16, #tpu.memory_space<vmem>>, vector<1x32x128xbf16>
    %797 = vector.shape_cast %796 : vector<1x32x128xbf16> to vector<32x128xbf16>
    %cst_371 = arith.constant dense<0.000000e+00> : vector<8x128xf32>
    %798 = tpu.matmul %703, %797, %cst_371 {dimension_numbers = #tpu.dot_dimension_numbers<[1], [0], [0], [1], [0, 0, 1, 1], [], []>} : vector<8x32xbf16>, vector<32x128xbf16>, vector<8x128xf32> -> vector<8x128xf32>
    %c3_372 = arith.constant 3 : index
    %c0_373 = arith.constant 0 : index
    %c0_374 = arith.constant 0 : index
    %799 = vector.load %arg2[%c3_372, %c0_373, %c0_374] : memref<5x32x128xbf16, #tpu.memory_space<vmem>>, vector<1x32x128xbf16>
    %800 = vector.shape_cast %799 : vector<1x32x128xbf16> to vector<32x128xbf16>
    %cst_375 = arith.constant dense<0.000000e+00> : vector<8x128xf32>
    %801 = tpu.matmul %673, %800, %cst_375 {dimension_numbers = #tpu.dot_dimension_numbers<[1], [0], [0], [1], [0, 0, 1, 1], [], []>} : vector<8x32xbf16>, vector<32x128xbf16>, vector<8x128xf32> -> vector<8x128xf32>
    %802 = arith.addf %798, %801 : vector<8x128xf32>
    %c3_376 = arith.constant 3 : index
    %c0_377 = arith.constant 0 : index
    %c0_378 = arith.constant 0 : index
    %803 = vector.load %arg3[%c3_376, %c0_377, %c0_378] : memref<5x1x128xf32, #tpu.memory_space<vmem>>, vector<1x1x128xf32>
    %804 = vector.shape_cast %803 : vector<1x1x128xf32> to vector<1x128xf32>
    %805 = vector.broadcast %804 : vector<1x128xf32> to vector<8x128xf32>
    %806 = arith.addf %802, %805 : vector<8x128xf32>
    %807 = vector.extract_strided_slice %806 {offsets = [0, 0], sizes = [8, 96], strides = [1, 1]} : vector<8x128xf32> to vector<8x96xf32>
    %cst_379 = arith.constant 5.000000e-01 : f32
    %808 = vector.broadcast %cst_379 : f32 to vector<8x96xf32>
    %809 = arith.mulf %808, %807 : vector<8x96xf32>
    %810 = math.tanh %809 : vector<8x96xf32>
    %cst_380 = arith.constant 5.000000e-01 : f32
    %811 = vector.broadcast %cst_380 : f32 to vector<8x96xf32>
    %812 = arith.mulf %811, %810 : vector<8x96xf32>
    %cst_381 = arith.constant 5.000000e-01 : f32
    %813 = vector.broadcast %cst_381 : f32 to vector<8x96xf32>
    %814 = arith.addf %812, %813 : vector<8x96xf32>
    %815 = vector.extract_strided_slice %814 {offsets = [0, 0], sizes = [8, 32], strides = [1, 1]} : vector<8x96xf32> to vector<8x32xf32>
    %816 = vector.extract_strided_slice %814 {offsets = [0, 32], sizes = [8, 32], strides = [1, 1]} : vector<8x96xf32> to vector<8x32xf32>
    %817 = vector.extract_strided_slice %814 {offsets = [0, 64], sizes = [8, 32], strides = [1, 1]} : vector<8x96xf32> to vector<8x32xf32>
    %818 = vector.extract_strided_slice %806 {offsets = [0, 96], sizes = [8, 32], strides = [1, 1]} : vector<8x128xf32> to vector<8x32xf32>
    %819 = math.tanh %818 : vector<8x32xf32>
    %820 = arith.mulf %816, %670 : vector<8x32xf32>
    %821 = arith.mulf %815, %819 : vector<8x32xf32>
    %822 = arith.addf %820, %821 : vector<8x32xf32>
    %823 = math.tanh %822 : vector<8x32xf32>
    %824 = arith.mulf %817, %823 : vector<8x32xf32>
    %825 = arith.truncf %824 : vector<8x32xf32> to vector<8x32xbf16>
    %c2_382 = arith.constant 2 : index
    %c0_383 = arith.constant 0 : index
    %c0_384 = arith.constant 0 : index
    %826 = vector.load %arg1[%c2_382, %c0_383, %c0_384] : memref<5x32x128xbf16, #tpu.memory_space<vmem>>, vector<1x32x128xbf16>
    %827 = vector.shape_cast %826 : vector<1x32x128xbf16> to vector<32x128xbf16>
    %cst_385 = arith.constant dense<0.000000e+00> : vector<8x128xf32>
    %828 = tpu.matmul %733, %827, %cst_385 {dimension_numbers = #tpu.dot_dimension_numbers<[1], [0], [0], [1], [0, 0, 1, 1], [], []>} : vector<8x32xbf16>, vector<32x128xbf16>, vector<8x128xf32> -> vector<8x128xf32>
    %c2_386 = arith.constant 2 : index
    %c0_387 = arith.constant 0 : index
    %c0_388 = arith.constant 0 : index
    %829 = vector.load %arg2[%c2_386, %c0_387, %c0_388] : memref<5x32x128xbf16, #tpu.memory_space<vmem>>, vector<1x32x128xbf16>
    %830 = vector.shape_cast %829 : vector<1x32x128xbf16> to vector<32x128xbf16>
    %cst_389 = arith.constant dense<0.000000e+00> : vector<8x128xf32>
    %831 = tpu.matmul %703, %830, %cst_389 {dimension_numbers = #tpu.dot_dimension_numbers<[1], [0], [0], [1], [0, 0, 1, 1], [], []>} : vector<8x32xbf16>, vector<32x128xbf16>, vector<8x128xf32> -> vector<8x128xf32>
    %832 = arith.addf %828, %831 : vector<8x128xf32>
    %c2_390 = arith.constant 2 : index
    %c0_391 = arith.constant 0 : index
    %c0_392 = arith.constant 0 : index
    %833 = vector.load %arg3[%c2_390, %c0_391, %c0_392] : memref<5x1x128xf32, #tpu.memory_space<vmem>>, vector<1x1x128xf32>
    %834 = vector.shape_cast %833 : vector<1x1x128xf32> to vector<1x128xf32>
    %835 = vector.broadcast %834 : vector<1x128xf32> to vector<8x128xf32>
    %836 = arith.addf %832, %835 : vector<8x128xf32>
    %837 = vector.extract_strided_slice %836 {offsets = [0, 0], sizes = [8, 96], strides = [1, 1]} : vector<8x128xf32> to vector<8x96xf32>
    %cst_393 = arith.constant 5.000000e-01 : f32
    %838 = vector.broadcast %cst_393 : f32 to vector<8x96xf32>
    %839 = arith.mulf %838, %837 : vector<8x96xf32>
    %840 = math.tanh %839 : vector<8x96xf32>
    %cst_394 = arith.constant 5.000000e-01 : f32
    %841 = vector.broadcast %cst_394 : f32 to vector<8x96xf32>
    %842 = arith.mulf %841, %840 : vector<8x96xf32>
    %cst_395 = arith.constant 5.000000e-01 : f32
    %843 = vector.broadcast %cst_395 : f32 to vector<8x96xf32>
    %844 = arith.addf %842, %843 : vector<8x96xf32>
    %845 = vector.extract_strided_slice %844 {offsets = [0, 0], sizes = [8, 32], strides = [1, 1]} : vector<8x96xf32> to vector<8x32xf32>
    %846 = vector.extract_strided_slice %844 {offsets = [0, 32], sizes = [8, 32], strides = [1, 1]} : vector<8x96xf32> to vector<8x32xf32>
    %847 = vector.extract_strided_slice %844 {offsets = [0, 64], sizes = [8, 32], strides = [1, 1]} : vector<8x96xf32> to vector<8x32xf32>
    %848 = vector.extract_strided_slice %836 {offsets = [0, 96], sizes = [8, 32], strides = [1, 1]} : vector<8x128xf32> to vector<8x32xf32>
    %849 = math.tanh %848 : vector<8x32xf32>
    %850 = arith.mulf %846, %700 : vector<8x32xf32>
    %851 = arith.mulf %845, %849 : vector<8x32xf32>
    %852 = arith.addf %850, %851 : vector<8x32xf32>
    %853 = math.tanh %852 : vector<8x32xf32>
    %854 = arith.mulf %847, %853 : vector<8x32xf32>
    %855 = arith.truncf %854 : vector<8x32xf32> to vector<8x32xbf16>
    %c1_396 = arith.constant 1 : index
    %c0_397 = arith.constant 0 : index
    %c0_398 = arith.constant 0 : index
    %856 = vector.load %arg1[%c1_396, %c0_397, %c0_398] : memref<5x32x128xbf16, #tpu.memory_space<vmem>>, vector<1x32x128xbf16>
    %857 = vector.shape_cast %856 : vector<1x32x128xbf16> to vector<32x128xbf16>
    %cst_399 = arith.constant dense<0.000000e+00> : vector<8x128xf32>
    %858 = tpu.matmul %765, %857, %cst_399 {dimension_numbers = #tpu.dot_dimension_numbers<[1], [0], [0], [1], [0, 0, 1, 1], [], []>} : vector<8x32xbf16>, vector<32x128xbf16>, vector<8x128xf32> -> vector<8x128xf32>
    %c1_400 = arith.constant 1 : index
    %c0_401 = arith.constant 0 : index
    %c0_402 = arith.constant 0 : index
    %859 = vector.load %arg2[%c1_400, %c0_401, %c0_402] : memref<5x32x128xbf16, #tpu.memory_space<vmem>>, vector<1x32x128xbf16>
    %860 = vector.shape_cast %859 : vector<1x32x128xbf16> to vector<32x128xbf16>
    %cst_403 = arith.constant dense<0.000000e+00> : vector<8x128xf32>
    %861 = tpu.matmul %733, %860, %cst_403 {dimension_numbers = #tpu.dot_dimension_numbers<[1], [0], [0], [1], [0, 0, 1, 1], [], []>} : vector<8x32xbf16>, vector<32x128xbf16>, vector<8x128xf32> -> vector<8x128xf32>
    %862 = arith.addf %858, %861 : vector<8x128xf32>
    %c1_404 = arith.constant 1 : index
    %c0_405 = arith.constant 0 : index
    %c0_406 = arith.constant 0 : index
    %863 = vector.load %arg3[%c1_404, %c0_405, %c0_406] : memref<5x1x128xf32, #tpu.memory_space<vmem>>, vector<1x1x128xf32>
    %864 = vector.shape_cast %863 : vector<1x1x128xf32> to vector<1x128xf32>
    %865 = vector.broadcast %864 : vector<1x128xf32> to vector<8x128xf32>
    %866 = arith.addf %862, %865 : vector<8x128xf32>
    %867 = vector.extract_strided_slice %866 {offsets = [0, 0], sizes = [8, 96], strides = [1, 1]} : vector<8x128xf32> to vector<8x96xf32>
    %cst_407 = arith.constant 5.000000e-01 : f32
    %868 = vector.broadcast %cst_407 : f32 to vector<8x96xf32>
    %869 = arith.mulf %868, %867 : vector<8x96xf32>
    %870 = math.tanh %869 : vector<8x96xf32>
    %cst_408 = arith.constant 5.000000e-01 : f32
    %871 = vector.broadcast %cst_408 : f32 to vector<8x96xf32>
    %872 = arith.mulf %871, %870 : vector<8x96xf32>
    %cst_409 = arith.constant 5.000000e-01 : f32
    %873 = vector.broadcast %cst_409 : f32 to vector<8x96xf32>
    %874 = arith.addf %872, %873 : vector<8x96xf32>
    %875 = vector.extract_strided_slice %874 {offsets = [0, 0], sizes = [8, 32], strides = [1, 1]} : vector<8x96xf32> to vector<8x32xf32>
    %876 = vector.extract_strided_slice %874 {offsets = [0, 32], sizes = [8, 32], strides = [1, 1]} : vector<8x96xf32> to vector<8x32xf32>
    %877 = vector.extract_strided_slice %874 {offsets = [0, 64], sizes = [8, 32], strides = [1, 1]} : vector<8x96xf32> to vector<8x32xf32>
    %878 = vector.extract_strided_slice %866 {offsets = [0, 96], sizes = [8, 32], strides = [1, 1]} : vector<8x128xf32> to vector<8x32xf32>
    %879 = math.tanh %878 : vector<8x32xf32>
    %880 = arith.mulf %876, %730 : vector<8x32xf32>
    %881 = arith.mulf %875, %879 : vector<8x32xf32>
    %882 = arith.addf %880, %881 : vector<8x32xf32>
    %883 = math.tanh %882 : vector<8x32xf32>
    %884 = arith.mulf %877, %883 : vector<8x32xf32>
    %885 = arith.truncf %884 : vector<8x32xf32> to vector<8x32xbf16>
    %c56 = arith.constant 56 : index
    %c0_410 = arith.constant 0 : index
    %886 = vector.load %arg0[%c56, %c0_410] : memref<64x32xf32, #tpu.memory_space<vmem>>, vector<8x32xf32>
    %887 = arith.truncf %886 : vector<8x32xf32> to vector<8x32xbf16>
    %c0_411 = arith.constant 0 : index
    %c0_412 = arith.constant 0 : index
    %c0_413 = arith.constant 0 : index
    %888 = vector.load %arg1[%c0_411, %c0_412, %c0_413] : memref<5x32x128xbf16, #tpu.memory_space<vmem>>, vector<1x32x128xbf16>
    %889 = vector.shape_cast %888 : vector<1x32x128xbf16> to vector<32x128xbf16>
    %cst_414 = arith.constant dense<0.000000e+00> : vector<8x128xf32>
    %890 = tpu.matmul %887, %889, %cst_414 {dimension_numbers = #tpu.dot_dimension_numbers<[1], [0], [0], [1], [0, 0, 1, 1], [], []>} : vector<8x32xbf16>, vector<32x128xbf16>, vector<8x128xf32> -> vector<8x128xf32>
    %c0_415 = arith.constant 0 : index
    %c0_416 = arith.constant 0 : index
    %c0_417 = arith.constant 0 : index
    %891 = vector.load %arg2[%c0_415, %c0_416, %c0_417] : memref<5x32x128xbf16, #tpu.memory_space<vmem>>, vector<1x32x128xbf16>
    %892 = vector.shape_cast %891 : vector<1x32x128xbf16> to vector<32x128xbf16>
    %cst_418 = arith.constant dense<0.000000e+00> : vector<8x128xf32>
    %893 = tpu.matmul %765, %892, %cst_418 {dimension_numbers = #tpu.dot_dimension_numbers<[1], [0], [0], [1], [0, 0, 1, 1], [], []>} : vector<8x32xbf16>, vector<32x128xbf16>, vector<8x128xf32> -> vector<8x128xf32>
    %894 = arith.addf %890, %893 : vector<8x128xf32>
    %c0_419 = arith.constant 0 : index
    %c0_420 = arith.constant 0 : index
    %c0_421 = arith.constant 0 : index
    %895 = vector.load %arg3[%c0_419, %c0_420, %c0_421] : memref<5x1x128xf32, #tpu.memory_space<vmem>>, vector<1x1x128xf32>
    %896 = vector.shape_cast %895 : vector<1x1x128xf32> to vector<1x128xf32>
    %897 = vector.broadcast %896 : vector<1x128xf32> to vector<8x128xf32>
    %898 = arith.addf %894, %897 : vector<8x128xf32>
    %899 = vector.extract_strided_slice %898 {offsets = [0, 0], sizes = [8, 96], strides = [1, 1]} : vector<8x128xf32> to vector<8x96xf32>
    %cst_422 = arith.constant 5.000000e-01 : f32
    %900 = vector.broadcast %cst_422 : f32 to vector<8x96xf32>
    %901 = arith.mulf %900, %899 : vector<8x96xf32>
    %902 = math.tanh %901 : vector<8x96xf32>
    %cst_423 = arith.constant 5.000000e-01 : f32
    %903 = vector.broadcast %cst_423 : f32 to vector<8x96xf32>
    %904 = arith.mulf %903, %902 : vector<8x96xf32>
    %cst_424 = arith.constant 5.000000e-01 : f32
    %905 = vector.broadcast %cst_424 : f32 to vector<8x96xf32>
    %906 = arith.addf %904, %905 : vector<8x96xf32>
    %907 = vector.extract_strided_slice %906 {offsets = [0, 0], sizes = [8, 32], strides = [1, 1]} : vector<8x96xf32> to vector<8x32xf32>
    %908 = vector.extract_strided_slice %906 {offsets = [0, 32], sizes = [8, 32], strides = [1, 1]} : vector<8x96xf32> to vector<8x32xf32>
    %909 = vector.extract_strided_slice %906 {offsets = [0, 64], sizes = [8, 32], strides = [1, 1]} : vector<8x96xf32> to vector<8x32xf32>
    %910 = vector.extract_strided_slice %898 {offsets = [0, 96], sizes = [8, 32], strides = [1, 1]} : vector<8x128xf32> to vector<8x32xf32>
    %911 = math.tanh %910 : vector<8x32xf32>
    %912 = arith.mulf %908, %762 : vector<8x32xf32>
    %913 = arith.mulf %907, %911 : vector<8x32xf32>
    %914 = arith.addf %912, %913 : vector<8x32xf32>
    %915 = math.tanh %914 : vector<8x32xf32>
    %916 = arith.mulf %909, %915 : vector<8x32xf32>
    %917 = arith.truncf %916 : vector<8x32xf32> to vector<8x32xbf16>
    %c4_425 = arith.constant 4 : index
    %c0_426 = arith.constant 0 : index
    %c0_427 = arith.constant 0 : index
    %918 = vector.load %arg1[%c4_425, %c0_426, %c0_427] : memref<5x32x128xbf16, #tpu.memory_space<vmem>>, vector<1x32x128xbf16>
    %919 = vector.shape_cast %918 : vector<1x32x128xbf16> to vector<32x128xbf16>
    %cst_428 = arith.constant dense<0.000000e+00> : vector<8x128xf32>
    %920 = tpu.matmul %825, %919, %cst_428 {dimension_numbers = #tpu.dot_dimension_numbers<[1], [0], [0], [1], [0, 0, 1, 1], [], []>} : vector<8x32xbf16>, vector<32x128xbf16>, vector<8x128xf32> -> vector<8x128xf32>
    %c4_429 = arith.constant 4 : index
    %c0_430 = arith.constant 0 : index
    %c0_431 = arith.constant 0 : index
    %921 = vector.load %arg2[%c4_429, %c0_430, %c0_431] : memref<5x32x128xbf16, #tpu.memory_space<vmem>>, vector<1x32x128xbf16>
    %922 = vector.shape_cast %921 : vector<1x32x128xbf16> to vector<32x128xbf16>
    %cst_432 = arith.constant dense<0.000000e+00> : vector<8x128xf32>
    %923 = tpu.matmul %795, %922, %cst_432 {dimension_numbers = #tpu.dot_dimension_numbers<[1], [0], [0], [1], [0, 0, 1, 1], [], []>} : vector<8x32xbf16>, vector<32x128xbf16>, vector<8x128xf32> -> vector<8x128xf32>
    %924 = arith.addf %920, %923 : vector<8x128xf32>
    %c4_433 = arith.constant 4 : index
    %c0_434 = arith.constant 0 : index
    %c0_435 = arith.constant 0 : index
    %925 = vector.load %arg3[%c4_433, %c0_434, %c0_435] : memref<5x1x128xf32, #tpu.memory_space<vmem>>, vector<1x1x128xf32>
    %926 = vector.shape_cast %925 : vector<1x1x128xf32> to vector<1x128xf32>
    %927 = vector.broadcast %926 : vector<1x128xf32> to vector<8x128xf32>
    %928 = arith.addf %924, %927 : vector<8x128xf32>
    %929 = vector.extract_strided_slice %928 {offsets = [0, 0], sizes = [8, 96], strides = [1, 1]} : vector<8x128xf32> to vector<8x96xf32>
    %cst_436 = arith.constant 5.000000e-01 : f32
    %930 = vector.broadcast %cst_436 : f32 to vector<8x96xf32>
    %931 = arith.mulf %930, %929 : vector<8x96xf32>
    %932 = math.tanh %931 : vector<8x96xf32>
    %cst_437 = arith.constant 5.000000e-01 : f32
    %933 = vector.broadcast %cst_437 : f32 to vector<8x96xf32>
    %934 = arith.mulf %933, %932 : vector<8x96xf32>
    %cst_438 = arith.constant 5.000000e-01 : f32
    %935 = vector.broadcast %cst_438 : f32 to vector<8x96xf32>
    %936 = arith.addf %934, %935 : vector<8x96xf32>
    %937 = vector.extract_strided_slice %936 {offsets = [0, 0], sizes = [8, 32], strides = [1, 1]} : vector<8x96xf32> to vector<8x32xf32>
    %938 = vector.extract_strided_slice %936 {offsets = [0, 32], sizes = [8, 32], strides = [1, 1]} : vector<8x96xf32> to vector<8x32xf32>
    %939 = vector.extract_strided_slice %936 {offsets = [0, 64], sizes = [8, 32], strides = [1, 1]} : vector<8x96xf32> to vector<8x32xf32>
    %940 = vector.extract_strided_slice %928 {offsets = [0, 96], sizes = [8, 32], strides = [1, 1]} : vector<8x128xf32> to vector<8x32xf32>
    %941 = math.tanh %940 : vector<8x32xf32>
    %942 = arith.mulf %938, %792 : vector<8x32xf32>
    %943 = arith.mulf %937, %941 : vector<8x32xf32>
    %944 = arith.addf %942, %943 : vector<8x32xf32>
    %945 = math.tanh %944 : vector<8x32xf32>
    %946 = arith.mulf %939, %945 : vector<8x32xf32>
    %947 = arith.truncf %946 : vector<8x32xf32> to vector<8x32xbf16>
    %c3_439 = arith.constant 3 : index
    %c0_440 = arith.constant 0 : index
    %c0_441 = arith.constant 0 : index
    %948 = vector.load %arg1[%c3_439, %c0_440, %c0_441] : memref<5x32x128xbf16, #tpu.memory_space<vmem>>, vector<1x32x128xbf16>
    %949 = vector.shape_cast %948 : vector<1x32x128xbf16> to vector<32x128xbf16>
    %cst_442 = arith.constant dense<0.000000e+00> : vector<8x128xf32>
    %950 = tpu.matmul %855, %949, %cst_442 {dimension_numbers = #tpu.dot_dimension_numbers<[1], [0], [0], [1], [0, 0, 1, 1], [], []>} : vector<8x32xbf16>, vector<32x128xbf16>, vector<8x128xf32> -> vector<8x128xf32>
    %c3_443 = arith.constant 3 : index
    %c0_444 = arith.constant 0 : index
    %c0_445 = arith.constant 0 : index
    %951 = vector.load %arg2[%c3_443, %c0_444, %c0_445] : memref<5x32x128xbf16, #tpu.memory_space<vmem>>, vector<1x32x128xbf16>
    %952 = vector.shape_cast %951 : vector<1x32x128xbf16> to vector<32x128xbf16>
    %cst_446 = arith.constant dense<0.000000e+00> : vector<8x128xf32>
    %953 = tpu.matmul %825, %952, %cst_446 {dimension_numbers = #tpu.dot_dimension_numbers<[1], [0], [0], [1], [0, 0, 1, 1], [], []>} : vector<8x32xbf16>, vector<32x128xbf16>, vector<8x128xf32> -> vector<8x128xf32>
    %954 = arith.addf %950, %953 : vector<8x128xf32>
    %c3_447 = arith.constant 3 : index
    %c0_448 = arith.constant 0 : index
    %c0_449 = arith.constant 0 : index
    %955 = vector.load %arg3[%c3_447, %c0_448, %c0_449] : memref<5x1x128xf32, #tpu.memory_space<vmem>>, vector<1x1x128xf32>
    %956 = vector.shape_cast %955 : vector<1x1x128xf32> to vector<1x128xf32>
    %957 = vector.broadcast %956 : vector<1x128xf32> to vector<8x128xf32>
    %958 = arith.addf %954, %957 : vector<8x128xf32>
    %959 = vector.extract_strided_slice %958 {offsets = [0, 0], sizes = [8, 96], strides = [1, 1]} : vector<8x128xf32> to vector<8x96xf32>
    %cst_450 = arith.constant 5.000000e-01 : f32
    %960 = vector.broadcast %cst_450 : f32 to vector<8x96xf32>
    %961 = arith.mulf %960, %959 : vector<8x96xf32>
    %962 = math.tanh %961 : vector<8x96xf32>
    %cst_451 = arith.constant 5.000000e-01 : f32
    %963 = vector.broadcast %cst_451 : f32 to vector<8x96xf32>
    %964 = arith.mulf %963, %962 : vector<8x96xf32>
    %cst_452 = arith.constant 5.000000e-01 : f32
    %965 = vector.broadcast %cst_452 : f32 to vector<8x96xf32>
    %966 = arith.addf %964, %965 : vector<8x96xf32>
    %967 = vector.extract_strided_slice %966 {offsets = [0, 0], sizes = [8, 32], strides = [1, 1]} : vector<8x96xf32> to vector<8x32xf32>
    %968 = vector.extract_strided_slice %966 {offsets = [0, 32], sizes = [8, 32], strides = [1, 1]} : vector<8x96xf32> to vector<8x32xf32>
    %969 = vector.extract_strided_slice %966 {offsets = [0, 64], sizes = [8, 32], strides = [1, 1]} : vector<8x96xf32> to vector<8x32xf32>
    %970 = vector.extract_strided_slice %958 {offsets = [0, 96], sizes = [8, 32], strides = [1, 1]} : vector<8x128xf32> to vector<8x32xf32>
    %971 = math.tanh %970 : vector<8x32xf32>
    %972 = arith.mulf %968, %822 : vector<8x32xf32>
    %973 = arith.mulf %967, %971 : vector<8x32xf32>
    %974 = arith.addf %972, %973 : vector<8x32xf32>
    %975 = math.tanh %974 : vector<8x32xf32>
    %976 = arith.mulf %969, %975 : vector<8x32xf32>
    %977 = arith.truncf %976 : vector<8x32xf32> to vector<8x32xbf16>
    %c2_453 = arith.constant 2 : index
    %c0_454 = arith.constant 0 : index
    %c0_455 = arith.constant 0 : index
    %978 = vector.load %arg1[%c2_453, %c0_454, %c0_455] : memref<5x32x128xbf16, #tpu.memory_space<vmem>>, vector<1x32x128xbf16>
    %979 = vector.shape_cast %978 : vector<1x32x128xbf16> to vector<32x128xbf16>
    %cst_456 = arith.constant dense<0.000000e+00> : vector<8x128xf32>
    %980 = tpu.matmul %885, %979, %cst_456 {dimension_numbers = #tpu.dot_dimension_numbers<[1], [0], [0], [1], [0, 0, 1, 1], [], []>} : vector<8x32xbf16>, vector<32x128xbf16>, vector<8x128xf32> -> vector<8x128xf32>
    %c2_457 = arith.constant 2 : index
    %c0_458 = arith.constant 0 : index
    %c0_459 = arith.constant 0 : index
    %981 = vector.load %arg2[%c2_457, %c0_458, %c0_459] : memref<5x32x128xbf16, #tpu.memory_space<vmem>>, vector<1x32x128xbf16>
    %982 = vector.shape_cast %981 : vector<1x32x128xbf16> to vector<32x128xbf16>
    %cst_460 = arith.constant dense<0.000000e+00> : vector<8x128xf32>
    %983 = tpu.matmul %855, %982, %cst_460 {dimension_numbers = #tpu.dot_dimension_numbers<[1], [0], [0], [1], [0, 0, 1, 1], [], []>} : vector<8x32xbf16>, vector<32x128xbf16>, vector<8x128xf32> -> vector<8x128xf32>
    %984 = arith.addf %980, %983 : vector<8x128xf32>
    %c2_461 = arith.constant 2 : index
    %c0_462 = arith.constant 0 : index
    %c0_463 = arith.constant 0 : index
    %985 = vector.load %arg3[%c2_461, %c0_462, %c0_463] : memref<5x1x128xf32, #tpu.memory_space<vmem>>, vector<1x1x128xf32>
    %986 = vector.shape_cast %985 : vector<1x1x128xf32> to vector<1x128xf32>
    %987 = vector.broadcast %986 : vector<1x128xf32> to vector<8x128xf32>
    %988 = arith.addf %984, %987 : vector<8x128xf32>
    %989 = vector.extract_strided_slice %988 {offsets = [0, 0], sizes = [8, 96], strides = [1, 1]} : vector<8x128xf32> to vector<8x96xf32>
    %cst_464 = arith.constant 5.000000e-01 : f32
    %990 = vector.broadcast %cst_464 : f32 to vector<8x96xf32>
    %991 = arith.mulf %990, %989 : vector<8x96xf32>
    %992 = math.tanh %991 : vector<8x96xf32>
    %cst_465 = arith.constant 5.000000e-01 : f32
    %993 = vector.broadcast %cst_465 : f32 to vector<8x96xf32>
    %994 = arith.mulf %993, %992 : vector<8x96xf32>
    %cst_466 = arith.constant 5.000000e-01 : f32
    %995 = vector.broadcast %cst_466 : f32 to vector<8x96xf32>
    %996 = arith.addf %994, %995 : vector<8x96xf32>
    %997 = vector.extract_strided_slice %996 {offsets = [0, 0], sizes = [8, 32], strides = [1, 1]} : vector<8x96xf32> to vector<8x32xf32>
    %998 = vector.extract_strided_slice %996 {offsets = [0, 32], sizes = [8, 32], strides = [1, 1]} : vector<8x96xf32> to vector<8x32xf32>
    %999 = vector.extract_strided_slice %996 {offsets = [0, 64], sizes = [8, 32], strides = [1, 1]} : vector<8x96xf32> to vector<8x32xf32>
    %1000 = vector.extract_strided_slice %988 {offsets = [0, 96], sizes = [8, 32], strides = [1, 1]} : vector<8x128xf32> to vector<8x32xf32>
    %1001 = math.tanh %1000 : vector<8x32xf32>
    %1002 = arith.mulf %998, %852 : vector<8x32xf32>
    %1003 = arith.mulf %997, %1001 : vector<8x32xf32>
    %1004 = arith.addf %1002, %1003 : vector<8x32xf32>
    %1005 = math.tanh %1004 : vector<8x32xf32>
    %1006 = arith.mulf %999, %1005 : vector<8x32xf32>
    %1007 = arith.truncf %1006 : vector<8x32xf32> to vector<8x32xbf16>
    %c1_467 = arith.constant 1 : index
    %c0_468 = arith.constant 0 : index
    %c0_469 = arith.constant 0 : index
    %1008 = vector.load %arg1[%c1_467, %c0_468, %c0_469] : memref<5x32x128xbf16, #tpu.memory_space<vmem>>, vector<1x32x128xbf16>
    %1009 = vector.shape_cast %1008 : vector<1x32x128xbf16> to vector<32x128xbf16>
    %cst_470 = arith.constant dense<0.000000e+00> : vector<8x128xf32>
    %1010 = tpu.matmul %917, %1009, %cst_470 {dimension_numbers = #tpu.dot_dimension_numbers<[1], [0], [0], [1], [0, 0, 1, 1], [], []>} : vector<8x32xbf16>, vector<32x128xbf16>, vector<8x128xf32> -> vector<8x128xf32>
    %c1_471 = arith.constant 1 : index
    %c0_472 = arith.constant 0 : index
    %c0_473 = arith.constant 0 : index
    %1011 = vector.load %arg2[%c1_471, %c0_472, %c0_473] : memref<5x32x128xbf16, #tpu.memory_space<vmem>>, vector<1x32x128xbf16>
    %1012 = vector.shape_cast %1011 : vector<1x32x128xbf16> to vector<32x128xbf16>
    %cst_474 = arith.constant dense<0.000000e+00> : vector<8x128xf32>
    %1013 = tpu.matmul %885, %1012, %cst_474 {dimension_numbers = #tpu.dot_dimension_numbers<[1], [0], [0], [1], [0, 0, 1, 1], [], []>} : vector<8x32xbf16>, vector<32x128xbf16>, vector<8x128xf32> -> vector<8x128xf32>
    %1014 = arith.addf %1010, %1013 : vector<8x128xf32>
    %c1_475 = arith.constant 1 : index
    %c0_476 = arith.constant 0 : index
    %c0_477 = arith.constant 0 : index
    %1015 = vector.load %arg3[%c1_475, %c0_476, %c0_477] : memref<5x1x128xf32, #tpu.memory_space<vmem>>, vector<1x1x128xf32>
    %1016 = vector.shape_cast %1015 : vector<1x1x128xf32> to vector<1x128xf32>
    %1017 = vector.broadcast %1016 : vector<1x128xf32> to vector<8x128xf32>
    %1018 = arith.addf %1014, %1017 : vector<8x128xf32>
    %1019 = vector.extract_strided_slice %1018 {offsets = [0, 0], sizes = [8, 96], strides = [1, 1]} : vector<8x128xf32> to vector<8x96xf32>
    %cst_478 = arith.constant 5.000000e-01 : f32
    %1020 = vector.broadcast %cst_478 : f32 to vector<8x96xf32>
    %1021 = arith.mulf %1020, %1019 : vector<8x96xf32>
    %1022 = math.tanh %1021 : vector<8x96xf32>
    %cst_479 = arith.constant 5.000000e-01 : f32
    %1023 = vector.broadcast %cst_479 : f32 to vector<8x96xf32>
    %1024 = arith.mulf %1023, %1022 : vector<8x96xf32>
    %cst_480 = arith.constant 5.000000e-01 : f32
    %1025 = vector.broadcast %cst_480 : f32 to vector<8x96xf32>
    %1026 = arith.addf %1024, %1025 : vector<8x96xf32>
    %1027 = vector.extract_strided_slice %1026 {offsets = [0, 0], sizes = [8, 32], strides = [1, 1]} : vector<8x96xf32> to vector<8x32xf32>
    %1028 = vector.extract_strided_slice %1026 {offsets = [0, 32], sizes = [8, 32], strides = [1, 1]} : vector<8x96xf32> to vector<8x32xf32>
    %1029 = vector.extract_strided_slice %1026 {offsets = [0, 64], sizes = [8, 32], strides = [1, 1]} : vector<8x96xf32> to vector<8x32xf32>
    %1030 = vector.extract_strided_slice %1018 {offsets = [0, 96], sizes = [8, 32], strides = [1, 1]} : vector<8x128xf32> to vector<8x32xf32>
    %1031 = math.tanh %1030 : vector<8x32xf32>
    %1032 = arith.mulf %1028, %882 : vector<8x32xf32>
    %1033 = arith.mulf %1027, %1031 : vector<8x32xf32>
    %1034 = arith.addf %1032, %1033 : vector<8x32xf32>
    %1035 = math.tanh %1034 : vector<8x32xf32>
    %1036 = arith.mulf %1029, %1035 : vector<8x32xf32>
    %1037 = arith.truncf %1036 : vector<8x32xf32> to vector<8x32xbf16>
    %c4_481 = arith.constant 4 : index
    %c0_482 = arith.constant 0 : index
    %c0_483 = arith.constant 0 : index
    %1038 = vector.load %arg1[%c4_481, %c0_482, %c0_483] : memref<5x32x128xbf16, #tpu.memory_space<vmem>>, vector<1x32x128xbf16>
    %1039 = vector.shape_cast %1038 : vector<1x32x128xbf16> to vector<32x128xbf16>
    %cst_484 = arith.constant dense<0.000000e+00> : vector<8x128xf32>
    %1040 = tpu.matmul %977, %1039, %cst_484 {dimension_numbers = #tpu.dot_dimension_numbers<[1], [0], [0], [1], [0, 0, 1, 1], [], []>} : vector<8x32xbf16>, vector<32x128xbf16>, vector<8x128xf32> -> vector<8x128xf32>
    %c4_485 = arith.constant 4 : index
    %c0_486 = arith.constant 0 : index
    %c0_487 = arith.constant 0 : index
    %1041 = vector.load %arg2[%c4_485, %c0_486, %c0_487] : memref<5x32x128xbf16, #tpu.memory_space<vmem>>, vector<1x32x128xbf16>
    %1042 = vector.shape_cast %1041 : vector<1x32x128xbf16> to vector<32x128xbf16>
    %cst_488 = arith.constant dense<0.000000e+00> : vector<8x128xf32>
    %1043 = tpu.matmul %947, %1042, %cst_488 {dimension_numbers = #tpu.dot_dimension_numbers<[1], [0], [0], [1], [0, 0, 1, 1], [], []>} : vector<8x32xbf16>, vector<32x128xbf16>, vector<8x128xf32> -> vector<8x128xf32>
    %1044 = arith.addf %1040, %1043 : vector<8x128xf32>
    %c4_489 = arith.constant 4 : index
    %c0_490 = arith.constant 0 : index
    %c0_491 = arith.constant 0 : index
    %1045 = vector.load %arg3[%c4_489, %c0_490, %c0_491] : memref<5x1x128xf32, #tpu.memory_space<vmem>>, vector<1x1x128xf32>
    %1046 = vector.shape_cast %1045 : vector<1x1x128xf32> to vector<1x128xf32>
    %1047 = vector.broadcast %1046 : vector<1x128xf32> to vector<8x128xf32>
    %1048 = arith.addf %1044, %1047 : vector<8x128xf32>
    %1049 = vector.extract_strided_slice %1048 {offsets = [0, 0], sizes = [8, 96], strides = [1, 1]} : vector<8x128xf32> to vector<8x96xf32>
    %cst_492 = arith.constant 5.000000e-01 : f32
    %1050 = vector.broadcast %cst_492 : f32 to vector<8x96xf32>
    %1051 = arith.mulf %1050, %1049 : vector<8x96xf32>
    %1052 = math.tanh %1051 : vector<8x96xf32>
    %cst_493 = arith.constant 5.000000e-01 : f32
    %1053 = vector.broadcast %cst_493 : f32 to vector<8x96xf32>
    %1054 = arith.mulf %1053, %1052 : vector<8x96xf32>
    %cst_494 = arith.constant 5.000000e-01 : f32
    %1055 = vector.broadcast %cst_494 : f32 to vector<8x96xf32>
    %1056 = arith.addf %1054, %1055 : vector<8x96xf32>
    %1057 = vector.extract_strided_slice %1056 {offsets = [0, 0], sizes = [8, 32], strides = [1, 1]} : vector<8x96xf32> to vector<8x32xf32>
    %1058 = vector.extract_strided_slice %1056 {offsets = [0, 32], sizes = [8, 32], strides = [1, 1]} : vector<8x96xf32> to vector<8x32xf32>
    %1059 = vector.extract_strided_slice %1056 {offsets = [0, 64], sizes = [8, 32], strides = [1, 1]} : vector<8x96xf32> to vector<8x32xf32>
    %1060 = vector.extract_strided_slice %1048 {offsets = [0, 96], sizes = [8, 32], strides = [1, 1]} : vector<8x128xf32> to vector<8x32xf32>
    %1061 = math.tanh %1060 : vector<8x32xf32>
    %1062 = arith.mulf %1058, %944 : vector<8x32xf32>
    %1063 = arith.mulf %1057, %1061 : vector<8x32xf32>
    %1064 = arith.addf %1062, %1063 : vector<8x32xf32>
    %1065 = math.tanh %1064 : vector<8x32xf32>
    %1066 = arith.mulf %1059, %1065 : vector<8x32xf32>
    %1067 = arith.truncf %1066 : vector<8x32xf32> to vector<8x32xbf16>
    %c3_495 = arith.constant 3 : index
    %c0_496 = arith.constant 0 : index
    %c0_497 = arith.constant 0 : index
    %1068 = vector.load %arg1[%c3_495, %c0_496, %c0_497] : memref<5x32x128xbf16, #tpu.memory_space<vmem>>, vector<1x32x128xbf16>
    %1069 = vector.shape_cast %1068 : vector<1x32x128xbf16> to vector<32x128xbf16>
    %cst_498 = arith.constant dense<0.000000e+00> : vector<8x128xf32>
    %1070 = tpu.matmul %1007, %1069, %cst_498 {dimension_numbers = #tpu.dot_dimension_numbers<[1], [0], [0], [1], [0, 0, 1, 1], [], []>} : vector<8x32xbf16>, vector<32x128xbf16>, vector<8x128xf32> -> vector<8x128xf32>
    %c3_499 = arith.constant 3 : index
    %c0_500 = arith.constant 0 : index
    %c0_501 = arith.constant 0 : index
    %1071 = vector.load %arg2[%c3_499, %c0_500, %c0_501] : memref<5x32x128xbf16, #tpu.memory_space<vmem>>, vector<1x32x128xbf16>
    %1072 = vector.shape_cast %1071 : vector<1x32x128xbf16> to vector<32x128xbf16>
    %cst_502 = arith.constant dense<0.000000e+00> : vector<8x128xf32>
    %1073 = tpu.matmul %977, %1072, %cst_502 {dimension_numbers = #tpu.dot_dimension_numbers<[1], [0], [0], [1], [0, 0, 1, 1], [], []>} : vector<8x32xbf16>, vector<32x128xbf16>, vector<8x128xf32> -> vector<8x128xf32>
    %1074 = arith.addf %1070, %1073 : vector<8x128xf32>
    %c3_503 = arith.constant 3 : index
    %c0_504 = arith.constant 0 : index
    %c0_505 = arith.constant 0 : index
    %1075 = vector.load %arg3[%c3_503, %c0_504, %c0_505] : memref<5x1x128xf32, #tpu.memory_space<vmem>>, vector<1x1x128xf32>
    %1076 = vector.shape_cast %1075 : vector<1x1x128xf32> to vector<1x128xf32>
    %1077 = vector.broadcast %1076 : vector<1x128xf32> to vector<8x128xf32>
    %1078 = arith.addf %1074, %1077 : vector<8x128xf32>
    %1079 = vector.extract_strided_slice %1078 {offsets = [0, 0], sizes = [8, 96], strides = [1, 1]} : vector<8x128xf32> to vector<8x96xf32>
    %cst_506 = arith.constant 5.000000e-01 : f32
    %1080 = vector.broadcast %cst_506 : f32 to vector<8x96xf32>
    %1081 = arith.mulf %1080, %1079 : vector<8x96xf32>
    %1082 = math.tanh %1081 : vector<8x96xf32>
    %cst_507 = arith.constant 5.000000e-01 : f32
    %1083 = vector.broadcast %cst_507 : f32 to vector<8x96xf32>
    %1084 = arith.mulf %1083, %1082 : vector<8x96xf32>
    %cst_508 = arith.constant 5.000000e-01 : f32
    %1085 = vector.broadcast %cst_508 : f32 to vector<8x96xf32>
    %1086 = arith.addf %1084, %1085 : vector<8x96xf32>
    %1087 = vector.extract_strided_slice %1086 {offsets = [0, 0], sizes = [8, 32], strides = [1, 1]} : vector<8x96xf32> to vector<8x32xf32>
    %1088 = vector.extract_strided_slice %1086 {offsets = [0, 32], sizes = [8, 32], strides = [1, 1]} : vector<8x96xf32> to vector<8x32xf32>
    %1089 = vector.extract_strided_slice %1086 {offsets = [0, 64], sizes = [8, 32], strides = [1, 1]} : vector<8x96xf32> to vector<8x32xf32>
    %1090 = vector.extract_strided_slice %1078 {offsets = [0, 96], sizes = [8, 32], strides = [1, 1]} : vector<8x128xf32> to vector<8x32xf32>
    %1091 = math.tanh %1090 : vector<8x32xf32>
    %1092 = arith.mulf %1088, %974 : vector<8x32xf32>
    %1093 = arith.mulf %1087, %1091 : vector<8x32xf32>
    %1094 = arith.addf %1092, %1093 : vector<8x32xf32>
    %1095 = math.tanh %1094 : vector<8x32xf32>
    %1096 = arith.mulf %1089, %1095 : vector<8x32xf32>
    %1097 = arith.truncf %1096 : vector<8x32xf32> to vector<8x32xbf16>
    %c2_509 = arith.constant 2 : index
    %c0_510 = arith.constant 0 : index
    %c0_511 = arith.constant 0 : index
    %1098 = vector.load %arg1[%c2_509, %c0_510, %c0_511] : memref<5x32x128xbf16, #tpu.memory_space<vmem>>, vector<1x32x128xbf16>
    %1099 = vector.shape_cast %1098 : vector<1x32x128xbf16> to vector<32x128xbf16>
    %cst_512 = arith.constant dense<0.000000e+00> : vector<8x128xf32>
    %1100 = tpu.matmul %1037, %1099, %cst_512 {dimension_numbers = #tpu.dot_dimension_numbers<[1], [0], [0], [1], [0, 0, 1, 1], [], []>} : vector<8x32xbf16>, vector<32x128xbf16>, vector<8x128xf32> -> vector<8x128xf32>
    %c2_513 = arith.constant 2 : index
    %c0_514 = arith.constant 0 : index
    %c0_515 = arith.constant 0 : index
    %1101 = vector.load %arg2[%c2_513, %c0_514, %c0_515] : memref<5x32x128xbf16, #tpu.memory_space<vmem>>, vector<1x32x128xbf16>
    %1102 = vector.shape_cast %1101 : vector<1x32x128xbf16> to vector<32x128xbf16>
    %cst_516 = arith.constant dense<0.000000e+00> : vector<8x128xf32>
    %1103 = tpu.matmul %1007, %1102, %cst_516 {dimension_numbers = #tpu.dot_dimension_numbers<[1], [0], [0], [1], [0, 0, 1, 1], [], []>} : vector<8x32xbf16>, vector<32x128xbf16>, vector<8x128xf32> -> vector<8x128xf32>
    %1104 = arith.addf %1100, %1103 : vector<8x128xf32>
    %c2_517 = arith.constant 2 : index
    %c0_518 = arith.constant 0 : index
    %c0_519 = arith.constant 0 : index
    %1105 = vector.load %arg3[%c2_517, %c0_518, %c0_519] : memref<5x1x128xf32, #tpu.memory_space<vmem>>, vector<1x1x128xf32>
    %1106 = vector.shape_cast %1105 : vector<1x1x128xf32> to vector<1x128xf32>
    %1107 = vector.broadcast %1106 : vector<1x128xf32> to vector<8x128xf32>
    %1108 = arith.addf %1104, %1107 : vector<8x128xf32>
    %1109 = vector.extract_strided_slice %1108 {offsets = [0, 0], sizes = [8, 96], strides = [1, 1]} : vector<8x128xf32> to vector<8x96xf32>
    %cst_520 = arith.constant 5.000000e-01 : f32
    %1110 = vector.broadcast %cst_520 : f32 to vector<8x96xf32>
    %1111 = arith.mulf %1110, %1109 : vector<8x96xf32>
    %1112 = math.tanh %1111 : vector<8x96xf32>
    %cst_521 = arith.constant 5.000000e-01 : f32
    %1113 = vector.broadcast %cst_521 : f32 to vector<8x96xf32>
    %1114 = arith.mulf %1113, %1112 : vector<8x96xf32>
    %cst_522 = arith.constant 5.000000e-01 : f32
    %1115 = vector.broadcast %cst_522 : f32 to vector<8x96xf32>
    %1116 = arith.addf %1114, %1115 : vector<8x96xf32>
    %1117 = vector.extract_strided_slice %1116 {offsets = [0, 0], sizes = [8, 32], strides = [1, 1]} : vector<8x96xf32> to vector<8x32xf32>
    %1118 = vector.extract_strided_slice %1116 {offsets = [0, 32], sizes = [8, 32], strides = [1, 1]} : vector<8x96xf32> to vector<8x32xf32>
    %1119 = vector.extract_strided_slice %1116 {offsets = [0, 64], sizes = [8, 32], strides = [1, 1]} : vector<8x96xf32> to vector<8x32xf32>
    %1120 = vector.extract_strided_slice %1108 {offsets = [0, 96], sizes = [8, 32], strides = [1, 1]} : vector<8x128xf32> to vector<8x32xf32>
    %1121 = math.tanh %1120 : vector<8x32xf32>
    %1122 = arith.mulf %1118, %1004 : vector<8x32xf32>
    %1123 = arith.mulf %1117, %1121 : vector<8x32xf32>
    %1124 = arith.addf %1122, %1123 : vector<8x32xf32>
    %1125 = math.tanh %1124 : vector<8x32xf32>
    %1126 = arith.mulf %1119, %1125 : vector<8x32xf32>
    %1127 = arith.truncf %1126 : vector<8x32xf32> to vector<8x32xbf16>
    %c4_523 = arith.constant 4 : index
    %c0_524 = arith.constant 0 : index
    %c0_525 = arith.constant 0 : index
    %1128 = vector.load %arg1[%c4_523, %c0_524, %c0_525] : memref<5x32x128xbf16, #tpu.memory_space<vmem>>, vector<1x32x128xbf16>
    %1129 = vector.shape_cast %1128 : vector<1x32x128xbf16> to vector<32x128xbf16>
    %cst_526 = arith.constant dense<0.000000e+00> : vector<8x128xf32>
    %1130 = tpu.matmul %1097, %1129, %cst_526 {dimension_numbers = #tpu.dot_dimension_numbers<[1], [0], [0], [1], [0, 0, 1, 1], [], []>} : vector<8x32xbf16>, vector<32x128xbf16>, vector<8x128xf32> -> vector<8x128xf32>
    %c4_527 = arith.constant 4 : index
    %c0_528 = arith.constant 0 : index
    %c0_529 = arith.constant 0 : index
    %1131 = vector.load %arg2[%c4_527, %c0_528, %c0_529] : memref<5x32x128xbf16, #tpu.memory_space<vmem>>, vector<1x32x128xbf16>
    %1132 = vector.shape_cast %1131 : vector<1x32x128xbf16> to vector<32x128xbf16>
    %cst_530 = arith.constant dense<0.000000e+00> : vector<8x128xf32>
    %1133 = tpu.matmul %1067, %1132, %cst_530 {dimension_numbers = #tpu.dot_dimension_numbers<[1], [0], [0], [1], [0, 0, 1, 1], [], []>} : vector<8x32xbf16>, vector<32x128xbf16>, vector<8x128xf32> -> vector<8x128xf32>
    %1134 = arith.addf %1130, %1133 : vector<8x128xf32>
    %c4_531 = arith.constant 4 : index
    %c0_532 = arith.constant 0 : index
    %c0_533 = arith.constant 0 : index
    %1135 = vector.load %arg3[%c4_531, %c0_532, %c0_533] : memref<5x1x128xf32, #tpu.memory_space<vmem>>, vector<1x1x128xf32>
    %1136 = vector.shape_cast %1135 : vector<1x1x128xf32> to vector<1x128xf32>
    %1137 = vector.broadcast %1136 : vector<1x128xf32> to vector<8x128xf32>
    %1138 = arith.addf %1134, %1137 : vector<8x128xf32>
    %1139 = vector.extract_strided_slice %1138 {offsets = [0, 0], sizes = [8, 96], strides = [1, 1]} : vector<8x128xf32> to vector<8x96xf32>
    %cst_534 = arith.constant 5.000000e-01 : f32
    %1140 = vector.broadcast %cst_534 : f32 to vector<8x96xf32>
    %1141 = arith.mulf %1140, %1139 : vector<8x96xf32>
    %1142 = math.tanh %1141 : vector<8x96xf32>
    %cst_535 = arith.constant 5.000000e-01 : f32
    %1143 = vector.broadcast %cst_535 : f32 to vector<8x96xf32>
    %1144 = arith.mulf %1143, %1142 : vector<8x96xf32>
    %cst_536 = arith.constant 5.000000e-01 : f32
    %1145 = vector.broadcast %cst_536 : f32 to vector<8x96xf32>
    %1146 = arith.addf %1144, %1145 : vector<8x96xf32>
    %1147 = vector.extract_strided_slice %1146 {offsets = [0, 0], sizes = [8, 32], strides = [1, 1]} : vector<8x96xf32> to vector<8x32xf32>
    %1148 = vector.extract_strided_slice %1146 {offsets = [0, 32], sizes = [8, 32], strides = [1, 1]} : vector<8x96xf32> to vector<8x32xf32>
    %1149 = vector.extract_strided_slice %1146 {offsets = [0, 64], sizes = [8, 32], strides = [1, 1]} : vector<8x96xf32> to vector<8x32xf32>
    %1150 = vector.extract_strided_slice %1138 {offsets = [0, 96], sizes = [8, 32], strides = [1, 1]} : vector<8x128xf32> to vector<8x32xf32>
    %1151 = math.tanh %1150 : vector<8x32xf32>
    %1152 = arith.mulf %1148, %1064 : vector<8x32xf32>
    %1153 = arith.mulf %1147, %1151 : vector<8x32xf32>
    %1154 = arith.addf %1152, %1153 : vector<8x32xf32>
    %1155 = math.tanh %1154 : vector<8x32xf32>
    %1156 = arith.mulf %1149, %1155 : vector<8x32xf32>
    %1157 = arith.truncf %1156 : vector<8x32xf32> to vector<8x32xbf16>
    %c3_537 = arith.constant 3 : index
    %c0_538 = arith.constant 0 : index
    %c0_539 = arith.constant 0 : index
    %1158 = vector.load %arg1[%c3_537, %c0_538, %c0_539] : memref<5x32x128xbf16, #tpu.memory_space<vmem>>, vector<1x32x128xbf16>
    %1159 = vector.shape_cast %1158 : vector<1x32x128xbf16> to vector<32x128xbf16>
    %cst_540 = arith.constant dense<0.000000e+00> : vector<8x128xf32>
    %1160 = tpu.matmul %1127, %1159, %cst_540 {dimension_numbers = #tpu.dot_dimension_numbers<[1], [0], [0], [1], [0, 0, 1, 1], [], []>} : vector<8x32xbf16>, vector<32x128xbf16>, vector<8x128xf32> -> vector<8x128xf32>
    %c3_541 = arith.constant 3 : index
    %c0_542 = arith.constant 0 : index
    %c0_543 = arith.constant 0 : index
    %1161 = vector.load %arg2[%c3_541, %c0_542, %c0_543] : memref<5x32x128xbf16, #tpu.memory_space<vmem>>, vector<1x32x128xbf16>
    %1162 = vector.shape_cast %1161 : vector<1x32x128xbf16> to vector<32x128xbf16>
    %cst_544 = arith.constant dense<0.000000e+00> : vector<8x128xf32>
    %1163 = tpu.matmul %1097, %1162, %cst_544 {dimension_numbers = #tpu.dot_dimension_numbers<[1], [0], [0], [1], [0, 0, 1, 1], [], []>} : vector<8x32xbf16>, vector<32x128xbf16>, vector<8x128xf32> -> vector<8x128xf32>
    %1164 = arith.addf %1160, %1163 : vector<8x128xf32>
    %c3_545 = arith.constant 3 : index
    %c0_546 = arith.constant 0 : index
    %c0_547 = arith.constant 0 : index
    %1165 = vector.load %arg3[%c3_545, %c0_546, %c0_547] : memref<5x1x128xf32, #tpu.memory_space<vmem>>, vector<1x1x128xf32>
    %1166 = vector.shape_cast %1165 : vector<1x1x128xf32> to vector<1x128xf32>
    %1167 = vector.broadcast %1166 : vector<1x128xf32> to vector<8x128xf32>
    %1168 = arith.addf %1164, %1167 : vector<8x128xf32>
    %1169 = vector.extract_strided_slice %1168 {offsets = [0, 0], sizes = [8, 96], strides = [1, 1]} : vector<8x128xf32> to vector<8x96xf32>
    %cst_548 = arith.constant 5.000000e-01 : f32
    %1170 = vector.broadcast %cst_548 : f32 to vector<8x96xf32>
    %1171 = arith.mulf %1170, %1169 : vector<8x96xf32>
    %1172 = math.tanh %1171 : vector<8x96xf32>
    %cst_549 = arith.constant 5.000000e-01 : f32
    %1173 = vector.broadcast %cst_549 : f32 to vector<8x96xf32>
    %1174 = arith.mulf %1173, %1172 : vector<8x96xf32>
    %cst_550 = arith.constant 5.000000e-01 : f32
    %1175 = vector.broadcast %cst_550 : f32 to vector<8x96xf32>
    %1176 = arith.addf %1174, %1175 : vector<8x96xf32>
    %1177 = vector.extract_strided_slice %1176 {offsets = [0, 0], sizes = [8, 32], strides = [1, 1]} : vector<8x96xf32> to vector<8x32xf32>
    %1178 = vector.extract_strided_slice %1176 {offsets = [0, 32], sizes = [8, 32], strides = [1, 1]} : vector<8x96xf32> to vector<8x32xf32>
    %1179 = vector.extract_strided_slice %1176 {offsets = [0, 64], sizes = [8, 32], strides = [1, 1]} : vector<8x96xf32> to vector<8x32xf32>
    %1180 = vector.extract_strided_slice %1168 {offsets = [0, 96], sizes = [8, 32], strides = [1, 1]} : vector<8x128xf32> to vector<8x32xf32>
    %1181 = math.tanh %1180 : vector<8x32xf32>
    %1182 = arith.mulf %1178, %1094 : vector<8x32xf32>
    %1183 = arith.mulf %1177, %1181 : vector<8x32xf32>
    %1184 = arith.addf %1182, %1183 : vector<8x32xf32>
    %1185 = math.tanh %1184 : vector<8x32xf32>
    %1186 = arith.mulf %1179, %1185 : vector<8x32xf32>
    %1187 = arith.truncf %1186 : vector<8x32xf32> to vector<8x32xbf16>
    %c4_551 = arith.constant 4 : index
    %c0_552 = arith.constant 0 : index
    %c0_553 = arith.constant 0 : index
    %1188 = vector.load %arg1[%c4_551, %c0_552, %c0_553] : memref<5x32x128xbf16, #tpu.memory_space<vmem>>, vector<1x32x128xbf16>
    %1189 = vector.shape_cast %1188 : vector<1x32x128xbf16> to vector<32x128xbf16>
    %cst_554 = arith.constant dense<0.000000e+00> : vector<8x128xf32>
    %1190 = tpu.matmul %1187, %1189, %cst_554 {dimension_numbers = #tpu.dot_dimension_numbers<[1], [0], [0], [1], [0, 0, 1, 1], [], []>} : vector<8x32xbf16>, vector<32x128xbf16>, vector<8x128xf32> -> vector<8x128xf32>
    %c4_555 = arith.constant 4 : index
    %c0_556 = arith.constant 0 : index
    %c0_557 = arith.constant 0 : index
    %1191 = vector.load %arg2[%c4_555, %c0_556, %c0_557] : memref<5x32x128xbf16, #tpu.memory_space<vmem>>, vector<1x32x128xbf16>
    %1192 = vector.shape_cast %1191 : vector<1x32x128xbf16> to vector<32x128xbf16>
    %cst_558 = arith.constant dense<0.000000e+00> : vector<8x128xf32>
    %1193 = tpu.matmul %1157, %1192, %cst_558 {dimension_numbers = #tpu.dot_dimension_numbers<[1], [0], [0], [1], [0, 0, 1, 1], [], []>} : vector<8x32xbf16>, vector<32x128xbf16>, vector<8x128xf32> -> vector<8x128xf32>
    %1194 = arith.addf %1190, %1193 : vector<8x128xf32>
    %c4_559 = arith.constant 4 : index
    %c0_560 = arith.constant 0 : index
    %c0_561 = arith.constant 0 : index
    %1195 = vector.load %arg3[%c4_559, %c0_560, %c0_561] : memref<5x1x128xf32, #tpu.memory_space<vmem>>, vector<1x1x128xf32>
    %1196 = vector.shape_cast %1195 : vector<1x1x128xf32> to vector<1x128xf32>
    %1197 = vector.broadcast %1196 : vector<1x128xf32> to vector<8x128xf32>
    %1198 = arith.addf %1194, %1197 : vector<8x128xf32>
    %1199 = vector.extract_strided_slice %1198 {offsets = [0, 0], sizes = [8, 96], strides = [1, 1]} : vector<8x128xf32> to vector<8x96xf32>
    %cst_562 = arith.constant 5.000000e-01 : f32
    %1200 = vector.broadcast %cst_562 : f32 to vector<8x96xf32>
    %1201 = arith.mulf %1200, %1199 : vector<8x96xf32>
    %1202 = math.tanh %1201 : vector<8x96xf32>
    %cst_563 = arith.constant 5.000000e-01 : f32
    %1203 = vector.broadcast %cst_563 : f32 to vector<8x96xf32>
    %1204 = arith.mulf %1203, %1202 : vector<8x96xf32>
    %cst_564 = arith.constant 5.000000e-01 : f32
    %1205 = vector.broadcast %cst_564 : f32 to vector<8x96xf32>
    %1206 = arith.addf %1204, %1205 : vector<8x96xf32>
    %1207 = vector.extract_strided_slice %1206 {offsets = [0, 0], sizes = [8, 32], strides = [1, 1]} : vector<8x96xf32> to vector<8x32xf32>
    %1208 = vector.extract_strided_slice %1206 {offsets = [0, 32], sizes = [8, 32], strides = [1, 1]} : vector<8x96xf32> to vector<8x32xf32>
    %1209 = vector.extract_strided_slice %1206 {offsets = [0, 64], sizes = [8, 32], strides = [1, 1]} : vector<8x96xf32> to vector<8x32xf32>
    %1210 = vector.extract_strided_slice %1198 {offsets = [0, 96], sizes = [8, 32], strides = [1, 1]} : vector<8x128xf32> to vector<8x32xf32>
    %1211 = math.tanh %1210 : vector<8x32xf32>
    %1212 = arith.mulf %1208, %1154 : vector<8x32xf32>
    %1213 = arith.mulf %1207, %1211 : vector<8x32xf32>
    %1214 = arith.addf %1212, %1213 : vector<8x32xf32>
    %1215 = math.tanh %1214 : vector<8x32xf32>
    %1216 = arith.mulf %1209, %1215 : vector<8x32xf32>
    %1217 = arith.truncf %1216 : vector<8x32xf32> to vector<8x32xbf16>
    %c56_565 = arith.constant 56 : index
    %c0_566 = arith.constant 0 : index
    %1218 = vector.load %arg0[%c56_565, %c0_566] : memref<64x32xf32, #tpu.memory_space<vmem>>, vector<8x32xf32>
    %1219 = arith.extf %1217 : vector<8x32xbf16> to vector<8x32xf32>
    %1220 = arith.addf %1219, %1218 : vector<8x32xf32>
    %c0_567 = arith.constant 0 : index
    %c0_568 = arith.constant 0 : index
    %1221 = vector.load %arg4[%c0_567, %c0_568] : memref<32x32xf32, #tpu.memory_space<vmem>>, vector<32x32xf32>
    %cst_569 = arith.constant dense<0.000000e+00> : vector<8x32xf32>
    %1222 = tpu.matmul %1220, %1221, %cst_569 {dimension_numbers = #tpu.dot_dimension_numbers<[1], [0], [0], [1], [0, 0, 1, 1], [], []>} : vector<8x32xf32>, vector<32x32xf32>, vector<8x32xf32> -> vector<8x32xf32>
    %c0_570 = arith.constant 0 : index
    %c0_571 = arith.constant 0 : index
    %1223 = vector.load %arg5[%c0_570, %c0_571] : memref<1x32xf32, #tpu.memory_space<vmem>>, vector<1x32xf32>
    %1224 = vector.broadcast %1223 : vector<1x32xf32> to vector<8x32xf32>
    %1225 = arith.addf %1222, %1224 : vector<8x32xf32>
    %cst_572 = arith.constant 0.000000e+00 : f32
    %1226 = vector.broadcast %cst_572 : f32 to vector<8x32xf32>
    %1227 = arith.maximumf %1225, %1226 : vector<8x32xf32>
    %c0_573 = arith.constant 0 : index
    %c0_574 = arith.constant 0 : index
    %1228 = vector.load %arg6[%c0_573, %c0_574] : memref<32x32xf32, #tpu.memory_space<vmem>>, vector<32x32xf32>
    %cst_575 = arith.constant dense<0.000000e+00> : vector<8x32xf32>
    %1229 = tpu.matmul %1227, %1228, %cst_575 {dimension_numbers = #tpu.dot_dimension_numbers<[1], [0], [0], [1], [0, 0, 1, 1], [], []>} : vector<8x32xf32>, vector<32x32xf32>, vector<8x32xf32> -> vector<8x32xf32>
    %c0_576 = arith.constant 0 : index
    %c0_577 = arith.constant 0 : index
    %1230 = vector.load %arg7[%c0_576, %c0_577] : memref<1x32xf32, #tpu.memory_space<vmem>>, vector<1x32xf32>
    %1231 = vector.broadcast %1230 : vector<1x32xf32> to vector<8x32xf32>
    %1232 = arith.addf %1229, %1231 : vector<8x32xf32>
    %cst_578 = arith.constant 0.000000e+00 : f32
    %1233 = vector.broadcast %cst_578 : f32 to vector<8x32xf32>
    %1234 = arith.maximumf %1232, %1233 : vector<8x32xf32>
    %c0_579 = arith.constant 0 : index
    %c0_580 = arith.constant 0 : index
    %1235 = vector.load %arg8[%c0_579, %c0_580] : memref<32x128xf32, #tpu.memory_space<vmem>>, vector<32x128xf32>
    %cst_581 = arith.constant dense<0.000000e+00> : vector<8x128xf32>
    %1236 = tpu.matmul %1234, %1235, %cst_581 {dimension_numbers = #tpu.dot_dimension_numbers<[1], [0], [0], [1], [0, 0, 1, 1], [], []>} : vector<8x32xf32>, vector<32x128xf32>, vector<8x128xf32> -> vector<8x128xf32>
    %c0_582 = arith.constant 0 : index
    %c0_583 = arith.constant 0 : index
    %1237 = vector.load %arg9[%c0_582, %c0_583] : memref<1x128xf32, #tpu.memory_space<vmem>>, vector<1x128xf32>
    %1238 = vector.broadcast %1237 : vector<1x128xf32> to vector<8x128xf32>
    %1239 = arith.addf %1236, %1238 : vector<8x128xf32>
    %c0_584 = arith.constant 0 : index
    %c0_585 = arith.constant 0 : index
    %1240 = vector.load %arg10[%c0_584, %c0_585] : memref<8x128xf32, #tpu.memory_space<vmem>>, vector<8x128xf32>
    tpu.vector_store %arg10[%c0_584, %c0_585], %1239 {strides = array<i32>} : memref<8x128xf32, #tpu.memory_space<vmem>>, vector<8x128xf32>,
    return
  }
}

</mosaic_0001>

<llo_original>
// kernel: rnn_forward.1
$region0: #{rnn_forward.1}
  #allocation0 [shape = 'u32[]', space=smem, size = 0x4, offset = 0x4, fixed_abs, tag = 'smem constant byte address 0x4 - core index']
  #allocation1 [shape = 'u32[144,128]{1,0:T(1,128)}', space=vmem, size = 0x12000, scoped, tag = 'internal scratch']
  %s0 = inlined_call_operand.vmem [shape: f32[64,32], index: 0, kind: input, shape index: {}]
  %s1 = inlined_call_operand.vmem [shape: bf16[5,32,128], index: 1, kind: input, shape index: {}]
  %s2 = inlined_call_operand.vmem [shape: bf16[5,32,128], index: 2, kind: input, shape index: {}]
  %s3 = inlined_call_operand.vmem [shape: f32[5,1,128], index: 3, kind: input, shape index: {}]
  %s4 = inlined_call_operand.vmem [shape: f32[32,32], index: 4, kind: input, shape index: {}]
  %s5 = inlined_call_operand.vmem [shape: f32[1,32], index: 5, kind: input, shape index: {}]
  %s6 = inlined_call_operand.vmem [shape: f32[32,32], index: 6, kind: input, shape index: {}]
  %s7 = inlined_call_operand.vmem [shape: f32[1,32], index: 7, kind: input, shape index: {}]
  %s8 = inlined_call_operand.vmem [shape: f32[32,128], index: 8, kind: input, shape index: {}]
  %s9 = inlined_call_operand.vmem [shape: f32[1,128], index: 9, kind: input, shape index: {}]
  %s10 = inlined_call_operand.vmem [shape: f32[8,128], index: 10, kind: output, shape index: {}]
  %s11 = sld [smem:[#allocation0]]
  $region50: #{rnn_forward.1} parent=0
    _
  %s13 = ssub.s32 1, %s11
  %s14 = scalar_select 0, %s13, %s11
  // Predicated region
  $region2: #{rnn_forward.1} parent=0 // pred_check
    _
  $region3: #{rnn_forward.1} parent=0 // pred_check_branch
    %16 = sbr.rel (0) target = $region5
  $region4: #{rnn_forward.1} parent=0 // pred_region
    _
  $region5: #{rnn_forward.1} parent=0 // pred_fallthru
    _
  // Predicated region
  $region6: #{rnn_forward.1} parent=0 // pred_check
    _
  $region7: #{rnn_forward.1} parent=0 // pred_check_branch
    %18 = sbr.rel (0) target = $region9
  $region8: #{rnn_forward.1} parent=0 // pred_region
    _
  $region9: #{rnn_forward.1} parent=0 // pred_fallthru
    _
  // Predicated region
  $region10: #{rnn_forward.1} parent=0 // pred_check
    _
  $region11: #{rnn_forward.1} parent=0 // pred_check_branch
    %20 = sbr.rel (0) target = $region13
  $region12: #{rnn_forward.1} parent=0 // pred_region
    _
  $region13: #{rnn_forward.1} parent=0 // pred_fallthru
    _
  // Predicated region
  $region14: #{rnn_forward.1} parent=0 // pred_check
    _
  $region15: #{rnn_forward.1} parent=0 // pred_check_branch
    %22 = sbr.rel (0) target = $region17
  $region16: #{rnn_forward.1} parent=0 // pred_region
    _
  $region17: #{rnn_forward.1} parent=0 // pred_fallthru
    _
  // Predicated region
  $region18: #{rnn_forward.1} parent=0 // pred_check
    _
  $region19: #{rnn_forward.1} parent=0 // pred_check_branch
    %24 = sbr.rel (0) target = $region21
  $region20: #{rnn_forward.1} parent=0 // pred_region
    _
  $region21: #{rnn_forward.1} parent=0 // pred_fallthru
    _
  // Predicated region
  $region22: #{rnn_forward.1} parent=0 // pred_check
    _
  $region23: #{rnn_forward.1} parent=0 // pred_check_branch
    %26 = sbr.rel (0) target = $region25
  $region24: #{rnn_forward.1} parent=0 // pred_region
    _
  $region25: #{rnn_forward.1} parent=0 // pred_fallthru
    _
  // Predicated region
  $region26: #{rnn_forward.1} parent=0 // pred_check
    _
  $region27: #{rnn_forward.1} parent=0 // pred_check_branch
    %28 = sbr.rel (0) target = $region29
  $region28: #{rnn_forward.1} parent=0 // pred_region
    _
  $region29: #{rnn_forward.1} parent=0 // pred_fallthru
    _
  // Predicated region
  $region30: #{rnn_forward.1} parent=0 // pred_check
    _
  $region31: #{rnn_forward.1} parent=0 // pred_check_branch
    %30 = sbr.rel (0) target = $region33
  $region32: #{rnn_forward.1} parent=0 // pred_region
    _
  $region33: #{rnn_forward.1} parent=0 // pred_fallthru
    _
  // Predicated region
  $region34: #{rnn_forward.1} parent=0 // pred_check
    _
  $region35: #{rnn_forward.1} parent=0 // pred_check_branch
    %32 = sbr.rel (0) target = $region37
  $region36: #{rnn_forward.1} parent=0 // pred_region
    _
  $region37: #{rnn_forward.1} parent=0 // pred_fallthru
    _
  // Predicated region
  $region38: #{rnn_forward.1} parent=0 // pred_check
    _
  $region39: #{rnn_forward.1} parent=0 // pred_check_branch
    %34 = sbr.rel (0) target = $region41
  $region40: #{rnn_forward.1} parent=0 // pred_region
    _
  $region41: #{rnn_forward.1} parent=0 // pred_fallthru
    _
  %v36 = vld [vmem:[%s0] sm:$0xff]
  %v37 = vpack.c.bf16 %v36, %v36
  %v38 = vld [vmem:[%s1] sm:$0xf]
  %v39 = vld [vmem:[%s1 + $0x4] sm:$0xf]
  %v40 = vld [vmem:[%s1 + $0x8] sm:$0xf]
  %v41 = vld [vmem:[%s1 + $0xc] sm:$0xf]
  %v42 = vld [vmem:[%s2] sm:$0xf]
  %v43 = vld [vmem:[%s2 + $0x4] sm:$0xf]
  %v44 = vld [vmem:[%s2 + $0x8] sm:$0xf]
  %v45 = vld [vmem:[%s2 + $0xc] sm:$0xf]
  %v50 = vunpack.c.l.b16 %v42
  %v51 = vunpack.c.l.b16 %v43
  %v52 = vunpack.c.l.b16 %v44
  %v53 = vunpack.c.l.b16 %v45
  %v54 = vpack.c.b16 %v51, %v50
  %v55 = vpack.c.b16 %v53, %v52
  %vm58 = vcmask 261120
  %v60 = vsel %vm58, 0, 0
  %62 = vmatprep.subr.bf16.mxu0 0
  %63 = vmatpush1.bf16.msra.mxu0 %v54
  %64 = vmatprep.subr.bf16.mxu0 0
  %65 = vmatpush1.bf16.msra.mxu0 %v55
  %66 = vmatprep.subr.bf16.mxu0 0
  %67 = vmatpush1.bf16.msra.mxu0 0
  %68 = vmatprep.subr.bf16.mxu0 0
  %69 = vmatpush1.bf16.msra.mxu0 0
  %70 = vmatprep.subr.bf16.mxu0 0
  %71 = vmatpush1.bf16.msra.mxu0 0
  %72 = vmatprep.subr.bf16.mxu0 0
  %73 = vmatpush1.bf16.msra.mxu0 0
  %74 = vmatprep.subr.bf16.mxu0 0
  %75 = vmatpush1.bf16.msra.mxu0 0
  %76 = vmatprep.subr.bf16.mxu0 0
  %77 = vmatpush1.bf16.msra.mxu0 0
  %78 = vmatprep.subr.bf16.mxu0 0
  %79 = vmatpush1.bf16.msra.mxu0 0
  %80 = vmatprep.subr.bf16.mxu0 0
  %81 = vmatpush1.bf16.msra.mxu0 0
  %82 = vmatprep.subr.bf16.mxu0 0
  %83 = vmatpush1.bf16.msra.mxu0 0
  %84 = vmatprep.subr.bf16.mxu0 0
  %85 = vmatpush1.bf16.msra.mxu0 0
  %86 = vmatprep.subr.bf16.mxu0 0
  %87 = vmatpush1.bf16.msra.mxu0 0
  %88 = vmatprep.subr.bf16.mxu0 0
  %89 = vmatpush1.bf16.msra.mxu0 0
  %90 = vmatprep.subr.bf16.mxu0 0
  %91 = vmatpush1.bf16.msra.mxu0 0
  %92 = vmatprep.subr.bf16.mxu0 0
  %93 = vmatpush1.bf16.msra.mxu0 0
  %94 = vmatprep.mubr.bf16.mxu0 0
  %95 = vmatmul.mubr.bf16.gmra.mrb[0].mxu0 %v60
  %v96 = vpop.f32.mrb[0].mxu0
  %v97 = vadd.f32 0.0, %v96
  %v98 = vpop.f32.mrb[0].mxu0
  %v99 = vpop.f32.mrb[0].mxu0
  %v100 = vpop.f32.mrb[0].mxu0
  %101 = vdwg.mxu0
  %v106 = vunpack.c.l.b16 %v38
  %v107 = vunpack.c.l.b16 %v39
  %v108 = vunpack.c.l.b16 %v40
  %v109 = vunpack.c.l.b16 %v41
  %v110 = vpack.c.b16 %v107, %v106
  %v111 = vpack.c.b16 %v109, %v108
  %v115 = vsel %vm58, %v37, 0
  %117 = vmatprep.subr.bf16.mxu0 0
  %118 = vmatpush1.bf16.msra.mxu0 %v110
  %119 = vmatprep.subr.bf16.mxu0 0
  %120 = vmatpush1.bf16.msra.mxu0 %v111
  %121 = vmatprep.subr.bf16.mxu0 0
  %122 = vmatpush1.bf16.msra.mxu0 0
  %123 = vmatprep.subr.bf16.mxu0 0
  %124 = vmatpush1.bf16.msra.mxu0 0
  %125 = vmatprep.subr.bf16.mxu0 0
  %126 = vmatpush1.bf16.msra.mxu0 0
  %127 = vmatprep.subr.bf16.mxu0 0
  %128 = vmatpush1.bf16.msra.mxu0 0
  %129 = vmatprep.subr.bf16.mxu0 0
  %130 = vmatpush1.bf16.msra.mxu0 0
  %131 = vmatprep.subr.bf16.mxu0 0
  %132 = vmatpush1.bf16.msra.mxu0 0
  %133 = vmatprep.subr.bf16.mxu0 0
  %134 = vmatpush1.bf16.msra.mxu0 0
  %135 = vmatprep.subr.bf16.mxu0 0
  %136 = vmatpush1.bf16.msra.mxu0 0
  %137 = vmatprep.subr.bf16.mxu0 0
  %138 = vmatpush1.bf16.msra.mxu0 0
  %139 = vmatprep.subr.bf16.mxu0 0
  %140 = vmatpush1.bf16.msra.mxu0 0
  %141 = vmatprep.subr.bf16.mxu0 0
  %142 = vmatpush1.bf16.msra.mxu0 0
  %143 = vmatprep.subr.bf16.mxu0 0
  %144 = vmatpush1.bf16.msra.mxu0 0
  %145 = vmatprep.subr.bf16.mxu0 0
  %146 = vmatpush1.bf16.msra.mxu0 0
  %147 = vmatprep.subr.bf16.mxu0 0
  %148 = vmatpush1.bf16.msra.mxu0 0
  %149 = vmatprep.mubr.bf16.mxu0 0
  %150 = vmatmul.mubr.bf16.gmra.mrb[0].mxu0 %v115
  %v151 = vpop.f32.mrb[0].mxu0
  %v152 = vadd.f32 %v97, %v151
  %v153 = vpop.f32.mrb[0].mxu0
  %v154 = vpop.f32.mrb[0].mxu0
  %v155 = vpop.f32.mrb[0].mxu0
  %156 = vdwg.mxu0
  %v157 = vld [vmem:[%s3] sm:$0x1]
  %v159 = vlaneseq
  %v160 = vshrl.u32 %v159, 7
  %v161 = vsub.s32 0, %v160
  %v162 = vrot.slane %v157, %v161
  %v164 = vadd.f32 %v152, %v162
  %v165 = vmul.f32 %v164, 0.5
  %v166 = vtanh.pop %v165
  %v167 = vmul.f32 %v166, 0.5
  %v168 = vadd.f32 %v167, 0.5
  %v169 = vtanh.pop %v164
  %v170 = vmul.f32 %v168, 0.0
  %172 = vrot.lane.b32.xlu0 %v169, 32
  %v173 = vpop.permute.xlu0 %172
  %v175 = vmul.f32 %v168, %v173
  %177 = vrot.lane.b32.xlu0 %v175, 32
  %v178 = vpop.permute.xlu0 %177
  %v180 = vadd.f32 %v170, %v178
  %v181 = vtanh.pop %v180
  %183 = vrot.lane.b32.xlu0 %v181, 32
  %v184 = vpop.permute.xlu0 %183
  %v186 = vmul.f32 %v168, %v184
  %v187 = vpack.c.bf16 %v186, %v186
  %s188 = scalar_lea.vmem %s1, 16
  %v189 = vld [vmem:[%s188] sm:$0xf]
  %v190 = vld [vmem:[%s188 + $0x4] sm:$0xf]
  %v191 = vld [vmem:[%s188 + $0x8] sm:$0xf]
  %v192 = vld [vmem:[%s188 + $0xc] sm:$0xf]
  %s193 = scalar_lea.vmem %s2, 16
  %v194 = vld [vmem:[%s193] sm:$0xf]
  %v195 = vld [vmem:[%s193 + $0x4] sm:$0xf]
  %v196 = vld [vmem:[%s193 + $0x8] sm:$0xf]
  %v197 = vld [vmem:[%s193 + $0xc] sm:$0xf]
  %v202 = vunpack.c.l.b16 %v194
  %v203 = vunpack.c.l.b16 %v195
  %v204 = vunpack.c.l.b16 %v196
  %v205 = vunpack.c.l.b16 %v197
  %v206 = vpack.c.b16 %v203, %v202
  %v207 = vpack.c.b16 %v205, %v204
  %210 = vmatprep.subr.bf16.mxu0 0
  %211 = vmatpush1.bf16.msra.mxu0 %v206
  %212 = vmatprep.subr.bf16.mxu0 0
  %213 = vmatpush1.bf16.msra.mxu0 %v207
  %214 = vmatprep.subr.bf16.mxu0 0
  %215 = vmatpush1.bf16.msra.mxu0 0
  %216 = vmatprep.subr.bf16.mxu0 0
  %217 = vmatpush1.bf16.msra.mxu0 0
  %218 = vmatprep.subr.bf16.mxu0 0
  %219 = vmatpush1.bf16.msra.mxu0 0
  %220 = vmatprep.subr.bf16.mxu0 0
  %221 = vmatpush1.bf16.msra.mxu0 0
  %222 = vmatprep.subr.bf16.mxu0 0
  %223 = vmatpush1.bf16.msra.mxu0 0
  %224 = vmatprep.subr.bf16.mxu0 0
  %225 = vmatpush1.bf16.msra.mxu0 0
  %226 = vmatprep.subr.bf16.mxu0 0
  %227 = vmatpush1.bf16.msra.mxu0 0
  %228 = vmatprep.subr.bf16.mxu0 0
  %229 = vmatpush1.bf16.msra.mxu0 0
  %230 = vmatprep.subr.bf16.mxu0 0
  %231 = vmatpush1.bf16.msra.mxu0 0
  %232 = vmatprep.subr.bf16.mxu0 0
  %233 = vmatpush1.bf16.msra.mxu0 0
  %234 = vmatprep.subr.bf16.mxu0 0
  %235 = vmatpush1.bf16.msra.mxu0 0
  %236 = vmatprep.subr.bf16.mxu0 0
  %237 = vmatpush1.bf16.msra.mxu0 0
  %238 = vmatprep.subr.bf16.mxu0 0
  %239 = vmatpush1.bf16.msra.mxu0 0
  %240 = vmatprep.subr.bf16.mxu0 0
  %241 = vmatpush1.bf16.msra.mxu0 0
  %242 = vmatprep.mubr.bf16.mxu0 0
  %243 = vmatmul.mubr.bf16.gmra.mrb[0].mxu0 %v60
  %v244 = vpop.f32.mrb[0].mxu0
  %v245 = vadd.f32 0.0, %v244
  %v246 = vpop.f32.mrb[0].mxu0
  %v247 = vpop.f32.mrb[0].mxu0
  %v248 = vpop.f32.mrb[0].mxu0
  %249 = vdwg.mxu0
  %251 = vrot.lane.b32.xlu0 %v187, 64
  %v252 = vpop.permute.xlu0 %251
  %v257 = vunpack.c.l.b16 %v189
  %v258 = vunpack.c.l.b16 %v190
  %v259 = vunpack.c.l.b16 %v191
  %v260 = vunpack.c.l.b16 %v192
  %v261 = vpack.c.b16 %v258, %v257
  %v262 = vpack.c.b16 %v260, %v259
  %v266 = vsel %vm58, %v252, 0
  %268 = vmatprep.subr.bf16.mxu0 0
  %269 = vmatpush1.bf16.msra.mxu0 %v261
  %270 = vmatprep.subr.bf16.mxu0 0
  %271 = vmatpush1.bf16.msra.mxu0 %v262
  %272 = vmatprep.subr.bf16.mxu0 0
  %273 = vmatpush1.bf16.msra.mxu0 0
  %274 = vmatprep.subr.bf16.mxu0 0
  %275 = vmatpush1.bf16.msra.mxu0 0
  %276 = vmatprep.subr.bf16.mxu0 0
  %277 = vmatpush1.bf16.msra.mxu0 0
  %278 = vmatprep.subr.bf16.mxu0 0
  %279 = vmatpush1.bf16.msra.mxu0 0
  %280 = vmatprep.subr.bf16.mxu0 0
  %281 = vmatpush1.bf16.msra.mxu0 0
  %282 = vmatprep.subr.bf16.mxu0 0
  %283 = vmatpush1.bf16.msra.mxu0 0
  %284 = vmatprep.subr.bf16.mxu0 0
  %285 = vmatpush1.bf16.msra.mxu0 0
  %286 = vmatprep.subr.bf16.mxu0 0
  %287 = vmatpush1.bf16.msra.mxu0 0
  %288 = vmatprep.subr.bf16.mxu0 0
  %289 = vmatpush1.bf16.msra.mxu0 0
  %290 = vmatprep.subr.bf16.mxu0 0
  %291 = vmatpush1.bf16.msra.mxu0 0
  %292 = vmatprep.subr.bf16.mxu0 0
  %293 = vmatpush1.bf16.msra.mxu0 0
  %294 = vmatprep.subr.bf16.mxu0 0
  %295 = vmatpush1.bf16.msra.mxu0 0
  %296 = vmatprep.subr.bf16.mxu0 0
  %297 = vmatpush1.bf16.msra.mxu0 0
  %298 = vmatprep.subr.bf16.mxu0 0
  %299 = vmatpush1.bf16.msra.mxu0 0
  %300 = vmatprep.mubr.bf16.mxu0 0
  %301 = vmatmul.mubr.bf16.gmra.mrb[0].mxu0 %v266
  %v302 = vpop.f32.mrb[0].mxu0
  %v303 = vadd.f32 %v245, %v302
  %v304 = vpop.f32.mrb[0].mxu0
  %v305 = vpop.f32.mrb[0].mxu0
  %v306 = vpop.f32.mrb[0].mxu0
  %307 = vdwg.mxu0
  %s308 = scalar_lea.vmem %s3, 1
  %v309 = vld [vmem:[%s308] sm:$0x1]
  %v311 = vlaneseq
  %v312 = vshrl.u32 %v311, 7
  %v313 = vsub.s32 0, %v312
  %v314 = vrot.slane %v309, %v313
  %v316 = vadd.f32 %v303, %v314
  %v317 = vmul.f32 %v316, 0.5
  %v318 = vtanh.pop %v317
  %v319 = vmul.f32 %v318, 0.5
  %v320 = vadd.f32 %v319, 0.5
  %v321 = vtanh.pop %v316
  %v322 = vmul.f32 %v320, 0.0
  %324 = vrot.lane.b32.xlu0 %v321, 32
  %v325 = vpop.permute.xlu0 %324
  %v327 = vmul.f32 %v320, %v325
  %329 = vrot.lane.b32.xlu0 %v327, 32
  %v330 = vpop.permute.xlu0 %329
  %v332 = vadd.f32 %v322, %v330
  %v333 = vtanh.pop %v332
  %335 = vrot.lane.b32.xlu0 %v333, 32
  %v336 = vpop.permute.xlu0 %335
  %v338 = vmul.f32 %v320, %v336
  %v339 = vpack.c.bf16 %v338, %v338
  %v340 = vld [vmem:[%s0 + $0x8] sm:$0xff]
  %v341 = vpack.c.bf16 %v340, %v340
  %342 = vmatprep.subr.bf16.mxu0 0
  %343 = vmatpush1.bf16.msra.mxu0 %v54
  %344 = vmatprep.subr.bf16.mxu0 0
  %345 = vmatpush1.bf16.msra.mxu0 %v55
  %346 = vmatprep.subr.bf16.mxu0 0
  %347 = vmatpush1.bf16.msra.mxu0 0
  %348 = vmatprep.subr.bf16.mxu0 0
  %349 = vmatpush1.bf16.msra.mxu0 0
  %350 = vmatprep.subr.bf16.mxu0 0
  %351 = vmatpush1.bf16.msra.mxu0 0
  %352 = vmatprep.subr.bf16.mxu0 0
  %353 = vmatpush1.bf16.msra.mxu0 0
  %354 = vmatprep.subr.bf16.mxu0 0
  %355 = vmatpush1.bf16.msra.mxu0 0
  %356 = vmatprep.subr.bf16.mxu0 0
  %357 = vmatpush1.bf16.msra.mxu0 0
  %358 = vmatprep.subr.bf16.mxu0 0
  %359 = vmatpush1.bf16.msra.mxu0 0
  %360 = vmatprep.subr.bf16.mxu0 0
  %361 = vmatpush1.bf16.msra.mxu0 0
  %362 = vmatprep.subr.bf16.mxu0 0
  %363 = vmatpush1.bf16.msra.mxu0 0
  %364 = vmatprep.subr.bf16.mxu0 0
  %365 = vmatpush1.bf16.msra.mxu0 0
  %366 = vmatprep.subr.bf16.mxu0 0
  %367 = vmatpush1.bf16.msra.mxu0 0
  %368 = vmatprep.subr.bf16.mxu0 0
  %369 = vmatpush1.bf16.msra.mxu0 0
  %370 = vmatprep.subr.bf16.mxu0 0
  %371 = vmatpush1.bf16.msra.mxu0 0
  %372 = vmatprep.subr.bf16.mxu0 0
  %373 = vmatpush1.bf16.msra.mxu0 0
  %374 = vmatprep.mubr.bf16.mxu0 0
  %375 = vmatmul.mubr.bf16.gmra.mrb[0].mxu0 %v266
  %v376 = vpop.f32.mrb[0].mxu0
  %v377 = vadd.f32 0.0, %v376
  %v378 = vpop.f32.mrb[0].mxu0
  %v379 = vpop.f32.mrb[0].mxu0
  %v380 = vpop.f32.mrb[0].mxu0
  %381 = vdwg.mxu0
  %v383 = vsel %vm58, %v341, 0
  %385 = vmatprep.subr.bf16.mxu0 0
  %386 = vmatpush1.bf16.msra.mxu0 %v110
  %387 = vmatprep.subr.bf16.mxu0 0
  %388 = vmatpush1.bf16.msra.mxu0 %v111
  %389 = vmatprep.subr.bf16.mxu0 0
  %390 = vmatpush1.bf16.msra.mxu0 0
  %391 = vmatprep.subr.bf16.mxu0 0
  %392 = vmatpush1.bf16.msra.mxu0 0
  %393 = vmatprep.subr.bf16.mxu0 0
  %394 = vmatpush1.bf16.msra.mxu0 0
  %395 = vmatprep.subr.bf16.mxu0 0
  %396 = vmatpush1.bf16.msra.mxu0 0
  %397 = vmatprep.subr.bf16.mxu0 0
  %398 = vmatpush1.bf16.msra.mxu0 0
  %399 = vmatprep.subr.bf16.mxu0 0
  %400 = vmatpush1.bf16.msra.mxu0 0
  %401 = vmatprep.subr.bf16.mxu0 0
  %402 = vmatpush1.bf16.msra.mxu0 0
  %403 = vmatprep.subr.bf16.mxu0 0
  %404 = vmatpush1.bf16.msra.mxu0 0
  %405 = vmatprep.subr.bf16.mxu0 0
  %406 = vmatpush1.bf16.msra.mxu0 0
  %407 = vmatprep.subr.bf16.mxu0 0
  %408 = vmatpush1.bf16.msra.mxu0 0
  %409 = vmatprep.subr.bf16.mxu0 0
  %410 = vmatpush1.bf16.msra.mxu0 0
  %411 = vmatprep.subr.bf16.mxu0 0
  %412 = vmatpush1.bf16.msra.mxu0 0
  %413 = vmatprep.subr.bf16.mxu0 0
  %414 = vmatpush1.bf16.msra.mxu0 0
  %415 = vmatprep.subr.bf16.mxu0 0
  %416 = vmatpush1.bf16.msra.mxu0 0
  %417 = vmatprep.mubr.bf16.mxu0 0
  %418 = vmatmul.mubr.bf16.gmra.mrb[0].mxu0 %v383
  %v419 = vpop.f32.mrb[0].mxu0
  %v420 = vadd.f32 %v377, %v419
  %v421 = vpop.f32.mrb[0].mxu0
  %v422 = vpop.f32.mrb[0].mxu0
  %v423 = vpop.f32.mrb[0].mxu0
  %424 = vdwg.mxu0
  %v425 = vadd.f32 %v420, %v162
  %v426 = vmul.f32 %v425, 0.5
  %v427 = vtanh.pop %v426
  %v428 = vmul.f32 %v427, 0.5
  %v429 = vadd.f32 %v428, 0.5
  %v430 = vtanh.pop %v425
  %v431 = vmul.f32 %v429, %v180
  %433 = vrot.lane.b32.xlu0 %v430, 32
  %v434 = vpop.permute.xlu0 %433
  %v436 = vmul.f32 %v429, %v434
  %438 = vrot.lane.b32.xlu0 %v436, 32
  %v439 = vpop.permute.xlu0 %438
  %v441 = vadd.f32 %v431, %v439
  %v442 = vtanh.pop %v441
  %444 = vrot.lane.b32.xlu0 %v442, 32
  %v445 = vpop.permute.xlu0 %444
  %v447 = vmul.f32 %v429, %v445
  %v448 = vpack.c.bf16 %v447, %v447
  %s449 = scalar_lea.vmem %s1, 32
  %v450 = vld [vmem:[%s449] sm:$0xf]
  %v451 = vld [vmem:[%s449 + $0x4] sm:$0xf]
  %v452 = vld [vmem:[%s449 + $0x8] sm:$0xf]
  %v453 = vld [vmem:[%s449 + $0xc] sm:$0xf]
  %s454 = scalar_lea.vmem %s2, 32
  %v455 = vld [vmem:[%s454] sm:$0xf]
  %v456 = vld [vmem:[%s454 + $0x4] sm:$0xf]
  %v457 = vld [vmem:[%s454 + $0x8] sm:$0xf]
  %v458 = vld [vmem:[%s454 + $0xc] sm:$0xf]
  %v463 = vunpack.c.l.b16 %v455
  %v464 = vunpack.c.l.b16 %v456
  %v465 = vunpack.c.l.b16 %v457
  %v466 = vunpack.c.l.b16 %v458
  %v467 = vpack.c.b16 %v464, %v463
  %v468 = vpack.c.b16 %v466, %v465
  %471 = vmatprep.subr.bf16.mxu0 0
  %472 = vmatpush1.bf16.msra.mxu0 %v467
  %473 = vmatprep.subr.bf16.mxu0 0
  %474 = vmatpush1.bf16.msra.mxu0 %v468
  %475 = vmatprep.subr.bf16.mxu0 0
  %476 = vmatpush1.bf16.msra.mxu0 0
  %477 = vmatprep.subr.bf16.mxu0 0
  %478 = vmatpush1.bf16.msra.mxu0 0
  %479 = vmatprep.subr.bf16.mxu0 0
  %480 = vmatpush1.bf16.msra.mxu0 0
  %481 = vmatprep.subr.bf16.mxu0 0
  %482 = vmatpush1.bf16.msra.mxu0 0
  %483 = vmatprep.subr.bf16.mxu0 0
  %484 = vmatpush1.bf16.msra.mxu0 0
  %485 = vmatprep.subr.bf16.mxu0 0
  %486 = vmatpush1.bf16.msra.mxu0 0
  %487 = vmatprep.subr.bf16.mxu0 0
  %488 = vmatpush1.bf16.msra.mxu0 0
  %489 = vmatprep.subr.bf16.mxu0 0
  %490 = vmatpush1.bf16.msra.mxu0 0
  %491 = vmatprep.subr.bf16.mxu0 0
  %492 = vmatpush1.bf16.msra.mxu0 0
  %493 = vmatprep.subr.bf16.mxu0 0
  %494 = vmatpush1.bf16.msra.mxu0 0
  %495 = vmatprep.subr.bf16.mxu0 0
  %496 = vmatpush1.bf16.msra.mxu0 0
  %497 = vmatprep.subr.bf16.mxu0 0
  %498 = vmatpush1.bf16.msra.mxu0 0
  %499 = vmatprep.subr.bf16.mxu0 0
  %500 = vmatpush1.bf16.msra.mxu0 0
  %501 = vmatprep.subr.bf16.mxu0 0
  %502 = vmatpush1.bf16.msra.mxu0 0
  %503 = vmatprep.mubr.bf16.mxu0 0
  %504 = vmatmul.mubr.bf16.gmra.mrb[0].mxu0 %v60
  %v505 = vpop.f32.mrb[0].mxu0
  %v506 = vadd.f32 0.0, %v505
  %v507 = vpop.f32.mrb[0].mxu0
  %v508 = vpop.f32.mrb[0].mxu0
  %v509 = vpop.f32.mrb[0].mxu0
  %510 = vdwg.mxu0
  %512 = vrot.lane.b32.xlu0 %v339, 64
  %v513 = vpop.permute.xlu0 %512
  %v518 = vunpack.c.l.b16 %v450
  %v519 = vunpack.c.l.b16 %v451
  %v520 = vunpack.c.l.b16 %v452
  %v521 = vunpack.c.l.b16 %v453
  %v522 = vpack.c.b16 %v519, %v518
  %v523 = vpack.c.b16 %v521, %v520
  %v527 = vsel %vm58, %v513, 0
  %529 = vmatprep.subr.bf16.mxu0 0
  %530 = vmatpush1.bf16.msra.mxu0 %v522
  %531 = vmatprep.subr.bf16.mxu0 0
  %532 = vmatpush1.bf16.msra.mxu0 %v523
  %533 = vmatprep.subr.bf16.mxu0 0
  %534 = vmatpush1.bf16.msra.mxu0 0
  %535 = vmatprep.subr.bf16.mxu0 0
  %536 = vmatpush1.bf16.msra.mxu0 0
  %537 = vmatprep.subr.bf16.mxu0 0
  %538 = vmatpush1.bf16.msra.mxu0 0
  %539 = vmatprep.subr.bf16.mxu0 0
  %540 = vmatpush1.bf16.msra.mxu0 0
  %541 = vmatprep.subr.bf16.mxu0 0
  %542 = vmatpush1.bf16.msra.mxu0 0
  %543 = vmatprep.subr.bf16.mxu0 0
  %544 = vmatpush1.bf16.msra.mxu0 0
  %545 = vmatprep.subr.bf16.mxu0 0
  %546 = vmatpush1.bf16.msra.mxu0 0
  %547 = vmatprep.subr.bf16.mxu0 0
  %548 = vmatpush1.bf16.msra.mxu0 0
  %549 = vmatprep.subr.bf16.mxu0 0
  %550 = vmatpush1.bf16.msra.mxu0 0
  %551 = vmatprep.subr.bf16.mxu0 0
  %552 = vmatpush1.bf16.msra.mxu0 0
  %553 = vmatprep.subr.bf16.mxu0 0
  %554 = vmatpush1.bf16.msra.mxu0 0
  %555 = vmatprep.subr.bf16.mxu0 0
  %556 = vmatpush1.bf16.msra.mxu0 0
  %557 = vmatprep.subr.bf16.mxu0 0
  %558 = vmatpush1.bf16.msra.mxu0 0
  %559 = vmatprep.subr.bf16.mxu0 0
  %560 = vmatpush1.bf16.msra.mxu0 0
  %561 = vmatprep.mubr.bf16.mxu0 0
  %562 = vmatmul.mubr.bf16.gmra.mrb[0].mxu0 %v527
  %v563 = vpop.f32.mrb[0].mxu0
  %v564 = vadd.f32 %v506, %v563
  %v565 = vpop.f32.mrb[0].mxu0
  %v566 = vpop.f32.mrb[0].mxu0
  %v567 = vpop.f32.mrb[0].mxu0
  %568 = vdwg.mxu0
  %s569 = scalar_lea.vmem %s3, 2
  %v570 = vld [vmem:[%s569] sm:$0x1]
  %v572 = vlaneseq
  %v573 = vshrl.u32 %v572, 7
  %v574 = vsub.s32 0, %v573
  %v575 = vrot.slane %v570, %v574
  %v577 = vadd.f32 %v564, %v575
  %v578 = vmul.f32 %v577, 0.5
  %v579 = vtanh.pop %v578
  %v580 = vmul.f32 %v579, 0.5
  %v581 = vadd.f32 %v580, 0.5
  %v582 = vtanh.pop %v577
  %v583 = vmul.f32 %v581, 0.0
  %585 = vrot.lane.b32.xlu0 %v582, 32
  %v586 = vpop.permute.xlu0 %585
  %v588 = vmul.f32 %v581, %v586
  %590 = vrot.lane.b32.xlu0 %v588, 32
  %v591 = vpop.permute.xlu0 %590
  %v593 = vadd.f32 %v583, %v591
  %v594 = vtanh.pop %v593
  %596 = vrot.lane.b32.xlu0 %v594, 32
  %v597 = vpop.permute.xlu0 %596
  %v599 = vmul.f32 %v581, %v597
  %v600 = vpack.c.bf16 %v599, %v599
  %601 = vmatprep.subr.bf16.mxu0 0
  %602 = vmatpush1.bf16.msra.mxu0 %v206
  %603 = vmatprep.subr.bf16.mxu0 0
  %604 = vmatpush1.bf16.msra.mxu0 %v207
  %605 = vmatprep.subr.bf16.mxu0 0
  %606 = vmatpush1.bf16.msra.mxu0 0
  %607 = vmatprep.subr.bf16.mxu0 0
  %608 = vmatpush1.bf16.msra.mxu0 0
  %609 = vmatprep.subr.bf16.mxu0 0
  %610 = vmatpush1.bf16.msra.mxu0 0
  %611 = vmatprep.subr.bf16.mxu0 0
  %612 = vmatpush1.bf16.msra.mxu0 0
  %613 = vmatprep.subr.bf16.mxu0 0
  %614 = vmatpush1.bf16.msra.mxu0 0
  %615 = vmatprep.subr.bf16.mxu0 0
  %616 = vmatpush1.bf16.msra.mxu0 0
  %617 = vmatprep.subr.bf16.mxu0 0
  %618 = vmatpush1.bf16.msra.mxu0 0
  %619 = vmatprep.subr.bf16.mxu0 0
  %620 = vmatpush1.bf16.msra.mxu0 0
  %621 = vmatprep.subr.bf16.mxu0 0
  %622 = vmatpush1.bf16.msra.mxu0 0
  %623 = vmatprep.subr.bf16.mxu0 0
  %624 = vmatpush1.bf16.msra.mxu0 0
  %625 = vmatprep.subr.bf16.mxu0 0
  %626 = vmatpush1.bf16.msra.mxu0 0
  %627 = vmatprep.subr.bf16.mxu0 0
  %628 = vmatpush1.bf16.msra.mxu0 0
  %629 = vmatprep.subr.bf16.mxu0 0
  %630 = vmatpush1.bf16.msra.mxu0 0
  %631 = vmatprep.subr.bf16.mxu0 0
  %632 = vmatpush1.bf16.msra.mxu0 0
  %633 = vmatprep.mubr.bf16.mxu0 0
  %634 = vmatmul.mubr.bf16.gmra.mrb[0].mxu0 %v527
  %v635 = vpop.f32.mrb[0].mxu0
  %v636 = vadd.f32 0.0, %v635
  %v637 = vpop.f32.mrb[0].mxu0
  %v638 = vpop.f32.mrb[0].mxu0
  %v639 = vpop.f32.mrb[0].mxu0
  %640 = vdwg.mxu0
  %642 = vrot.lane.b32.xlu0 %v448, 64
  %v643 = vpop.permute.xlu0 %642
  %v645 = vsel %vm58, %v643, 0
  %647 = vmatprep.subr.bf16.mxu0 0
  %648 = vmatpush1.bf16.msra.mxu0 %v261
  %649 = vmatprep.subr.bf16.mxu0 0
  %650 = vmatpush1.bf16.msra.mxu0 %v262
  %651 = vmatprep.subr.bf16.mxu0 0
  %652 = vmatpush1.bf16.msra.mxu0 0
  %653 = vmatprep.subr.bf16.mxu0 0
  %654 = vmatpush1.bf16.msra.mxu0 0
  %655 = vmatprep.subr.bf16.mxu0 0
  %656 = vmatpush1.bf16.msra.mxu0 0
  %657 = vmatprep.subr.bf16.mxu0 0
  %658 = vmatpush1.bf16.msra.mxu0 0
  %659 = vmatprep.subr.bf16.mxu0 0
  %660 = vmatpush1.bf16.msra.mxu0 0
  %661 = vmatprep.subr.bf16.mxu0 0
  %662 = vmatpush1.bf16.msra.mxu0 0
  %663 = vmatprep.subr.bf16.mxu0 0
  %664 = vmatpush1.bf16.msra.mxu0 0
  %665 = vmatprep.subr.bf16.mxu0 0
  %666 = vmatpush1.bf16.msra.mxu0 0
  %667 = vmatprep.subr.bf16.mxu0 0
  %668 = vmatpush1.bf16.msra.mxu0 0
  %669 = vmatprep.subr.bf16.mxu0 0
  %670 = vmatpush1.bf16.msra.mxu0 0
  %671 = vmatprep.subr.bf16.mxu0 0
  %672 = vmatpush1.bf16.msra.mxu0 0
  %673 = vmatprep.subr.bf16.mxu0 0
  %674 = vmatpush1.bf16.msra.mxu0 0
  %675 = vmatprep.subr.bf16.mxu0 0
  %676 = vmatpush1.bf16.msra.mxu0 0
  %677 = vmatprep.subr.bf16.mxu0 0
  %678 = vmatpush1.bf16.msra.mxu0 0
  %679 = vmatprep.mubr.bf16.mxu0 0
  %680 = vmatmul.mubr.bf16.gmra.mrb[0].mxu0 %v645
  %v681 = vpop.f32.mrb[0].mxu0
  %v682 = vadd.f32 %v636, %v681
  %v683 = vpop.f32.mrb[0].mxu0
  %v684 = vpop.f32.mrb[0].mxu0
  %v685 = vpop.f32.mrb[0].mxu0
  %686 = vdwg.mxu0
  %v687 = vadd.f32 %v682, %v314
  %v688 = vmul.f32 %v687, 0.5
  %v689 = vtanh.pop %v688
  %v690 = vmul.f32 %v689, 0.5
  %v691 = vadd.f32 %v690, 0.5
  %v692 = vtanh.pop %v687
  %v693 = vmul.f32 %v691, %v332
  %695 = vrot.lane.b32.xlu0 %v692, 32
  %v696 = vpop.permute.xlu0 %695
  %v698 = vmul.f32 %v691, %v696
  %700 = vrot.lane.b32.xlu0 %v698, 32
  %v701 = vpop.permute.xlu0 %700
  %v703 = vadd.f32 %v693, %v701
  %v704 = vtanh.pop %v703
  %706 = vrot.lane.b32.xlu0 %v704, 32
  %v707 = vpop.permute.xlu0 %706
  %v709 = vmul.f32 %v691, %v707
  %v710 = vpack.c.bf16 %v709, %v709
  %v711 = vld [vmem:[%s0 + $0x10] sm:$0xff]
  %v712 = vpack.c.bf16 %v711, %v711
  %713 = vmatprep.subr.bf16.mxu0 0
  %714 = vmatpush1.bf16.msra.mxu0 %v54
  %715 = vmatprep.subr.bf16.mxu0 0
  %716 = vmatpush1.bf16.msra.mxu0 %v55
  %717 = vmatprep.subr.bf16.mxu0 0
  %718 = vmatpush1.bf16.msra.mxu0 0
  %719 = vmatprep.subr.bf16.mxu0 0
  %720 = vmatpush1.bf16.msra.mxu0 0
  %721 = vmatprep.subr.bf16.mxu0 0
  %722 = vmatpush1.bf16.msra.mxu0 0
  %723 = vmatprep.subr.bf16.mxu0 0
  %724 = vmatpush1.bf16.msra.mxu0 0
  %725 = vmatprep.subr.bf16.mxu0 0
  %726 = vmatpush1.bf16.msra.mxu0 0
  %727 = vmatprep.subr.bf16.mxu0 0
  %728 = vmatpush1.bf16.msra.mxu0 0
  %729 = vmatprep.subr.bf16.mxu0 0
  %730 = vmatpush1.bf16.msra.mxu0 0
  %731 = vmatprep.subr.bf16.mxu0 0
  %732 = vmatpush1.bf16.msra.mxu0 0
  %733 = vmatprep.subr.bf16.mxu0 0
  %734 = vmatpush1.bf16.msra.mxu0 0
  %735 = vmatprep.subr.bf16.mxu0 0
  %736 = vmatpush1.bf16.msra.mxu0 0
  %737 = vmatprep.subr.bf16.mxu0 0
  %738 = vmatpush1.bf16.msra.mxu0 0
  %739 = vmatprep.subr.bf16.mxu0 0
  %740 = vmatpush1.bf16.msra.mxu0 0
  %741 = vmatprep.subr.bf16.mxu0 0
  %742 = vmatpush1.bf16.msra.mxu0 0
  %743 = vmatprep.subr.bf16.mxu0 0
  %744 = vmatpush1.bf16.msra.mxu0 0
  %745 = vmatprep.mubr.bf16.mxu0 0
  %746 = vmatmul.mubr.bf16.gmra.mrb[0].mxu0 %v645
  %v747 = vpop.f32.mrb[0].mxu0
  %v748 = vadd.f32 0.0, %v747
  %v749 = vpop.f32.mrb[0].mxu0
  %v750 = vpop.f32.mrb[0].mxu0
  %v751 = vpop.f32.mrb[0].mxu0
  %752 = vdwg.mxu0
  %v754 = vsel %vm58, %v712, 0
  %756 = vmatprep.subr.bf16.mxu0 0
  %757 = vmatpush1.bf16.msra.mxu0 %v110
  %758 = vmatprep.subr.bf16.mxu0 0
  %759 = vmatpush1.bf16.msra.mxu0 %v111
  %760 = vmatprep.subr.bf16.mxu0 0
  %761 = vmatpush1.bf16.msra.mxu0 0
  %762 = vmatprep.subr.bf16.mxu0 0
  %763 = vmatpush1.bf16.msra.mxu0 0
  %764 = vmatprep.subr.bf16.mxu0 0
  %765 = vmatpush1.bf16.msra.mxu0 0
  %766 = vmatprep.subr.bf16.mxu0 0
  %767 = vmatpush1.bf16.msra.mxu0 0
  %768 = vmatprep.subr.bf16.mxu0 0
  %769 = vmatpush1.bf16.msra.mxu0 0
  %770 = vmatprep.subr.bf16.mxu0 0
  %771 = vmatpush1.bf16.msra.mxu0 0
  %772 = vmatprep.subr.bf16.mxu0 0
  %773 = vmatpush1.bf16.msra.mxu0 0
  %774 = vmatprep.subr.bf16.mxu0 0
  %775 = vmatpush1.bf16.msra.mxu0 0
  %776 = vmatprep.subr.bf16.mxu0 0
  %777 = vmatpush1.bf16.msra.mxu0 0
  %778 = vmatprep.subr.bf16.mxu0 0
  %779 = vmatpush1.bf16.msra.mxu0 0
  %780 = vmatprep.subr.bf16.mxu0 0
  %781 = vmatpush1.bf16.msra.mxu0 0
  %782 = vmatprep.subr.bf16.mxu0 0
  %783 = vmatpush1.bf16.msra.mxu0 0
  %784 = vmatprep.subr.bf16.mxu0 0
  %785 = vmatpush1.bf16.msra.mxu0 0
  %786 = vmatprep.subr.bf16.mxu0 0
  %787 = vmatpush1.bf16.msra.mxu0 0
  %788 = vmatprep.mubr.bf16.mxu0 0
  %789 = vmatmul.mubr.bf16.gmra.mrb[0].mxu0 %v754
  %v790 = vpop.f32.mrb[0].mxu0
  %v791 = vadd.f32 %v748, %v790
  %v792 = vpop.f32.mrb[0].mxu0
  %v793 = vpop.f32.mrb[0].mxu0
  %v794 = vpop.f32.mrb[0].mxu0
  %795 = vdwg.mxu0
  %v796 = vadd.f32 %v791, %v162
  %v797 = vmul.f32 %v796, 0.5
  %v798 = vtanh.pop %v797
  %v799 = vmul.f32 %v798, 0.5
  %v800 = vadd.f32 %v799, 0.5
  %v801 = vtanh.pop %v796
  %v802 = vmul.f32 %v800, %v441
  %804 = vrot.lane.b32.xlu0 %v801, 32
  %v805 = vpop.permute.xlu0 %804
  %v807 = vmul.f32 %v800, %v805
  %809 = vrot.lane.b32.xlu0 %v807, 32
  %v810 = vpop.permute.xlu0 %809
  %v812 = vadd.f32 %v802, %v810
  %v813 = vtanh.pop %v812
  %815 = vrot.lane.b32.xlu0 %v813, 32
  %v816 = vpop.permute.xlu0 %815
  %v818 = vmul.f32 %v800, %v816
  %v819 = vpack.c.bf16 %v818, %v818
  %s820 = scalar_lea.vmem %s1, 48
  %v821 = vld [vmem:[%s820] sm:$0xf]
  %v822 = vld [vmem:[%s820 + $0x4] sm:$0xf]
  %v823 = vld [vmem:[%s820 + $0x8] sm:$0xf]
  %v824 = vld [vmem:[%s820 + $0xc] sm:$0xf]
  %s825 = scalar_lea.vmem %s2, 48
  %v826 = vld [vmem:[%s825] sm:$0xf]
  %v827 = vld [vmem:[%s825 + $0x4] sm:$0xf]
  %v828 = vld [vmem:[%s825 + $0x8] sm:$0xf]
  %v829 = vld [vmem:[%s825 + $0xc] sm:$0xf]
  %v834 = vunpack.c.l.b16 %v826
  %v835 = vunpack.c.l.b16 %v827
  %v836 = vunpack.c.l.b16 %v828
  %v837 = vunpack.c.l.b16 %v829
  %v838 = vpack.c.b16 %v835, %v834
  %v839 = vpack.c.b16 %v837, %v836
  %842 = vmatprep.subr.bf16.mxu0 0
  %843 = vmatpush1.bf16.msra.mxu0 %v838
  %844 = vmatprep.subr.bf16.mxu0 0
  %845 = vmatpush1.bf16.msra.mxu0 %v839
  %846 = vmatprep.subr.bf16.mxu0 0
  %847 = vmatpush1.bf16.msra.mxu0 0
  %848 = vmatprep.subr.bf16.mxu0 0
  %849 = vmatpush1.bf16.msra.mxu0 0
  %850 = vmatprep.subr.bf16.mxu0 0
  %851 = vmatpush1.bf16.msra.mxu0 0
  %852 = vmatprep.subr.bf16.mxu0 0
  %853 = vmatpush1.bf16.msra.mxu0 0
  %854 = vmatprep.subr.bf16.mxu0 0
  %855 = vmatpush1.bf16.msra.mxu0 0
  %856 = vmatprep.subr.bf16.mxu0 0
  %857 = vmatpush1.bf16.msra.mxu0 0
  %858 = vmatprep.subr.bf16.mxu0 0
  %859 = vmatpush1.bf16.msra.mxu0 0
  %860 = vmatprep.subr.bf16.mxu0 0
  %861 = vmatpush1.bf16.msra.mxu0 0
  %862 = vmatprep.subr.bf16.mxu0 0
  %863 = vmatpush1.bf16.msra.mxu0 0
  %864 = vmatprep.subr.bf16.mxu0 0
  %865 = vmatpush1.bf16.msra.mxu0 0
  %866 = vmatprep.subr.bf16.mxu0 0
  %867 = vmatpush1.bf16.msra.mxu0 0
  %868 = vmatprep.subr.bf16.mxu0 0
  %869 = vmatpush1.bf16.msra.mxu0 0
  %870 = vmatprep.subr.bf16.mxu0 0
  %871 = vmatpush1.bf16.msra.mxu0 0
  %872 = vmatprep.subr.bf16.mxu0 0
  %873 = vmatpush1.bf16.msra.mxu0 0
  %874 = vmatprep.mubr.bf16.mxu0 0
  %875 = vmatmul.mubr.bf16.gmra.mrb[0].mxu0 %v60
  %v876 = vpop.f32.mrb[0].mxu0
  %v877 = vadd.f32 0.0, %v876
  %v878 = vpop.f32.mrb[0].mxu0
  %v879 = vpop.f32.mrb[0].mxu0
  %v880 = vpop.f32.mrb[0].mxu0
  %881 = vdwg.mxu0
  %883 = vrot.lane.b32.xlu0 %v600, 64
  %v884 = vpop.permute.xlu0 %883
  %v889 = vunpack.c.l.b16 %v821
  %v890 = vunpack.c.l.b16 %v822
  %v891 = vunpack.c.l.b16 %v823
  %v892 = vunpack.c.l.b16 %v824
  %v893 = vpack.c.b16 %v890, %v889
  %v894 = vpack.c.b16 %v892, %v891
  %v898 = vsel %vm58, %v884, 0
  %900 = vmatprep.subr.bf16.mxu0 0
  %901 = vmatpush1.bf16.msra.mxu0 %v893
  %902 = vmatprep.subr.bf16.mxu0 0
  %903 = vmatpush1.bf16.msra.mxu0 %v894
  %904 = vmatprep.subr.bf16.mxu0 0
  %905 = vmatpush1.bf16.msra.mxu0 0
  %906 = vmatprep.subr.bf16.mxu0 0
  %907 = vmatpush1.bf16.msra.mxu0 0
  %908 = vmatprep.subr.bf16.mxu0 0
  %909 = vmatpush1.bf16.msra.mxu0 0
  %910 = vmatprep.subr.bf16.mxu0 0
  %911 = vmatpush1.bf16.msra.mxu0 0
  %912 = vmatprep.subr.bf16.mxu0 0
  %913 = vmatpush1.bf16.msra.mxu0 0
  %914 = vmatprep.subr.bf16.mxu0 0
  %915 = vmatpush1.bf16.msra.mxu0 0
  %916 = vmatprep.subr.bf16.mxu0 0
  %917 = vmatpush1.bf16.msra.mxu0 0
  %918 = vmatprep.subr.bf16.mxu0 0
  %919 = vmatpush1.bf16.msra.mxu0 0
  %920 = vmatprep.subr.bf16.mxu0 0
  %921 = vmatpush1.bf16.msra.mxu0 0
  %922 = vmatprep.subr.bf16.mxu0 0
  %923 = vmatpush1.bf16.msra.mxu0 0
  %924 = vmatprep.subr.bf16.mxu0 0
  %925 = vmatpush1.bf16.msra.mxu0 0
  %926 = vmatprep.subr.bf16.mxu0 0
  %927 = vmatpush1.bf16.msra.mxu0 0
  %928 = vmatprep.subr.bf16.mxu0 0
  %929 = vmatpush1.bf16.msra.mxu0 0
  %930 = vmatprep.subr.bf16.mxu0 0
  %931 = vmatpush1.bf16.msra.mxu0 0
  %932 = vmatprep.mubr.bf16.mxu0 0
  %933 = vmatmul.mubr.bf16.gmra.mrb[0].mxu0 %v898
  %v934 = vpop.f32.mrb[0].mxu0
  %v935 = vadd.f32 %v877, %v934
  %v936 = vpop.f32.mrb[0].mxu0
  %v937 = vpop.f32.mrb[0].mxu0
  %v938 = vpop.f32.mrb[0].mxu0
  %939 = vdwg.mxu0
  %s940 = scalar_lea.vmem %s3, 3
  %v941 = vld [vmem:[%s940] sm:$0x1]
  %v943 = vlaneseq
  %v944 = vshrl.u32 %v943, 7
  %v945 = vsub.s32 0, %v944
  %v946 = vrot.slane %v941, %v945
  %v948 = vadd.f32 %v935, %v946
  %v949 = vmul.f32 %v948, 0.5
  %v950 = vtanh.pop %v949
  %v951 = vmul.f32 %v950, 0.5
  %v952 = vadd.f32 %v951, 0.5
  %v953 = vtanh.pop %v948
  %v954 = vmul.f32 %v952, 0.0
  %956 = vrot.lane.b32.xlu0 %v953, 32
  %v957 = vpop.permute.xlu0 %956
  %v959 = vmul.f32 %v952, %v957
  %961 = vrot.lane.b32.xlu0 %v959, 32
  %v962 = vpop.permute.xlu0 %961
  %v964 = vadd.f32 %v954, %v962
  %v965 = vtanh.pop %v964
  %967 = vrot.lane.b32.xlu0 %v965, 32
  %v968 = vpop.permute.xlu0 %967
  %v970 = vmul.f32 %v952, %v968
  %v971 = vpack.c.bf16 %v970, %v970
  %972 = vmatprep.subr.bf16.mxu0 0
  %973 = vmatpush1.bf16.msra.mxu0 %v467
  %974 = vmatprep.subr.bf16.mxu0 0
  %975 = vmatpush1.bf16.msra.mxu0 %v468
  %976 = vmatprep.subr.bf16.mxu0 0
  %977 = vmatpush1.bf16.msra.mxu0 0
  %978 = vmatprep.subr.bf16.mxu0 0
  %979 = vmatpush1.bf16.msra.mxu0 0
  %980 = vmatprep.subr.bf16.mxu0 0
  %981 = vmatpush1.bf16.msra.mxu0 0
  %982 = vmatprep.subr.bf16.mxu0 0
  %983 = vmatpush1.bf16.msra.mxu0 0
  %984 = vmatprep.subr.bf16.mxu0 0
  %985 = vmatpush1.bf16.msra.mxu0 0
  %986 = vmatprep.subr.bf16.mxu0 0
  %987 = vmatpush1.bf16.msra.mxu0 0
  %988 = vmatprep.subr.bf16.mxu0 0
  %989 = vmatpush1.bf16.msra.mxu0 0
  %990 = vmatprep.subr.bf16.mxu0 0
  %991 = vmatpush1.bf16.msra.mxu0 0
  %992 = vmatprep.subr.bf16.mxu0 0
  %993 = vmatpush1.bf16.msra.mxu0 0
  %994 = vmatprep.subr.bf16.mxu0 0
  %995 = vmatpush1.bf16.msra.mxu0 0
  %996 = vmatprep.subr.bf16.mxu0 0
  %997 = vmatpush1.bf16.msra.mxu0 0
  %998 = vmatprep.subr.bf16.mxu0 0
  %999 = vmatpush1.bf16.msra.mxu0 0
  %1000 = vmatprep.subr.bf16.mxu0 0
  %1001 = vmatpush1.bf16.msra.mxu0 0
  %1002 = vmatprep.subr.bf16.mxu0 0
  %1003 = vmatpush1.bf16.msra.mxu0 0
  %1004 = vmatprep.mubr.bf16.mxu0 0
  %1005 = vmatmul.mubr.bf16.gmra.mrb[0].mxu0 %v898
  %v1006 = vpop.f32.mrb[0].mxu0
  %v1007 = vadd.f32 0.0, %v1006
  %v1008 = vpop.f32.mrb[0].mxu0
  %v1009 = vpop.f32.mrb[0].mxu0
  %v1010 = vpop.f32.mrb[0].mxu0
  %1011 = vdwg.mxu0
  %1013 = vrot.lane.b32.xlu0 %v710, 64
  %v1014 = vpop.permute.xlu0 %1013
  %v1016 = vsel %vm58, %v1014, 0
  %1018 = vmatprep.subr.bf16.mxu0 0
  %1019 = vmatpush1.bf16.msra.mxu0 %v522
  %1020 = vmatprep.subr.bf16.mxu0 0
  %1021 = vmatpush1.bf16.msra.mxu0 %v523
  %1022 = vmatprep.subr.bf16.mxu0 0
  %1023 = vmatpush1.bf16.msra.mxu0 0
  %1024 = vmatprep.subr.bf16.mxu0 0
  %1025 = vmatpush1.bf16.msra.mxu0 0
  %1026 = vmatprep.subr.bf16.mxu0 0
  %1027 = vmatpush1.bf16.msra.mxu0 0
  %1028 = vmatprep.subr.bf16.mxu0 0
  %1029 = vmatpush1.bf16.msra.mxu0 0
  %1030 = vmatprep.subr.bf16.mxu0 0
  %1031 = vmatpush1.bf16.msra.mxu0 0
  %1032 = vmatprep.subr.bf16.mxu0 0
  %1033 = vmatpush1.bf16.msra.mxu0 0
  %1034 = vmatprep.subr.bf16.mxu0 0
  %1035 = vmatpush1.bf16.msra.mxu0 0
  %1036 = vmatprep.subr.bf16.mxu0 0
  %1037 = vmatpush1.bf16.msra.mxu0 0
  %1038 = vmatprep.subr.bf16.mxu0 0
  %1039 = vmatpush1.bf16.msra.mxu0 0
  %1040 = vmatprep.subr.bf16.mxu0 0
  %1041 = vmatpush1.bf16.msra.mxu0 0
  %1042 = vmatprep.subr.bf16.mxu0 0
  %1043 = vmatpush1.bf16.msra.mxu0 0
  %1044 = vmatprep.subr.bf16.mxu0 0
  %1045 = vmatpush1.bf16.msra.mxu0 0
  %1046 = vmatprep.subr.bf16.mxu0 0
  %1047 = vmatpush1.bf16.msra.mxu0 0
  %1048 = vmatprep.subr.bf16.mxu0 0
  %1049 = vmatpush1.bf16.msra.mxu0 0
  %1050 = vmatprep.mubr.bf16.mxu0 0
  %1051 = vmatmul.mubr.bf16.gmra.mrb[0].mxu0 %v1016
  %v1052 = vpop.f32.mrb[0].mxu0
  %v1053 = vadd.f32 %v1007, %v1052
  %v1054 = vpop.f32.mrb[0].mxu0
  %v1055 = vpop.f32.mrb[0].mxu0
  %v1056 = vpop.f32.mrb[0].mxu0
  %1057 = vdwg.mxu0
  %v1058 = vadd.f32 %v1053, %v575
  %v1059 = vmul.f32 %v1058, 0.5
  %v1060 = vtanh.pop %v1059
  %v1061 = vmul.f32 %v1060, 0.5
  %v1062 = vadd.f32 %v1061, 0.5
  %v1063 = vtanh.pop %v1058
  %v1064 = vmul.f32 %v1062, %v593
  %1066 = vrot.lane.b32.xlu0 %v1063, 32
  %v1067 = vpop.permute.xlu0 %1066
  %v1069 = vmul.f32 %v1062, %v1067
  %1071 = vrot.lane.b32.xlu0 %v1069, 32
  %v1072 = vpop.permute.xlu0 %1071
  %v1074 = vadd.f32 %v1064, %v1072
  %v1075 = vtanh.pop %v1074
  %1077 = vrot.lane.b32.xlu0 %v1075, 32
  %v1078 = vpop.permute.xlu0 %1077
  %v1080 = vmul.f32 %v1062, %v1078
  %v1081 = vpack.c.bf16 %v1080, %v1080
  %1082 = vmatprep.subr.bf16.mxu0 0
  %1083 = vmatpush1.bf16.msra.mxu0 %v206
  %1084 = vmatprep.subr.bf16.mxu0 0
  %1085 = vmatpush1.bf16.msra.mxu0 %v207
  %1086 = vmatprep.subr.bf16.mxu0 0
  %1087 = vmatpush1.bf16.msra.mxu0 0
  %1088 = vmatprep.subr.bf16.mxu0 0
  %1089 = vmatpush1.bf16.msra.mxu0 0
  %1090 = vmatprep.subr.bf16.mxu0 0
  %1091 = vmatpush1.bf16.msra.mxu0 0
  %1092 = vmatprep.subr.bf16.mxu0 0
  %1093 = vmatpush1.bf16.msra.mxu0 0
  %1094 = vmatprep.subr.bf16.mxu0 0
  %1095 = vmatpush1.bf16.msra.mxu0 0
  %1096 = vmatprep.subr.bf16.mxu0 0
  %1097 = vmatpush1.bf16.msra.mxu0 0
  %1098 = vmatprep.subr.bf16.mxu0 0
  %1099 = vmatpush1.bf16.msra.mxu0 0
  %1100 = vmatprep.subr.bf16.mxu0 0
  %1101 = vmatpush1.bf16.msra.mxu0 0
  %1102 = vmatprep.subr.bf16.mxu0 0
  %1103 = vmatpush1.bf16.msra.mxu0 0
  %1104 = vmatprep.subr.bf16.mxu0 0
  %1105 = vmatpush1.bf16.msra.mxu0 0
  %1106 = vmatprep.subr.bf16.mxu0 0
  %1107 = vmatpush1.bf16.msra.mxu0 0
  %1108 = vmatprep.subr.bf16.mxu0 0
  %1109 = vmatpush1.bf16.msra.mxu0 0
  %1110 = vmatprep.subr.bf16.mxu0 0
  %1111 = vmatpush1.bf16.msra.mxu0 0
  %1112 = vmatprep.subr.bf16.mxu0 0
  %1113 = vmatpush1.bf16.msra.mxu0 0
  %1114 = vmatprep.mubr.bf16.mxu0 0
  %1115 = vmatmul.mubr.bf16.gmra.mrb[0].mxu0 %v1016
  %v1116 = vpop.f32.mrb[0].mxu0
  %v1117 = vadd.f32 0.0, %v1116
  %v1118 = vpop.f32.mrb[0].mxu0
  %v1119 = vpop.f32.mrb[0].mxu0
  %v1120 = vpop.f32.mrb[0].mxu0
  %1121 = vdwg.mxu0
  %1123 = vrot.lane.b32.xlu0 %v819, 64
  %v1124 = vpop.permute.xlu0 %1123
  %v1126 = vsel %vm58, %v1124, 0
  %1128 = vmatprep.subr.bf16.mxu0 0
  %1129 = vmatpush1.bf16.msra.mxu0 %v261
  %1130 = vmatprep.subr.bf16.mxu0 0
  %1131 = vmatpush1.bf16.msra.mxu0 %v262
  %1132 = vmatprep.subr.bf16.mxu0 0
  %1133 = vmatpush1.bf16.msra.mxu0 0
  %1134 = vmatprep.subr.bf16.mxu0 0
  %1135 = vmatpush1.bf16.msra.mxu0 0
  %1136 = vmatprep.subr.bf16.mxu0 0
  %1137 = vmatpush1.bf16.msra.mxu0 0
  %1138 = vmatprep.subr.bf16.mxu0 0
  %1139 = vmatpush1.bf16.msra.mxu0 0
  %1140 = vmatprep.subr.bf16.mxu0 0
  %1141 = vmatpush1.bf16.msra.mxu0 0
  %1142 = vmatprep.subr.bf16.mxu0 0
  %1143 = vmatpush1.bf16.msra.mxu0 0
  %1144 = vmatprep.subr.bf16.mxu0 0
  %1145 = vmatpush1.bf16.msra.mxu0 0
  %1146 = vmatprep.subr.bf16.mxu0 0
  %1147 = vmatpush1.bf16.msra.mxu0 0
  %1148 = vmatprep.subr.bf16.mxu0 0
  %1149 = vmatpush1.bf16.msra.mxu0 0
  %1150 = vmatprep.subr.bf16.mxu0 0
  %1151 = vmatpush1.bf16.msra.mxu0 0
  %1152 = vmatprep.subr.bf16.mxu0 0
  %1153 = vmatpush1.bf16.msra.mxu0 0
  %1154 = vmatprep.subr.bf16.mxu0 0
  %1155 = vmatpush1.bf16.msra.mxu0 0
  %1156 = vmatprep.subr.bf16.mxu0 0
  %1157 = vmatpush1.bf16.msra.mxu0 0
  %1158 = vmatprep.subr.bf16.mxu0 0
  %1159 = vmatpush1.bf16.msra.mxu0 0
  %1160 = vmatprep.mubr.bf16.mxu0 0
  %1161 = vmatmul.mubr.bf16.gmra.mrb[0].mxu0 %v1126
  %v1162 = vpop.f32.mrb[0].mxu0
  %v1163 = vadd.f32 %v1117, %v1162
  %v1164 = vpop.f32.mrb[0].mxu0
  %v1165 = vpop.f32.mrb[0].mxu0
  %v1166 = vpop.f32.mrb[0].mxu0
  %1167 = vdwg.mxu0
  %v1168 = vadd.f32 %v1163, %v314
  %v1169 = vmul.f32 %v1168, 0.5
  %v1170 = vtanh.pop %v1169
  %v1171 = vmul.f32 %v1170, 0.5
  %v1172 = vadd.f32 %v1171, 0.5
  %v1173 = vtanh.pop %v1168
  %v1174 = vmul.f32 %v1172, %v703
  %1176 = vrot.lane.b32.xlu0 %v1173, 32
  %v1177 = vpop.permute.xlu0 %1176
  %v1179 = vmul.f32 %v1172, %v1177
  %1181 = vrot.lane.b32.xlu0 %v1179, 32
  %v1182 = vpop.permute.xlu0 %1181
  %v1184 = vadd.f32 %v1174, %v1182
  %v1185 = vtanh.pop %v1184
  %1187 = vrot.lane.b32.xlu0 %v1185, 32
  %v1188 = vpop.permute.xlu0 %1187
  %v1190 = vmul.f32 %v1172, %v1188
  %v1191 = vpack.c.bf16 %v1190, %v1190
  %v1192 = vld [vmem:[%s0 + $0x18] sm:$0xff]
  %v1193 = vpack.c.bf16 %v1192, %v1192
  %1194 = vmatprep.subr.bf16.mxu0 0
  %1195 = vmatpush1.bf16.msra.mxu0 %v54
  %1196 = vmatprep.subr.bf16.mxu0 0
  %1197 = vmatpush1.bf16.msra.mxu0 %v55
  %1198 = vmatprep.subr.bf16.mxu0 0
  %1199 = vmatpush1.bf16.msra.mxu0 0
  %1200 = vmatprep.subr.bf16.mxu0 0
  %1201 = vmatpush1.bf16.msra.mxu0 0
  %1202 = vmatprep.subr.bf16.mxu0 0
  %1203 = vmatpush1.bf16.msra.mxu0 0
  %1204 = vmatprep.subr.bf16.mxu0 0
  %1205 = vmatpush1.bf16.msra.mxu0 0
  %1206 = vmatprep.subr.bf16.mxu0 0
  %1207 = vmatpush1.bf16.msra.mxu0 0
  %1208 = vmatprep.subr.bf16.mxu0 0
  %1209 = vmatpush1.bf16.msra.mxu0 0
  %1210 = vmatprep.subr.bf16.mxu0 0
  %1211 = vmatpush1.bf16.msra.mxu0 0
  %1212 = vmatprep.subr.bf16.mxu0 0
  %1213 = vmatpush1.bf16.msra.mxu0 0
  %1214 = vmatprep.subr.bf16.mxu0 0
  %1215 = vmatpush1.bf16.msra.mxu0 0
  %1216 = vmatprep.subr.bf16.mxu0 0
  %1217 = vmatpush1.bf16.msra.mxu0 0
  %1218 = vmatprep.subr.bf16.mxu0 0
  %1219 = vmatpush1.bf16.msra.mxu0 0
  %1220 = vmatprep.subr.bf16.mxu0 0
  %1221 = vmatpush1.bf16.msra.mxu0 0
  %1222 = vmatprep.subr.bf16.mxu0 0
  %1223 = vmatpush1.bf16.msra.mxu0 0
  %1224 = vmatprep.subr.bf16.mxu0 0
  %1225 = vmatpush1.bf16.msra.mxu0 0
  %1226 = vmatprep.mubr.bf16.mxu0 0
  %1227 = vmatmul.mubr.bf16.gmra.mrb[0].mxu0 %v1126
  %v1228 = vpop.f32.mrb[0].mxu0
  %v1229 = vadd.f32 0.0, %v1228
  %v1230 = vpop.f32.mrb[0].mxu0
  %v1231 = vpop.f32.mrb[0].mxu0
  %v1232 = vpop.f32.mrb[0].mxu0
  %1233 = vdwg.mxu0
  %v1235 = vsel %vm58, %v1193, 0
  %1237 = vmatprep.subr.bf16.mxu0 0
  %1238 = vmatpush1.bf16.msra.mxu0 %v110
  %1239 = vmatprep.subr.bf16.mxu0 0
  %1240 = vmatpush1.bf16.msra.mxu0 %v111
  %1241 = vmatprep.subr.bf16.mxu0 0
  %1242 = vmatpush1.bf16.msra.mxu0 0
  %1243 = vmatprep.subr.bf16.mxu0 0
  %1244 = vmatpush1.bf16.msra.mxu0 0
  %1245 = vmatprep.subr.bf16.mxu0 0
  %1246 = vmatpush1.bf16.msra.mxu0 0
  %1247 = vmatprep.subr.bf16.mxu0 0
  %1248 = vmatpush1.bf16.msra.mxu0 0
  %1249 = vmatprep.subr.bf16.mxu0 0
  %1250 = vmatpush1.bf16.msra.mxu0 0
  %1251 = vmatprep.subr.bf16.mxu0 0
  %1252 = vmatpush1.bf16.msra.mxu0 0
  %1253 = vmatprep.subr.bf16.mxu0 0
  %1254 = vmatpush1.bf16.msra.mxu0 0
  %1255 = vmatprep.subr.bf16.mxu0 0
  %1256 = vmatpush1.bf16.msra.mxu0 0
  %1257 = vmatprep.subr.bf16.mxu0 0
  %1258 = vmatpush1.bf16.msra.mxu0 0
  %1259 = vmatprep.subr.bf16.mxu0 0
  %1260 = vmatpush1.bf16.msra.mxu0 0
  %1261 = vmatprep.subr.bf16.mxu0 0
  %1262 = vmatpush1.bf16.msra.mxu0 0
  %1263 = vmatprep.subr.bf16.mxu0 0
  %1264 = vmatpush1.bf16.msra.mxu0 0
  %1265 = vmatprep.subr.bf16.mxu0 0
  %1266 = vmatpush1.bf16.msra.mxu0 0
  %1267 = vmatprep.subr.bf16.mxu0 0
  %1268 = vmatpush1.bf16.msra.mxu0 0
  %1269 = vmatprep.mubr.bf16.mxu0 0
  %1270 = vmatmul.mubr.bf16.gmra.mrb[0].mxu0 %v1235
  %v1271 = vpop.f32.mrb[0].mxu0
  %v1272 = vadd.f32 %v1229, %v1271
  %v1273 = vpop.f32.mrb[0].mxu0
  %v1274 = vpop.f32.mrb[0].mxu0
  %v1275 = vpop.f32.mrb[0].mxu0
  %1276 = vdwg.mxu0
  %v1277 = vadd.f32 %v1272, %v162
  %v1278 = vmul.f32 %v1277, 0.5
  %v1279 = vtanh.pop %v1278
  %v1280 = vmul.f32 %v1279, 0.5
  %v1281 = vadd.f32 %v1280, 0.5
  %v1282 = vtanh.pop %v1277
  %v1283 = vmul.f32 %v1281, %v812
  %1285 = vrot.lane.b32.xlu0 %v1282, 32
  %v1286 = vpop.permute.xlu0 %1285
  %v1288 = vmul.f32 %v1281, %v1286
  %1290 = vrot.lane.b32.xlu0 %v1288, 32
  %v1291 = vpop.permute.xlu0 %1290
  %v1293 = vadd.f32 %v1283, %v1291
  %v1294 = vtanh.pop %v1293
  %1296 = vrot.lane.b32.xlu0 %v1294, 32
  %v1297 = vpop.permute.xlu0 %1296
  %v1299 = vmul.f32 %v1281, %v1297
  %v1300 = vpack.c.bf16 %v1299, %v1299
  %s1301 = scalar_lea.vmem %s1, 64
  %v1302 = vld [vmem:[%s1301] sm:$0xf]
  %v1303 = vld [vmem:[%s1301 + $0x4] sm:$0xf]
  %v1304 = vld [vmem:[%s1301 + $0x8] sm:$0xf]
  %v1305 = vld [vmem:[%s1301 + $0xc] sm:$0xf]
  %s1306 = scalar_lea.vmem %s2, 64
  %v1307 = vld [vmem:[%s1306] sm:$0xf]
  %v1308 = vld [vmem:[%s1306 + $0x4] sm:$0xf]
  %v1309 = vld [vmem:[%s1306 + $0x8] sm:$0xf]
  %v1310 = vld [vmem:[%s1306 + $0xc] sm:$0xf]
  %v1315 = vunpack.c.l.b16 %v1307
  %v1316 = vunpack.c.l.b16 %v1308
  %v1317 = vunpack.c.l.b16 %v1309
  %v1318 = vunpack.c.l.b16 %v1310
  %v1319 = vpack.c.b16 %v1316, %v1315
  %v1320 = vpack.c.b16 %v1318, %v1317
  %1323 = vmatprep.subr.bf16.mxu0 0
  %1324 = vmatpush1.bf16.msra.mxu0 %v1319
  %1325 = vmatprep.subr.bf16.mxu0 0
  %1326 = vmatpush1.bf16.msra.mxu0 %v1320
  %1327 = vmatprep.subr.bf16.mxu0 0
  %1328 = vmatpush1.bf16.msra.mxu0 0
  %1329 = vmatprep.subr.bf16.mxu0 0
  %1330 = vmatpush1.bf16.msra.mxu0 0
  %1331 = vmatprep.subr.bf16.mxu0 0
  %1332 = vmatpush1.bf16.msra.mxu0 0
  %1333 = vmatprep.subr.bf16.mxu0 0
  %1334 = vmatpush1.bf16.msra.mxu0 0
  %1335 = vmatprep.subr.bf16.mxu0 0
  %1336 = vmatpush1.bf16.msra.mxu0 0
  %1337 = vmatprep.subr.bf16.mxu0 0
  %1338 = vmatpush1.bf16.msra.mxu0 0
  %1339 = vmatprep.subr.bf16.mxu0 0
  %1340 = vmatpush1.bf16.msra.mxu0 0
  %1341 = vmatprep.subr.bf16.mxu0 0
  %1342 = vmatpush1.bf16.msra.mxu0 0
  %1343 = vmatprep.subr.bf16.mxu0 0
  %1344 = vmatpush1.bf16.msra.mxu0 0
  %1345 = vmatprep.subr.bf16.mxu0 0
  %1346 = vmatpush1.bf16.msra.mxu0 0
  %1347 = vmatprep.subr.bf16.mxu0 0
  %1348 = vmatpush1.bf16.msra.mxu0 0
  %1349 = vmatprep.subr.bf16.mxu0 0
  %1350 = vmatpush1.bf16.msra.mxu0 0
  %1351 = vmatprep.subr.bf16.mxu0 0
  %1352 = vmatpush1.bf16.msra.mxu0 0
  %1353 = vmatprep.subr.bf16.mxu0 0
  %1354 = vmatpush1.bf16.msra.mxu0 0
  %1355 = vmatprep.mubr.bf16.mxu0 0
  %1356 = vmatmul.mubr.bf16.gmra.mrb[0].mxu0 %v60
  %v1357 = vpop.f32.mrb[0].mxu0
  %v1358 = vadd.f32 0.0, %v1357
  %v1359 = vpop.f32.mrb[0].mxu0
  %v1360 = vpop.f32.mrb[0].mxu0
  %v1361 = vpop.f32.mrb[0].mxu0
  %1362 = vdwg.mxu0
  %1364 = vrot.lane.b32.xlu0 %v971, 64
  %v1365 = vpop.permute.xlu0 %1364
  %v1370 = vunpack.c.l.b16 %v1302
  %v1371 = vunpack.c.l.b16 %v1303
  %v1372 = vunpack.c.l.b16 %v1304
  %v1373 = vunpack.c.l.b16 %v1305
  %v1374 = vpack.c.b16 %v1371, %v1370
  %v1375 = vpack.c.b16 %v1373, %v1372
  %v1379 = vsel %vm58, %v1365, 0
  %1381 = vmatprep.subr.bf16.mxu0 0
  %1382 = vmatpush1.bf16.msra.mxu0 %v1374
  %1383 = vmatprep.subr.bf16.mxu0 0
  %1384 = vmatpush1.bf16.msra.mxu0 %v1375
  %1385 = vmatprep.subr.bf16.mxu0 0
  %1386 = vmatpush1.bf16.msra.mxu0 0
  %1387 = vmatprep.subr.bf16.mxu0 0
  %1388 = vmatpush1.bf16.msra.mxu0 0
  %1389 = vmatprep.subr.bf16.mxu0 0
  %1390 = vmatpush1.bf16.msra.mxu0 0
  %1391 = vmatprep.subr.bf16.mxu0 0
  %1392 = vmatpush1.bf16.msra.mxu0 0
  %1393 = vmatprep.subr.bf16.mxu0 0
  %1394 = vmatpush1.bf16.msra.mxu0 0
  %1395 = vmatprep.subr.bf16.mxu0 0
  %1396 = vmatpush1.bf16.msra.mxu0 0
  %1397 = vmatprep.subr.bf16.mxu0 0
  %1398 = vmatpush1.bf16.msra.mxu0 0
  %1399 = vmatprep.subr.bf16.mxu0 0
  %1400 = vmatpush1.bf16.msra.mxu0 0
  %1401 = vmatprep.subr.bf16.mxu0 0
  %1402 = vmatpush1.bf16.msra.mxu0 0
  %1403 = vmatprep.subr.bf16.mxu0 0
  %1404 = vmatpush1.bf16.msra.mxu0 0
  %1405 = vmatprep.subr.bf16.mxu0 0
  %1406 = vmatpush1.bf16.msra.mxu0 0
  %1407 = vmatprep.subr.bf16.mxu0 0
  %1408 = vmatpush1.bf16.msra.mxu0 0
  %1409 = vmatprep.subr.bf16.mxu0 0
  %1410 = vmatpush1.bf16.msra.mxu0 0
  %1411 = vmatprep.subr.bf16.mxu0 0
  %1412 = vmatpush1.bf16.msra.mxu0 0
  %1413 = vmatprep.mubr.bf16.mxu0 0
  %1414 = vmatmul.mubr.bf16.gmra.mrb[0].mxu0 %v1379
  %v1415 = vpop.f32.mrb[0].mxu0
  %v1416 = vadd.f32 %v1358, %v1415
  %v1417 = vpop.f32.mrb[0].mxu0
  %v1418 = vpop.f32.mrb[0].mxu0
  %v1419 = vpop.f32.mrb[0].mxu0
  %1420 = vdwg.mxu0
  %s1421 = scalar_lea.vmem %s3, 4
  %v1422 = vld [vmem:[%s1421] sm:$0x1]
  %v1424 = vlaneseq
  %v1425 = vshrl.u32 %v1424, 7
  %v1426 = vsub.s32 0, %v1425
  %v1427 = vrot.slane %v1422, %v1426
  %v1429 = vadd.f32 %v1416, %v1427
  %v1430 = vmul.f32 %v1429, 0.5
  %v1431 = vtanh.pop %v1430
  %v1432 = vmul.f32 %v1431, 0.5
  %v1433 = vadd.f32 %v1432, 0.5
  %v1434 = vtanh.pop %v1429
  %v1435 = vmul.f32 %v1433, 0.0
  %1437 = vrot.lane.b32.xlu0 %v1434, 32
  %v1438 = vpop.permute.xlu0 %1437
  %v1440 = vmul.f32 %v1433, %v1438
  %1442 = vrot.lane.b32.xlu0 %v1440, 32
  %v1443 = vpop.permute.xlu0 %1442
  %v1445 = vadd.f32 %v1435, %v1443
  %v1446 = vtanh.pop %v1445
  %1448 = vrot.lane.b32.xlu0 %v1446, 32
  %v1449 = vpop.permute.xlu0 %1448
  %v1451 = vmul.f32 %v1433, %v1449
  %v1452 = vpack.c.bf16 %v1451, %v1451
  %1453 = vmatprep.subr.bf16.mxu0 0
  %1454 = vmatpush1.bf16.msra.mxu0 %v838
  %1455 = vmatprep.subr.bf16.mxu0 0
  %1456 = vmatpush1.bf16.msra.mxu0 %v839
  %1457 = vmatprep.subr.bf16.mxu0 0
  %1458 = vmatpush1.bf16.msra.mxu0 0
  %1459 = vmatprep.subr.bf16.mxu0 0
  %1460 = vmatpush1.bf16.msra.mxu0 0
  %1461 = vmatprep.subr.bf16.mxu0 0
  %1462 = vmatpush1.bf16.msra.mxu0 0
  %1463 = vmatprep.subr.bf16.mxu0 0
  %1464 = vmatpush1.bf16.msra.mxu0 0
  %1465 = vmatprep.subr.bf16.mxu0 0
  %1466 = vmatpush1.bf16.msra.mxu0 0
  %1467 = vmatprep.subr.bf16.mxu0 0
  %1468 = vmatpush1.bf16.msra.mxu0 0
  %1469 = vmatprep.subr.bf16.mxu0 0
  %1470 = vmatpush1.bf16.msra.mxu0 0
  %1471 = vmatprep.subr.bf16.mxu0 0
  %1472 = vmatpush1.bf16.msra.mxu0 0
  %1473 = vmatprep.subr.bf16.mxu0 0
  %1474 = vmatpush1.bf16.msra.mxu0 0
  %1475 = vmatprep.subr.bf16.mxu0 0
  %1476 = vmatpush1.bf16.msra.mxu0 0
  %1477 = vmatprep.subr.bf16.mxu0 0
  %1478 = vmatpush1.bf16.msra.mxu0 0
  %1479 = vmatprep.subr.bf16.mxu0 0
  %1480 = vmatpush1.bf16.msra.mxu0 0
  %1481 = vmatprep.subr.bf16.mxu0 0
  %1482 = vmatpush1.bf16.msra.mxu0 0
  %1483 = vmatprep.subr.bf16.mxu0 0
  %1484 = vmatpush1.bf16.msra.mxu0 0
  %1485 = vmatprep.mubr.bf16.mxu0 0
  %1486 = vmatmul.mubr.bf16.gmra.mrb[0].mxu0 %v1379
  %v1487 = vpop.f32.mrb[0].mxu0
  %v1488 = vadd.f32 0.0, %v1487
  %v1489 = vpop.f32.mrb[0].mxu0
  %v1490 = vpop.f32.mrb[0].mxu0
  %v1491 = vpop.f32.mrb[0].mxu0
  %1492 = vdwg.mxu0
  %1494 = vrot.lane.b32.xlu0 %v1081, 64
  %v1495 = vpop.permute.xlu0 %1494
  %v1497 = vsel %vm58, %v1495, 0
  %1499 = vmatprep.subr.bf16.mxu0 0
  %1500 = vmatpush1.bf16.msra.mxu0 %v893
  %1501 = vmatprep.subr.bf16.mxu0 0
  %1502 = vmatpush1.bf16.msra.mxu0 %v894
  %1503 = vmatprep.subr.bf16.mxu0 0
  %1504 = vmatpush1.bf16.msra.mxu0 0
  %1505 = vmatprep.subr.bf16.mxu0 0
  %1506 = vmatpush1.bf16.msra.mxu0 0
  %1507 = vmatprep.subr.bf16.mxu0 0
  %1508 = vmatpush1.bf16.msra.mxu0 0
  %1509 = vmatprep.subr.bf16.mxu0 0
  %1510 = vmatpush1.bf16.msra.mxu0 0
  %1511 = vmatprep.subr.bf16.mxu0 0
  %1512 = vmatpush1.bf16.msra.mxu0 0
  %1513 = vmatprep.subr.bf16.mxu0 0
  %1514 = vmatpush1.bf16.msra.mxu0 0
  %1515 = vmatprep.subr.bf16.mxu0 0
  %1516 = vmatpush1.bf16.msra.mxu0 0
  %1517 = vmatprep.subr.bf16.mxu0 0
  %1518 = vmatpush1.bf16.msra.mxu0 0
  %1519 = vmatprep.subr.bf16.mxu0 0
  %1520 = vmatpush1.bf16.msra.mxu0 0
  %1521 = vmatprep.subr.bf16.mxu0 0
  %1522 = vmatpush1.bf16.msra.mxu0 0
  %1523 = vmatprep.subr.bf16.mxu0 0
  %1524 = vmatpush1.bf16.msra.mxu0 0
  %1525 = vmatprep.subr.bf16.mxu0 0
  %1526 = vmatpush1.bf16.msra.mxu0 0
  %1527 = vmatprep.subr.bf16.mxu0 0
  %1528 = vmatpush1.bf16.msra.mxu0 0
  %1529 = vmatprep.subr.bf16.mxu0 0
  %1530 = vmatpush1.bf16.msra.mxu0 0
  %1531 = vmatprep.mubr.bf16.mxu0 0
  %1532 = vmatmul.mubr.bf16.gmra.mrb[0].mxu0 %v1497
  %v1533 = vpop.f32.mrb[0].mxu0
  %v1534 = vadd.f32 %v1488, %v1533
  %v1535 = vpop.f32.mrb[0].mxu0
  %v1536 = vpop.f32.mrb[0].mxu0
  %v1537 = vpop.f32.mrb[0].mxu0
  %1538 = vdwg.mxu0
  %v1539 = vadd.f32 %v1534, %v946
  %v1540 = vmul.f32 %v1539, 0.5
  %v1541 = vtanh.pop %v1540
  %v1542 = vmul.f32 %v1541, 0.5
  %v1543 = vadd.f32 %v1542, 0.5
  %v1544 = vtanh.pop %v1539
  %v1545 = vmul.f32 %v1543, %v964
  %1547 = vrot.lane.b32.xlu0 %v1544, 32
  %v1548 = vpop.permute.xlu0 %1547
  %v1550 = vmul.f32 %v1543, %v1548
  %1552 = vrot.lane.b32.xlu0 %v1550, 32
  %v1553 = vpop.permute.xlu0 %1552
  %v1555 = vadd.f32 %v1545, %v1553
  %v1556 = vtanh.pop %v1555
  %1558 = vrot.lane.b32.xlu0 %v1556, 32
  %v1559 = vpop.permute.xlu0 %1558
  %v1561 = vmul.f32 %v1543, %v1559
  %v1562 = vpack.c.bf16 %v1561, %v1561
  %1563 = vmatprep.subr.bf16.mxu0 0
  %1564 = vmatpush1.bf16.msra.mxu0 %v467
  %1565 = vmatprep.subr.bf16.mxu0 0
  %1566 = vmatpush1.bf16.msra.mxu0 %v468
  %1567 = vmatprep.subr.bf16.mxu0 0
  %1568 = vmatpush1.bf16.msra.mxu0 0
  %1569 = vmatprep.subr.bf16.mxu0 0
  %1570 = vmatpush1.bf16.msra.mxu0 0
  %1571 = vmatprep.subr.bf16.mxu0 0
  %1572 = vmatpush1.bf16.msra.mxu0 0
  %1573 = vmatprep.subr.bf16.mxu0 0
  %1574 = vmatpush1.bf16.msra.mxu0 0
  %1575 = vmatprep.subr.bf16.mxu0 0
  %1576 = vmatpush1.bf16.msra.mxu0 0
  %1577 = vmatprep.subr.bf16.mxu0 0
  %1578 = vmatpush1.bf16.msra.mxu0 0
  %1579 = vmatprep.subr.bf16.mxu0 0
  %1580 = vmatpush1.bf16.msra.mxu0 0
  %1581 = vmatprep.subr.bf16.mxu0 0
  %1582 = vmatpush1.bf16.msra.mxu0 0
  %1583 = vmatprep.subr.bf16.mxu0 0
  %1584 = vmatpush1.bf16.msra.mxu0 0
  %1585 = vmatprep.subr.bf16.mxu0 0
  %1586 = vmatpush1.bf16.msra.mxu0 0
  %1587 = vmatprep.subr.bf16.mxu0 0
  %1588 = vmatpush1.bf16.msra.mxu0 0
  %1589 = vmatprep.subr.bf16.mxu0 0
  %1590 = vmatpush1.bf16.msra.mxu0 0
  %1591 = vmatprep.subr.bf16.mxu0 0
  %1592 = vmatpush1.bf16.msra.mxu0 0
  %1593 = vmatprep.subr.bf16.mxu0 0
  %1594 = vmatpush1.bf16.msra.mxu0 0
  %1595 = vmatprep.mubr.bf16.mxu0 0
  %1596 = vmatmul.mubr.bf16.gmra.mrb[0].mxu0 %v1497
  %v1597 = vpop.f32.mrb[0].mxu0
  %v1598 = vadd.f32 0.0, %v1597
  %v1599 = vpop.f32.mrb[0].mxu0
  %v1600 = vpop.f32.mrb[0].mxu0
  %v1601 = vpop.f32.mrb[0].mxu0
  %1602 = vdwg.mxu0
  %1604 = vrot.lane.b32.xlu0 %v1191, 64
  %v1605 = vpop.permute.xlu0 %1604
  %v1607 = vsel %vm58, %v1605, 0
  %1609 = vmatprep.subr.bf16.mxu0 0
  %1610 = vmatpush1.bf16.msra.mxu0 %v522
  %1611 = vmatprep.subr.bf16.mxu0 0
  %1612 = vmatpush1.bf16.msra.mxu0 %v523
  %1613 = vmatprep.subr.bf16.mxu0 0
  %1614 = vmatpush1.bf16.msra.mxu0 0
  %1615 = vmatprep.subr.bf16.mxu0 0
  %1616 = vmatpush1.bf16.msra.mxu0 0
  %1617 = vmatprep.subr.bf16.mxu0 0
  %1618 = vmatpush1.bf16.msra.mxu0 0
  %1619 = vmatprep.subr.bf16.mxu0 0
  %1620 = vmatpush1.bf16.msra.mxu0 0
  %1621 = vmatprep.subr.bf16.mxu0 0
  %1622 = vmatpush1.bf16.msra.mxu0 0
  %1623 = vmatprep.subr.bf16.mxu0 0
  %1624 = vmatpush1.bf16.msra.mxu0 0
  %1625 = vmatprep.subr.bf16.mxu0 0
  %1626 = vmatpush1.bf16.msra.mxu0 0
  %1627 = vmatprep.subr.bf16.mxu0 0
  %1628 = vmatpush1.bf16.msra.mxu0 0
  %1629 = vmatprep.subr.bf16.mxu0 0
  %1630 = vmatpush1.bf16.msra.mxu0 0
  %1631 = vmatprep.subr.bf16.mxu0 0
  %1632 = vmatpush1.bf16.msra.mxu0 0
  %1633 = vmatprep.subr.bf16.mxu0 0
  %1634 = vmatpush1.bf16.msra.mxu0 0
  %1635 = vmatprep.subr.bf16.mxu0 0
  %1636 = vmatpush1.bf16.msra.mxu0 0
  %1637 = vmatprep.subr.bf16.mxu0 0
  %1638 = vmatpush1.bf16.msra.mxu0 0
  %1639 = vmatprep.subr.bf16.mxu0 0
  %1640 = vmatpush1.bf16.msra.mxu0 0
  %1641 = vmatprep.mubr.bf16.mxu0 0
  %1642 = vmatmul.mubr.bf16.gmra.mrb[0].mxu0 %v1607
  %v1643 = vpop.f32.mrb[0].mxu0
  %v1644 = vadd.f32 %v1598, %v1643
  %v1645 = vpop.f32.mrb[0].mxu0
  %v1646 = vpop.f32.mrb[0].mxu0
  %v1647 = vpop.f32.mrb[0].mxu0
  %1648 = vdwg.mxu0
  %v1649 = vadd.f32 %v1644, %v575
  %v1650 = vmul.f32 %v1649, 0.5
  %v1651 = vtanh.pop %v1650
  %v1652 = vmul.f32 %v1651, 0.5
  %v1653 = vadd.f32 %v1652, 0.5
  %v1654 = vtanh.pop %v1649
  %v1655 = vmul.f32 %v1653, %v1074
  %1657 = vrot.lane.b32.xlu0 %v1654, 32
  %v1658 = vpop.permute.xlu0 %1657
  %v1660 = vmul.f32 %v1653, %v1658
  %1662 = vrot.lane.b32.xlu0 %v1660, 32
  %v1663 = vpop.permute.xlu0 %1662
  %v1665 = vadd.f32 %v1655, %v1663
  %v1666 = vtanh.pop %v1665
  %1668 = vrot.lane.b32.xlu0 %v1666, 32
  %v1669 = vpop.permute.xlu0 %1668
  %v1671 = vmul.f32 %v1653, %v1669
  %v1672 = vpack.c.bf16 %v1671, %v1671
  %1673 = vmatprep.subr.bf16.mxu0 0
  %1674 = vmatpush1.bf16.msra.mxu0 %v206
  %1675 = vmatprep.subr.bf16.mxu0 0
  %1676 = vmatpush1.bf16.msra.mxu0 %v207
  %1677 = vmatprep.subr.bf16.mxu0 0
  %1678 = vmatpush1.bf16.msra.mxu0 0
  %1679 = vmatprep.subr.bf16.mxu0 0
  %1680 = vmatpush1.bf16.msra.mxu0 0
  %1681 = vmatprep.subr.bf16.mxu0 0
  %1682 = vmatpush1.bf16.msra.mxu0 0
  %1683 = vmatprep.subr.bf16.mxu0 0
  %1684 = vmatpush1.bf16.msra.mxu0 0
  %1685 = vmatprep.subr.bf16.mxu0 0
  %1686 = vmatpush1.bf16.msra.mxu0 0
  %1687 = vmatprep.subr.bf16.mxu0 0
  %1688 = vmatpush1.bf16.msra.mxu0 0
  %1689 = vmatprep.subr.bf16.mxu0 0
  %1690 = vmatpush1.bf16.msra.mxu0 0
  %1691 = vmatprep.subr.bf16.mxu0 0
  %1692 = vmatpush1.bf16.msra.mxu0 0
  %1693 = vmatprep.subr.bf16.mxu0 0
  %1694 = vmatpush1.bf16.msra.mxu0 0
  %1695 = vmatprep.subr.bf16.mxu0 0
  %1696 = vmatpush1.bf16.msra.mxu0 0
  %1697 = vmatprep.subr.bf16.mxu0 0
  %1698 = vmatpush1.bf16.msra.mxu0 0
  %1699 = vmatprep.subr.bf16.mxu0 0
  %1700 = vmatpush1.bf16.msra.mxu0 0
  %1701 = vmatprep.subr.bf16.mxu0 0
  %1702 = vmatpush1.bf16.msra.mxu0 0
  %1703 = vmatprep.subr.bf16.mxu0 0
  %1704 = vmatpush1.bf16.msra.mxu0 0
  %1705 = vmatprep.mubr.bf16.mxu0 0
  %1706 = vmatmul.mubr.bf16.gmra.mrb[0].mxu0 %v1607
  %v1707 = vpop.f32.mrb[0].mxu0
  %v1708 = vadd.f32 0.0, %v1707
  %v1709 = vpop.f32.mrb[0].mxu0
  %v1710 = vpop.f32.mrb[0].mxu0
  %v1711 = vpop.f32.mrb[0].mxu0
  %1712 = vdwg.mxu0
  %1714 = vrot.lane.b32.xlu0 %v1300, 64
  %v1715 = vpop.permute.xlu0 %1714
  %v1717 = vsel %vm58, %v1715, 0
  %1719 = vmatprep.subr.bf16.mxu0 0
  %1720 = vmatpush1.bf16.msra.mxu0 %v261
  %1721 = vmatprep.subr.bf16.mxu0 0
  %1722 = vmatpush1.bf16.msra.mxu0 %v262
  %1723 = vmatprep.subr.bf16.mxu0 0
  %1724 = vmatpush1.bf16.msra.mxu0 0
  %1725 = vmatprep.subr.bf16.mxu0 0
  %1726 = vmatpush1.bf16.msra.mxu0 0
  %1727 = vmatprep.subr.bf16.mxu0 0
  %1728 = vmatpush1.bf16.msra.mxu0 0
  %1729 = vmatprep.subr.bf16.mxu0 0
  %1730 = vmatpush1.bf16.msra.mxu0 0
  %1731 = vmatprep.subr.bf16.mxu0 0
  %1732 = vmatpush1.bf16.msra.mxu0 0
  %1733 = vmatprep.subr.bf16.mxu0 0
  %1734 = vmatpush1.bf16.msra.mxu0 0
  %1735 = vmatprep.subr.bf16.mxu0 0
  %1736 = vmatpush1.bf16.msra.mxu0 0
  %1737 = vmatprep.subr.bf16.mxu0 0
  %1738 = vmatpush1.bf16.msra.mxu0 0
  %1739 = vmatprep.subr.bf16.mxu0 0
  %1740 = vmatpush1.bf16.msra.mxu0 0
  %1741 = vmatprep.subr.bf16.mxu0 0
  %1742 = vmatpush1.bf16.msra.mxu0 0
  %1743 = vmatprep.subr.bf16.mxu0 0
  %1744 = vmatpush1.bf16.msra.mxu0 0
  %1745 = vmatprep.subr.bf16.mxu0 0
  %1746 = vmatpush1.bf16.msra.mxu0 0
  %1747 = vmatprep.subr.bf16.mxu0 0
  %1748 = vmatpush1.bf16.msra.mxu0 0
  %1749 = vmatprep.subr.bf16.mxu0 0
  %1750 = vmatpush1.bf16.msra.mxu0 0
  %1751 = vmatprep.mubr.bf16.mxu0 0
  %1752 = vmatmul.mubr.bf16.gmra.mrb[0].mxu0 %v1717
  %v1753 = vpop.f32.mrb[0].mxu0
  %v1754 = vadd.f32 %v1708, %v1753
  %v1755 = vpop.f32.mrb[0].mxu0
  %v1756 = vpop.f32.mrb[0].mxu0
  %v1757 = vpop.f32.mrb[0].mxu0
  %1758 = vdwg.mxu0
  %v1759 = vadd.f32 %v1754, %v314
  %v1760 = vmul.f32 %v1759, 0.5
  %v1761 = vtanh.pop %v1760
  %v1762 = vmul.f32 %v1761, 0.5
  %v1763 = vadd.f32 %v1762, 0.5
  %v1764 = vtanh.pop %v1759
  %v1765 = vmul.f32 %v1763, %v1184
  %1767 = vrot.lane.b32.xlu0 %v1764, 32
  %v1768 = vpop.permute.xlu0 %1767
  %v1770 = vmul.f32 %v1763, %v1768
  %1772 = vrot.lane.b32.xlu0 %v1770, 32
  %v1773 = vpop.permute.xlu0 %1772
  %v1775 = vadd.f32 %v1765, %v1773
  %v1776 = vtanh.pop %v1775
  %1778 = vrot.lane.b32.xlu0 %v1776, 32
  %v1779 = vpop.permute.xlu0 %1778
  %v1781 = vmul.f32 %v1763, %v1779
  %v1782 = vpack.c.bf16 %v1781, %v1781
  %v1783 = vld [vmem:[%s0 + $0x20] sm:$0xff]
  %v1784 = vpack.c.bf16 %v1783, %v1783
  %1785 = vmatprep.subr.bf16.mxu0 0
  %1786 = vmatpush1.bf16.msra.mxu0 %v54
  %1787 = vmatprep.subr.bf16.mxu0 0
  %1788 = vmatpush1.bf16.msra.mxu0 %v55
  %1789 = vmatprep.subr.bf16.mxu0 0
  %1790 = vmatpush1.bf16.msra.mxu0 0
  %1791 = vmatprep.subr.bf16.mxu0 0
  %1792 = vmatpush1.bf16.msra.mxu0 0
  %1793 = vmatprep.subr.bf16.mxu0 0
  %1794 = vmatpush1.bf16.msra.mxu0 0
  %1795 = vmatprep.subr.bf16.mxu0 0
  %1796 = vmatpush1.bf16.msra.mxu0 0
  %1797 = vmatprep.subr.bf16.mxu0 0
  %1798 = vmatpush1.bf16.msra.mxu0 0
  %1799 = vmatprep.subr.bf16.mxu0 0
  %1800 = vmatpush1.bf16.msra.mxu0 0
  %1801 = vmatprep.subr.bf16.mxu0 0
  %1802 = vmatpush1.bf16.msra.mxu0 0
  %1803 = vmatprep.subr.bf16.mxu0 0
  %1804 = vmatpush1.bf16.msra.mxu0 0
  %1805 = vmatprep.subr.bf16.mxu0 0
  %1806 = vmatpush1.bf16.msra.mxu0 0
  %1807 = vmatprep.subr.bf16.mxu0 0
  %1808 = vmatpush1.bf16.msra.mxu0 0
  %1809 = vmatprep.subr.bf16.mxu0 0
  %1810 = vmatpush1.bf16.msra.mxu0 0
  %1811 = vmatprep.subr.bf16.mxu0 0
  %1812 = vmatpush1.bf16.msra.mxu0 0
  %1813 = vmatprep.subr.bf16.mxu0 0
  %1814 = vmatpush1.bf16.msra.mxu0 0
  %1815 = vmatprep.subr.bf16.mxu0 0
  %1816 = vmatpush1.bf16.msra.mxu0 0
  %1817 = vmatprep.mubr.bf16.mxu0 0
  %1818 = vmatmul.mubr.bf16.gmra.mrb[0].mxu0 %v1717
  %v1819 = vpop.f32.mrb[0].mxu0
  %v1820 = vadd.f32 0.0, %v1819
  %v1821 = vpop.f32.mrb[0].mxu0
  %v1822 = vpop.f32.mrb[0].mxu0
  %v1823 = vpop.f32.mrb[0].mxu0
  %1824 = vdwg.mxu0
  %v1826 = vsel %vm58, %v1784, 0
  %1828 = vmatprep.subr.bf16.mxu0 0
  %1829 = vmatpush1.bf16.msra.mxu0 %v110
  %1830 = vmatprep.subr.bf16.mxu0 0
  %1831 = vmatpush1.bf16.msra.mxu0 %v111
  %1832 = vmatprep.subr.bf16.mxu0 0
  %1833 = vmatpush1.bf16.msra.mxu0 0
  %1834 = vmatprep.subr.bf16.mxu0 0
  %1835 = vmatpush1.bf16.msra.mxu0 0
  %1836 = vmatprep.subr.bf16.mxu0 0
  %1837 = vmatpush1.bf16.msra.mxu0 0
  %1838 = vmatprep.subr.bf16.mxu0 0
  %1839 = vmatpush1.bf16.msra.mxu0 0
  %1840 = vmatprep.subr.bf16.mxu0 0
  %1841 = vmatpush1.bf16.msra.mxu0 0
  %1842 = vmatprep.subr.bf16.mxu0 0
  %1843 = vmatpush1.bf16.msra.mxu0 0
  %1844 = vmatprep.subr.bf16.mxu0 0
  %1845 = vmatpush1.bf16.msra.mxu0 0
  %1846 = vmatprep.subr.bf16.mxu0 0
  %1847 = vmatpush1.bf16.msra.mxu0 0
  %1848 = vmatprep.subr.bf16.mxu0 0
  %1849 = vmatpush1.bf16.msra.mxu0 0
  %1850 = vmatprep.subr.bf16.mxu0 0
  %1851 = vmatpush1.bf16.msra.mxu0 0
  %1852 = vmatprep.subr.bf16.mxu0 0
  %1853 = vmatpush1.bf16.msra.mxu0 0
  %1854 = vmatprep.subr.bf16.mxu0 0
  %1855 = vmatpush1.bf16.msra.mxu0 0
  %1856 = vmatprep.subr.bf16.mxu0 0
  %1857 = vmatpush1.bf16.msra.mxu0 0
  %1858 = vmatprep.subr.bf16.mxu0 0
  %1859 = vmatpush1.bf16.msra.mxu0 0
  %1860 = vmatprep.mubr.bf16.mxu0 0
  %1861 = vmatmul.mubr.bf16.gmra.mrb[0].mxu0 %v1826
  %v1862 = vpop.f32.mrb[0].mxu0
  %v1863 = vadd.f32 %v1820, %v1862
  %v1864 = vpop.f32.mrb[0].mxu0
  %v1865 = vpop.f32.mrb[0].mxu0
  %v1866 = vpop.f32.mrb[0].mxu0
  %1867 = vdwg.mxu0
  %v1868 = vadd.f32 %v1863, %v162
  %v1869 = vmul.f32 %v1868, 0.5
  %v1870 = vtanh.pop %v1869
  %v1871 = vmul.f32 %v1870, 0.5
  %v1872 = vadd.f32 %v1871, 0.5
  %v1873 = vtanh.pop %v1868
  %v1874 = vmul.f32 %v1872, %v1293
  %1876 = vrot.lane.b32.xlu0 %v1873, 32
  %v1877 = vpop.permute.xlu0 %1876
  %v1879 = vmul.f32 %v1872, %v1877
  %1881 = vrot.lane.b32.xlu0 %v1879, 32
  %v1882 = vpop.permute.xlu0 %1881
  %v1884 = vadd.f32 %v1874, %v1882
  %v1885 = vtanh.pop %v1884
  %1887 = vrot.lane.b32.xlu0 %v1885, 32
  %v1888 = vpop.permute.xlu0 %1887
  %v1890 = vmul.f32 %v1872, %v1888
  %v1891 = vpack.c.bf16 %v1890, %v1890
  %1893 = vrot.lane.b32.xlu0 %v1452, 64
  %v1894 = vpop.permute.xlu0 %1893
  %v1896 = vsel %vm58, %v1894, 0
  %1898 = vmatprep.subr.bf16.mxu0 0
  %1899 = vmatpush1.bf16.msra.mxu0 %v1319
  %1900 = vmatprep.subr.bf16.mxu0 0
  %1901 = vmatpush1.bf16.msra.mxu0 %v1320
  %1902 = vmatprep.subr.bf16.mxu0 0
  %1903 = vmatpush1.bf16.msra.mxu0 0
  %1904 = vmatprep.subr.bf16.mxu0 0
  %1905 = vmatpush1.bf16.msra.mxu0 0
  %1906 = vmatprep.subr.bf16.mxu0 0
  %1907 = vmatpush1.bf16.msra.mxu0 0
  %1908 = vmatprep.subr.bf16.mxu0 0
  %1909 = vmatpush1.bf16.msra.mxu0 0
  %1910 = vmatprep.subr.bf16.mxu0 0
  %1911 = vmatpush1.bf16.msra.mxu0 0
  %1912 = vmatprep.subr.bf16.mxu0 0
  %1913 = vmatpush1.bf16.msra.mxu0 0
  %1914 = vmatprep.subr.bf16.mxu0 0
  %1915 = vmatpush1.bf16.msra.mxu0 0
  %1916 = vmatprep.subr.bf16.mxu0 0
  %1917 = vmatpush1.bf16.msra.mxu0 0
  %1918 = vmatprep.subr.bf16.mxu0 0
  %1919 = vmatpush1.bf16.msra.mxu0 0
  %1920 = vmatprep.subr.bf16.mxu0 0
  %1921 = vmatpush1.bf16.msra.mxu0 0
  %1922 = vmatprep.subr.bf16.mxu0 0
  %1923 = vmatpush1.bf16.msra.mxu0 0
  %1924 = vmatprep.subr.bf16.mxu0 0
  %1925 = vmatpush1.bf16.msra.mxu0 0
  %1926 = vmatprep.subr.bf16.mxu0 0
  %1927 = vmatpush1.bf16.msra.mxu0 0
  %1928 = vmatprep.subr.bf16.mxu0 0
  %1929 = vmatpush1.bf16.msra.mxu0 0
  %1930 = vmatprep.mubr.bf16.mxu0 0
  %1931 = vmatmul.mubr.bf16.gmra.mrb[0].mxu0 %v1896
  %v1932 = vpop.f32.mrb[0].mxu0
  %v1933 = vadd.f32 0.0, %v1932
  %v1934 = vpop.f32.mrb[0].mxu0
  %v1935 = vpop.f32.mrb[0].mxu0
  %v1936 = vpop.f32.mrb[0].mxu0
  %1937 = vdwg.mxu0
  %1939 = vrot.lane.b32.xlu0 %v1562, 64
  %v1940 = vpop.permute.xlu0 %1939
  %v1942 = vsel %vm58, %v1940, 0
  %1944 = vmatprep.subr.bf16.mxu0 0
  %1945 = vmatpush1.bf16.msra.mxu0 %v1374
  %1946 = vmatprep.subr.bf16.mxu0 0
  %1947 = vmatpush1.bf16.msra.mxu0 %v1375
  %1948 = vmatprep.subr.bf16.mxu0 0
  %1949 = vmatpush1.bf16.msra.mxu0 0
  %1950 = vmatprep.subr.bf16.mxu0 0
  %1951 = vmatpush1.bf16.msra.mxu0 0
  %1952 = vmatprep.subr.bf16.mxu0 0
  %1953 = vmatpush1.bf16.msra.mxu0 0
  %1954 = vmatprep.subr.bf16.mxu0 0
  %1955 = vmatpush1.bf16.msra.mxu0 0
  %1956 = vmatprep.subr.bf16.mxu0 0
  %1957 = vmatpush1.bf16.msra.mxu0 0
  %1958 = vmatprep.subr.bf16.mxu0 0
  %1959 = vmatpush1.bf16.msra.mxu0 0
  %1960 = vmatprep.subr.bf16.mxu0 0
  %1961 = vmatpush1.bf16.msra.mxu0 0
  %1962 = vmatprep.subr.bf16.mxu0 0
  %1963 = vmatpush1.bf16.msra.mxu0 0
  %1964 = vmatprep.subr.bf16.mxu0 0
  %1965 = vmatpush1.bf16.msra.mxu0 0
  %1966 = vmatprep.subr.bf16.mxu0 0
  %1967 = vmatpush1.bf16.msra.mxu0 0
  %1968 = vmatprep.subr.bf16.mxu0 0
  %1969 = vmatpush1.bf16.msra.mxu0 0
  %1970 = vmatprep.subr.bf16.mxu0 0
  %1971 = vmatpush1.bf16.msra.mxu0 0
  %1972 = vmatprep.subr.bf16.mxu0 0
  %1973 = vmatpush1.bf16.msra.mxu0 0
  %1974 = vmatprep.subr.bf16.mxu0 0
  %1975 = vmatpush1.bf16.msra.mxu0 0
  %1976 = vmatprep.mubr.bf16.mxu0 0
  %1977 = vmatmul.mubr.bf16.gmra.mrb[0].mxu0 %v1942
  %v1978 = vpop.f32.mrb[0].mxu0
  %v1979 = vadd.f32 %v1933, %v1978
  %v1980 = vpop.f32.mrb[0].mxu0
  %v1981 = vpop.f32.mrb[0].mxu0
  %v1982 = vpop.f32.mrb[0].mxu0
  %1983 = vdwg.mxu0
  %v1984 = vadd.f32 %v1979, %v1427
  %v1985 = vmul.f32 %v1984, 0.5
  %v1986 = vtanh.pop %v1985
  %v1987 = vmul.f32 %v1986, 0.5
  %v1988 = vadd.f32 %v1987, 0.5
  %v1989 = vtanh.pop %v1984
  %v1990 = vmul.f32 %v1988, %v1445
  %1992 = vrot.lane.b32.xlu0 %v1989, 32
  %v1993 = vpop.permute.xlu0 %1992
  %v1995 = vmul.f32 %v1988, %v1993
  %1997 = vrot.lane.b32.xlu0 %v1995, 32
  %v1998 = vpop.permute.xlu0 %1997
  %v2000 = vadd.f32 %v1990, %v1998
  %v2001 = vtanh.pop %v2000
  %2003 = vrot.lane.b32.xlu0 %v2001, 32
  %v2004 = vpop.permute.xlu0 %2003
  %v2006 = vmul.f32 %v1988, %v2004
  %v2007 = vpack.c.bf16 %v2006, %v2006
  %2008 = vmatprep.subr.bf16.mxu0 0
  %2009 = vmatpush1.bf16.msra.mxu0 %v838
  %2010 = vmatprep.subr.bf16.mxu0 0
  %2011 = vmatpush1.bf16.msra.mxu0 %v839
  %2012 = vmatprep.subr.bf16.mxu0 0
  %2013 = vmatpush1.bf16.msra.mxu0 0
  %2014 = vmatprep.subr.bf16.mxu0 0
  %2015 = vmatpush1.bf16.msra.mxu0 0
  %2016 = vmatprep.subr.bf16.mxu0 0
  %2017 = vmatpush1.bf16.msra.mxu0 0
  %2018 = vmatprep.subr.bf16.mxu0 0
  %2019 = vmatpush1.bf16.msra.mxu0 0
  %2020 = vmatprep.subr.bf16.mxu0 0
  %2021 = vmatpush1.bf16.msra.mxu0 0
  %2022 = vmatprep.subr.bf16.mxu0 0
  %2023 = vmatpush1.bf16.msra.mxu0 0
  %2024 = vmatprep.subr.bf16.mxu0 0
  %2025 = vmatpush1.bf16.msra.mxu0 0
  %2026 = vmatprep.subr.bf16.mxu0 0
  %2027 = vmatpush1.bf16.msra.mxu0 0
  %2028 = vmatprep.subr.bf16.mxu0 0
  %2029 = vmatpush1.bf16.msra.mxu0 0
  %2030 = vmatprep.subr.bf16.mxu0 0
  %2031 = vmatpush1.bf16.msra.mxu0 0
  %2032 = vmatprep.subr.bf16.mxu0 0
  %2033 = vmatpush1.bf16.msra.mxu0 0
  %2034 = vmatprep.subr.bf16.mxu0 0
  %2035 = vmatpush1.bf16.msra.mxu0 0
  %2036 = vmatprep.subr.bf16.mxu0 0
  %2037 = vmatpush1.bf16.msra.mxu0 0
  %2038 = vmatprep.subr.bf16.mxu0 0
  %2039 = vmatpush1.bf16.msra.mxu0 0
  %2040 = vmatprep.mubr.bf16.mxu0 0
  %2041 = vmatmul.mubr.bf16.gmra.mrb[0].mxu0 %v1942
  %v2042 = vpop.f32.mrb[0].mxu0
  %v2043 = vadd.f32 0.0, %v2042
  %v2044 = vpop.f32.mrb[0].mxu0
  %v2045 = vpop.f32.mrb[0].mxu0
  %v2046 = vpop.f32.mrb[0].mxu0
  %2047 = vdwg.mxu0
  %2049 = vrot.lane.b32.xlu0 %v1672, 64
  %v2050 = vpop.permute.xlu0 %2049
  %v2052 = vsel %vm58, %v2050, 0
  %2054 = vmatprep.subr.bf16.mxu0 0
  %2055 = vmatpush1.bf16.msra.mxu0 %v893
  %2056 = vmatprep.subr.bf16.mxu0 0
  %2057 = vmatpush1.bf16.msra.mxu0 %v894
  %2058 = vmatprep.subr.bf16.mxu0 0
  %2059 = vmatpush1.bf16.msra.mxu0 0
  %2060 = vmatprep.subr.bf16.mxu0 0
  %2061 = vmatpush1.bf16.msra.mxu0 0
  %2062 = vmatprep.subr.bf16.mxu0 0
  %2063 = vmatpush1.bf16.msra.mxu0 0
  %2064 = vmatprep.subr.bf16.mxu0 0
  %2065 = vmatpush1.bf16.msra.mxu0 0
  %2066 = vmatprep.subr.bf16.mxu0 0
  %2067 = vmatpush1.bf16.msra.mxu0 0
  %2068 = vmatprep.subr.bf16.mxu0 0
  %2069 = vmatpush1.bf16.msra.mxu0 0
  %2070 = vmatprep.subr.bf16.mxu0 0
  %2071 = vmatpush1.bf16.msra.mxu0 0
  %2072 = vmatprep.subr.bf16.mxu0 0
  %2073 = vmatpush1.bf16.msra.mxu0 0
  %2074 = vmatprep.subr.bf16.mxu0 0
  %2075 = vmatpush1.bf16.msra.mxu0 0
  %2076 = vmatprep.subr.bf16.mxu0 0
  %2077 = vmatpush1.bf16.msra.mxu0 0
  %2078 = vmatprep.subr.bf16.mxu0 0
  %2079 = vmatpush1.bf16.msra.mxu0 0
  %2080 = vmatprep.subr.bf16.mxu0 0
  %2081 = vmatpush1.bf16.msra.mxu0 0
  %2082 = vmatprep.subr.bf16.mxu0 0
  %2083 = vmatpush1.bf16.msra.mxu0 0
  %2084 = vmatprep.subr.bf16.mxu0 0
  %2085 = vmatpush1.bf16.msra.mxu0 0
  %2086 = vmatprep.mubr.bf16.mxu0 0
  %2087 = vmatmul.mubr.bf16.gmra.mrb[0].mxu0 %v2052
  %v2088 = vpop.f32.mrb[0].mxu0
  %v2089 = vadd.f32 %v2043, %v2088
  %v2090 = vpop.f32.mrb[0].mxu0
  %v2091 = vpop.f32.mrb[0].mxu0
  %v2092 = vpop.f32.mrb[0].mxu0
  %2093 = vdwg.mxu0
  %v2094 = vadd.f32 %v2089, %v946
  %v2095 = vmul.f32 %v2094, 0.5
  %v2096 = vtanh.pop %v2095
  %v2097 = vmul.f32 %v2096, 0.5
  %v2098 = vadd.f32 %v2097, 0.5
  %v2099 = vtanh.pop %v2094
  %v2100 = vmul.f32 %v2098, %v1555
  %2102 = vrot.lane.b32.xlu0 %v2099, 32
  %v2103 = vpop.permute.xlu0 %2102
  %v2105 = vmul.f32 %v2098, %v2103
  %2107 = vrot.lane.b32.xlu0 %v2105, 32
  %v2108 = vpop.permute.xlu0 %2107
  %v2110 = vadd.f32 %v2100, %v2108
  %v2111 = vtanh.pop %v2110
  %2113 = vrot.lane.b32.xlu0 %v2111, 32
  %v2114 = vpop.permute.xlu0 %2113
  %v2116 = vmul.f32 %v2098, %v2114
  %v2117 = vpack.c.bf16 %v2116, %v2116
  %2118 = vmatprep.subr.bf16.mxu0 0
  %2119 = vmatpush1.bf16.msra.mxu0 %v467
  %2120 = vmatprep.subr.bf16.mxu0 0
  %2121 = vmatpush1.bf16.msra.mxu0 %v468
  %2122 = vmatprep.subr.bf16.mxu0 0
  %2123 = vmatpush1.bf16.msra.mxu0 0
  %2124 = vmatprep.subr.bf16.mxu0 0
  %2125 = vmatpush1.bf16.msra.mxu0 0
  %2126 = vmatprep.subr.bf16.mxu0 0
  %2127 = vmatpush1.bf16.msra.mxu0 0
  %2128 = vmatprep.subr.bf16.mxu0 0
  %2129 = vmatpush1.bf16.msra.mxu0 0
  %2130 = vmatprep.subr.bf16.mxu0 0
  %2131 = vmatpush1.bf16.msra.mxu0 0
  %2132 = vmatprep.subr.bf16.mxu0 0
  %2133 = vmatpush1.bf16.msra.mxu0 0
  %2134 = vmatprep.subr.bf16.mxu0 0
  %2135 = vmatpush1.bf16.msra.mxu0 0
  %2136 = vmatprep.subr.bf16.mxu0 0
  %2137 = vmatpush1.bf16.msra.mxu0 0
  %2138 = vmatprep.subr.bf16.mxu0 0
  %2139 = vmatpush1.bf16.msra.mxu0 0
  %2140 = vmatprep.subr.bf16.mxu0 0
  %2141 = vmatpush1.bf16.msra.mxu0 0
  %2142 = vmatprep.subr.bf16.mxu0 0
  %2143 = vmatpush1.bf16.msra.mxu0 0
  %2144 = vmatprep.subr.bf16.mxu0 0
  %2145 = vmatpush1.bf16.msra.mxu0 0
  %2146 = vmatprep.subr.bf16.mxu0 0
  %2147 = vmatpush1.bf16.msra.mxu0 0
  %2148 = vmatprep.subr.bf16.mxu0 0
  %2149 = vmatpush1.bf16.msra.mxu0 0
  %2150 = vmatprep.mubr.bf16.mxu0 0
  %2151 = vmatmul.mubr.bf16.gmra.mrb[0].mxu0 %v2052
  %v2152 = vpop.f32.mrb[0].mxu0
  %v2153 = vadd.f32 0.0, %v2152
  %v2154 = vpop.f32.mrb[0].mxu0
  %v2155 = vpop.f32.mrb[0].mxu0
  %v2156 = vpop.f32.mrb[0].mxu0
  %2157 = vdwg.mxu0
  %2159 = vrot.lane.b32.xlu0 %v1782, 64
  %v2160 = vpop.permute.xlu0 %2159
  %v2162 = vsel %vm58, %v2160, 0
  %2164 = vmatprep.subr.bf16.mxu0 0
  %2165 = vmatpush1.bf16.msra.mxu0 %v522
  %2166 = vmatprep.subr.bf16.mxu0 0
  %2167 = vmatpush1.bf16.msra.mxu0 %v523
  %2168 = vmatprep.subr.bf16.mxu0 0
  %2169 = vmatpush1.bf16.msra.mxu0 0
  %2170 = vmatprep.subr.bf16.mxu0 0
  %2171 = vmatpush1.bf16.msra.mxu0 0
  %2172 = vmatprep.subr.bf16.mxu0 0
  %2173 = vmatpush1.bf16.msra.mxu0 0
  %2174 = vmatprep.subr.bf16.mxu0 0
  %2175 = vmatpush1.bf16.msra.mxu0 0
  %2176 = vmatprep.subr.bf16.mxu0 0
  %2177 = vmatpush1.bf16.msra.mxu0 0
  %2178 = vmatprep.subr.bf16.mxu0 0
  %2179 = vmatpush1.bf16.msra.mxu0 0
  %2180 = vmatprep.subr.bf16.mxu0 0
  %2181 = vmatpush1.bf16.msra.mxu0 0
  %2182 = vmatprep.subr.bf16.mxu0 0
  %2183 = vmatpush1.bf16.msra.mxu0 0
  %2184 = vmatprep.subr.bf16.mxu0 0
  %2185 = vmatpush1.bf16.msra.mxu0 0
  %2186 = vmatprep.subr.bf16.mxu0 0
  %2187 = vmatpush1.bf16.msra.mxu0 0
  %2188 = vmatprep.subr.bf16.mxu0 0
  %2189 = vmatpush1.bf16.msra.mxu0 0
  %2190 = vmatprep.subr.bf16.mxu0 0
  %2191 = vmatpush1.bf16.msra.mxu0 0
  %2192 = vmatprep.subr.bf16.mxu0 0
  %2193 = vmatpush1.bf16.msra.mxu0 0
  %2194 = vmatprep.subr.bf16.mxu0 0
  %2195 = vmatpush1.bf16.msra.mxu0 0
  %2196 = vmatprep.mubr.bf16.mxu0 0
  %2197 = vmatmul.mubr.bf16.gmra.mrb[0].mxu0 %v2162
  %v2198 = vpop.f32.mrb[0].mxu0
  %v2199 = vadd.f32 %v2153, %v2198
  %v2200 = vpop.f32.mrb[0].mxu0
  %v2201 = vpop.f32.mrb[0].mxu0
  %v2202 = vpop.f32.mrb[0].mxu0
  %2203 = vdwg.mxu0
  %v2204 = vadd.f32 %v2199, %v575
  %v2205 = vmul.f32 %v2204, 0.5
  %v2206 = vtanh.pop %v2205
  %v2207 = vmul.f32 %v2206, 0.5
  %v2208 = vadd.f32 %v2207, 0.5
  %v2209 = vtanh.pop %v2204
  %v2210 = vmul.f32 %v2208, %v1665
  %2212 = vrot.lane.b32.xlu0 %v2209, 32
  %v2213 = vpop.permute.xlu0 %2212
  %v2215 = vmul.f32 %v2208, %v2213
  %2217 = vrot.lane.b32.xlu0 %v2215, 32
  %v2218 = vpop.permute.xlu0 %2217
  %v2220 = vadd.f32 %v2210, %v2218
  %v2221 = vtanh.pop %v2220
  %2223 = vrot.lane.b32.xlu0 %v2221, 32
  %v2224 = vpop.permute.xlu0 %2223
  %v2226 = vmul.f32 %v2208, %v2224
  %v2227 = vpack.c.bf16 %v2226, %v2226
  %2228 = vmatprep.subr.bf16.mxu0 0
  %2229 = vmatpush1.bf16.msra.mxu0 %v206
  %2230 = vmatprep.subr.bf16.mxu0 0
  %2231 = vmatpush1.bf16.msra.mxu0 %v207
  %2232 = vmatprep.subr.bf16.mxu0 0
  %2233 = vmatpush1.bf16.msra.mxu0 0
  %2234 = vmatprep.subr.bf16.mxu0 0
  %2235 = vmatpush1.bf16.msra.mxu0 0
  %2236 = vmatprep.subr.bf16.mxu0 0
  %2237 = vmatpush1.bf16.msra.mxu0 0
  %2238 = vmatprep.subr.bf16.mxu0 0
  %2239 = vmatpush1.bf16.msra.mxu0 0
  %2240 = vmatprep.subr.bf16.mxu0 0
  %2241 = vmatpush1.bf16.msra.mxu0 0
  %2242 = vmatprep.subr.bf16.mxu0 0
  %2243 = vmatpush1.bf16.msra.mxu0 0
  %2244 = vmatprep.subr.bf16.mxu0 0
  %2245 = vmatpush1.bf16.msra.mxu0 0
  %2246 = vmatprep.subr.bf16.mxu0 0
  %2247 = vmatpush1.bf16.msra.mxu0 0
  %2248 = vmatprep.subr.bf16.mxu0 0
  %2249 = vmatpush1.bf16.msra.mxu0 0
  %2250 = vmatprep.subr.bf16.mxu0 0
  %2251 = vmatpush1.bf16.msra.mxu0 0
  %2252 = vmatprep.subr.bf16.mxu0 0
  %2253 = vmatpush1.bf16.msra.mxu0 0
  %2254 = vmatprep.subr.bf16.mxu0 0
  %2255 = vmatpush1.bf16.msra.mxu0 0
  %2256 = vmatprep.subr.bf16.mxu0 0
  %2257 = vmatpush1.bf16.msra.mxu0 0
  %2258 = vmatprep.subr.bf16.mxu0 0
  %2259 = vmatpush1.bf16.msra.mxu0 0
  %2260 = vmatprep.mubr.bf16.mxu0 0
  %2261 = vmatmul.mubr.bf16.gmra.mrb[0].mxu0 %v2162
  %v2262 = vpop.f32.mrb[0].mxu0
  %v2263 = vadd.f32 0.0, %v2262
  %v2264 = vpop.f32.mrb[0].mxu0
  %v2265 = vpop.f32.mrb[0].mxu0
  %v2266 = vpop.f32.mrb[0].mxu0
  %2267 = vdwg.mxu0
  %2269 = vrot.lane.b32.xlu0 %v1891, 64
  %v2270 = vpop.permute.xlu0 %2269
  %v2272 = vsel %vm58, %v2270, 0
  %2274 = vmatprep.subr.bf16.mxu0 0
  %2275 = vmatpush1.bf16.msra.mxu0 %v261
  %2276 = vmatprep.subr.bf16.mxu0 0
  %2277 = vmatpush1.bf16.msra.mxu0 %v262
  %2278 = vmatprep.subr.bf16.mxu0 0
  %2279 = vmatpush1.bf16.msra.mxu0 0
  %2280 = vmatprep.subr.bf16.mxu0 0
  %2281 = vmatpush1.bf16.msra.mxu0 0
  %2282 = vmatprep.subr.bf16.mxu0 0
  %2283 = vmatpush1.bf16.msra.mxu0 0
  %2284 = vmatprep.subr.bf16.mxu0 0
  %2285 = vmatpush1.bf16.msra.mxu0 0
  %2286 = vmatprep.subr.bf16.mxu0 0
  %2287 = vmatpush1.bf16.msra.mxu0 0
  %2288 = vmatprep.subr.bf16.mxu0 0
  %2289 = vmatpush1.bf16.msra.mxu0 0
  %2290 = vmatprep.subr.bf16.mxu0 0
  %2291 = vmatpush1.bf16.msra.mxu0 0
  %2292 = vmatprep.subr.bf16.mxu0 0
  %2293 = vmatpush1.bf16.msra.mxu0 0
  %2294 = vmatprep.subr.bf16.mxu0 0
  %2295 = vmatpush1.bf16.msra.mxu0 0
  %2296 = vmatprep.subr.bf16.mxu0 0
  %2297 = vmatpush1.bf16.msra.mxu0 0
  %2298 = vmatprep.subr.bf16.mxu0 0
  %2299 = vmatpush1.bf16.msra.mxu0 0
  %2300 = vmatprep.subr.bf16.mxu0 0
  %2301 = vmatpush1.bf16.msra.mxu0 0
  %2302 = vmatprep.subr.bf16.mxu0 0
  %2303 = vmatpush1.bf16.msra.mxu0 0
  %2304 = vmatprep.subr.bf16.mxu0 0
  %2305 = vmatpush1.bf16.msra.mxu0 0
  %2306 = vmatprep.mubr.bf16.mxu0 0
  %2307 = vmatmul.mubr.bf16.gmra.mrb[0].mxu0 %v2272
  %v2308 = vpop.f32.mrb[0].mxu0
  %v2309 = vadd.f32 %v2263, %v2308
  %v2310 = vpop.f32.mrb[0].mxu0
  %v2311 = vpop.f32.mrb[0].mxu0
  %v2312 = vpop.f32.mrb[0].mxu0
  %2313 = vdwg.mxu0
  %v2314 = vadd.f32 %v2309, %v314
  %v2315 = vmul.f32 %v2314, 0.5
  %v2316 = vtanh.pop %v2315
  %v2317 = vmul.f32 %v2316, 0.5
  %v2318 = vadd.f32 %v2317, 0.5
  %v2319 = vtanh.pop %v2314
  %v2320 = vmul.f32 %v2318, %v1775
  %2322 = vrot.lane.b32.xlu0 %v2319, 32
  %v2323 = vpop.permute.xlu0 %2322
  %v2325 = vmul.f32 %v2318, %v2323
  %2327 = vrot.lane.b32.xlu0 %v2325, 32
  %v2328 = vpop.permute.xlu0 %2327
  %v2330 = vadd.f32 %v2320, %v2328
  %v2331 = vtanh.pop %v2330
  %2333 = vrot.lane.b32.xlu0 %v2331, 32
  %v2334 = vpop.permute.xlu0 %2333
  %v2336 = vmul.f32 %v2318, %v2334
  %v2337 = vpack.c.bf16 %v2336, %v2336
  %v2338 = vld [vmem:[%s0 + $0x28] sm:$0xff]
  %v2339 = vpack.c.bf16 %v2338, %v2338
  %2340 = vmatprep.subr.bf16.mxu0 0
  %2341 = vmatpush1.bf16.msra.mxu0 %v54
  %2342 = vmatprep.subr.bf16.mxu0 0
  %2343 = vmatpush1.bf16.msra.mxu0 %v55
  %2344 = vmatprep.subr.bf16.mxu0 0
  %2345 = vmatpush1.bf16.msra.mxu0 0
  %2346 = vmatprep.subr.bf16.mxu0 0
  %2347 = vmatpush1.bf16.msra.mxu0 0
  %2348 = vmatprep.subr.bf16.mxu0 0
  %2349 = vmatpush1.bf16.msra.mxu0 0
  %2350 = vmatprep.subr.bf16.mxu0 0
  %2351 = vmatpush1.bf16.msra.mxu0 0
  %2352 = vmatprep.subr.bf16.mxu0 0
  %2353 = vmatpush1.bf16.msra.mxu0 0
  %2354 = vmatprep.subr.bf16.mxu0 0
  %2355 = vmatpush1.bf16.msra.mxu0 0
  %2356 = vmatprep.subr.bf16.mxu0 0
  %2357 = vmatpush1.bf16.msra.mxu0 0
  %2358 = vmatprep.subr.bf16.mxu0 0
  %2359 = vmatpush1.bf16.msra.mxu0 0
  %2360 = vmatprep.subr.bf16.mxu0 0
  %2361 = vmatpush1.bf16.msra.mxu0 0
  %2362 = vmatprep.subr.bf16.mxu0 0
  %2363 = vmatpush1.bf16.msra.mxu0 0
  %2364 = vmatprep.subr.bf16.mxu0 0
  %2365 = vmatpush1.bf16.msra.mxu0 0
  %2366 = vmatprep.subr.bf16.mxu0 0
  %2367 = vmatpush1.bf16.msra.mxu0 0
  %2368 = vmatprep.subr.bf16.mxu0 0
  %2369 = vmatpush1.bf16.msra.mxu0 0
  %2370 = vmatprep.subr.bf16.mxu0 0
  %2371 = vmatpush1.bf16.msra.mxu0 0
  %2372 = vmatprep.mubr.bf16.mxu0 0
  %2373 = vmatmul.mubr.bf16.gmra.mrb[0].mxu0 %v2272
  %v2374 = vpop.f32.mrb[0].mxu0
  %v2375 = vadd.f32 0.0, %v2374
  %v2376 = vpop.f32.mrb[0].mxu0
  %v2377 = vpop.f32.mrb[0].mxu0
  %v2378 = vpop.f32.mrb[0].mxu0
  %2379 = vdwg.mxu0
  %v2381 = vsel %vm58, %v2339, 0
  %2383 = vmatprep.subr.bf16.mxu0 0
  %2384 = vmatpush1.bf16.msra.mxu0 %v110
  %2385 = vmatprep.subr.bf16.mxu0 0
  %2386 = vmatpush1.bf16.msra.mxu0 %v111
  %2387 = vmatprep.subr.bf16.mxu0 0
  %2388 = vmatpush1.bf16.msra.mxu0 0
  %2389 = vmatprep.subr.bf16.mxu0 0
  %2390 = vmatpush1.bf16.msra.mxu0 0
  %2391 = vmatprep.subr.bf16.mxu0 0
  %2392 = vmatpush1.bf16.msra.mxu0 0
  %2393 = vmatprep.subr.bf16.mxu0 0
  %2394 = vmatpush1.bf16.msra.mxu0 0
  %2395 = vmatprep.subr.bf16.mxu0 0
  %2396 = vmatpush1.bf16.msra.mxu0 0
  %2397 = vmatprep.subr.bf16.mxu0 0
  %2398 = vmatpush1.bf16.msra.mxu0 0
  %2399 = vmatprep.subr.bf16.mxu0 0
  %2400 = vmatpush1.bf16.msra.mxu0 0
  %2401 = vmatprep.subr.bf16.mxu0 0
  %2402 = vmatpush1.bf16.msra.mxu0 0
  %2403 = vmatprep.subr.bf16.mxu0 0
  %2404 = vmatpush1.bf16.msra.mxu0 0
  %2405 = vmatprep.subr.bf16.mxu0 0
  %2406 = vmatpush1.bf16.msra.mxu0 0
  %2407 = vmatprep.subr.bf16.mxu0 0
  %2408 = vmatpush1.bf16.msra.mxu0 0
  %2409 = vmatprep.subr.bf16.mxu0 0
  %2410 = vmatpush1.bf16.msra.mxu0 0
  %2411 = vmatprep.subr.bf16.mxu0 0
  %2412 = vmatpush1.bf16.msra.mxu0 0
  %2413 = vmatprep.subr.bf16.mxu0 0
  %2414 = vmatpush1.bf16.msra.mxu0 0
  %2415 = vmatprep.mubr.bf16.mxu0 0
  %2416 = vmatmul.mubr.bf16.gmra.mrb[0].mxu0 %v2381
  %v2417 = vpop.f32.mrb[0].mxu0
  %v2418 = vadd.f32 %v2375, %v2417
  %v2419 = vpop.f32.mrb[0].mxu0
  %v2420 = vpop.f32.mrb[0].mxu0
  %v2421 = vpop.f32.mrb[0].mxu0
  %2422 = vdwg.mxu0
  %v2423 = vadd.f32 %v2418, %v162
  %v2424 = vmul.f32 %v2423, 0.5
  %v2425 = vtanh.pop %v2424
  %v2426 = vmul.f32 %v2425, 0.5
  %v2427 = vadd.f32 %v2426, 0.5
  %v2428 = vtanh.pop %v2423
  %v2429 = vmul.f32 %v2427, %v1884
  %2431 = vrot.lane.b32.xlu0 %v2428, 32
  %v2432 = vpop.permute.xlu0 %2431
  %v2434 = vmul.f32 %v2427, %v2432
  %2436 = vrot.lane.b32.xlu0 %v2434, 32
  %v2437 = vpop.permute.xlu0 %2436
  %v2439 = vadd.f32 %v2429, %v2437
  %v2440 = vtanh.pop %v2439
  %2442 = vrot.lane.b32.xlu0 %v2440, 32
  %v2443 = vpop.permute.xlu0 %2442
  %v2445 = vmul.f32 %v2427, %v2443
  %v2446 = vpack.c.bf16 %v2445, %v2445
  %2448 = vrot.lane.b32.xlu0 %v2007, 64
  %v2449 = vpop.permute.xlu0 %2448
  %v2451 = vsel %vm58, %v2449, 0
  %2453 = vmatprep.subr.bf16.mxu0 0
  %2454 = vmatpush1.bf16.msra.mxu0 %v1319
  %2455 = vmatprep.subr.bf16.mxu0 0
  %2456 = vmatpush1.bf16.msra.mxu0 %v1320
  %2457 = vmatprep.subr.bf16.mxu0 0
  %2458 = vmatpush1.bf16.msra.mxu0 0
  %2459 = vmatprep.subr.bf16.mxu0 0
  %2460 = vmatpush1.bf16.msra.mxu0 0
  %2461 = vmatprep.subr.bf16.mxu0 0
  %2462 = vmatpush1.bf16.msra.mxu0 0
  %2463 = vmatprep.subr.bf16.mxu0 0
  %2464 = vmatpush1.bf16.msra.mxu0 0
  %2465 = vmatprep.subr.bf16.mxu0 0
  %2466 = vmatpush1.bf16.msra.mxu0 0
  %2467 = vmatprep.subr.bf16.mxu0 0
  %2468 = vmatpush1.bf16.msra.mxu0 0
  %2469 = vmatprep.subr.bf16.mxu0 0
  %2470 = vmatpush1.bf16.msra.mxu0 0
  %2471 = vmatprep.subr.bf16.mxu0 0
  %2472 = vmatpush1.bf16.msra.mxu0 0
  %2473 = vmatprep.subr.bf16.mxu0 0
  %2474 = vmatpush1.bf16.msra.mxu0 0
  %2475 = vmatprep.subr.bf16.mxu0 0
  %2476 = vmatpush1.bf16.msra.mxu0 0
  %2477 = vmatprep.subr.bf16.mxu0 0
  %2478 = vmatpush1.bf16.msra.mxu0 0
  %2479 = vmatprep.subr.bf16.mxu0 0
  %2480 = vmatpush1.bf16.msra.mxu0 0
  %2481 = vmatprep.subr.bf16.mxu0 0
  %2482 = vmatpush1.bf16.msra.mxu0 0
  %2483 = vmatprep.subr.bf16.mxu0 0
  %2484 = vmatpush1.bf16.msra.mxu0 0
  %2485 = vmatprep.mubr.bf16.mxu0 0
  %2486 = vmatmul.mubr.bf16.gmra.mrb[0].mxu0 %v2451
  %v2487 = vpop.f32.mrb[0].mxu0
  %v2488 = vadd.f32 0.0, %v2487
  %v2489 = vpop.f32.mrb[0].mxu0
  %v2490 = vpop.f32.mrb[0].mxu0
  %v2491 = vpop.f32.mrb[0].mxu0
  %2492 = vdwg.mxu0
  %2494 = vrot.lane.b32.xlu0 %v2117, 64
  %v2495 = vpop.permute.xlu0 %2494
  %v2497 = vsel %vm58, %v2495, 0
  %2499 = vmatprep.subr.bf16.mxu0 0
  %2500 = vmatpush1.bf16.msra.mxu0 %v1374
  %2501 = vmatprep.subr.bf16.mxu0 0
  %2502 = vmatpush1.bf16.msra.mxu0 %v1375
  %2503 = vmatprep.subr.bf16.mxu0 0
  %2504 = vmatpush1.bf16.msra.mxu0 0
  %2505 = vmatprep.subr.bf16.mxu0 0
  %2506 = vmatpush1.bf16.msra.mxu0 0
  %2507 = vmatprep.subr.bf16.mxu0 0
  %2508 = vmatpush1.bf16.msra.mxu0 0
  %2509 = vmatprep.subr.bf16.mxu0 0
  %2510 = vmatpush1.bf16.msra.mxu0 0
  %2511 = vmatprep.subr.bf16.mxu0 0
  %2512 = vmatpush1.bf16.msra.mxu0 0
  %2513 = vmatprep.subr.bf16.mxu0 0
  %2514 = vmatpush1.bf16.msra.mxu0 0
  %2515 = vmatprep.subr.bf16.mxu0 0
  %2516 = vmatpush1.bf16.msra.mxu0 0
  %2517 = vmatprep.subr.bf16.mxu0 0
  %2518 = vmatpush1.bf16.msra.mxu0 0
  %2519 = vmatprep.subr.bf16.mxu0 0
  %2520 = vmatpush1.bf16.msra.mxu0 0
  %2521 = vmatprep.subr.bf16.mxu0 0
  %2522 = vmatpush1.bf16.msra.mxu0 0
  %2523 = vmatprep.subr.bf16.mxu0 0
  %2524 = vmatpush1.bf16.msra.mxu0 0
  %2525 = vmatprep.subr.bf16.mxu0 0
  %2526 = vmatpush1.bf16.msra.mxu0 0
  %2527 = vmatprep.subr.bf16.mxu0 0
  %2528 = vmatpush1.bf16.msra.mxu0 0
  %2529 = vmatprep.subr.bf16.mxu0 0
  %2530 = vmatpush1.bf16.msra.mxu0 0
  %2531 = vmatprep.mubr.bf16.mxu0 0
  %2532 = vmatmul.mubr.bf16.gmra.mrb[0].mxu0 %v2497
  %v2533 = vpop.f32.mrb[0].mxu0
  %v2534 = vadd.f32 %v2488, %v2533
  %v2535 = vpop.f32.mrb[0].mxu0
  %v2536 = vpop.f32.mrb[0].mxu0
  %v2537 = vpop.f32.mrb[0].mxu0
  %2538 = vdwg.mxu0
  %v2539 = vadd.f32 %v2534, %v1427
  %v2540 = vmul.f32 %v2539, 0.5
  %v2541 = vtanh.pop %v2540
  %v2542 = vmul.f32 %v2541, 0.5
  %v2543 = vadd.f32 %v2542, 0.5
  %v2544 = vtanh.pop %v2539
  %v2545 = vmul.f32 %v2543, %v2000
  %2547 = vrot.lane.b32.xlu0 %v2544, 32
  %v2548 = vpop.permute.xlu0 %2547
  %v2550 = vmul.f32 %v2543, %v2548
  %2552 = vrot.lane.b32.xlu0 %v2550, 32
  %v2553 = vpop.permute.xlu0 %2552
  %v2555 = vadd.f32 %v2545, %v2553
  %v2556 = vtanh.pop %v2555
  %2558 = vrot.lane.b32.xlu0 %v2556, 32
  %v2559 = vpop.permute.xlu0 %2558
  %v2561 = vmul.f32 %v2543, %v2559
  %v2562 = vpack.c.bf16 %v2561, %v2561
  %2563 = vmatprep.subr.bf16.mxu0 0
  %2564 = vmatpush1.bf16.msra.mxu0 %v838
  %2565 = vmatprep.subr.bf16.mxu0 0
  %2566 = vmatpush1.bf16.msra.mxu0 %v839
  %2567 = vmatprep.subr.bf16.mxu0 0
  %2568 = vmatpush1.bf16.msra.mxu0 0
  %2569 = vmatprep.subr.bf16.mxu0 0
  %2570 = vmatpush1.bf16.msra.mxu0 0
  %2571 = vmatprep.subr.bf16.mxu0 0
  %2572 = vmatpush1.bf16.msra.mxu0 0
  %2573 = vmatprep.subr.bf16.mxu0 0
  %2574 = vmatpush1.bf16.msra.mxu0 0
  %2575 = vmatprep.subr.bf16.mxu0 0
  %2576 = vmatpush1.bf16.msra.mxu0 0
  %2577 = vmatprep.subr.bf16.mxu0 0
  %2578 = vmatpush1.bf16.msra.mxu0 0
  %2579 = vmatprep.subr.bf16.mxu0 0
  %2580 = vmatpush1.bf16.msra.mxu0 0
  %2581 = vmatprep.subr.bf16.mxu0 0
  %2582 = vmatpush1.bf16.msra.mxu0 0
  %2583 = vmatprep.subr.bf16.mxu0 0
  %2584 = vmatpush1.bf16.msra.mxu0 0
  %2585 = vmatprep.subr.bf16.mxu0 0
  %2586 = vmatpush1.bf16.msra.mxu0 0
  %2587 = vmatprep.subr.bf16.mxu0 0
  %2588 = vmatpush1.bf16.msra.mxu0 0
  %2589 = vmatprep.subr.bf16.mxu0 0
  %2590 = vmatpush1.bf16.msra.mxu0 0
  %2591 = vmatprep.subr.bf16.mxu0 0
  %2592 = vmatpush1.bf16.msra.mxu0 0
  %2593 = vmatprep.subr.bf16.mxu0 0
  %2594 = vmatpush1.bf16.msra.mxu0 0
  %2595 = vmatprep.mubr.bf16.mxu0 0
  %2596 = vmatmul.mubr.bf16.gmra.mrb[0].mxu0 %v2497
  %v2597 = vpop.f32.mrb[0].mxu0
  %v2598 = vadd.f32 0.0, %v2597
  %v2599 = vpop.f32.mrb[0].mxu0
  %v2600 = vpop.f32.mrb[0].mxu0
  %v2601 = vpop.f32.mrb[0].mxu0
  %2602 = vdwg.mxu0
  %2604 = vrot.lane.b32.xlu0 %v2227, 64
  %v2605 = vpop.permute.xlu0 %2604
  %v2607 = vsel %vm58, %v2605, 0
  %2609 = vmatprep.subr.bf16.mxu0 0
  %2610 = vmatpush1.bf16.msra.mxu0 %v893
  %2611 = vmatprep.subr.bf16.mxu0 0
  %2612 = vmatpush1.bf16.msra.mxu0 %v894
  %2613 = vmatprep.subr.bf16.mxu0 0
  %2614 = vmatpush1.bf16.msra.mxu0 0
  %2615 = vmatprep.subr.bf16.mxu0 0
  %2616 = vmatpush1.bf16.msra.mxu0 0
  %2617 = vmatprep.subr.bf16.mxu0 0
  %2618 = vmatpush1.bf16.msra.mxu0 0
  %2619 = vmatprep.subr.bf16.mxu0 0
  %2620 = vmatpush1.bf16.msra.mxu0 0
  %2621 = vmatprep.subr.bf16.mxu0 0
  %2622 = vmatpush1.bf16.msra.mxu0 0
  %2623 = vmatprep.subr.bf16.mxu0 0
  %2624 = vmatpush1.bf16.msra.mxu0 0
  %2625 = vmatprep.subr.bf16.mxu0 0
  %2626 = vmatpush1.bf16.msra.mxu0 0
  %2627 = vmatprep.subr.bf16.mxu0 0
  %2628 = vmatpush1.bf16.msra.mxu0 0
  %2629 = vmatprep.subr.bf16.mxu0 0
  %2630 = vmatpush1.bf16.msra.mxu0 0
  %2631 = vmatprep.subr.bf16.mxu0 0
  %2632 = vmatpush1.bf16.msra.mxu0 0
  %2633 = vmatprep.subr.bf16.mxu0 0
  %2634 = vmatpush1.bf16.msra.mxu0 0
  %2635 = vmatprep.subr.bf16.mxu0 0
  %2636 = vmatpush1.bf16.msra.mxu0 0
  %2637 = vmatprep.subr.bf16.mxu0 0
  %2638 = vmatpush1.bf16.msra.mxu0 0
  %2639 = vmatprep.subr.bf16.mxu0 0
  %2640 = vmatpush1.bf16.msra.mxu0 0
  %2641 = vmatprep.mubr.bf16.mxu0 0
  %2642 = vmatmul.mubr.bf16.gmra.mrb[0].mxu0 %v2607
  %v2643 = vpop.f32.mrb[0].mxu0
  %v2644 = vadd.f32 %v2598, %v2643
  %v2645 = vpop.f32.mrb[0].mxu0
  %v2646 = vpop.f32.mrb[0].mxu0
  %v2647 = vpop.f32.mrb[0].mxu0
  %2648 = vdwg.mxu0
  %v2649 = vadd.f32 %v2644, %v946
  %v2650 = vmul.f32 %v2649, 0.5
  %v2651 = vtanh.pop %v2650
  %v2652 = vmul.f32 %v2651, 0.5
  %v2653 = vadd.f32 %v2652, 0.5
  %v2654 = vtanh.pop %v2649
  %v2655 = vmul.f32 %v2653, %v2110
  %2657 = vrot.lane.b32.xlu0 %v2654, 32
  %v2658 = vpop.permute.xlu0 %2657
  %v2660 = vmul.f32 %v2653, %v2658
  %2662 = vrot.lane.b32.xlu0 %v2660, 32
  %v2663 = vpop.permute.xlu0 %2662
  %v2665 = vadd.f32 %v2655, %v2663
  %v2666 = vtanh.pop %v2665
  %2668 = vrot.lane.b32.xlu0 %v2666, 32
  %v2669 = vpop.permute.xlu0 %2668
  %v2671 = vmul.f32 %v2653, %v2669
  %v2672 = vpack.c.bf16 %v2671, %v2671
  %2673 = vmatprep.subr.bf16.mxu0 0
  %2674 = vmatpush1.bf16.msra.mxu0 %v467
  %2675 = vmatprep.subr.bf16.mxu0 0
  %2676 = vmatpush1.bf16.msra.mxu0 %v468
  %2677 = vmatprep.subr.bf16.mxu0 0
  %2678 = vmatpush1.bf16.msra.mxu0 0
  %2679 = vmatprep.subr.bf16.mxu0 0
  %2680 = vmatpush1.bf16.msra.mxu0 0
  %2681 = vmatprep.subr.bf16.mxu0 0
  %2682 = vmatpush1.bf16.msra.mxu0 0
  %2683 = vmatprep.subr.bf16.mxu0 0
  %2684 = vmatpush1.bf16.msra.mxu0 0
  %2685 = vmatprep.subr.bf16.mxu0 0
  %2686 = vmatpush1.bf16.msra.mxu0 0
  %2687 = vmatprep.subr.bf16.mxu0 0
  %2688 = vmatpush1.bf16.msra.mxu0 0
  %2689 = vmatprep.subr.bf16.mxu0 0
  %2690 = vmatpush1.bf16.msra.mxu0 0
  %2691 = vmatprep.subr.bf16.mxu0 0
  %2692 = vmatpush1.bf16.msra.mxu0 0
  %2693 = vmatprep.subr.bf16.mxu0 0
  %2694 = vmatpush1.bf16.msra.mxu0 0
  %2695 = vmatprep.subr.bf16.mxu0 0
  %2696 = vmatpush1.bf16.msra.mxu0 0
  %2697 = vmatprep.subr.bf16.mxu0 0
  %2698 = vmatpush1.bf16.msra.mxu0 0
  %2699 = vmatprep.subr.bf16.mxu0 0
  %2700 = vmatpush1.bf16.msra.mxu0 0
  %2701 = vmatprep.subr.bf16.mxu0 0
  %2702 = vmatpush1.bf16.msra.mxu0 0
  %2703 = vmatprep.subr.bf16.mxu0 0
  %2704 = vmatpush1.bf16.msra.mxu0 0
  %2705 = vmatprep.mubr.bf16.mxu0 0
  %2706 = vmatmul.mubr.bf16.gmra.mrb[0].mxu0 %v2607
  %v2707 = vpop.f32.mrb[0].mxu0
  %v2708 = vadd.f32 0.0, %v2707
  %v2709 = vpop.f32.mrb[0].mxu0
  %v2710 = vpop.f32.mrb[0].mxu0
  %v2711 = vpop.f32.mrb[0].mxu0
  %2712 = vdwg.mxu0
  %2714 = vrot.lane.b32.xlu0 %v2337, 64
  %v2715 = vpop.permute.xlu0 %2714
  %v2717 = vsel %vm58, %v2715, 0
  %2719 = vmatprep.subr.bf16.mxu0 0
  %2720 = vmatpush1.bf16.msra.mxu0 %v522
  %2721 = vmatprep.subr.bf16.mxu0 0
  %2722 = vmatpush1.bf16.msra.mxu0 %v523
  %2723 = vmatprep.subr.bf16.mxu0 0
  %2724 = vmatpush1.bf16.msra.mxu0 0
  %2725 = vmatprep.subr.bf16.mxu0 0
  %2726 = vmatpush1.bf16.msra.mxu0 0
  %2727 = vmatprep.subr.bf16.mxu0 0
  %2728 = vmatpush1.bf16.msra.mxu0 0
  %2729 = vmatprep.subr.bf16.mxu0 0
  %2730 = vmatpush1.bf16.msra.mxu0 0
  %2731 = vmatprep.subr.bf16.mxu0 0
  %2732 = vmatpush1.bf16.msra.mxu0 0
  %2733 = vmatprep.subr.bf16.mxu0 0
  %2734 = vmatpush1.bf16.msra.mxu0 0
  %2735 = vmatprep.subr.bf16.mxu0 0
  %2736 = vmatpush1.bf16.msra.mxu0 0
  %2737 = vmatprep.subr.bf16.mxu0 0
  %2738 = vmatpush1.bf16.msra.mxu0 0
  %2739 = vmatprep.subr.bf16.mxu0 0
  %2740 = vmatpush1.bf16.msra.mxu0 0
  %2741 = vmatprep.subr.bf16.mxu0 0
  %2742 = vmatpush1.bf16.msra.mxu0 0
  %2743 = vmatprep.subr.bf16.mxu0 0
  %2744 = vmatpush1.bf16.msra.mxu0 0
  %2745 = vmatprep.subr.bf16.mxu0 0
  %2746 = vmatpush1.bf16.msra.mxu0 0
  %2747 = vmatprep.subr.bf16.mxu0 0
  %2748 = vmatpush1.bf16.msra.mxu0 0
  %2749 = vmatprep.subr.bf16.mxu0 0
  %2750 = vmatpush1.bf16.msra.mxu0 0
  %2751 = vmatprep.mubr.bf16.mxu0 0
  %2752 = vmatmul.mubr.bf16.gmra.mrb[0].mxu0 %v2717
  %v2753 = vpop.f32.mrb[0].mxu0
  %v2754 = vadd.f32 %v2708, %v2753
  %v2755 = vpop.f32.mrb[0].mxu0
  %v2756 = vpop.f32.mrb[0].mxu0
  %v2757 = vpop.f32.mrb[0].mxu0
  %2758 = vdwg.mxu0
  %v2759 = vadd.f32 %v2754, %v575
  %v2760 = vmul.f32 %v2759, 0.5
  %v2761 = vtanh.pop %v2760
  %v2762 = vmul.f32 %v2761, 0.5
  %v2763 = vadd.f32 %v2762, 0.5
  %v2764 = vtanh.pop %v2759
  %v2765 = vmul.f32 %v2763, %v2220
  %2767 = vrot.lane.b32.xlu0 %v2764, 32
  %v2768 = vpop.permute.xlu0 %2767
  %v2770 = vmul.f32 %v2763, %v2768
  %2772 = vrot.lane.b32.xlu0 %v2770, 32
  %v2773 = vpop.permute.xlu0 %2772
  %v2775 = vadd.f32 %v2765, %v2773
  %v2776 = vtanh.pop %v2775
  %2778 = vrot.lane.b32.xlu0 %v2776, 32
  %v2779 = vpop.permute.xlu0 %2778
  %v2781 = vmul.f32 %v2763, %v2779
  %v2782 = vpack.c.bf16 %v2781, %v2781
  %2783 = vmatprep.subr.bf16.mxu0 0
  %2784 = vmatpush1.bf16.msra.mxu0 %v206
  %2785 = vmatprep.subr.bf16.mxu0 0
  %2786 = vmatpush1.bf16.msra.mxu0 %v207
  %2787 = vmatprep.subr.bf16.mxu0 0
  %2788 = vmatpush1.bf16.msra.mxu0 0
  %2789 = vmatprep.subr.bf16.mxu0 0
  %2790 = vmatpush1.bf16.msra.mxu0 0
  %2791 = vmatprep.subr.bf16.mxu0 0
  %2792 = vmatpush1.bf16.msra.mxu0 0
  %2793 = vmatprep.subr.bf16.mxu0 0
  %2794 = vmatpush1.bf16.msra.mxu0 0
  %2795 = vmatprep.subr.bf16.mxu0 0
  %2796 = vmatpush1.bf16.msra.mxu0 0
  %2797 = vmatprep.subr.bf16.mxu0 0
  %2798 = vmatpush1.bf16.msra.mxu0 0
  %2799 = vmatprep.subr.bf16.mxu0 0
  %2800 = vmatpush1.bf16.msra.mxu0 0
  %2801 = vmatprep.subr.bf16.mxu0 0
  %2802 = vmatpush1.bf16.msra.mxu0 0
  %2803 = vmatprep.subr.bf16.mxu0 0
  %2804 = vmatpush1.bf16.msra.mxu0 0
  %2805 = vmatprep.subr.bf16.mxu0 0
  %2806 = vmatpush1.bf16.msra.mxu0 0
  %2807 = vmatprep.subr.bf16.mxu0 0
  %2808 = vmatpush1.bf16.msra.mxu0 0
  %2809 = vmatprep.subr.bf16.mxu0 0
  %2810 = vmatpush1.bf16.msra.mxu0 0
  %2811 = vmatprep.subr.bf16.mxu0 0
  %2812 = vmatpush1.bf16.msra.mxu0 0
  %2813 = vmatprep.subr.bf16.mxu0 0
  %2814 = vmatpush1.bf16.msra.mxu0 0
  %2815 = vmatprep.mubr.bf16.mxu0 0
  %2816 = vmatmul.mubr.bf16.gmra.mrb[0].mxu0 %v2717
  %v2817 = vpop.f32.mrb[0].mxu0
  %v2818 = vadd.f32 0.0, %v2817
  %v2819 = vpop.f32.mrb[0].mxu0
  %v2820 = vpop.f32.mrb[0].mxu0
  %v2821 = vpop.f32.mrb[0].mxu0
  %2822 = vdwg.mxu0
  %2824 = vrot.lane.b32.xlu0 %v2446, 64
  %v2825 = vpop.permute.xlu0 %2824
  %v2827 = vsel %vm58, %v2825, 0
  %2829 = vmatprep.subr.bf16.mxu0 0
  %2830 = vmatpush1.bf16.msra.mxu0 %v261
  %2831 = vmatprep.subr.bf16.mxu0 0
  %2832 = vmatpush1.bf16.msra.mxu0 %v262
  %2833 = vmatprep.subr.bf16.mxu0 0
  %2834 = vmatpush1.bf16.msra.mxu0 0
  %2835 = vmatprep.subr.bf16.mxu0 0
  %2836 = vmatpush1.bf16.msra.mxu0 0
  %2837 = vmatprep.subr.bf16.mxu0 0
  %2838 = vmatpush1.bf16.msra.mxu0 0
  %2839 = vmatprep.subr.bf16.mxu0 0
  %2840 = vmatpush1.bf16.msra.mxu0 0
  %2841 = vmatprep.subr.bf16.mxu0 0
  %2842 = vmatpush1.bf16.msra.mxu0 0
  %2843 = vmatprep.subr.bf16.mxu0 0
  %2844 = vmatpush1.bf16.msra.mxu0 0
  %2845 = vmatprep.subr.bf16.mxu0 0
  %2846 = vmatpush1.bf16.msra.mxu0 0
  %2847 = vmatprep.subr.bf16.mxu0 0
  %2848 = vmatpush1.bf16.msra.mxu0 0
  %2849 = vmatprep.subr.bf16.mxu0 0
  %2850 = vmatpush1.bf16.msra.mxu0 0
  %2851 = vmatprep.subr.bf16.mxu0 0
  %2852 = vmatpush1.bf16.msra.mxu0 0
  %2853 = vmatprep.subr.bf16.mxu0 0
  %2854 = vmatpush1.bf16.msra.mxu0 0
  %2855 = vmatprep.subr.bf16.mxu0 0
  %2856 = vmatpush1.bf16.msra.mxu0 0
  %2857 = vmatprep.subr.bf16.mxu0 0
  %2858 = vmatpush1.bf16.msra.mxu0 0
  %2859 = vmatprep.subr.bf16.mxu0 0
  %2860 = vmatpush1.bf16.msra.mxu0 0
  %2861 = vmatprep.mubr.bf16.mxu0 0
  %2862 = vmatmul.mubr.bf16.gmra.mrb[0].mxu0 %v2827
  %v2863 = vpop.f32.mrb[0].mxu0
  %v2864 = vadd.f32 %v2818, %v2863
  %v2865 = vpop.f32.mrb[0].mxu0
  %v2866 = vpop.f32.mrb[0].mxu0
  %v2867 = vpop.f32.mrb[0].mxu0
  %2868 = vdwg.mxu0
  %v2869 = vadd.f32 %v2864, %v314
  %v2870 = vmul.f32 %v2869, 0.5
  %v2871 = vtanh.pop %v2870
  %v2872 = vmul.f32 %v2871, 0.5
  %v2873 = vadd.f32 %v2872, 0.5
  %v2874 = vtanh.pop %v2869
  %v2875 = vmul.f32 %v2873, %v2330
  %2877 = vrot.lane.b32.xlu0 %v2874, 32
  %v2878 = vpop.permute.xlu0 %2877
  %v2880 = vmul.f32 %v2873, %v2878
  %2882 = vrot.lane.b32.xlu0 %v2880, 32
  %v2883 = vpop.permute.xlu0 %2882
  %v2885 = vadd.f32 %v2875, %v2883
  %v2886 = vtanh.pop %v2885
  %2888 = vrot.lane.b32.xlu0 %v2886, 32
  %v2889 = vpop.permute.xlu0 %2888
  %v2891 = vmul.f32 %v2873, %v2889
  %v2892 = vpack.c.bf16 %v2891, %v2891
  %v2893 = vld [vmem:[%s0 + $0x30] sm:$0xff]
  %v2894 = vpack.c.bf16 %v2893, %v2893
  %2895 = vmatprep.subr.bf16.mxu0 0
  %2896 = vmatpush1.bf16.msra.mxu0 %v54
  %2897 = vmatprep.subr.bf16.mxu0 0
  %2898 = vmatpush1.bf16.msra.mxu0 %v55
  %2899 = vmatprep.subr.bf16.mxu0 0
  %2900 = vmatpush1.bf16.msra.mxu0 0
  %2901 = vmatprep.subr.bf16.mxu0 0
  %2902 = vmatpush1.bf16.msra.mxu0 0
  %2903 = vmatprep.subr.bf16.mxu0 0
  %2904 = vmatpush1.bf16.msra.mxu0 0
  %2905 = vmatprep.subr.bf16.mxu0 0
  %2906 = vmatpush1.bf16.msra.mxu0 0
  %2907 = vmatprep.subr.bf16.mxu0 0
  %2908 = vmatpush1.bf16.msra.mxu0 0
  %2909 = vmatprep.subr.bf16.mxu0 0
  %2910 = vmatpush1.bf16.msra.mxu0 0
  %2911 = vmatprep.subr.bf16.mxu0 0
  %2912 = vmatpush1.bf16.msra.mxu0 0
  %2913 = vmatprep.subr.bf16.mxu0 0
  %2914 = vmatpush1.bf16.msra.mxu0 0
  %2915 = vmatprep.subr.bf16.mxu0 0
  %2916 = vmatpush1.bf16.msra.mxu0 0
  %2917 = vmatprep.subr.bf16.mxu0 0
  %2918 = vmatpush1.bf16.msra.mxu0 0
  %2919 = vmatprep.subr.bf16.mxu0 0
  %2920 = vmatpush1.bf16.msra.mxu0 0
  %2921 = vmatprep.subr.bf16.mxu0 0
  %2922 = vmatpush1.bf16.msra.mxu0 0
  %2923 = vmatprep.subr.bf16.mxu0 0
  %2924 = vmatpush1.bf16.msra.mxu0 0
  %2925 = vmatprep.subr.bf16.mxu0 0
  %2926 = vmatpush1.bf16.msra.mxu0 0
  %2927 = vmatprep.mubr.bf16.mxu0 0
  %2928 = vmatmul.mubr.bf16.gmra.mrb[0].mxu0 %v2827
  %v2929 = vpop.f32.mrb[0].mxu0
  %v2930 = vadd.f32 0.0, %v2929
  %v2931 = vpop.f32.mrb[0].mxu0
  %v2932 = vpop.f32.mrb[0].mxu0
  %v2933 = vpop.f32.mrb[0].mxu0
  %2934 = vdwg.mxu0
  %v2936 = vsel %vm58, %v2894, 0
  %2938 = vmatprep.subr.bf16.mxu0 0
  %2939 = vmatpush1.bf16.msra.mxu0 %v110
  %2940 = vmatprep.subr.bf16.mxu0 0
  %2941 = vmatpush1.bf16.msra.mxu0 %v111
  %2942 = vmatprep.subr.bf16.mxu0 0
  %2943 = vmatpush1.bf16.msra.mxu0 0
  %2944 = vmatprep.subr.bf16.mxu0 0
  %2945 = vmatpush1.bf16.msra.mxu0 0
  %2946 = vmatprep.subr.bf16.mxu0 0
  %2947 = vmatpush1.bf16.msra.mxu0 0
  %2948 = vmatprep.subr.bf16.mxu0 0
  %2949 = vmatpush1.bf16.msra.mxu0 0
  %2950 = vmatprep.subr.bf16.mxu0 0
  %2951 = vmatpush1.bf16.msra.mxu0 0
  %2952 = vmatprep.subr.bf16.mxu0 0
  %2953 = vmatpush1.bf16.msra.mxu0 0
  %2954 = vmatprep.subr.bf16.mxu0 0
  %2955 = vmatpush1.bf16.msra.mxu0 0
  %2956 = vmatprep.subr.bf16.mxu0 0
  %2957 = vmatpush1.bf16.msra.mxu0 0
  %2958 = vmatprep.subr.bf16.mxu0 0
  %2959 = vmatpush1.bf16.msra.mxu0 0
  %2960 = vmatprep.subr.bf16.mxu0 0
  %2961 = vmatpush1.bf16.msra.mxu0 0
  %2962 = vmatprep.subr.bf16.mxu0 0
  %2963 = vmatpush1.bf16.msra.mxu0 0
  %2964 = vmatprep.subr.bf16.mxu0 0
  %2965 = vmatpush1.bf16.msra.mxu0 0
  %2966 = vmatprep.subr.bf16.mxu0 0
  %2967 = vmatpush1.bf16.msra.mxu0 0
  %2968 = vmatprep.subr.bf16.mxu0 0
  %2969 = vmatpush1.bf16.msra.mxu0 0
  %2970 = vmatprep.mubr.bf16.mxu0 0
  %2971 = vmatmul.mubr.bf16.gmra.mrb[0].mxu0 %v2936
  %v2972 = vpop.f32.mrb[0].mxu0
  %v2973 = vadd.f32 %v2930, %v2972
  %v2974 = vpop.f32.mrb[0].mxu0
  %v2975 = vpop.f32.mrb[0].mxu0
  %v2976 = vpop.f32.mrb[0].mxu0
  %2977 = vdwg.mxu0
  %v2978 = vadd.f32 %v2973, %v162
  %v2979 = vmul.f32 %v2978, 0.5
  %v2980 = vtanh.pop %v2979
  %v2981 = vmul.f32 %v2980, 0.5
  %v2982 = vadd.f32 %v2981, 0.5
  %v2983 = vtanh.pop %v2978
  %v2984 = vmul.f32 %v2982, %v2439
  %2986 = vrot.lane.b32.xlu0 %v2983, 32
  %v2987 = vpop.permute.xlu0 %2986
  %v2989 = vmul.f32 %v2982, %v2987
  %2991 = vrot.lane.b32.xlu0 %v2989, 32
  %v2992 = vpop.permute.xlu0 %2991
  %v2994 = vadd.f32 %v2984, %v2992
  %v2995 = vtanh.pop %v2994
  %2997 = vrot.lane.b32.xlu0 %v2995, 32
  %v2998 = vpop.permute.xlu0 %2997
  %v3000 = vmul.f32 %v2982, %v2998
  %v3001 = vpack.c.bf16 %v3000, %v3000
  %3003 = vrot.lane.b32.xlu0 %v2562, 64
  %v3004 = vpop.permute.xlu0 %3003
  %v3006 = vsel %vm58, %v3004, 0
  %3008 = vmatprep.subr.bf16.mxu0 0
  %3009 = vmatpush1.bf16.msra.mxu0 %v1319
  %3010 = vmatprep.subr.bf16.mxu0 0
  %3011 = vmatpush1.bf16.msra.mxu0 %v1320
  %3012 = vmatprep.subr.bf16.mxu0 0
  %3013 = vmatpush1.bf16.msra.mxu0 0
  %3014 = vmatprep.subr.bf16.mxu0 0
  %3015 = vmatpush1.bf16.msra.mxu0 0
  %3016 = vmatprep.subr.bf16.mxu0 0
  %3017 = vmatpush1.bf16.msra.mxu0 0
  %3018 = vmatprep.subr.bf16.mxu0 0
  %3019 = vmatpush1.bf16.msra.mxu0 0
  %3020 = vmatprep.subr.bf16.mxu0 0
  %3021 = vmatpush1.bf16.msra.mxu0 0
  %3022 = vmatprep.subr.bf16.mxu0 0
  %3023 = vmatpush1.bf16.msra.mxu0 0
  %3024 = vmatprep.subr.bf16.mxu0 0
  %3025 = vmatpush1.bf16.msra.mxu0 0
  %3026 = vmatprep.subr.bf16.mxu0 0
  %3027 = vmatpush1.bf16.msra.mxu0 0
  %3028 = vmatprep.subr.bf16.mxu0 0
  %3029 = vmatpush1.bf16.msra.mxu0 0
  %3030 = vmatprep.subr.bf16.mxu0 0
  %3031 = vmatpush1.bf16.msra.mxu0 0
  %3032 = vmatprep.subr.bf16.mxu0 0
  %3033 = vmatpush1.bf16.msra.mxu0 0
  %3034 = vmatprep.subr.bf16.mxu0 0
  %3035 = vmatpush1.bf16.msra.mxu0 0
  %3036 = vmatprep.subr.bf16.mxu0 0
  %3037 = vmatpush1.bf16.msra.mxu0 0
  %3038 = vmatprep.subr.bf16.mxu0 0
  %3039 = vmatpush1.bf16.msra.mxu0 0
  %3040 = vmatprep.mubr.bf16.mxu0 0
  %3041 = vmatmul.mubr.bf16.gmra.mrb[0].mxu0 %v3006
  %v3042 = vpop.f32.mrb[0].mxu0
  %v3043 = vadd.f32 0.0, %v3042
  %v3044 = vpop.f32.mrb[0].mxu0
  %v3045 = vpop.f32.mrb[0].mxu0
  %v3046 = vpop.f32.mrb[0].mxu0
  %3047 = vdwg.mxu0
  %3049 = vrot.lane.b32.xlu0 %v2672, 64
  %v3050 = vpop.permute.xlu0 %3049
  %v3052 = vsel %vm58, %v3050, 0
  %3054 = vmatprep.subr.bf16.mxu0 0
  %3055 = vmatpush1.bf16.msra.mxu0 %v1374
  %3056 = vmatprep.subr.bf16.mxu0 0
  %3057 = vmatpush1.bf16.msra.mxu0 %v1375
  %3058 = vmatprep.subr.bf16.mxu0 0
  %3059 = vmatpush1.bf16.msra.mxu0 0
  %3060 = vmatprep.subr.bf16.mxu0 0
  %3061 = vmatpush1.bf16.msra.mxu0 0
  %3062 = vmatprep.subr.bf16.mxu0 0
  %3063 = vmatpush1.bf16.msra.mxu0 0
  %3064 = vmatprep.subr.bf16.mxu0 0
  %3065 = vmatpush1.bf16.msra.mxu0 0
  %3066 = vmatprep.subr.bf16.mxu0 0
  %3067 = vmatpush1.bf16.msra.mxu0 0
  %3068 = vmatprep.subr.bf16.mxu0 0
  %3069 = vmatpush1.bf16.msra.mxu0 0
  %3070 = vmatprep.subr.bf16.mxu0 0
  %3071 = vmatpush1.bf16.msra.mxu0 0
  %3072 = vmatprep.subr.bf16.mxu0 0
  %3073 = vmatpush1.bf16.msra.mxu0 0
  %3074 = vmatprep.subr.bf16.mxu0 0
  %3075 = vmatpush1.bf16.msra.mxu0 0
  %3076 = vmatprep.subr.bf16.mxu0 0
  %3077 = vmatpush1.bf16.msra.mxu0 0
  %3078 = vmatprep.subr.bf16.mxu0 0
  %3079 = vmatpush1.bf16.msra.mxu0 0
  %3080 = vmatprep.subr.bf16.mxu0 0
  %3081 = vmatpush1.bf16.msra.mxu0 0
  %3082 = vmatprep.subr.bf16.mxu0 0
  %3083 = vmatpush1.bf16.msra.mxu0 0
  %3084 = vmatprep.subr.bf16.mxu0 0
  %3085 = vmatpush1.bf16.msra.mxu0 0
  %3086 = vmatprep.mubr.bf16.mxu0 0
  %3087 = vmatmul.mubr.bf16.gmra.mrb[0].mxu0 %v3052
  %v3088 = vpop.f32.mrb[0].mxu0
  %v3089 = vadd.f32 %v3043, %v3088
  %v3090 = vpop.f32.mrb[0].mxu0
  %v3091 = vpop.f32.mrb[0].mxu0
  %v3092 = vpop.f32.mrb[0].mxu0
  %3093 = vdwg.mxu0
  %v3094 = vadd.f32 %v3089, %v1427
  %v3095 = vmul.f32 %v3094, 0.5
  %v3096 = vtanh.pop %v3095
  %v3097 = vmul.f32 %v3096, 0.5
  %v3098 = vadd.f32 %v3097, 0.5
  %v3099 = vtanh.pop %v3094
  %v3100 = vmul.f32 %v3098, %v2555
  %3102 = vrot.lane.b32.xlu0 %v3099, 32
  %v3103 = vpop.permute.xlu0 %3102
  %v3105 = vmul.f32 %v3098, %v3103
  %3107 = vrot.lane.b32.xlu0 %v3105, 32
  %v3108 = vpop.permute.xlu0 %3107
  %v3110 = vadd.f32 %v3100, %v3108
  %v3111 = vtanh.pop %v3110
  %3113 = vrot.lane.b32.xlu0 %v3111, 32
  %v3114 = vpop.permute.xlu0 %3113
  %v3116 = vmul.f32 %v3098, %v3114
  %v3117 = vpack.c.bf16 %v3116, %v3116
  %3118 = vmatprep.subr.bf16.mxu0 0
  %3119 = vmatpush1.bf16.msra.mxu0 %v838
  %3120 = vmatprep.subr.bf16.mxu0 0
  %3121 = vmatpush1.bf16.msra.mxu0 %v839
  %3122 = vmatprep.subr.bf16.mxu0 0
  %3123 = vmatpush1.bf16.msra.mxu0 0
  %3124 = vmatprep.subr.bf16.mxu0 0
  %3125 = vmatpush1.bf16.msra.mxu0 0
  %3126 = vmatprep.subr.bf16.mxu0 0
  %3127 = vmatpush1.bf16.msra.mxu0 0
  %3128 = vmatprep.subr.bf16.mxu0 0
  %3129 = vmatpush1.bf16.msra.mxu0 0
  %3130 = vmatprep.subr.bf16.mxu0 0
  %3131 = vmatpush1.bf16.msra.mxu0 0
  %3132 = vmatprep.subr.bf16.mxu0 0
  %3133 = vmatpush1.bf16.msra.mxu0 0
  %3134 = vmatprep.subr.bf16.mxu0 0
  %3135 = vmatpush1.bf16.msra.mxu0 0
  %3136 = vmatprep.subr.bf16.mxu0 0
  %3137 = vmatpush1.bf16.msra.mxu0 0
  %3138 = vmatprep.subr.bf16.mxu0 0
  %3139 = vmatpush1.bf16.msra.mxu0 0
  %3140 = vmatprep.subr.bf16.mxu0 0
  %3141 = vmatpush1.bf16.msra.mxu0 0
  %3142 = vmatprep.subr.bf16.mxu0 0
  %3143 = vmatpush1.bf16.msra.mxu0 0
  %3144 = vmatprep.subr.bf16.mxu0 0
  %3145 = vmatpush1.bf16.msra.mxu0 0
  %3146 = vmatprep.subr.bf16.mxu0 0
  %3147 = vmatpush1.bf16.msra.mxu0 0
  %3148 = vmatprep.subr.bf16.mxu0 0
  %3149 = vmatpush1.bf16.msra.mxu0 0
  %3150 = vmatprep.mubr.bf16.mxu0 0
  %3151 = vmatmul.mubr.bf16.gmra.mrb[0].mxu0 %v3052
  %v3152 = vpop.f32.mrb[0].mxu0
  %v3153 = vadd.f32 0.0, %v3152
  %v3154 = vpop.f32.mrb[0].mxu0
  %v3155 = vpop.f32.mrb[0].mxu0
  %v3156 = vpop.f32.mrb[0].mxu0
  %3157 = vdwg.mxu0
  %3159 = vrot.lane.b32.xlu0 %v2782, 64
  %v3160 = vpop.permute.xlu0 %3159
  %v3162 = vsel %vm58, %v3160, 0
  %3164 = vmatprep.subr.bf16.mxu0 0
  %3165 = vmatpush1.bf16.msra.mxu0 %v893
  %3166 = vmatprep.subr.bf16.mxu0 0
  %3167 = vmatpush1.bf16.msra.mxu0 %v894
  %3168 = vmatprep.subr.bf16.mxu0 0
  %3169 = vmatpush1.bf16.msra.mxu0 0
  %3170 = vmatprep.subr.bf16.mxu0 0
  %3171 = vmatpush1.bf16.msra.mxu0 0
  %3172 = vmatprep.subr.bf16.mxu0 0
  %3173 = vmatpush1.bf16.msra.mxu0 0
  %3174 = vmatprep.subr.bf16.mxu0 0
  %3175 = vmatpush1.bf16.msra.mxu0 0
  %3176 = vmatprep.subr.bf16.mxu0 0
  %3177 = vmatpush1.bf16.msra.mxu0 0
  %3178 = vmatprep.subr.bf16.mxu0 0
  %3179 = vmatpush1.bf16.msra.mxu0 0
  %3180 = vmatprep.subr.bf16.mxu0 0
  %3181 = vmatpush1.bf16.msra.mxu0 0
  %3182 = vmatprep.subr.bf16.mxu0 0
  %3183 = vmatpush1.bf16.msra.mxu0 0
  %3184 = vmatprep.subr.bf16.mxu0 0
  %3185 = vmatpush1.bf16.msra.mxu0 0
  %3186 = vmatprep.subr.bf16.mxu0 0
  %3187 = vmatpush1.bf16.msra.mxu0 0
  %3188 = vmatprep.subr.bf16.mxu0 0
  %3189 = vmatpush1.bf16.msra.mxu0 0
  %3190 = vmatprep.subr.bf16.mxu0 0
  %3191 = vmatpush1.bf16.msra.mxu0 0
  %3192 = vmatprep.subr.bf16.mxu0 0
  %3193 = vmatpush1.bf16.msra.mxu0 0
  %3194 = vmatprep.subr.bf16.mxu0 0
  %3195 = vmatpush1.bf16.msra.mxu0 0
  %3196 = vmatprep.mubr.bf16.mxu0 0
  %3197 = vmatmul.mubr.bf16.gmra.mrb[0].mxu0 %v3162
  %v3198 = vpop.f32.mrb[0].mxu0
  %v3199 = vadd.f32 %v3153, %v3198
  %v3200 = vpop.f32.mrb[0].mxu0
  %v3201 = vpop.f32.mrb[0].mxu0
  %v3202 = vpop.f32.mrb[0].mxu0
  %3203 = vdwg.mxu0
  %v3204 = vadd.f32 %v3199, %v946
  %v3205 = vmul.f32 %v3204, 0.5
  %v3206 = vtanh.pop %v3205
  %v3207 = vmul.f32 %v3206, 0.5
  %v3208 = vadd.f32 %v3207, 0.5
  %v3209 = vtanh.pop %v3204
  %v3210 = vmul.f32 %v3208, %v2665
  %3212 = vrot.lane.b32.xlu0 %v3209, 32
  %v3213 = vpop.permute.xlu0 %3212
  %v3215 = vmul.f32 %v3208, %v3213
  %3217 = vrot.lane.b32.xlu0 %v3215, 32
  %v3218 = vpop.permute.xlu0 %3217
  %v3220 = vadd.f32 %v3210, %v3218
  %v3221 = vtanh.pop %v3220
  %3223 = vrot.lane.b32.xlu0 %v3221, 32
  %v3224 = vpop.permute.xlu0 %3223
  %v3226 = vmul.f32 %v3208, %v3224
  %v3227 = vpack.c.bf16 %v3226, %v3226
  %3228 = vmatprep.subr.bf16.mxu0 0
  %3229 = vmatpush1.bf16.msra.mxu0 %v467
  %3230 = vmatprep.subr.bf16.mxu0 0
  %3231 = vmatpush1.bf16.msra.mxu0 %v468
  %3232 = vmatprep.subr.bf16.mxu0 0
  %3233 = vmatpush1.bf16.msra.mxu0 0
  %3234 = vmatprep.subr.bf16.mxu0 0
  %3235 = vmatpush1.bf16.msra.mxu0 0
  %3236 = vmatprep.subr.bf16.mxu0 0
  %3237 = vmatpush1.bf16.msra.mxu0 0
  %3238 = vmatprep.subr.bf16.mxu0 0
  %3239 = vmatpush1.bf16.msra.mxu0 0
  %3240 = vmatprep.subr.bf16.mxu0 0
  %3241 = vmatpush1.bf16.msra.mxu0 0
  %3242 = vmatprep.subr.bf16.mxu0 0
  %3243 = vmatpush1.bf16.msra.mxu0 0
  %3244 = vmatprep.subr.bf16.mxu0 0
  %3245 = vmatpush1.bf16.msra.mxu0 0
  %3246 = vmatprep.subr.bf16.mxu0 0
  %3247 = vmatpush1.bf16.msra.mxu0 0
  %3248 = vmatprep.subr.bf16.mxu0 0
  %3249 = vmatpush1.bf16.msra.mxu0 0
  %3250 = vmatprep.subr.bf16.mxu0 0
  %3251 = vmatpush1.bf16.msra.mxu0 0
  %3252 = vmatprep.subr.bf16.mxu0 0
  %3253 = vmatpush1.bf16.msra.mxu0 0
  %3254 = vmatprep.subr.bf16.mxu0 0
  %3255 = vmatpush1.bf16.msra.mxu0 0
  %3256 = vmatprep.subr.bf16.mxu0 0
  %3257 = vmatpush1.bf16.msra.mxu0 0
  %3258 = vmatprep.subr.bf16.mxu0 0
  %3259 = vmatpush1.bf16.msra.mxu0 0
  %3260 = vmatprep.mubr.bf16.mxu0 0
  %3261 = vmatmul.mubr.bf16.gmra.mrb[0].mxu0 %v3162
  %v3262 = vpop.f32.mrb[0].mxu0
  %v3263 = vadd.f32 0.0, %v3262
  %v3264 = vpop.f32.mrb[0].mxu0
  %v3265 = vpop.f32.mrb[0].mxu0
  %v3266 = vpop.f32.mrb[0].mxu0
  %3267 = vdwg.mxu0
  %3269 = vrot.lane.b32.xlu0 %v2892, 64
  %v3270 = vpop.permute.xlu0 %3269
  %v3272 = vsel %vm58, %v3270, 0
  %3274 = vmatprep.subr.bf16.mxu0 0
  %3275 = vmatpush1.bf16.msra.mxu0 %v522
  %3276 = vmatprep.subr.bf16.mxu0 0
  %3277 = vmatpush1.bf16.msra.mxu0 %v523
  %3278 = vmatprep.subr.bf16.mxu0 0
  %3279 = vmatpush1.bf16.msra.mxu0 0
  %3280 = vmatprep.subr.bf16.mxu0 0
  %3281 = vmatpush1.bf16.msra.mxu0 0
  %3282 = vmatprep.subr.bf16.mxu0 0
  %3283 = vmatpush1.bf16.msra.mxu0 0
  %3284 = vmatprep.subr.bf16.mxu0 0
  %3285 = vmatpush1.bf16.msra.mxu0 0
  %3286 = vmatprep.subr.bf16.mxu0 0
  %3287 = vmatpush1.bf16.msra.mxu0 0
  %3288 = vmatprep.subr.bf16.mxu0 0
  %3289 = vmatpush1.bf16.msra.mxu0 0
  %3290 = vmatprep.subr.bf16.mxu0 0
  %3291 = vmatpush1.bf16.msra.mxu0 0
  %3292 = vmatprep.subr.bf16.mxu0 0
  %3293 = vmatpush1.bf16.msra.mxu0 0
  %3294 = vmatprep.subr.bf16.mxu0 0
  %3295 = vmatpush1.bf16.msra.mxu0 0
  %3296 = vmatprep.subr.bf16.mxu0 0
  %3297 = vmatpush1.bf16.msra.mxu0 0
  %3298 = vmatprep.subr.bf16.mxu0 0
  %3299 = vmatpush1.bf16.msra.mxu0 0
  %3300 = vmatprep.subr.bf16.mxu0 0
  %3301 = vmatpush1.bf16.msra.mxu0 0
  %3302 = vmatprep.subr.bf16.mxu0 0
  %3303 = vmatpush1.bf16.msra.mxu0 0
  %3304 = vmatprep.subr.bf16.mxu0 0
  %3305 = vmatpush1.bf16.msra.mxu0 0
  %3306 = vmatprep.mubr.bf16.mxu0 0
  %3307 = vmatmul.mubr.bf16.gmra.mrb[0].mxu0 %v3272
  %v3308 = vpop.f32.mrb[0].mxu0
  %v3309 = vadd.f32 %v3263, %v3308
  %v3310 = vpop.f32.mrb[0].mxu0
  %v3311 = vpop.f32.mrb[0].mxu0
  %v3312 = vpop.f32.mrb[0].mxu0
  %3313 = vdwg.mxu0
  %v3314 = vadd.f32 %v3309, %v575
  %v3315 = vmul.f32 %v3314, 0.5
  %v3316 = vtanh.pop %v3315
  %v3317 = vmul.f32 %v3316, 0.5
  %v3318 = vadd.f32 %v3317, 0.5
  %v3319 = vtanh.pop %v3314
  %v3320 = vmul.f32 %v3318, %v2775
  %3322 = vrot.lane.b32.xlu0 %v3319, 32
  %v3323 = vpop.permute.xlu0 %3322
  %v3325 = vmul.f32 %v3318, %v3323
  %3327 = vrot.lane.b32.xlu0 %v3325, 32
  %v3328 = vpop.permute.xlu0 %3327
  %v3330 = vadd.f32 %v3320, %v3328
  %v3331 = vtanh.pop %v3330
  %3333 = vrot.lane.b32.xlu0 %v3331, 32
  %v3334 = vpop.permute.xlu0 %3333
  %v3336 = vmul.f32 %v3318, %v3334
  %v3337 = vpack.c.bf16 %v3336, %v3336
  %3338 = vmatprep.subr.bf16.mxu0 0
  %3339 = vmatpush1.bf16.msra.mxu0 %v206
  %3340 = vmatprep.subr.bf16.mxu0 0
  %3341 = vmatpush1.bf16.msra.mxu0 %v207
  %3342 = vmatprep.subr.bf16.mxu0 0
  %3343 = vmatpush1.bf16.msra.mxu0 0
  %3344 = vmatprep.subr.bf16.mxu0 0
  %3345 = vmatpush1.bf16.msra.mxu0 0
  %3346 = vmatprep.subr.bf16.mxu0 0
  %3347 = vmatpush1.bf16.msra.mxu0 0
  %3348 = vmatprep.subr.bf16.mxu0 0
  %3349 = vmatpush1.bf16.msra.mxu0 0
  %3350 = vmatprep.subr.bf16.mxu0 0
  %3351 = vmatpush1.bf16.msra.mxu0 0
  %3352 = vmatprep.subr.bf16.mxu0 0
  %3353 = vmatpush1.bf16.msra.mxu0 0
  %3354 = vmatprep.subr.bf16.mxu0 0
  %3355 = vmatpush1.bf16.msra.mxu0 0
  %3356 = vmatprep.subr.bf16.mxu0 0
  %3357 = vmatpush1.bf16.msra.mxu0 0
  %3358 = vmatprep.subr.bf16.mxu0 0
  %3359 = vmatpush1.bf16.msra.mxu0 0
  %3360 = vmatprep.subr.bf16.mxu0 0
  %3361 = vmatpush1.bf16.msra.mxu0 0
  %3362 = vmatprep.subr.bf16.mxu0 0
  %3363 = vmatpush1.bf16.msra.mxu0 0
  %3364 = vmatprep.subr.bf16.mxu0 0
  %3365 = vmatpush1.bf16.msra.mxu0 0
  %3366 = vmatprep.subr.bf16.mxu0 0
  %3367 = vmatpush1.bf16.msra.mxu0 0
  %3368 = vmatprep.subr.bf16.mxu0 0
  %3369 = vmatpush1.bf16.msra.mxu0 0
  %3370 = vmatprep.mubr.bf16.mxu0 0
  %3371 = vmatmul.mubr.bf16.gmra.mrb[0].mxu0 %v3272
  %v3372 = vpop.f32.mrb[0].mxu0
  %v3373 = vadd.f32 0.0, %v3372
  %v3374 = vpop.f32.mrb[0].mxu0
  %v3375 = vpop.f32.mrb[0].mxu0
  %v3376 = vpop.f32.mrb[0].mxu0
  %3377 = vdwg.mxu0
  %3379 = vrot.lane.b32.xlu0 %v3001, 64
  %v3380 = vpop.permute.xlu0 %3379
  %v3382 = vsel %vm58, %v3380, 0
  %3384 = vmatprep.subr.bf16.mxu0 0
  %3385 = vmatpush1.bf16.msra.mxu0 %v261
  %3386 = vmatprep.subr.bf16.mxu0 0
  %3387 = vmatpush1.bf16.msra.mxu0 %v262
  %3388 = vmatprep.subr.bf16.mxu0 0
  %3389 = vmatpush1.bf16.msra.mxu0 0
  %3390 = vmatprep.subr.bf16.mxu0 0
  %3391 = vmatpush1.bf16.msra.mxu0 0
  %3392 = vmatprep.subr.bf16.mxu0 0
  %3393 = vmatpush1.bf16.msra.mxu0 0
  %3394 = vmatprep.subr.bf16.mxu0 0
  %3395 = vmatpush1.bf16.msra.mxu0 0
  %3396 = vmatprep.subr.bf16.mxu0 0
  %3397 = vmatpush1.bf16.msra.mxu0 0
  %3398 = vmatprep.subr.bf16.mxu0 0
  %3399 = vmatpush1.bf16.msra.mxu0 0
  %3400 = vmatprep.subr.bf16.mxu0 0
  %3401 = vmatpush1.bf16.msra.mxu0 0
  %3402 = vmatprep.subr.bf16.mxu0 0
  %3403 = vmatpush1.bf16.msra.mxu0 0
  %3404 = vmatprep.subr.bf16.mxu0 0
  %3405 = vmatpush1.bf16.msra.mxu0 0
  %3406 = vmatprep.subr.bf16.mxu0 0
  %3407 = vmatpush1.bf16.msra.mxu0 0
  %3408 = vmatprep.subr.bf16.mxu0 0
  %3409 = vmatpush1.bf16.msra.mxu0 0
  %3410 = vmatprep.subr.bf16.mxu0 0
  %3411 = vmatpush1.bf16.msra.mxu0 0
  %3412 = vmatprep.subr.bf16.mxu0 0
  %3413 = vmatpush1.bf16.msra.mxu0 0
  %3414 = vmatprep.subr.bf16.mxu0 0
  %3415 = vmatpush1.bf16.msra.mxu0 0
  %3416 = vmatprep.mubr.bf16.mxu0 0
  %3417 = vmatmul.mubr.bf16.gmra.mrb[0].mxu0 %v3382
  %v3418 = vpop.f32.mrb[0].mxu0
  %v3419 = vadd.f32 %v3373, %v3418
  %v3420 = vpop.f32.mrb[0].mxu0
  %v3421 = vpop.f32.mrb[0].mxu0
  %v3422 = vpop.f32.mrb[0].mxu0
  %3423 = vdwg.mxu0
  %v3424 = vadd.f32 %v3419, %v314
  %v3425 = vmul.f32 %v3424, 0.5
  %v3426 = vtanh.pop %v3425
  %v3427 = vmul.f32 %v3426, 0.5
  %v3428 = vadd.f32 %v3427, 0.5
  %v3429 = vtanh.pop %v3424
  %v3430 = vmul.f32 %v3428, %v2885
  %3432 = vrot.lane.b32.xlu0 %v3429, 32
  %v3433 = vpop.permute.xlu0 %3432
  %v3435 = vmul.f32 %v3428, %v3433
  %3437 = vrot.lane.b32.xlu0 %v3435, 32
  %v3438 = vpop.permute.xlu0 %3437
  %v3440 = vadd.f32 %v3430, %v3438
  %v3441 = vtanh.pop %v3440
  %3443 = vrot.lane.b32.xlu0 %v3441, 32
  %v3444 = vpop.permute.xlu0 %3443
  %v3446 = vmul.f32 %v3428, %v3444
  %v3447 = vpack.c.bf16 %v3446, %v3446
  %v3448 = vld [vmem:[%s0 + $0x38] sm:$0xff]
  %v3449 = vpack.c.bf16 %v3448, %v3448
  %3450 = vmatprep.subr.bf16.mxu0 0
  %3451 = vmatpush1.bf16.msra.mxu0 %v54
  %3452 = vmatprep.subr.bf16.mxu0 0
  %3453 = vmatpush1.bf16.msra.mxu0 %v55
  %3454 = vmatprep.subr.bf16.mxu0 0
  %3455 = vmatpush1.bf16.msra.mxu0 0
  %3456 = vmatprep.subr.bf16.mxu0 0
  %3457 = vmatpush1.bf16.msra.mxu0 0
  %3458 = vmatprep.subr.bf16.mxu0 0
  %3459 = vmatpush1.bf16.msra.mxu0 0
  %3460 = vmatprep.subr.bf16.mxu0 0
  %3461 = vmatpush1.bf16.msra.mxu0 0
  %3462 = vmatprep.subr.bf16.mxu0 0
  %3463 = vmatpush1.bf16.msra.mxu0 0
  %3464 = vmatprep.subr.bf16.mxu0 0
  %3465 = vmatpush1.bf16.msra.mxu0 0
  %3466 = vmatprep.subr.bf16.mxu0 0
  %3467 = vmatpush1.bf16.msra.mxu0 0
  %3468 = vmatprep.subr.bf16.mxu0 0
  %3469 = vmatpush1.bf16.msra.mxu0 0
  %3470 = vmatprep.subr.bf16.mxu0 0
  %3471 = vmatpush1.bf16.msra.mxu0 0
  %3472 = vmatprep.subr.bf16.mxu0 0
  %3473 = vmatpush1.bf16.msra.mxu0 0
  %3474 = vmatprep.subr.bf16.mxu0 0
  %3475 = vmatpush1.bf16.msra.mxu0 0
  %3476 = vmatprep.subr.bf16.mxu0 0
  %3477 = vmatpush1.bf16.msra.mxu0 0
  %3478 = vmatprep.subr.bf16.mxu0 0
  %3479 = vmatpush1.bf16.msra.mxu0 0
  %3480 = vmatprep.subr.bf16.mxu0 0
  %3481 = vmatpush1.bf16.msra.mxu0 0
  %3482 = vmatprep.mubr.bf16.mxu0 0
  %3483 = vmatmul.mubr.bf16.gmra.mrb[0].mxu0 %v3382
  %v3484 = vpop.f32.mrb[0].mxu0
  %v3485 = vadd.f32 0.0, %v3484
  %v3486 = vpop.f32.mrb[0].mxu0
  %v3487 = vpop.f32.mrb[0].mxu0
  %v3488 = vpop.f32.mrb[0].mxu0
  %3489 = vdwg.mxu0
  %v3491 = vsel %vm58, %v3449, 0
  %3493 = vmatprep.subr.bf16.mxu0 0
  %3494 = vmatpush1.bf16.msra.mxu0 %v110
  %3495 = vmatprep.subr.bf16.mxu0 0
  %3496 = vmatpush1.bf16.msra.mxu0 %v111
  %3497 = vmatprep.subr.bf16.mxu0 0
  %3498 = vmatpush1.bf16.msra.mxu0 0
  %3499 = vmatprep.subr.bf16.mxu0 0
  %3500 = vmatpush1.bf16.msra.mxu0 0
  %3501 = vmatprep.subr.bf16.mxu0 0
  %3502 = vmatpush1.bf16.msra.mxu0 0
  %3503 = vmatprep.subr.bf16.mxu0 0
  %3504 = vmatpush1.bf16.msra.mxu0 0
  %3505 = vmatprep.subr.bf16.mxu0 0
  %3506 = vmatpush1.bf16.msra.mxu0 0
  %3507 = vmatprep.subr.bf16.mxu0 0
  %3508 = vmatpush1.bf16.msra.mxu0 0
  %3509 = vmatprep.subr.bf16.mxu0 0
  %3510 = vmatpush1.bf16.msra.mxu0 0
  %3511 = vmatprep.subr.bf16.mxu0 0
  %3512 = vmatpush1.bf16.msra.mxu0 0
  %3513 = vmatprep.subr.bf16.mxu0 0
  %3514 = vmatpush1.bf16.msra.mxu0 0
  %3515 = vmatprep.subr.bf16.mxu0 0
  %3516 = vmatpush1.bf16.msra.mxu0 0
  %3517 = vmatprep.subr.bf16.mxu0 0
  %3518 = vmatpush1.bf16.msra.mxu0 0
  %3519 = vmatprep.subr.bf16.mxu0 0
  %3520 = vmatpush1.bf16.msra.mxu0 0
  %3521 = vmatprep.subr.bf16.mxu0 0
  %3522 = vmatpush1.bf16.msra.mxu0 0
  %3523 = vmatprep.subr.bf16.mxu0 0
  %3524 = vmatpush1.bf16.msra.mxu0 0
  %3525 = vmatprep.mubr.bf16.mxu0 0
  %3526 = vmatmul.mubr.bf16.gmra.mrb[0].mxu0 %v3491
  %v3527 = vpop.f32.mrb[0].mxu0
  %v3528 = vadd.f32 %v3485, %v3527
  %v3529 = vpop.f32.mrb[0].mxu0
  %v3530 = vpop.f32.mrb[0].mxu0
  %v3531 = vpop.f32.mrb[0].mxu0
  %3532 = vdwg.mxu0
  %v3533 = vadd.f32 %v3528, %v162
  %v3534 = vmul.f32 %v3533, 0.5
  %v3535 = vtanh.pop %v3534
  %v3536 = vmul.f32 %v3535, 0.5
  %v3537 = vadd.f32 %v3536, 0.5
  %v3538 = vtanh.pop %v3533
  %v3539 = vmul.f32 %v3537, %v2994
  %3541 = vrot.lane.b32.xlu0 %v3538, 32
  %v3542 = vpop.permute.xlu0 %3541
  %v3544 = vmul.f32 %v3537, %v3542
  %3546 = vrot.lane.b32.xlu0 %v3544, 32
  %v3547 = vpop.permute.xlu0 %3546
  %v3549 = vadd.f32 %v3539, %v3547
  %v3550 = vtanh.pop %v3549
  %3552 = vrot.lane.b32.xlu0 %v3550, 32
  %v3553 = vpop.permute.xlu0 %3552
  %v3555 = vmul.f32 %v3537, %v3553
  %v3556 = vpack.c.bf16 %v3555, %v3555
  %3558 = vrot.lane.b32.xlu0 %v3117, 64
  %v3559 = vpop.permute.xlu0 %3558
  %v3561 = vsel %vm58, %v3559, 0
  %3563 = vmatprep.subr.bf16.mxu0 0
  %3564 = vmatpush1.bf16.msra.mxu0 %v1319
  %3565 = vmatprep.subr.bf16.mxu0 0
  %3566 = vmatpush1.bf16.msra.mxu0 %v1320
  %3567 = vmatprep.subr.bf16.mxu0 0
  %3568 = vmatpush1.bf16.msra.mxu0 0
  %3569 = vmatprep.subr.bf16.mxu0 0
  %3570 = vmatpush1.bf16.msra.mxu0 0
  %3571 = vmatprep.subr.bf16.mxu0 0
  %3572 = vmatpush1.bf16.msra.mxu0 0
  %3573 = vmatprep.subr.bf16.mxu0 0
  %3574 = vmatpush1.bf16.msra.mxu0 0
  %3575 = vmatprep.subr.bf16.mxu0 0
  %3576 = vmatpush1.bf16.msra.mxu0 0
  %3577 = vmatprep.subr.bf16.mxu0 0
  %3578 = vmatpush1.bf16.msra.mxu0 0
  %3579 = vmatprep.subr.bf16.mxu0 0
  %3580 = vmatpush1.bf16.msra.mxu0 0
  %3581 = vmatprep.subr.bf16.mxu0 0
  %3582 = vmatpush1.bf16.msra.mxu0 0
  %3583 = vmatprep.subr.bf16.mxu0 0
  %3584 = vmatpush1.bf16.msra.mxu0 0
  %3585 = vmatprep.subr.bf16.mxu0 0
  %3586 = vmatpush1.bf16.msra.mxu0 0
  %3587 = vmatprep.subr.bf16.mxu0 0
  %3588 = vmatpush1.bf16.msra.mxu0 0
  %3589 = vmatprep.subr.bf16.mxu0 0
  %3590 = vmatpush1.bf16.msra.mxu0 0
  %3591 = vmatprep.subr.bf16.mxu0 0
  %3592 = vmatpush1.bf16.msra.mxu0 0
  %3593 = vmatprep.subr.bf16.mxu0 0
  %3594 = vmatpush1.bf16.msra.mxu0 0
  %3595 = vmatprep.mubr.bf16.mxu0 0
  %3596 = vmatmul.mubr.bf16.gmra.mrb[0].mxu0 %v3561
  %v3597 = vpop.f32.mrb[0].mxu0
  %v3598 = vadd.f32 0.0, %v3597
  %v3599 = vpop.f32.mrb[0].mxu0
  %v3600 = vpop.f32.mrb[0].mxu0
  %v3601 = vpop.f32.mrb[0].mxu0
  %3602 = vdwg.mxu0
  %3604 = vrot.lane.b32.xlu0 %v3227, 64
  %v3605 = vpop.permute.xlu0 %3604
  %v3607 = vsel %vm58, %v3605, 0
  %3609 = vmatprep.subr.bf16.mxu0 0
  %3610 = vmatpush1.bf16.msra.mxu0 %v1374
  %3611 = vmatprep.subr.bf16.mxu0 0
  %3612 = vmatpush1.bf16.msra.mxu0 %v1375
  %3613 = vmatprep.subr.bf16.mxu0 0
  %3614 = vmatpush1.bf16.msra.mxu0 0
  %3615 = vmatprep.subr.bf16.mxu0 0
  %3616 = vmatpush1.bf16.msra.mxu0 0
  %3617 = vmatprep.subr.bf16.mxu0 0
  %3618 = vmatpush1.bf16.msra.mxu0 0
  %3619 = vmatprep.subr.bf16.mxu0 0
  %3620 = vmatpush1.bf16.msra.mxu0 0
  %3621 = vmatprep.subr.bf16.mxu0 0
  %3622 = vmatpush1.bf16.msra.mxu0 0
  %3623 = vmatprep.subr.bf16.mxu0 0
  %3624 = vmatpush1.bf16.msra.mxu0 0
  %3625 = vmatprep.subr.bf16.mxu0 0
  %3626 = vmatpush1.bf16.msra.mxu0 0
  %3627 = vmatprep.subr.bf16.mxu0 0
  %3628 = vmatpush1.bf16.msra.mxu0 0
  %3629 = vmatprep.subr.bf16.mxu0 0
  %3630 = vmatpush1.bf16.msra.mxu0 0
  %3631 = vmatprep.subr.bf16.mxu0 0
  %3632 = vmatpush1.bf16.msra.mxu0 0
  %3633 = vmatprep.subr.bf16.mxu0 0
  %3634 = vmatpush1.bf16.msra.mxu0 0
  %3635 = vmatprep.subr.bf16.mxu0 0
  %3636 = vmatpush1.bf16.msra.mxu0 0
  %3637 = vmatprep.subr.bf16.mxu0 0
  %3638 = vmatpush1.bf16.msra.mxu0 0
  %3639 = vmatprep.subr.bf16.mxu0 0
  %3640 = vmatpush1.bf16.msra.mxu0 0
  %3641 = vmatprep.mubr.bf16.mxu0 0
  %3642 = vmatmul.mubr.bf16.gmra.mrb[0].mxu0 %v3607
  %v3643 = vpop.f32.mrb[0].mxu0
  %v3644 = vadd.f32 %v3598, %v3643
  %v3645 = vpop.f32.mrb[0].mxu0
  %v3646 = vpop.f32.mrb[0].mxu0
  %v3647 = vpop.f32.mrb[0].mxu0
  %3648 = vdwg.mxu0
  %v3649 = vadd.f32 %v3644, %v1427
  %v3650 = vmul.f32 %v3649, 0.5
  %v3651 = vtanh.pop %v3650
  %v3652 = vmul.f32 %v3651, 0.5
  %v3653 = vadd.f32 %v3652, 0.5
  %v3654 = vtanh.pop %v3649
  %v3655 = vmul.f32 %v3653, %v3110
  %3657 = vrot.lane.b32.xlu0 %v3654, 32
  %v3658 = vpop.permute.xlu0 %3657
  %v3660 = vmul.f32 %v3653, %v3658
  %3662 = vrot.lane.b32.xlu0 %v3660, 32
  %v3663 = vpop.permute.xlu0 %3662
  %v3665 = vadd.f32 %v3655, %v3663
  %v3666 = vtanh.pop %v3665
  %3668 = vrot.lane.b32.xlu0 %v3666, 32
  %v3669 = vpop.permute.xlu0 %3668
  %v3671 = vmul.f32 %v3653, %v3669
  %v3672 = vpack.c.bf16 %v3671, %v3671
  %3673 = vmatprep.subr.bf16.mxu0 0
  %3674 = vmatpush1.bf16.msra.mxu0 %v838
  %3675 = vmatprep.subr.bf16.mxu0 0
  %3676 = vmatpush1.bf16.msra.mxu0 %v839
  %3677 = vmatprep.subr.bf16.mxu0 0
  %3678 = vmatpush1.bf16.msra.mxu0 0
  %3679 = vmatprep.subr.bf16.mxu0 0
  %3680 = vmatpush1.bf16.msra.mxu0 0
  %3681 = vmatprep.subr.bf16.mxu0 0
  %3682 = vmatpush1.bf16.msra.mxu0 0
  %3683 = vmatprep.subr.bf16.mxu0 0
  %3684 = vmatpush1.bf16.msra.mxu0 0
  %3685 = vmatprep.subr.bf16.mxu0 0
  %3686 = vmatpush1.bf16.msra.mxu0 0
  %3687 = vmatprep.subr.bf16.mxu0 0
  %3688 = vmatpush1.bf16.msra.mxu0 0
  %3689 = vmatprep.subr.bf16.mxu0 0
  %3690 = vmatpush1.bf16.msra.mxu0 0
  %3691 = vmatprep.subr.bf16.mxu0 0
  %3692 = vmatpush1.bf16.msra.mxu0 0
  %3693 = vmatprep.subr.bf16.mxu0 0
  %3694 = vmatpush1.bf16.msra.mxu0 0
  %3695 = vmatprep.subr.bf16.mxu0 0
  %3696 = vmatpush1.bf16.msra.mxu0 0
  %3697 = vmatprep.subr.bf16.mxu0 0
  %3698 = vmatpush1.bf16.msra.mxu0 0
  %3699 = vmatprep.subr.bf16.mxu0 0
  %3700 = vmatpush1.bf16.msra.mxu0 0
  %3701 = vmatprep.subr.bf16.mxu0 0
  %3702 = vmatpush1.bf16.msra.mxu0 0
  %3703 = vmatprep.subr.bf16.mxu0 0
  %3704 = vmatpush1.bf16.msra.mxu0 0
  %3705 = vmatprep.mubr.bf16.mxu0 0
  %3706 = vmatmul.mubr.bf16.gmra.mrb[0].mxu0 %v3607
  %v3707 = vpop.f32.mrb[0].mxu0
  %v3708 = vadd.f32 0.0, %v3707
  %v3709 = vpop.f32.mrb[0].mxu0
  %v3710 = vpop.f32.mrb[0].mxu0
  %v3711 = vpop.f32.mrb[0].mxu0
  %3712 = vdwg.mxu0
  %3714 = vrot.lane.b32.xlu0 %v3337, 64
  %v3715 = vpop.permute.xlu0 %3714
  %v3717 = vsel %vm58, %v3715, 0
  %3719 = vmatprep.subr.bf16.mxu0 0
  %3720 = vmatpush1.bf16.msra.mxu0 %v893
  %3721 = vmatprep.subr.bf16.mxu0 0
  %3722 = vmatpush1.bf16.msra.mxu0 %v894
  %3723 = vmatprep.subr.bf16.mxu0 0
  %3724 = vmatpush1.bf16.msra.mxu0 0
  %3725 = vmatprep.subr.bf16.mxu0 0
  %3726 = vmatpush1.bf16.msra.mxu0 0
  %3727 = vmatprep.subr.bf16.mxu0 0
  %3728 = vmatpush1.bf16.msra.mxu0 0
  %3729 = vmatprep.subr.bf16.mxu0 0
  %3730 = vmatpush1.bf16.msra.mxu0 0
  %3731 = vmatprep.subr.bf16.mxu0 0
  %3732 = vmatpush1.bf16.msra.mxu0 0
  %3733 = vmatprep.subr.bf16.mxu0 0
  %3734 = vmatpush1.bf16.msra.mxu0 0
  %3735 = vmatprep.subr.bf16.mxu0 0
  %3736 = vmatpush1.bf16.msra.mxu0 0
  %3737 = vmatprep.subr.bf16.mxu0 0
  %3738 = vmatpush1.bf16.msra.mxu0 0
  %3739 = vmatprep.subr.bf16.mxu0 0
  %3740 = vmatpush1.bf16.msra.mxu0 0
  %3741 = vmatprep.subr.bf16.mxu0 0
  %3742 = vmatpush1.bf16.msra.mxu0 0
  %3743 = vmatprep.subr.bf16.mxu0 0
  %3744 = vmatpush1.bf16.msra.mxu0 0
  %3745 = vmatprep.subr.bf16.mxu0 0
  %3746 = vmatpush1.bf16.msra.mxu0 0
  %3747 = vmatprep.subr.bf16.mxu0 0
  %3748 = vmatpush1.bf16.msra.mxu0 0
  %3749 = vmatprep.subr.bf16.mxu0 0
  %3750 = vmatpush1.bf16.msra.mxu0 0
  %3751 = vmatprep.mubr.bf16.mxu0 0
  %3752 = vmatmul.mubr.bf16.gmra.mrb[0].mxu0 %v3717
  %v3753 = vpop.f32.mrb[0].mxu0
  %v3754 = vadd.f32 %v3708, %v3753
  %v3755 = vpop.f32.mrb[0].mxu0
  %v3756 = vpop.f32.mrb[0].mxu0
  %v3757 = vpop.f32.mrb[0].mxu0
  %3758 = vdwg.mxu0
  %v3759 = vadd.f32 %v3754, %v946
  %v3760 = vmul.f32 %v3759, 0.5
  %v3761 = vtanh.pop %v3760
  %v3762 = vmul.f32 %v3761, 0.5
  %v3763 = vadd.f32 %v3762, 0.5
  %v3764 = vtanh.pop %v3759
  %v3765 = vmul.f32 %v3763, %v3220
  %3767 = vrot.lane.b32.xlu0 %v3764, 32
  %v3768 = vpop.permute.xlu0 %3767
  %v3770 = vmul.f32 %v3763, %v3768
  %3772 = vrot.lane.b32.xlu0 %v3770, 32
  %v3773 = vpop.permute.xlu0 %3772
  %v3775 = vadd.f32 %v3765, %v3773
  %v3776 = vtanh.pop %v3775
  %3778 = vrot.lane.b32.xlu0 %v3776, 32
  %v3779 = vpop.permute.xlu0 %3778
  %v3781 = vmul.f32 %v3763, %v3779
  %v3782 = vpack.c.bf16 %v3781, %v3781
  %3783 = vmatprep.subr.bf16.mxu0 0
  %3784 = vmatpush1.bf16.msra.mxu0 %v467
  %3785 = vmatprep.subr.bf16.mxu0 0
  %3786 = vmatpush1.bf16.msra.mxu0 %v468
  %3787 = vmatprep.subr.bf16.mxu0 0
  %3788 = vmatpush1.bf16.msra.mxu0 0
  %3789 = vmatprep.subr.bf16.mxu0 0
  %3790 = vmatpush1.bf16.msra.mxu0 0
  %3791 = vmatprep.subr.bf16.mxu0 0
  %3792 = vmatpush1.bf16.msra.mxu0 0
  %3793 = vmatprep.subr.bf16.mxu0 0
  %3794 = vmatpush1.bf16.msra.mxu0 0
  %3795 = vmatprep.subr.bf16.mxu0 0
  %3796 = vmatpush1.bf16.msra.mxu0 0
  %3797 = vmatprep.subr.bf16.mxu0 0
  %3798 = vmatpush1.bf16.msra.mxu0 0
  %3799 = vmatprep.subr.bf16.mxu0 0
  %3800 = vmatpush1.bf16.msra.mxu0 0
  %3801 = vmatprep.subr.bf16.mxu0 0
  %3802 = vmatpush1.bf16.msra.mxu0 0
  %3803 = vmatprep.subr.bf16.mxu0 0
  %3804 = vmatpush1.bf16.msra.mxu0 0
  %3805 = vmatprep.subr.bf16.mxu0 0
  %3806 = vmatpush1.bf16.msra.mxu0 0
  %3807 = vmatprep.subr.bf16.mxu0 0
  %3808 = vmatpush1.bf16.msra.mxu0 0
  %3809 = vmatprep.subr.bf16.mxu0 0
  %3810 = vmatpush1.bf16.msra.mxu0 0
  %3811 = vmatprep.subr.bf16.mxu0 0
  %3812 = vmatpush1.bf16.msra.mxu0 0
  %3813 = vmatprep.subr.bf16.mxu0 0
  %3814 = vmatpush1.bf16.msra.mxu0 0
  %3815 = vmatprep.mubr.bf16.mxu0 0
  %3816 = vmatmul.mubr.bf16.gmra.mrb[0].mxu0 %v3717
  %v3817 = vpop.f32.mrb[0].mxu0
  %v3818 = vadd.f32 0.0, %v3817
  %v3819 = vpop.f32.mrb[0].mxu0
  %v3820 = vpop.f32.mrb[0].mxu0
  %v3821 = vpop.f32.mrb[0].mxu0
  %3822 = vdwg.mxu0
  %3824 = vrot.lane.b32.xlu0 %v3447, 64
  %v3825 = vpop.permute.xlu0 %3824
  %v3827 = vsel %vm58, %v3825, 0
  %3829 = vmatprep.subr.bf16.mxu0 0
  %3830 = vmatpush1.bf16.msra.mxu0 %v522
  %3831 = vmatprep.subr.bf16.mxu0 0
  %3832 = vmatpush1.bf16.msra.mxu0 %v523
  %3833 = vmatprep.subr.bf16.mxu0 0
  %3834 = vmatpush1.bf16.msra.mxu0 0
  %3835 = vmatprep.subr.bf16.mxu0 0
  %3836 = vmatpush1.bf16.msra.mxu0 0
  %3837 = vmatprep.subr.bf16.mxu0 0
  %3838 = vmatpush1.bf16.msra.mxu0 0
  %3839 = vmatprep.subr.bf16.mxu0 0
  %3840 = vmatpush1.bf16.msra.mxu0 0
  %3841 = vmatprep.subr.bf16.mxu0 0
  %3842 = vmatpush1.bf16.msra.mxu0 0
  %3843 = vmatprep.subr.bf16.mxu0 0
  %3844 = vmatpush1.bf16.msra.mxu0 0
  %3845 = vmatprep.subr.bf16.mxu0 0
  %3846 = vmatpush1.bf16.msra.mxu0 0
  %3847 = vmatprep.subr.bf16.mxu0 0
  %3848 = vmatpush1.bf16.msra.mxu0 0
  %3849 = vmatprep.subr.bf16.mxu0 0
  %3850 = vmatpush1.bf16.msra.mxu0 0
  %3851 = vmatprep.subr.bf16.mxu0 0
  %3852 = vmatpush1.bf16.msra.mxu0 0
  %3853 = vmatprep.subr.bf16.mxu0 0
  %3854 = vmatpush1.bf16.msra.mxu0 0
  %3855 = vmatprep.subr.bf16.mxu0 0
  %3856 = vmatpush1.bf16.msra.mxu0 0
  %3857 = vmatprep.subr.bf16.mxu0 0
  %3858 = vmatpush1.bf16.msra.mxu0 0
  %3859 = vmatprep.subr.bf16.mxu0 0
  %3860 = vmatpush1.bf16.msra.mxu0 0
  %3861 = vmatprep.mubr.bf16.mxu0 0
  %3862 = vmatmul.mubr.bf16.gmra.mrb[0].mxu0 %v3827
  %v3863 = vpop.f32.mrb[0].mxu0
  %v3864 = vadd.f32 %v3818, %v3863
  %v3865 = vpop.f32.mrb[0].mxu0
  %v3866 = vpop.f32.mrb[0].mxu0
  %v3867 = vpop.f32.mrb[0].mxu0
  %3868 = vdwg.mxu0
  %v3869 = vadd.f32 %v3864, %v575
  %v3870 = vmul.f32 %v3869, 0.5
  %v3871 = vtanh.pop %v3870
  %v3872 = vmul.f32 %v3871, 0.5
  %v3873 = vadd.f32 %v3872, 0.5
  %v3874 = vtanh.pop %v3869
  %v3875 = vmul.f32 %v3873, %v3330
  %3877 = vrot.lane.b32.xlu0 %v3874, 32
  %v3878 = vpop.permute.xlu0 %3877
  %v3880 = vmul.f32 %v3873, %v3878
  %3882 = vrot.lane.b32.xlu0 %v3880, 32
  %v3883 = vpop.permute.xlu0 %3882
  %v3885 = vadd.f32 %v3875, %v3883
  %v3886 = vtanh.pop %v3885
  %3888 = vrot.lane.b32.xlu0 %v3886, 32
  %v3889 = vpop.permute.xlu0 %3888
  %v3891 = vmul.f32 %v3873, %v3889
  %v3892 = vpack.c.bf16 %v3891, %v3891
  %3893 = vmatprep.subr.bf16.mxu0 0
  %3894 = vmatpush1.bf16.msra.mxu0 %v206
  %3895 = vmatprep.subr.bf16.mxu0 0
  %3896 = vmatpush1.bf16.msra.mxu0 %v207
  %3897 = vmatprep.subr.bf16.mxu0 0
  %3898 = vmatpush1.bf16.msra.mxu0 0
  %3899 = vmatprep.subr.bf16.mxu0 0
  %3900 = vmatpush1.bf16.msra.mxu0 0
  %3901 = vmatprep.subr.bf16.mxu0 0
  %3902 = vmatpush1.bf16.msra.mxu0 0
  %3903 = vmatprep.subr.bf16.mxu0 0
  %3904 = vmatpush1.bf16.msra.mxu0 0
  %3905 = vmatprep.subr.bf16.mxu0 0
  %3906 = vmatpush1.bf16.msra.mxu0 0
  %3907 = vmatprep.subr.bf16.mxu0 0
  %3908 = vmatpush1.bf16.msra.mxu0 0
  %3909 = vmatprep.subr.bf16.mxu0 0
  %3910 = vmatpush1.bf16.msra.mxu0 0
  %3911 = vmatprep.subr.bf16.mxu0 0
  %3912 = vmatpush1.bf16.msra.mxu0 0
  %3913 = vmatprep.subr.bf16.mxu0 0
  %3914 = vmatpush1.bf16.msra.mxu0 0
  %3915 = vmatprep.subr.bf16.mxu0 0
  %3916 = vmatpush1.bf16.msra.mxu0 0
  %3917 = vmatprep.subr.bf16.mxu0 0
  %3918 = vmatpush1.bf16.msra.mxu0 0
  %3919 = vmatprep.subr.bf16.mxu0 0
  %3920 = vmatpush1.bf16.msra.mxu0 0
  %3921 = vmatprep.subr.bf16.mxu0 0
  %3922 = vmatpush1.bf16.msra.mxu0 0
  %3923 = vmatprep.subr.bf16.mxu0 0
  %3924 = vmatpush1.bf16.msra.mxu0 0
  %3925 = vmatprep.mubr.bf16.mxu0 0
  %3926 = vmatmul.mubr.bf16.gmra.mrb[0].mxu0 %v3827
  %v3927 = vpop.f32.mrb[0].mxu0
  %v3928 = vadd.f32 0.0, %v3927
  %v3929 = vpop.f32.mrb[0].mxu0
  %v3930 = vpop.f32.mrb[0].mxu0
  %v3931 = vpop.f32.mrb[0].mxu0
  %3932 = vdwg.mxu0
  %3934 = vrot.lane.b32.xlu0 %v3556, 64
  %v3935 = vpop.permute.xlu0 %3934
  %v3937 = vsel %vm58, %v3935, 0
  %3939 = vmatprep.subr.bf16.mxu0 0
  %3940 = vmatpush1.bf16.msra.mxu0 %v261
  %3941 = vmatprep.subr.bf16.mxu0 0
  %3942 = vmatpush1.bf16.msra.mxu0 %v262
  %3943 = vmatprep.subr.bf16.mxu0 0
  %3944 = vmatpush1.bf16.msra.mxu0 0
  %3945 = vmatprep.subr.bf16.mxu0 0
  %3946 = vmatpush1.bf16.msra.mxu0 0
  %3947 = vmatprep.subr.bf16.mxu0 0
  %3948 = vmatpush1.bf16.msra.mxu0 0
  %3949 = vmatprep.subr.bf16.mxu0 0
  %3950 = vmatpush1.bf16.msra.mxu0 0
  %3951 = vmatprep.subr.bf16.mxu0 0
  %3952 = vmatpush1.bf16.msra.mxu0 0
  %3953 = vmatprep.subr.bf16.mxu0 0
  %3954 = vmatpush1.bf16.msra.mxu0 0
  %3955 = vmatprep.subr.bf16.mxu0 0
  %3956 = vmatpush1.bf16.msra.mxu0 0
  %3957 = vmatprep.subr.bf16.mxu0 0
  %3958 = vmatpush1.bf16.msra.mxu0 0
  %3959 = vmatprep.subr.bf16.mxu0 0
  %3960 = vmatpush1.bf16.msra.mxu0 0
  %3961 = vmatprep.subr.bf16.mxu0 0
  %3962 = vmatpush1.bf16.msra.mxu0 0
  %3963 = vmatprep.subr.bf16.mxu0 0
  %3964 = vmatpush1.bf16.msra.mxu0 0
  %3965 = vmatprep.subr.bf16.mxu0 0
  %3966 = vmatpush1.bf16.msra.mxu0 0
  %3967 = vmatprep.subr.bf16.mxu0 0
  %3968 = vmatpush1.bf16.msra.mxu0 0
  %3969 = vmatprep.subr.bf16.mxu0 0
  %3970 = vmatpush1.bf16.msra.mxu0 0
  %3971 = vmatprep.mubr.bf16.mxu0 0
  %3972 = vmatmul.mubr.bf16.gmra.mrb[0].mxu0 %v3937
  %v3973 = vpop.f32.mrb[0].mxu0
  %v3974 = vadd.f32 %v3928, %v3973
  %v3975 = vpop.f32.mrb[0].mxu0
  %v3976 = vpop.f32.mrb[0].mxu0
  %v3977 = vpop.f32.mrb[0].mxu0
  %3978 = vdwg.mxu0
  %v3979 = vadd.f32 %v3974, %v314
  %v3980 = vmul.f32 %v3979, 0.5
  %v3981 = vtanh.pop %v3980
  %v3982 = vmul.f32 %v3981, 0.5
  %v3983 = vadd.f32 %v3982, 0.5
  %v3984 = vtanh.pop %v3979
  %v3985 = vmul.f32 %v3983, %v3440
  %3987 = vrot.lane.b32.xlu0 %v3984, 32
  %v3988 = vpop.permute.xlu0 %3987
  %v3990 = vmul.f32 %v3983, %v3988
  %3992 = vrot.lane.b32.xlu0 %v3990, 32
  %v3993 = vpop.permute.xlu0 %3992
  %v3995 = vadd.f32 %v3985, %v3993
  %v3996 = vtanh.pop %v3995
  %3998 = vrot.lane.b32.xlu0 %v3996, 32
  %v3999 = vpop.permute.xlu0 %3998
  %v4001 = vmul.f32 %v3983, %v3999
  %v4002 = vpack.c.bf16 %v4001, %v4001
  %4004 = vrot.lane.b32.xlu0 %v3672, 64
  %v4005 = vpop.permute.xlu0 %4004
  %v4007 = vsel %vm58, %v4005, 0
  %4009 = vmatprep.subr.bf16.mxu0 0
  %4010 = vmatpush1.bf16.msra.mxu0 %v1319
  %4011 = vmatprep.subr.bf16.mxu0 0
  %4012 = vmatpush1.bf16.msra.mxu0 %v1320
  %4013 = vmatprep.subr.bf16.mxu0 0
  %4014 = vmatpush1.bf16.msra.mxu0 0
  %4015 = vmatprep.subr.bf16.mxu0 0
  %4016 = vmatpush1.bf16.msra.mxu0 0
  %4017 = vmatprep.subr.bf16.mxu0 0
  %4018 = vmatpush1.bf16.msra.mxu0 0
  %4019 = vmatprep.subr.bf16.mxu0 0
  %4020 = vmatpush1.bf16.msra.mxu0 0
  %4021 = vmatprep.subr.bf16.mxu0 0
  %4022 = vmatpush1.bf16.msra.mxu0 0
  %4023 = vmatprep.subr.bf16.mxu0 0
  %4024 = vmatpush1.bf16.msra.mxu0 0
  %4025 = vmatprep.subr.bf16.mxu0 0
  %4026 = vmatpush1.bf16.msra.mxu0 0
  %4027 = vmatprep.subr.bf16.mxu0 0
  %4028 = vmatpush1.bf16.msra.mxu0 0
  %4029 = vmatprep.subr.bf16.mxu0 0
  %4030 = vmatpush1.bf16.msra.mxu0 0
  %4031 = vmatprep.subr.bf16.mxu0 0
  %4032 = vmatpush1.bf16.msra.mxu0 0
  %4033 = vmatprep.subr.bf16.mxu0 0
  %4034 = vmatpush1.bf16.msra.mxu0 0
  %4035 = vmatprep.subr.bf16.mxu0 0
  %4036 = vmatpush1.bf16.msra.mxu0 0
  %4037 = vmatprep.subr.bf16.mxu0 0
  %4038 = vmatpush1.bf16.msra.mxu0 0
  %4039 = vmatprep.subr.bf16.mxu0 0
  %4040 = vmatpush1.bf16.msra.mxu0 0
  %4041 = vmatprep.mubr.bf16.mxu0 0
  %4042 = vmatmul.mubr.bf16.gmra.mrb[0].mxu0 %v4007
  %v4043 = vpop.f32.mrb[0].mxu0
  %v4044 = vadd.f32 0.0, %v4043
  %v4045 = vpop.f32.mrb[0].mxu0
  %v4046 = vpop.f32.mrb[0].mxu0
  %v4047 = vpop.f32.mrb[0].mxu0
  %4048 = vdwg.mxu0
  %4050 = vrot.lane.b32.xlu0 %v3782, 64
  %v4051 = vpop.permute.xlu0 %4050
  %v4053 = vsel %vm58, %v4051, 0
  %4055 = vmatprep.subr.bf16.mxu0 0
  %4056 = vmatpush1.bf16.msra.mxu0 %v1374
  %4057 = vmatprep.subr.bf16.mxu0 0
  %4058 = vmatpush1.bf16.msra.mxu0 %v1375
  %4059 = vmatprep.subr.bf16.mxu0 0
  %4060 = vmatpush1.bf16.msra.mxu0 0
  %4061 = vmatprep.subr.bf16.mxu0 0
  %4062 = vmatpush1.bf16.msra.mxu0 0
  %4063 = vmatprep.subr.bf16.mxu0 0
  %4064 = vmatpush1.bf16.msra.mxu0 0
  %4065 = vmatprep.subr.bf16.mxu0 0
  %4066 = vmatpush1.bf16.msra.mxu0 0
  %4067 = vmatprep.subr.bf16.mxu0 0
  %4068 = vmatpush1.bf16.msra.mxu0 0
  %4069 = vmatprep.subr.bf16.mxu0 0
  %4070 = vmatpush1.bf16.msra.mxu0 0
  %4071 = vmatprep.subr.bf16.mxu0 0
  %4072 = vmatpush1.bf16.msra.mxu0 0
  %4073 = vmatprep.subr.bf16.mxu0 0
  %4074 = vmatpush1.bf16.msra.mxu0 0
  %4075 = vmatprep.subr.bf16.mxu0 0
  %4076 = vmatpush1.bf16.msra.mxu0 0
  %4077 = vmatprep.subr.bf16.mxu0 0
  %4078 = vmatpush1.bf16.msra.mxu0 0
  %4079 = vmatprep.subr.bf16.mxu0 0
  %4080 = vmatpush1.bf16.msra.mxu0 0
  %4081 = vmatprep.subr.bf16.mxu0 0
  %4082 = vmatpush1.bf16.msra.mxu0 0
  %4083 = vmatprep.subr.bf16.mxu0 0
  %4084 = vmatpush1.bf16.msra.mxu0 0
  %4085 = vmatprep.subr.bf16.mxu0 0
  %4086 = vmatpush1.bf16.msra.mxu0 0
  %4087 = vmatprep.mubr.bf16.mxu0 0
  %4088 = vmatmul.mubr.bf16.gmra.mrb[0].mxu0 %v4053
  %v4089 = vpop.f32.mrb[0].mxu0
  %v4090 = vadd.f32 %v4044, %v4089
  %v4091 = vpop.f32.mrb[0].mxu0
  %v4092 = vpop.f32.mrb[0].mxu0
  %v4093 = vpop.f32.mrb[0].mxu0
  %4094 = vdwg.mxu0
  %v4095 = vadd.f32 %v4090, %v1427
  %v4096 = vmul.f32 %v4095, 0.5
  %v4097 = vtanh.pop %v4096
  %v4098 = vmul.f32 %v4097, 0.5
  %v4099 = vadd.f32 %v4098, 0.5
  %v4100 = vtanh.pop %v4095
  %v4101 = vmul.f32 %v4099, %v3665
  %4103 = vrot.lane.b32.xlu0 %v4100, 32
  %v4104 = vpop.permute.xlu0 %4103
  %v4106 = vmul.f32 %v4099, %v4104
  %4108 = vrot.lane.b32.xlu0 %v4106, 32
  %v4109 = vpop.permute.xlu0 %4108
  %v4111 = vadd.f32 %v4101, %v4109
  %v4112 = vtanh.pop %v4111
  %4114 = vrot.lane.b32.xlu0 %v4112, 32
  %v4115 = vpop.permute.xlu0 %4114
  %v4117 = vmul.f32 %v4099, %v4115
  %v4118 = vpack.c.bf16 %v4117, %v4117
  %4119 = vmatprep.subr.bf16.mxu0 0
  %4120 = vmatpush1.bf16.msra.mxu0 %v838
  %4121 = vmatprep.subr.bf16.mxu0 0
  %4122 = vmatpush1.bf16.msra.mxu0 %v839
  %4123 = vmatprep.subr.bf16.mxu0 0
  %4124 = vmatpush1.bf16.msra.mxu0 0
  %4125 = vmatprep.subr.bf16.mxu0 0
  %4126 = vmatpush1.bf16.msra.mxu0 0
  %4127 = vmatprep.subr.bf16.mxu0 0
  %4128 = vmatpush1.bf16.msra.mxu0 0
  %4129 = vmatprep.subr.bf16.mxu0 0
  %4130 = vmatpush1.bf16.msra.mxu0 0
  %4131 = vmatprep.subr.bf16.mxu0 0
  %4132 = vmatpush1.bf16.msra.mxu0 0
  %4133 = vmatprep.subr.bf16.mxu0 0
  %4134 = vmatpush1.bf16.msra.mxu0 0
  %4135 = vmatprep.subr.bf16.mxu0 0
  %4136 = vmatpush1.bf16.msra.mxu0 0
  %4137 = vmatprep.subr.bf16.mxu0 0
  %4138 = vmatpush1.bf16.msra.mxu0 0
  %4139 = vmatprep.subr.bf16.mxu0 0
  %4140 = vmatpush1.bf16.msra.mxu0 0
  %4141 = vmatprep.subr.bf16.mxu0 0
  %4142 = vmatpush1.bf16.msra.mxu0 0
  %4143 = vmatprep.subr.bf16.mxu0 0
  %4144 = vmatpush1.bf16.msra.mxu0 0
  %4145 = vmatprep.subr.bf16.mxu0 0
  %4146 = vmatpush1.bf16.msra.mxu0 0
  %4147 = vmatprep.subr.bf16.mxu0 0
  %4148 = vmatpush1.bf16.msra.mxu0 0
  %4149 = vmatprep.subr.bf16.mxu0 0
  %4150 = vmatpush1.bf16.msra.mxu0 0
  %4151 = vmatprep.mubr.bf16.mxu0 0
  %4152 = vmatmul.mubr.bf16.gmra.mrb[0].mxu0 %v4053
  %v4153 = vpop.f32.mrb[0].mxu0
  %v4154 = vadd.f32 0.0, %v4153
  %v4155 = vpop.f32.mrb[0].mxu0
  %v4156 = vpop.f32.mrb[0].mxu0
  %v4157 = vpop.f32.mrb[0].mxu0
  %4158 = vdwg.mxu0
  %4160 = vrot.lane.b32.xlu0 %v3892, 64
  %v4161 = vpop.permute.xlu0 %4160
  %v4163 = vsel %vm58, %v4161, 0
  %4165 = vmatprep.subr.bf16.mxu0 0
  %4166 = vmatpush1.bf16.msra.mxu0 %v893
  %4167 = vmatprep.subr.bf16.mxu0 0
  %4168 = vmatpush1.bf16.msra.mxu0 %v894
  %4169 = vmatprep.subr.bf16.mxu0 0
  %4170 = vmatpush1.bf16.msra.mxu0 0
  %4171 = vmatprep.subr.bf16.mxu0 0
  %4172 = vmatpush1.bf16.msra.mxu0 0
  %4173 = vmatprep.subr.bf16.mxu0 0
  %4174 = vmatpush1.bf16.msra.mxu0 0
  %4175 = vmatprep.subr.bf16.mxu0 0
  %4176 = vmatpush1.bf16.msra.mxu0 0
  %4177 = vmatprep.subr.bf16.mxu0 0
  %4178 = vmatpush1.bf16.msra.mxu0 0
  %4179 = vmatprep.subr.bf16.mxu0 0
  %4180 = vmatpush1.bf16.msra.mxu0 0
  %4181 = vmatprep.subr.bf16.mxu0 0
  %4182 = vmatpush1.bf16.msra.mxu0 0
  %4183 = vmatprep.subr.bf16.mxu0 0
  %4184 = vmatpush1.bf16.msra.mxu0 0
  %4185 = vmatprep.subr.bf16.mxu0 0
  %4186 = vmatpush1.bf16.msra.mxu0 0
  %4187 = vmatprep.subr.bf16.mxu0 0
  %4188 = vmatpush1.bf16.msra.mxu0 0
  %4189 = vmatprep.subr.bf16.mxu0 0
  %4190 = vmatpush1.bf16.msra.mxu0 0
  %4191 = vmatprep.subr.bf16.mxu0 0
  %4192 = vmatpush1.bf16.msra.mxu0 0
  %4193 = vmatprep.subr.bf16.mxu0 0
  %4194 = vmatpush1.bf16.msra.mxu0 0
  %4195 = vmatprep.subr.bf16.mxu0 0
  %4196 = vmatpush1.bf16.msra.mxu0 0
  %4197 = vmatprep.mubr.bf16.mxu0 0
  %4198 = vmatmul.mubr.bf16.gmra.mrb[0].mxu0 %v4163
  %v4199 = vpop.f32.mrb[0].mxu0
  %v4200 = vadd.f32 %v4154, %v4199
  %v4201 = vpop.f32.mrb[0].mxu0
  %v4202 = vpop.f32.mrb[0].mxu0
  %v4203 = vpop.f32.mrb[0].mxu0
  %4204 = vdwg.mxu0
  %v4205 = vadd.f32 %v4200, %v946
  %v4206 = vmul.f32 %v4205, 0.5
  %v4207 = vtanh.pop %v4206
  %v4208 = vmul.f32 %v4207, 0.5
  %v4209 = vadd.f32 %v4208, 0.5
  %v4210 = vtanh.pop %v4205
  %v4211 = vmul.f32 %v4209, %v3775
  %4213 = vrot.lane.b32.xlu0 %v4210, 32
  %v4214 = vpop.permute.xlu0 %4213
  %v4216 = vmul.f32 %v4209, %v4214
  %4218 = vrot.lane.b32.xlu0 %v4216, 32
  %v4219 = vpop.permute.xlu0 %4218
  %v4221 = vadd.f32 %v4211, %v4219
  %v4222 = vtanh.pop %v4221
  %4224 = vrot.lane.b32.xlu0 %v4222, 32
  %v4225 = vpop.permute.xlu0 %4224
  %v4227 = vmul.f32 %v4209, %v4225
  %v4228 = vpack.c.bf16 %v4227, %v4227
  %4229 = vmatprep.subr.bf16.mxu0 0
  %4230 = vmatpush1.bf16.msra.mxu0 %v467
  %4231 = vmatprep.subr.bf16.mxu0 0
  %4232 = vmatpush1.bf16.msra.mxu0 %v468
  %4233 = vmatprep.subr.bf16.mxu0 0
  %4234 = vmatpush1.bf16.msra.mxu0 0
  %4235 = vmatprep.subr.bf16.mxu0 0
  %4236 = vmatpush1.bf16.msra.mxu0 0
  %4237 = vmatprep.subr.bf16.mxu0 0
  %4238 = vmatpush1.bf16.msra.mxu0 0
  %4239 = vmatprep.subr.bf16.mxu0 0
  %4240 = vmatpush1.bf16.msra.mxu0 0
  %4241 = vmatprep.subr.bf16.mxu0 0
  %4242 = vmatpush1.bf16.msra.mxu0 0
  %4243 = vmatprep.subr.bf16.mxu0 0
  %4244 = vmatpush1.bf16.msra.mxu0 0
  %4245 = vmatprep.subr.bf16.mxu0 0
  %4246 = vmatpush1.bf16.msra.mxu0 0
  %4247 = vmatprep.subr.bf16.mxu0 0
  %4248 = vmatpush1.bf16.msra.mxu0 0
  %4249 = vmatprep.subr.bf16.mxu0 0
  %4250 = vmatpush1.bf16.msra.mxu0 0
  %4251 = vmatprep.subr.bf16.mxu0 0
  %4252 = vmatpush1.bf16.msra.mxu0 0
  %4253 = vmatprep.subr.bf16.mxu0 0
  %4254 = vmatpush1.bf16.msra.mxu0 0
  %4255 = vmatprep.subr.bf16.mxu0 0
  %4256 = vmatpush1.bf16.msra.mxu0 0
  %4257 = vmatprep.subr.bf16.mxu0 0
  %4258 = vmatpush1.bf16.msra.mxu0 0
  %4259 = vmatprep.subr.bf16.mxu0 0
  %4260 = vmatpush1.bf16.msra.mxu0 0
  %4261 = vmatprep.mubr.bf16.mxu0 0
  %4262 = vmatmul.mubr.bf16.gmra.mrb[0].mxu0 %v4163
  %v4263 = vpop.f32.mrb[0].mxu0
  %v4264 = vadd.f32 0.0, %v4263
  %v4265 = vpop.f32.mrb[0].mxu0
  %v4266 = vpop.f32.mrb[0].mxu0
  %v4267 = vpop.f32.mrb[0].mxu0
  %4268 = vdwg.mxu0
  %4270 = vrot.lane.b32.xlu0 %v4002, 64
  %v4271 = vpop.permute.xlu0 %4270
  %v4273 = vsel %vm58, %v4271, 0
  %4275 = vmatprep.subr.bf16.mxu0 0
  %4276 = vmatpush1.bf16.msra.mxu0 %v522
  %4277 = vmatprep.subr.bf16.mxu0 0
  %4278 = vmatpush1.bf16.msra.mxu0 %v523
  %4279 = vmatprep.subr.bf16.mxu0 0
  %4280 = vmatpush1.bf16.msra.mxu0 0
  %4281 = vmatprep.subr.bf16.mxu0 0
  %4282 = vmatpush1.bf16.msra.mxu0 0
  %4283 = vmatprep.subr.bf16.mxu0 0
  %4284 = vmatpush1.bf16.msra.mxu0 0
  %4285 = vmatprep.subr.bf16.mxu0 0
  %4286 = vmatpush1.bf16.msra.mxu0 0
  %4287 = vmatprep.subr.bf16.mxu0 0
  %4288 = vmatpush1.bf16.msra.mxu0 0
  %4289 = vmatprep.subr.bf16.mxu0 0
  %4290 = vmatpush1.bf16.msra.mxu0 0
  %4291 = vmatprep.subr.bf16.mxu0 0
  %4292 = vmatpush1.bf16.msra.mxu0 0
  %4293 = vmatprep.subr.bf16.mxu0 0
  %4294 = vmatpush1.bf16.msra.mxu0 0
  %4295 = vmatprep.subr.bf16.mxu0 0
  %4296 = vmatpush1.bf16.msra.mxu0 0
  %4297 = vmatprep.subr.bf16.mxu0 0
  %4298 = vmatpush1.bf16.msra.mxu0 0
  %4299 = vmatprep.subr.bf16.mxu0 0
  %4300 = vmatpush1.bf16.msra.mxu0 0
  %4301 = vmatprep.subr.bf16.mxu0 0
  %4302 = vmatpush1.bf16.msra.mxu0 0
  %4303 = vmatprep.subr.bf16.mxu0 0
  %4304 = vmatpush1.bf16.msra.mxu0 0
  %4305 = vmatprep.subr.bf16.mxu0 0
  %4306 = vmatpush1.bf16.msra.mxu0 0
  %4307 = vmatprep.mubr.bf16.mxu0 0
  %4308 = vmatmul.mubr.bf16.gmra.mrb[0].mxu0 %v4273
  %v4309 = vpop.f32.mrb[0].mxu0
  %v4310 = vadd.f32 %v4264, %v4309
  %v4311 = vpop.f32.mrb[0].mxu0
  %v4312 = vpop.f32.mrb[0].mxu0
  %v4313 = vpop.f32.mrb[0].mxu0
  %4314 = vdwg.mxu0
  %v4315 = vadd.f32 %v4310, %v575
  %v4316 = vmul.f32 %v4315, 0.5
  %v4317 = vtanh.pop %v4316
  %v4318 = vmul.f32 %v4317, 0.5
  %v4319 = vadd.f32 %v4318, 0.5
  %v4320 = vtanh.pop %v4315
  %v4321 = vmul.f32 %v4319, %v3885
  %4323 = vrot.lane.b32.xlu0 %v4320, 32
  %v4324 = vpop.permute.xlu0 %4323
  %v4326 = vmul.f32 %v4319, %v4324
  %4328 = vrot.lane.b32.xlu0 %v4326, 32
  %v4329 = vpop.permute.xlu0 %4328
  %v4331 = vadd.f32 %v4321, %v4329
  %v4332 = vtanh.pop %v4331
  %4334 = vrot.lane.b32.xlu0 %v4332, 32
  %v4335 = vpop.permute.xlu0 %4334
  %v4337 = vmul.f32 %v4319, %v4335
  %v4338 = vpack.c.bf16 %v4337, %v4337
  %4340 = vrot.lane.b32.xlu0 %v4118, 64
  %v4341 = vpop.permute.xlu0 %4340
  %v4343 = vsel %vm58, %v4341, 0
  %4345 = vmatprep.subr.bf16.mxu0 0
  %4346 = vmatpush1.bf16.msra.mxu0 %v1319
  %4347 = vmatprep.subr.bf16.mxu0 0
  %4348 = vmatpush1.bf16.msra.mxu0 %v1320
  %4349 = vmatprep.subr.bf16.mxu0 0
  %4350 = vmatpush1.bf16.msra.mxu0 0
  %4351 = vmatprep.subr.bf16.mxu0 0
  %4352 = vmatpush1.bf16.msra.mxu0 0
  %4353 = vmatprep.subr.bf16.mxu0 0
  %4354 = vmatpush1.bf16.msra.mxu0 0
  %4355 = vmatprep.subr.bf16.mxu0 0
  %4356 = vmatpush1.bf16.msra.mxu0 0
  %4357 = vmatprep.subr.bf16.mxu0 0
  %4358 = vmatpush1.bf16.msra.mxu0 0
  %4359 = vmatprep.subr.bf16.mxu0 0
  %4360 = vmatpush1.bf16.msra.mxu0 0
  %4361 = vmatprep.subr.bf16.mxu0 0
  %4362 = vmatpush1.bf16.msra.mxu0 0
  %4363 = vmatprep.subr.bf16.mxu0 0
  %4364 = vmatpush1.bf16.msra.mxu0 0
  %4365 = vmatprep.subr.bf16.mxu0 0
  %4366 = vmatpush1.bf16.msra.mxu0 0
  %4367 = vmatprep.subr.bf16.mxu0 0
  %4368 = vmatpush1.bf16.msra.mxu0 0
  %4369 = vmatprep.subr.bf16.mxu0 0
  %4370 = vmatpush1.bf16.msra.mxu0 0
  %4371 = vmatprep.subr.bf16.mxu0 0
  %4372 = vmatpush1.bf16.msra.mxu0 0
  %4373 = vmatprep.subr.bf16.mxu0 0
  %4374 = vmatpush1.bf16.msra.mxu0 0
  %4375 = vmatprep.subr.bf16.mxu0 0
  %4376 = vmatpush1.bf16.msra.mxu0 0
  %4377 = vmatprep.mubr.bf16.mxu0 0
  %4378 = vmatmul.mubr.bf16.gmra.mrb[0].mxu0 %v4343
  %v4379 = vpop.f32.mrb[0].mxu0
  %v4380 = vadd.f32 0.0, %v4379
  %v4381 = vpop.f32.mrb[0].mxu0
  %v4382 = vpop.f32.mrb[0].mxu0
  %v4383 = vpop.f32.mrb[0].mxu0
  %4384 = vdwg.mxu0
  %4386 = vrot.lane.b32.xlu0 %v4228, 64
  %v4387 = vpop.permute.xlu0 %4386
  %v4389 = vsel %vm58, %v4387, 0
  %4391 = vmatprep.subr.bf16.mxu0 0
  %4392 = vmatpush1.bf16.msra.mxu0 %v1374
  %4393 = vmatprep.subr.bf16.mxu0 0
  %4394 = vmatpush1.bf16.msra.mxu0 %v1375
  %4395 = vmatprep.subr.bf16.mxu0 0
  %4396 = vmatpush1.bf16.msra.mxu0 0
  %4397 = vmatprep.subr.bf16.mxu0 0
  %4398 = vmatpush1.bf16.msra.mxu0 0
  %4399 = vmatprep.subr.bf16.mxu0 0
  %4400 = vmatpush1.bf16.msra.mxu0 0
  %4401 = vmatprep.subr.bf16.mxu0 0
  %4402 = vmatpush1.bf16.msra.mxu0 0
  %4403 = vmatprep.subr.bf16.mxu0 0
  %4404 = vmatpush1.bf16.msra.mxu0 0
  %4405 = vmatprep.subr.bf16.mxu0 0
  %4406 = vmatpush1.bf16.msra.mxu0 0
  %4407 = vmatprep.subr.bf16.mxu0 0
  %4408 = vmatpush1.bf16.msra.mxu0 0
  %4409 = vmatprep.subr.bf16.mxu0 0
  %4410 = vmatpush1.bf16.msra.mxu0 0
  %4411 = vmatprep.subr.bf16.mxu0 0
  %4412 = vmatpush1.bf16.msra.mxu0 0
  %4413 = vmatprep.subr.bf16.mxu0 0
  %4414 = vmatpush1.bf16.msra.mxu0 0
  %4415 = vmatprep.subr.bf16.mxu0 0
  %4416 = vmatpush1.bf16.msra.mxu0 0
  %4417 = vmatprep.subr.bf16.mxu0 0
  %4418 = vmatpush1.bf16.msra.mxu0 0
  %4419 = vmatprep.subr.bf16.mxu0 0
  %4420 = vmatpush1.bf16.msra.mxu0 0
  %4421 = vmatprep.subr.bf16.mxu0 0
  %4422 = vmatpush1.bf16.msra.mxu0 0
  %4423 = vmatprep.mubr.bf16.mxu0 0
  %4424 = vmatmul.mubr.bf16.gmra.mrb[0].mxu0 %v4389
  %v4425 = vpop.f32.mrb[0].mxu0
  %v4426 = vadd.f32 %v4380, %v4425
  %v4427 = vpop.f32.mrb[0].mxu0
  %v4428 = vpop.f32.mrb[0].mxu0
  %v4429 = vpop.f32.mrb[0].mxu0
  %4430 = vdwg.mxu0
  %v4431 = vadd.f32 %v4426, %v1427
  %v4432 = vmul.f32 %v4431, 0.5
  %v4433 = vtanh.pop %v4432
  %v4434 = vmul.f32 %v4433, 0.5
  %v4435 = vadd.f32 %v4434, 0.5
  %v4436 = vtanh.pop %v4431
  %v4437 = vmul.f32 %v4435, %v4111
  %4439 = vrot.lane.b32.xlu0 %v4436, 32
  %v4440 = vpop.permute.xlu0 %4439
  %v4442 = vmul.f32 %v4435, %v4440
  %4444 = vrot.lane.b32.xlu0 %v4442, 32
  %v4445 = vpop.permute.xlu0 %4444
  %v4447 = vadd.f32 %v4437, %v4445
  %v4448 = vtanh.pop %v4447
  %4450 = vrot.lane.b32.xlu0 %v4448, 32
  %v4451 = vpop.permute.xlu0 %4450
  %v4453 = vmul.f32 %v4435, %v4451
  %v4454 = vpack.c.bf16 %v4453, %v4453
  %4455 = vmatprep.subr.bf16.mxu0 0
  %4456 = vmatpush1.bf16.msra.mxu0 %v838
  %4457 = vmatprep.subr.bf16.mxu0 0
  %4458 = vmatpush1.bf16.msra.mxu0 %v839
  %4459 = vmatprep.subr.bf16.mxu0 0
  %4460 = vmatpush1.bf16.msra.mxu0 0
  %4461 = vmatprep.subr.bf16.mxu0 0
  %4462 = vmatpush1.bf16.msra.mxu0 0
  %4463 = vmatprep.subr.bf16.mxu0 0
  %4464 = vmatpush1.bf16.msra.mxu0 0
  %4465 = vmatprep.subr.bf16.mxu0 0
  %4466 = vmatpush1.bf16.msra.mxu0 0
  %4467 = vmatprep.subr.bf16.mxu0 0
  %4468 = vmatpush1.bf16.msra.mxu0 0
  %4469 = vmatprep.subr.bf16.mxu0 0
  %4470 = vmatpush1.bf16.msra.mxu0 0
  %4471 = vmatprep.subr.bf16.mxu0 0
  %4472 = vmatpush1.bf16.msra.mxu0 0
  %4473 = vmatprep.subr.bf16.mxu0 0
  %4474 = vmatpush1.bf16.msra.mxu0 0
  %4475 = vmatprep.subr.bf16.mxu0 0
  %4476 = vmatpush1.bf16.msra.mxu0 0
  %4477 = vmatprep.subr.bf16.mxu0 0
  %4478 = vmatpush1.bf16.msra.mxu0 0
  %4479 = vmatprep.subr.bf16.mxu0 0
  %4480 = vmatpush1.bf16.msra.mxu0 0
  %4481 = vmatprep.subr.bf16.mxu0 0
  %4482 = vmatpush1.bf16.msra.mxu0 0
  %4483 = vmatprep.subr.bf16.mxu0 0
  %4484 = vmatpush1.bf16.msra.mxu0 0
  %4485 = vmatprep.subr.bf16.mxu0 0
  %4486 = vmatpush1.bf16.msra.mxu0 0
  %4487 = vmatprep.mubr.bf16.mxu0 0
  %4488 = vmatmul.mubr.bf16.gmra.mrb[0].mxu0 %v4389
  %v4489 = vpop.f32.mrb[0].mxu0
  %v4490 = vadd.f32 0.0, %v4489
  %v4491 = vpop.f32.mrb[0].mxu0
  %v4492 = vpop.f32.mrb[0].mxu0
  %v4493 = vpop.f32.mrb[0].mxu0
  %4494 = vdwg.mxu0
  %4496 = vrot.lane.b32.xlu0 %v4338, 64
  %v4497 = vpop.permute.xlu0 %4496
  %v4499 = vsel %vm58, %v4497, 0
  %4501 = vmatprep.subr.bf16.mxu0 0
  %4502 = vmatpush1.bf16.msra.mxu0 %v893
  %4503 = vmatprep.subr.bf16.mxu0 0
  %4504 = vmatpush1.bf16.msra.mxu0 %v894
  %4505 = vmatprep.subr.bf16.mxu0 0
  %4506 = vmatpush1.bf16.msra.mxu0 0
  %4507 = vmatprep.subr.bf16.mxu0 0
  %4508 = vmatpush1.bf16.msra.mxu0 0
  %4509 = vmatprep.subr.bf16.mxu0 0
  %4510 = vmatpush1.bf16.msra.mxu0 0
  %4511 = vmatprep.subr.bf16.mxu0 0
  %4512 = vmatpush1.bf16.msra.mxu0 0
  %4513 = vmatprep.subr.bf16.mxu0 0
  %4514 = vmatpush1.bf16.msra.mxu0 0
  %4515 = vmatprep.subr.bf16.mxu0 0
  %4516 = vmatpush1.bf16.msra.mxu0 0
  %4517 = vmatprep.subr.bf16.mxu0 0
  %4518 = vmatpush1.bf16.msra.mxu0 0
  %4519 = vmatprep.subr.bf16.mxu0 0
  %4520 = vmatpush1.bf16.msra.mxu0 0
  %4521 = vmatprep.subr.bf16.mxu0 0
  %4522 = vmatpush1.bf16.msra.mxu0 0
  %4523 = vmatprep.subr.bf16.mxu0 0
  %4524 = vmatpush1.bf16.msra.mxu0 0
  %4525 = vmatprep.subr.bf16.mxu0 0
  %4526 = vmatpush1.bf16.msra.mxu0 0
  %4527 = vmatprep.subr.bf16.mxu0 0
  %4528 = vmatpush1.bf16.msra.mxu0 0
  %4529 = vmatprep.subr.bf16.mxu0 0
  %4530 = vmatpush1.bf16.msra.mxu0 0
  %4531 = vmatprep.subr.bf16.mxu0 0
  %4532 = vmatpush1.bf16.msra.mxu0 0
  %4533 = vmatprep.mubr.bf16.mxu0 0
  %4534 = vmatmul.mubr.bf16.gmra.mrb[0].mxu0 %v4499
  %v4535 = vpop.f32.mrb[0].mxu0
  %v4536 = vadd.f32 %v4490, %v4535
  %v4537 = vpop.f32.mrb[0].mxu0
  %v4538 = vpop.f32.mrb[0].mxu0
  %v4539 = vpop.f32.mrb[0].mxu0
  %4540 = vdwg.mxu0
  %v4541 = vadd.f32 %v4536, %v946
  %v4542 = vmul.f32 %v4541, 0.5
  %v4543 = vtanh.pop %v4542
  %v4544 = vmul.f32 %v4543, 0.5
  %v4545 = vadd.f32 %v4544, 0.5
  %v4546 = vtanh.pop %v4541
  %v4547 = vmul.f32 %v4545, %v4221
  %4549 = vrot.lane.b32.xlu0 %v4546, 32
  %v4550 = vpop.permute.xlu0 %4549
  %v4552 = vmul.f32 %v4545, %v4550
  %4554 = vrot.lane.b32.xlu0 %v4552, 32
  %v4555 = vpop.permute.xlu0 %4554
  %v4557 = vadd.f32 %v4547, %v4555
  %v4558 = vtanh.pop %v4557
  %4560 = vrot.lane.b32.xlu0 %v4558, 32
  %v4561 = vpop.permute.xlu0 %4560
  %v4563 = vmul.f32 %v4545, %v4561
  %v4564 = vpack.c.bf16 %v4563, %v4563
  %4566 = vrot.lane.b32.xlu0 %v4454, 64
  %v4567 = vpop.permute.xlu0 %4566
  %v4569 = vsel %vm58, %v4567, 0
  %4571 = vmatprep.subr.bf16.mxu0 0
  %4572 = vmatpush1.bf16.msra.mxu0 %v1319
  %4573 = vmatprep.subr.bf16.mxu0 0
  %4574 = vmatpush1.bf16.msra.mxu0 %v1320
  %4575 = vmatprep.subr.bf16.mxu0 0
  %4576 = vmatpush1.bf16.msra.mxu0 0
  %4577 = vmatprep.subr.bf16.mxu0 0
  %4578 = vmatpush1.bf16.msra.mxu0 0
  %4579 = vmatprep.subr.bf16.mxu0 0
  %4580 = vmatpush1.bf16.msra.mxu0 0
  %4581 = vmatprep.subr.bf16.mxu0 0
  %4582 = vmatpush1.bf16.msra.mxu0 0
  %4583 = vmatprep.subr.bf16.mxu0 0
  %4584 = vmatpush1.bf16.msra.mxu0 0
  %4585 = vmatprep.subr.bf16.mxu0 0
  %4586 = vmatpush1.bf16.msra.mxu0 0
  %4587 = vmatprep.subr.bf16.mxu0 0
  %4588 = vmatpush1.bf16.msra.mxu0 0
  %4589 = vmatprep.subr.bf16.mxu0 0
  %4590 = vmatpush1.bf16.msra.mxu0 0
  %4591 = vmatprep.subr.bf16.mxu0 0
  %4592 = vmatpush1.bf16.msra.mxu0 0
  %4593 = vmatprep.subr.bf16.mxu0 0
  %4594 = vmatpush1.bf16.msra.mxu0 0
  %4595 = vmatprep.subr.bf16.mxu0 0
  %4596 = vmatpush1.bf16.msra.mxu0 0
  %4597 = vmatprep.subr.bf16.mxu0 0
  %4598 = vmatpush1.bf16.msra.mxu0 0
  %4599 = vmatprep.subr.bf16.mxu0 0
  %4600 = vmatpush1.bf16.msra.mxu0 0
  %4601 = vmatprep.subr.bf16.mxu0 0
  %4602 = vmatpush1.bf16.msra.mxu0 0
  %4603 = vmatprep.mubr.bf16.mxu0 0
  %4604 = vmatmul.mubr.bf16.gmra.mrb[0].mxu0 %v4569
  %v4605 = vpop.f32.mrb[0].mxu0
  %v4606 = vadd.f32 0.0, %v4605
  %v4607 = vpop.f32.mrb[0].mxu0
  %v4608 = vpop.f32.mrb[0].mxu0
  %v4609 = vpop.f32.mrb[0].mxu0
  %4610 = vdwg.mxu0
  %4612 = vrot.lane.b32.xlu0 %v4564, 64
  %v4613 = vpop.permute.xlu0 %4612
  %v4615 = vsel %vm58, %v4613, 0
  %4617 = vmatprep.subr.bf16.mxu0 0
  %4618 = vmatpush1.bf16.msra.mxu0 %v1374
  %4619 = vmatprep.subr.bf16.mxu0 0
  %4620 = vmatpush1.bf16.msra.mxu0 %v1375
  %4621 = vmatprep.subr.bf16.mxu0 0
  %4622 = vmatpush1.bf16.msra.mxu0 0
  %4623 = vmatprep.subr.bf16.mxu0 0
  %4624 = vmatpush1.bf16.msra.mxu0 0
  %4625 = vmatprep.subr.bf16.mxu0 0
  %4626 = vmatpush1.bf16.msra.mxu0 0
  %4627 = vmatprep.subr.bf16.mxu0 0
  %4628 = vmatpush1.bf16.msra.mxu0 0
  %4629 = vmatprep.subr.bf16.mxu0 0
  %4630 = vmatpush1.bf16.msra.mxu0 0
  %4631 = vmatprep.subr.bf16.mxu0 0
  %4632 = vmatpush1.bf16.msra.mxu0 0
  %4633 = vmatprep.subr.bf16.mxu0 0
  %4634 = vmatpush1.bf16.msra.mxu0 0
  %4635 = vmatprep.subr.bf16.mxu0 0
  %4636 = vmatpush1.bf16.msra.mxu0 0
  %4637 = vmatprep.subr.bf16.mxu0 0
  %4638 = vmatpush1.bf16.msra.mxu0 0
  %4639 = vmatprep.subr.bf16.mxu0 0
  %4640 = vmatpush1.bf16.msra.mxu0 0
  %4641 = vmatprep.subr.bf16.mxu0 0
  %4642 = vmatpush1.bf16.msra.mxu0 0
  %4643 = vmatprep.subr.bf16.mxu0 0
  %4644 = vmatpush1.bf16.msra.mxu0 0
  %4645 = vmatprep.subr.bf16.mxu0 0
  %4646 = vmatpush1.bf16.msra.mxu0 0
  %4647 = vmatprep.subr.bf16.mxu0 0
  %4648 = vmatpush1.bf16.msra.mxu0 0
  %4649 = vmatprep.mubr.bf16.mxu0 0
  %4650 = vmatmul.mubr.bf16.gmra.mrb[0].mxu0 %v4615
  %v4651 = vpop.f32.mrb[0].mxu0
  %v4652 = vadd.f32 %v4606, %v4651
  %v4653 = vpop.f32.mrb[0].mxu0
  %v4654 = vpop.f32.mrb[0].mxu0
  %v4655 = vpop.f32.mrb[0].mxu0
  %4656 = vdwg.mxu0
  %v4657 = vadd.f32 %v4652, %v1427
  %v4658 = vmul.f32 %v4657, 0.5
  %v4659 = vtanh.pop %v4658
  %v4660 = vmul.f32 %v4659, 0.5
  %v4661 = vadd.f32 %v4660, 0.5
  %v4662 = vtanh.pop %v4657
  %v4663 = vmul.f32 %v4661, %v4447
  %4665 = vrot.lane.b32.xlu0 %v4662, 32
  %v4666 = vpop.permute.xlu0 %4665
  %v4668 = vmul.f32 %v4661, %v4666
  %4670 = vrot.lane.b32.xlu0 %v4668, 32
  %v4671 = vpop.permute.xlu0 %4670
  %v4673 = vadd.f32 %v4663, %v4671
  %v4674 = vtanh.pop %v4673
  %4676 = vrot.lane.b32.xlu0 %v4674, 32
  %v4677 = vpop.permute.xlu0 %4676
  %v4679 = vmul.f32 %v4661, %v4677
  %v4680 = vpack.c.bf16 %v4679, %v4679
  %v4681 = vunpack.c.l.bf16 %v4680
  %4683 = vrot.lane.b32.xlu0 %v3448, 64
  %v4684 = vpop.permute.xlu0 %4683
  %v4686 = vadd.f32 %v4681, %v4684
  %v4687 = vld [vmem:[%s4] sm:$0xff]
  %v4688 = vld [vmem:[%s4 + $0x8] sm:$0xff]
  %v4689 = vld [vmem:[%s4 + $0x10] sm:$0xff]
  %v4690 = vld [vmem:[%s4 + $0x18] sm:$0xff]
  %v4691 = vld [vmem:[%s5] sm:$0x1]
  %v4693 = vlaneseq
  %v4694 = vshrl.u32 %v4693, 7
  %v4695 = vsub.s32 0, %v4694
  %v4696 = vrot.slane %v4691, %v4695
  %4699 = vrot.lane.b32.xlu0 %v4686, 64
  %v4700 = vpop.permute.xlu0 %4699
  %v4701 = vsel %vm58, %v4700, 0
  %4703 = vmatprep.subr.mxu0 0.0
  %4704 = vmatpush1.msra.mxu0 %v4687
  %4705 = vmatprep.subr.mxu0 0.0
  %4706 = vmatpush1.msra.mxu0 %v4688
  %4707 = vmatprep.subr.mxu0 0.0
  %4708 = vmatpush1.msra.mxu0 %v4689
  %4709 = vmatprep.subr.mxu0 0.0
  %4710 = vmatpush1.msra.mxu0 %v4690
  %4711 = vmatprep.subr.mxu0 0.0
  %4712 = vmatpush1.msra.mxu0 0.0
  %4713 = vmatprep.subr.mxu0 0.0
  %4714 = vmatpush1.msra.mxu0 0.0
  %4715 = vmatprep.subr.mxu0 0.0
  %4716 = vmatpush1.msra.mxu0 0.0
  %4717 = vmatprep.subr.mxu0 0.0
  %4718 = vmatpush1.msra.mxu0 0.0
  %4719 = vmatprep.subr.mxu0 0.0
  %4720 = vmatpush1.msra.mxu0 0.0
  %4721 = vmatprep.subr.mxu0 0.0
  %4722 = vmatpush1.msra.mxu0 0.0
  %4723 = vmatprep.subr.mxu0 0.0
  %4724 = vmatpush1.msra.mxu0 0.0
  %4725 = vmatprep.subr.mxu0 0.0
  %4726 = vmatpush1.msra.mxu0 0.0
  %4727 = vmatprep.subr.mxu0 0.0
  %4728 = vmatpush1.msra.mxu0 0.0
  %4729 = vmatprep.subr.mxu0 0.0
  %4730 = vmatpush1.msra.mxu0 0.0
  %4731 = vmatprep.subr.mxu0 0.0
  %4732 = vmatpush1.msra.mxu0 0.0
  %4733 = vmatprep.subr.mxu0 0.0
  %4734 = vmatpush1.msra.mxu0 0.0
  %4735 = vmatprep.subr.mxu0 0.0
  %4736 = vmatpush1.msra.mxu0 0.0
  %4737 = vmatprep.subr.mxu0 0.0
  %4738 = vmatpush1.msra.mxu0 0.0
  %4739 = vmatprep.subr.mxu0 0.0
  %4740 = vmatpush1.msra.mxu0 0.0
  %4741 = vmatprep.subr.mxu0 0.0
  %4742 = vmatpush1.msra.mxu0 0.0
  %4743 = vmatprep.subr.mxu0 0.0
  %4744 = vmatpush1.msra.mxu0 0.0
  %4745 = vmatprep.subr.mxu0 0.0
  %4746 = vmatpush1.msra.mxu0 0.0
  %4747 = vmatprep.subr.mxu0 0.0
  %4748 = vmatpush1.msra.mxu0 0.0
  %4749 = vmatprep.subr.mxu0 0.0
  %4750 = vmatpush1.msra.mxu0 0.0
  %4751 = vmatprep.subr.mxu0 0.0
  %4752 = vmatpush1.msra.mxu0 0.0
  %4753 = vmatprep.subr.mxu0 0.0
  %4754 = vmatpush1.msra.mxu0 0.0
  %4755 = vmatprep.subr.mxu0 0.0
  %4756 = vmatpush1.msra.mxu0 0.0
  %4757 = vmatprep.subr.mxu0 0.0
  %4758 = vmatpush1.msra.mxu0 0.0
  %4759 = vmatprep.subr.mxu0 0.0
  %4760 = vmatpush1.msra.mxu0 0.0
  %4761 = vmatprep.subr.mxu0 0.0
  %4762 = vmatpush1.msra.mxu0 0.0
  %4763 = vmatprep.subr.mxu0 0.0
  %4764 = vmatpush1.msra.mxu0 0.0
  %4765 = vmatprep.subr.mxu0 0.0
  %4766 = vmatpush1.msra.mxu0 0.0
  %4767 = vmatprep.mubr.f32.mxu0 0.0
  %4768 = vmatmul.mubr.f32.gmra.mrb[0].mxu0 %v4701
  %v4769 = vpop.f32.mrb[0].mxu0
  %v4770 = vadd.f32 %v4696, %v4769
  %v4771 = vpop.f32.mrb[0].mxu0
  %4772 = vdwg.mxu0
  %v4773 = vmax.f32 %v4770, 0.0
  %v4774 = vld [vmem:[%s6] sm:$0xff]
  %v4775 = vld [vmem:[%s6 + $0x8] sm:$0xff]
  %v4776 = vld [vmem:[%s6 + $0x10] sm:$0xff]
  %v4777 = vld [vmem:[%s6 + $0x18] sm:$0xff]
  %v4778 = vld [vmem:[%s7] sm:$0x1]
  %v4780 = vlaneseq
  %v4781 = vshrl.u32 %v4780, 7
  %v4782 = vsub.s32 0, %v4781
  %v4783 = vrot.slane %v4778, %v4782
  %v4786 = vsel %vm58, %v4773, 0
  %4788 = vmatprep.subr.mxu0 0.0
  %4789 = vmatpush1.msra.mxu0 %v4774
  %4790 = vmatprep.subr.mxu0 0.0
  %4791 = vmatpush1.msra.mxu0 %v4775
  %4792 = vmatprep.subr.mxu0 0.0
  %4793 = vmatpush1.msra.mxu0 %v4776
  %4794 = vmatprep.subr.mxu0 0.0
  %4795 = vmatpush1.msra.mxu0 %v4777
  %4796 = vmatprep.subr.mxu0 0.0
  %4797 = vmatpush1.msra.mxu0 0.0
  %4798 = vmatprep.subr.mxu0 0.0
  %4799 = vmatpush1.msra.mxu0 0.0
  %4800 = vmatprep.subr.mxu0 0.0
  %4801 = vmatpush1.msra.mxu0 0.0
  %4802 = vmatprep.subr.mxu0 0.0
  %4803 = vmatpush1.msra.mxu0 0.0
  %4804 = vmatprep.subr.mxu0 0.0
  %4805 = vmatpush1.msra.mxu0 0.0
  %4806 = vmatprep.subr.mxu0 0.0
  %4807 = vmatpush1.msra.mxu0 0.0
  %4808 = vmatprep.subr.mxu0 0.0
  %4809 = vmatpush1.msra.mxu0 0.0
  %4810 = vmatprep.subr.mxu0 0.0
  %4811 = vmatpush1.msra.mxu0 0.0
  %4812 = vmatprep.subr.mxu0 0.0
  %4813 = vmatpush1.msra.mxu0 0.0
  %4814 = vmatprep.subr.mxu0 0.0
  %4815 = vmatpush1.msra.mxu0 0.0
  %4816 = vmatprep.subr.mxu0 0.0
  %4817 = vmatpush1.msra.mxu0 0.0
  %4818 = vmatprep.subr.mxu0 0.0
  %4819 = vmatpush1.msra.mxu0 0.0
  %4820 = vmatprep.subr.mxu0 0.0
  %4821 = vmatpush1.msra.mxu0 0.0
  %4822 = vmatprep.subr.mxu0 0.0
  %4823 = vmatpush1.msra.mxu0 0.0
  %4824 = vmatprep.subr.mxu0 0.0
  %4825 = vmatpush1.msra.mxu0 0.0
  %4826 = vmatprep.subr.mxu0 0.0
  %4827 = vmatpush1.msra.mxu0 0.0
  %4828 = vmatprep.subr.mxu0 0.0
  %4829 = vmatpush1.msra.mxu0 0.0
  %4830 = vmatprep.subr.mxu0 0.0
  %4831 = vmatpush1.msra.mxu0 0.0
  %4832 = vmatprep.subr.mxu0 0.0
  %4833 = vmatpush1.msra.mxu0 0.0
  %4834 = vmatprep.subr.mxu0 0.0
  %4835 = vmatpush1.msra.mxu0 0.0
  %4836 = vmatprep.subr.mxu0 0.0
  %4837 = vmatpush1.msra.mxu0 0.0
  %4838 = vmatprep.subr.mxu0 0.0
  %4839 = vmatpush1.msra.mxu0 0.0
  %4840 = vmatprep.subr.mxu0 0.0
  %4841 = vmatpush1.msra.mxu0 0.0
  %4842 = vmatprep.subr.mxu0 0.0
  %4843 = vmatpush1.msra.mxu0 0.0
  %4844 = vmatprep.subr.mxu0 0.0
  %4845 = vmatpush1.msra.mxu0 0.0
  %4846 = vmatprep.subr.mxu0 0.0
  %4847 = vmatpush1.msra.mxu0 0.0
  %4848 = vmatprep.subr.mxu0 0.0
  %4849 = vmatpush1.msra.mxu0 0.0
  %4850 = vmatprep.subr.mxu0 0.0
  %4851 = vmatpush1.msra.mxu0 0.0
  %4852 = vmatprep.mubr.f32.mxu0 0.0
  %4853 = vmatmul.mubr.f32.gmra.mrb[0].mxu0 %v4786
  %v4854 = vpop.f32.mrb[0].mxu0
  %v4855 = vadd.f32 %v4783, %v4854
  %v4856 = vpop.f32.mrb[0].mxu0
  %4857 = vdwg.mxu0
  %v4858 = vmax.f32 %v4855, 0.0
  %v4859 = vld [vmem:[%s8] sm:$0xff]
  %v4860 = vld [vmem:[%s8 + $0x8] sm:$0xff]
  %v4861 = vld [vmem:[%s8 + $0x10] sm:$0xff]
  %v4862 = vld [vmem:[%s8 + $0x18] sm:$0xff]
  %v4863 = vld [vmem:[%s9] sm:$0x1]
  %v4865 = vlaneseq
  %v4866 = vshrl.u32 %v4865, 7
  %v4867 = vsub.s32 0, %v4866
  %v4868 = vrot.slane %v4863, %v4867
  %v4871 = vsel %vm58, %v4858, 0
  %4873 = vmatprep.subr.mxu0 0.0
  %4874 = vmatpush1.msra.mxu0 %v4859
  %4875 = vmatprep.subr.mxu0 0.0
  %4876 = vmatpush1.msra.mxu0 %v4860
  %4877 = vmatprep.subr.mxu0 0.0
  %4878 = vmatpush1.msra.mxu0 %v4861
  %4879 = vmatprep.subr.mxu0 0.0
  %4880 = vmatpush1.msra.mxu0 %v4862
  %4881 = vmatprep.subr.mxu0 0.0
  %4882 = vmatpush1.msra.mxu0 0.0
  %4883 = vmatprep.subr.mxu0 0.0
  %4884 = vmatpush1.msra.mxu0 0.0
  %4885 = vmatprep.subr.mxu0 0.0
  %4886 = vmatpush1.msra.mxu0 0.0
  %4887 = vmatprep.subr.mxu0 0.0
  %4888 = vmatpush1.msra.mxu0 0.0
  %4889 = vmatprep.subr.mxu0 0.0
  %4890 = vmatpush1.msra.mxu0 0.0
  %4891 = vmatprep.subr.mxu0 0.0
  %4892 = vmatpush1.msra.mxu0 0.0
  %4893 = vmatprep.subr.mxu0 0.0
  %4894 = vmatpush1.msra.mxu0 0.0
  %4895 = vmatprep.subr.mxu0 0.0
  %4896 = vmatpush1.msra.mxu0 0.0
  %4897 = vmatprep.subr.mxu0 0.0
  %4898 = vmatpush1.msra.mxu0 0.0
  %4899 = vmatprep.subr.mxu0 0.0
  %4900 = vmatpush1.msra.mxu0 0.0
  %4901 = vmatprep.subr.mxu0 0.0
  %4902 = vmatpush1.msra.mxu0 0.0
  %4903 = vmatprep.subr.mxu0 0.0
  %4904 = vmatpush1.msra.mxu0 0.0
  %4905 = vmatprep.subr.mxu0 0.0
  %4906 = vmatpush1.msra.mxu0 0.0
  %4907 = vmatprep.subr.mxu0 0.0
  %4908 = vmatpush1.msra.mxu0 0.0
  %4909 = vmatprep.subr.mxu0 0.0
  %4910 = vmatpush1.msra.mxu0 0.0
  %4911 = vmatprep.subr.mxu0 0.0
  %4912 = vmatpush1.msra.mxu0 0.0
  %4913 = vmatprep.subr.mxu0 0.0
  %4914 = vmatpush1.msra.mxu0 0.0
  %4915 = vmatprep.subr.mxu0 0.0
  %4916 = vmatpush1.msra.mxu0 0.0
  %4917 = vmatprep.subr.mxu0 0.0
  %4918 = vmatpush1.msra.mxu0 0.0
  %4919 = vmatprep.subr.mxu0 0.0
  %4920 = vmatpush1.msra.mxu0 0.0
  %4921 = vmatprep.subr.mxu0 0.0
  %4922 = vmatpush1.msra.mxu0 0.0
  %4923 = vmatprep.subr.mxu0 0.0
  %4924 = vmatpush1.msra.mxu0 0.0
  %4925 = vmatprep.subr.mxu0 0.0
  %4926 = vmatpush1.msra.mxu0 0.0
  %4927 = vmatprep.subr.mxu0 0.0
  %4928 = vmatpush1.msra.mxu0 0.0
  %4929 = vmatprep.subr.mxu0 0.0
  %4930 = vmatpush1.msra.mxu0 0.0
  %4931 = vmatprep.subr.mxu0 0.0
  %4932 = vmatpush1.msra.mxu0 0.0
  %4933 = vmatprep.subr.mxu0 0.0
  %4934 = vmatpush1.msra.mxu0 0.0
  %4935 = vmatprep.subr.mxu0 0.0
  %4936 = vmatpush1.msra.mxu0 0.0
  %4937 = vmatprep.mubr.f32.mxu0 0.0
  %4938 = vmatmul.mubr.f32.gmra.mrb[0].mxu0 %v4871
  %v4939 = vpop.f32.mrb[0].mxu0
  %v4940 = vadd.f32 %v4868, %v4939
  %v4941 = vpop.f32.mrb[0].mxu0
  %4942 = vdwg.mxu0
  %4943 = vst [vmem:[%s10] sm:$0xff] %v4940
  // Predicated region
  $region42: #{rnn_forward.1} parent=0 // pred_check
    _
  $region43: #{rnn_forward.1} parent=0 // pred_check_branch
    %4945 = sbr.rel (0) target = $region45
  $region44: #{rnn_forward.1} parent=0 // pred_region
    _
  $region45: #{rnn_forward.1} parent=0 // pred_fallthru
    _
  // Predicated region
  $region46: #{rnn_forward.1} parent=0 // pred_check
    _
  $region47: #{rnn_forward.1} parent=0 // pred_check_branch
    %4947 = sbr.rel (0) target = $region49
  $region48: #{rnn_forward.1} parent=0 // pred_region
    _
  $region49: #{rnn_forward.1} parent=0 // pred_fallthru
    _

</llo_original>
